<compile_context>
chip_gen: v6e
topology: v6e:2x2x1
jax: 0.10.0
libtpu: 0.0.40
codegen_flags: <defaults>
</compile_context>

<pallas_src>
import functools

import jax
import jax.numpy as jnp
from jax.experimental import pallas as pl
from jax.experimental.pallas import tpu as pltpu


# ----------------------------------------------------------------------------
# Fused conv (+ bias + InstanceNorm + affine + act + residual) Pallas kernel
# ----------------------------------------------------------------------------
def _make_conv_kernel(mode, has_res, eps=1e-5):
    """mode: 'linear' | 'in_relu' | 'in_prelu'.  One matmul + fused epilogue."""

    def kernel(*refs):
        if has_res:
            x_ref, w_ref, b_ref, g_ref, be_ref, a_ref, r_ref, o_ref = refs
        else:
            x_ref, w_ref, b_ref, g_ref, be_ref, a_ref, o_ref = refs
            r_ref = None

        # (P, K) bf16 x (K, Cout) bf16 -> (P, Cout) f32 on the MXU.
        y = jnp.dot(x_ref[0], w_ref[...], preferred_element_type=jnp.float32)
        y = y + b_ref[...]

        if mode != "linear":
            # One-pass instance-norm stats over the spatial axis (per channel).
            inv_p = 1.0 / y.shape[0]
            mean = jnp.sum(y, axis=0, keepdims=True) * inv_p
            var = jnp.maximum(
                jnp.sum(y * y, axis=0, keepdims=True) * inv_p - mean * mean, 0.0)
            y = (y - mean) * jax.lax.rsqrt(var + eps)
            y = y * g_ref[...] + be_ref[...]

        if has_res:
            y = y + r_ref[0].astype(jnp.float32)

        if mode == "in_relu":
            y = jnp.maximum(y, 0.0)
        elif mode == "in_prelu":
            y = jnp.where(y >= 0.0, y, a_ref[...] * y)

        o_ref[0] = y.astype(o_ref.dtype)

    return kernel


@functools.lru_cache(maxsize=None)
def _conv_call(N, P, K, Cout, mode, has_res, out_dtype):
    """Build (and cache) the pallas_call for one conv signature."""
    vec_in = pl.BlockSpec((1, P, K), lambda n: (n, 0, 0))
    w_spec = pl.BlockSpec((K, Cout), lambda n: (0, 0))
    ch_spec = pl.BlockSpec((1, Cout), lambda n: (0, 0))
    in_specs = [vec_in, w_spec, ch_spec, ch_spec, ch_spec, ch_spec]
    if has_res:
        in_specs.append(pl.BlockSpec((1, P, Cout), lambda n: (n, 0, 0)))

    return pl.pallas_call(
        _make_conv_kernel(mode, has_res),
        out_shape=jax.ShapeDtypeStruct((N, P, Cout), out_dtype),
        grid_spec=pltpu.PrefetchScalarGridSpec(
            num_scalar_prefetch=0,
            grid=(N,),
            in_specs=in_specs,
            out_specs=pl.BlockSpec((1, P, Cout), lambda n: (n, 0, 0)),
        ),
        compiler_params=pltpu.CompilerParams(
            dimension_semantics=("parallel",)),   # batch shards across v7x's 2 TCs
    )


# ----------------------------------------------------------------------------
# JAX-side glue (runs inside the single top-level jit)
# ----------------------------------------------------------------------------
def _round_up(v, m):
    return (v + m - 1) // m * m


def _im2col(x, kh, kw, padding):
    """x: (N,H,W,C) -> (N, Ho*Wo, kh*kw*C), taps folded into the K dimension."""
    N, H, W, C = x.shape
    xp = jnp.pad(x, ((0, 0), (padding, padding), (padding, padding), (0, 0)))
    Ho = H + 2 * padding - kh + 1
    Wo = W + 2 * padding - kw + 1
    cols = []
    for dy in range(kh):
        for dx in range(kw):
            cols.append(xp[:, dy:dy + Ho, dx:dx + Wo, :])
    col = jnp.concatenate(cols, axis=-1)               # (N, Ho, Wo, kh*kw*C)
    return col.reshape(N, Ho * Wo, kh * kw * C), Ho, Wo


def conv_block(x, cp, *, padding=1, mode="linear", gamma=None, beta=None,
               alpha=None, residual=None, out_dtype=jnp.bfloat16, cout_pad=None):
    """Fused Conv2d(k x k, stride=1) [+ IN(affine) + act + residual].  x: NHWC."""
    w, b = cp["w"], cp["b"]
    kh, kw, cin, cout = w.shape
    N, H, W, C = x.shape
    assert C == cin

    col, Ho, Wo = _im2col(x.astype(jnp.bfloat16), kh, kw, padding)
    P = Ho * Wo
    K0 = kh * kw * cin
    K = _round_up(K0, 16)                               # sublane-friendly K (bf16)
    if K != K0:
        col = jnp.pad(col, ((0, 0), (0, 0), (0, K - K0)))

    wf = w.reshape(K0, cout).astype(jnp.bfloat16)
    if K != K0:
        wf = jnp.pad(wf, ((0, K - K0), (0, 0)))

    co = cout if cout_pad is None else max(cout, cout_pad)   # lane-dense output head
    if co != cout:
        wf = jnp.pad(wf, ((0, 0), (0, co - cout)))

    def chan(v):
        v = v.astype(jnp.float32)
        if co != cout:
            v = jnp.pad(v, (0, co - cout))
        return v.reshape(1, co)

    b2 = chan(b)
    g2 = chan(gamma if gamma is not None else jnp.ones((cout,), jnp.float32))
    be2 = chan(beta if beta is not None else jnp.zeros((cout,), jnp.float32))
    a2 = chan(alpha if alpha is not None else jnp.zeros((cout,), jnp.float32))

    args = [col, wf, b2, g2, be2, a2]
    has_res = residual is not None
    if has_res:
        assert co == cout
        args.append(residual.reshape(N, P, cout).astype(jnp.bfloat16))

    out = _conv_call(N, P, K, co, mode, has_res, out_dtype)(*args)
    if co != cout:
        out = out[:, :, :cout]
    return out.reshape(N, Ho, Wo, cout)


# ----------------------------------------------------------------------------
# Parameter initialization (deterministic, in-script; NHWC / (kh,kw,Cin,Cout) layout)
# ----------------------------------------------------------------------------
class KeyGen:
    def __init__(self, seed):
        self._key = jax.random.PRNGKey(seed)

    def __call__(self):
        self._key, sub = jax.random.split(self._key)
        return sub


def conv_params(kg, kh, kw, cin, cout, bias=True):
    w = jax.random.normal(kg(), (kh, kw, cin, cout), jnp.float32) * (kh * kw * cin) ** -0.5
    b = (jax.random.normal(kg(), (cout,), jnp.float32) * 0.01
         if bias else jnp.zeros((cout,), jnp.float32))
    return {"w": w, "b": b}


def in_params(kg, c):
    return {"g": 1.0 + 0.05 * jax.random.normal(kg(), (c,), jnp.float32),
            "b": 0.05 * jax.random.normal(kg(), (c,), jnp.float32)}


def res_block_params(kg, c):
    return {"conv1": conv_params(kg, 3, 3, c, c, bias=False),
            "in1": in_params(kg, c),
            "conv2": conv_params(kg, 3, 3, c, c, bias=False),
            "in2": in_params(kg, c)}


def build_params(seed=1):
    kg = KeyGen(seed)
    return {"conv_input": conv_params(kg, 3, 3, 3, 64),
            "prelu": 0.25 * jnp.ones((64,), jnp.float32),
            "bn_mid": in_params(kg, 64),
            "residual": [res_block_params(kg, 64) for _ in range(3)],
            "conv_mid": conv_params(kg, 3, 3, 64, 3)}


# ----------------------------------------------------------------------------
# Network forward (mirrors Course_SR_Network.forward)
# ----------------------------------------------------------------------------
def residual_block(x, bp):
    # relu(in1(conv1(x)))  -> fused kernel
    h = conv_block(x, bp["conv1"], mode="in_relu",
                   gamma=bp["in1"]["g"], beta=bp["in1"]["b"])
    # relu(in2(conv2(h)) + x) -> fused kernel with residual
    h = conv_block(h, bp["conv2"], mode="in_relu",
                   gamma=bp["in2"]["g"], beta=bp["in2"]["b"], residual=x)
    return h


def course_sr_forward(x_nchw, params):
    """x_nchw: (N, 3, H, W) -> (out (N,64,H,W), out_coarse (N,3,H,W)) in f32 NCHW."""
    x = jnp.transpose(x_nchw, (0, 2, 3, 1))                       # -> NHWC
    # relu(bn_mid(conv_input(x)))  with relu = PReLU(64)   (single fused kernel)
    out = conv_block(x, params["conv_input"], mode="in_prelu",
                     gamma=params["bn_mid"]["g"], beta=params["bn_mid"]["b"],
                     alpha=params["prelu"])
    # nn.Dropout2d(p=0.5, inplace=True): identity under eval semantics.
    # TODO(synk): training-mode channel-dropout randomness is not reproduced.
    for _ in range(2):                 # self.residual(...) applied twice (shared weights)
        for bp in params["residual"]:
            out = residual_block(out, bp)
    out_coarse = conv_block(out, params["conv_mid"], mode="linear",
                            out_dtype=jnp.float32, cout_pad=128)
    to_nchw = lambda t: jnp.transpose(t, (0, 3, 1, 2))
    return to_nchw(out.astype(jnp.float32)), to_nchw(out_coarse)


# ----------------------------------------------------------------------------
if __name__ == "__main__":
    params = build_params(seed=1)
    x = jax.random.normal(jax.random.PRNGKey(0), (2, 3, 16, 16), jnp.float32)

    fwd = jax.jit(course_sr_forward)            # single top-level jit over the whole net
    out, out_coarse = jax.block_until_ready(fwd(x, params))

    assert out.shape == (2, 64, 16, 16)
    assert out_coarse.shape == (2, 3, 16, 16)
    assert bool(jnp.all(jnp.isfinite(out)))
    assert bool(jnp.all(jnp.isfinite(out_coarse)))
    print("KERNEL_OK")
</pallas_src>

<mosaic_0001>
module attributes {stable_mosaic.version = 11 : i64} {
  func.func @kernel(%arg0: i32, %arg1: memref<1x256x32xbf16, #tpu.memory_space<vmem>>, %arg2: memref<32x64xbf16, #tpu.memory_space<vmem>>, %arg3: memref<1x64xf32, #tpu.memory_space<vmem>>, %arg4: memref<1x64xf32, #tpu.memory_space<vmem>>, %arg5: memref<1x64xf32, #tpu.memory_space<vmem>>, %arg6: memref<1x64xf32, #tpu.memory_space<vmem>>, %arg7: memref<1x256x64xbf16, #tpu.memory_space<vmem>>) attributes {dimension_semantics = [#tpu.dimension_semantics<parallel>], iteration_bounds = array<i64: 2>, scalar_prefetch = 0 : i64, scratch_operands = 0 : i64, tpu.core_type = #tpu.core_type<tc>, window_params = [{transform_indices = @transform_0, window_bounds = array<i64: 1, 256, 32>}, {pipeline_mode = #tpu.pipeline_mode<synchronous>, transform_indices = @transform_1, window_bounds = array<i64: 32, 64>}, {pipeline_mode = #tpu.pipeline_mode<synchronous>, transform_indices = @transform_2, window_bounds = array<i64: 1, 64>}, {pipeline_mode = #tpu.pipeline_mode<synchronous>, transform_indices = @transform_3, window_bounds = array<i64: 1, 64>}, {pipeline_mode = #tpu.pipeline_mode<synchronous>, transform_indices = @transform_4, window_bounds = array<i64: 1, 64>}, {pipeline_mode = #tpu.pipeline_mode<synchronous>, transform_indices = @transform_5, window_bounds = array<i64: 1, 64>}, {transform_indices = @transform_6, window_bounds = array<i64: 1, 256, 64>}]} {
    %c0 = arith.constant 0 : index
    %c0_0 = arith.constant 0 : index
    %c0_1 = arith.constant 0 : index
    %0 = vector.load %arg1[%c0, %c0_0, %c0_1] : memref<1x256x32xbf16, #tpu.memory_space<vmem>>, vector<1x256x32xbf16>
    %1 = vector.shape_cast %0 : vector<1x256x32xbf16> to vector<256x32xbf16>
    %c0_2 = arith.constant 0 : index
    %c0_3 = arith.constant 0 : index
    %2 = vector.load %arg2[%c0_2, %c0_3] : memref<32x64xbf16, #tpu.memory_space<vmem>>, vector<32x64xbf16>
    %cst = arith.constant dense<0.000000e+00> : vector<256x64xf32>
    %3 = tpu.matmul %1, %2, %cst {dimension_numbers = #tpu.dot_dimension_numbers<[1], [0], [0], [1], [0, 0, 1, 1], [], []>} : vector<256x32xbf16>, vector<32x64xbf16>, vector<256x64xf32> -> vector<256x64xf32>
    %c0_4 = arith.constant 0 : index
    %c0_5 = arith.constant 0 : index
    %4 = vector.load %arg3[%c0_4, %c0_5] : memref<1x64xf32, #tpu.memory_space<vmem>>, vector<1x64xf32>
    %5 = vector.broadcast %4 : vector<1x64xf32> to vector<256x64xf32>
    %6 = arith.addf %3, %5 : vector<256x64xf32>
    %cst_6 = arith.constant dense<0.000000e+00> : vector<64xf32>
    %7 = vector.multi_reduction <add>, %6, %cst_6 [0] : vector<256x64xf32> to vector<64xf32>
    %8 = vector.shape_cast %7 : vector<64xf32> to vector<1x64xf32>
    %cst_7 = arith.constant 3.906250e-03 : f32
    %9 = vector.broadcast %cst_7 : f32 to vector<1x64xf32>
    %10 = arith.mulf %8, %9 : vector<1x64xf32>
    %11 = arith.mulf %6, %6 : vector<256x64xf32>
    %cst_8 = arith.constant dense<0.000000e+00> : vector<64xf32>
    %12 = vector.multi_reduction <add>, %11, %cst_8 [0] : vector<256x64xf32> to vector<64xf32>
    %13 = vector.shape_cast %12 : vector<64xf32> to vector<1x64xf32>
    %cst_9 = arith.constant 3.906250e-03 : f32
    %14 = vector.broadcast %cst_9 : f32 to vector<1x64xf32>
    %15 = arith.mulf %13, %14 : vector<1x64xf32>
    %16 = arith.mulf %10, %10 : vector<1x64xf32>
    %17 = arith.subf %15, %16 : vector<1x64xf32>
    %cst_10 = arith.constant 0.000000e+00 : f32
    %18 = vector.broadcast %cst_10 : f32 to vector<1x64xf32>
    %19 = arith.maximumf %17, %18 : vector<1x64xf32>
    %20 = vector.broadcast %10 : vector<1x64xf32> to vector<256x64xf32>
    %21 = arith.subf %6, %20 : vector<256x64xf32>
    %cst_11 = arith.constant 9.99999974E-6 : f32
    %22 = vector.broadcast %cst_11 : f32 to vector<1x64xf32>
    %23 = arith.addf %19, %22 : vector<1x64xf32>
    %24 = math.rsqrt %23 : vector<1x64xf32>
    %25 = vector.broadcast %24 : vector<1x64xf32> to vector<256x64xf32>
    %26 = arith.mulf %21, %25 : vector<256x64xf32>
    %c0_12 = arith.constant 0 : index
    %c0_13 = arith.constant 0 : index
    %27 = vector.load %arg4[%c0_12, %c0_13] : memref<1x64xf32, #tpu.memory_space<vmem>>, vector<1x64xf32>
    %28 = vector.broadcast %27 : vector<1x64xf32> to vector<256x64xf32>
    %29 = arith.mulf %26, %28 : vector<256x64xf32>
    %c0_14 = arith.constant 0 : index
    %c0_15 = arith.constant 0 : index
    %30 = vector.load %arg5[%c0_14, %c0_15] : memref<1x64xf32, #tpu.memory_space<vmem>>, vector<1x64xf32>
    %31 = vector.broadcast %30 : vector<1x64xf32> to vector<256x64xf32>
    %32 = arith.addf %29, %31 : vector<256x64xf32>
    %cst_16 = arith.constant 0.000000e+00 : f32
    %33 = vector.broadcast %cst_16 : f32 to vector<256x64xf32>
    %34 = arith.cmpf oge, %32, %33 : vector<256x64xf32>
    %c0_17 = arith.constant 0 : index
    %c0_18 = arith.constant 0 : index
    %35 = vector.load %arg6[%c0_17, %c0_18] : memref<1x64xf32, #tpu.memory_space<vmem>>, vector<1x64xf32>
    %36 = vector.broadcast %35 : vector<1x64xf32> to vector<256x64xf32>
    %37 = arith.mulf %36, %32 : vector<256x64xf32>
    %38 = arith.select %34, %32, %37 : vector<256x64xi1>, vector<256x64xf32>
    %39 = arith.truncf %38 : vector<256x64xf32> to vector<256x64xbf16>
    %c0_19 = arith.constant 0 : index
    %c0_20 = arith.constant 0 : index
    %c0_21 = arith.constant 0 : index
    %40 = vector.load %arg7[%c0_19, %c0_20, %c0_21] : memref<1x256x64xbf16, #tpu.memory_space<vmem>>, vector<1x256x64xbf16>
    %41 = vector.shape_cast %40 : vector<1x256x64xbf16> to vector<256x64xbf16>
    %42 = vector.shape_cast %39 : vector<256x64xbf16> to vector<1x256x64xbf16>
    tpu.vector_store %arg7[%c0_19, %c0_20, %c0_21], %42 {strides = array<i32>} : memref<1x256x64xbf16, #tpu.memory_space<vmem>>, vector<1x256x64xbf16>,
    return
  }
  func.func @transform_0(%arg0: i32) -> (i32, i32, i32) {
    %c0_i32 = arith.constant 0 : i32
    %c0_i32_0 = arith.constant 0 : i32
    %c0_i32_1 = arith.constant 0 : i32
    return %arg0, %c0_i32, %c0_i32_0 : i32, i32, i32
  }
  func.func @transform_1(%arg0: i32) -> (i32, i32) {
    %c0_i32 = arith.constant 0 : i32
    %c0_i32_0 = arith.constant 0 : i32
    %c0_i32_1 = arith.constant 0 : i32
    return %c0_i32, %c0_i32_0 : i32, i32
  }
  func.func @transform_2(%arg0: i32) -> (i32, i32) {
    %c0_i32 = arith.constant 0 : i32
    %c0_i32_0 = arith.constant 0 : i32
    %c0_i32_1 = arith.constant 0 : i32
    return %c0_i32, %c0_i32_0 : i32, i32
  }
  func.func @transform_3(%arg0: i32) -> (i32, i32) {
    %c0_i32 = arith.constant 0 : i32
    %c0_i32_0 = arith.constant 0 : i32
    %c0_i32_1 = arith.constant 0 : i32
    return %c0_i32, %c0_i32_0 : i32, i32
  }
  func.func @transform_4(%arg0: i32) -> (i32, i32) {
    %c0_i32 = arith.constant 0 : i32
    %c0_i32_0 = arith.constant 0 : i32
    %c0_i32_1 = arith.constant 0 : i32
    return %c0_i32, %c0_i32_0 : i32, i32
  }
  func.func @transform_5(%arg0: i32) -> (i32, i32) {
    %c0_i32 = arith.constant 0 : i32
    %c0_i32_0 = arith.constant 0 : i32
    %c0_i32_1 = arith.constant 0 : i32
    return %c0_i32, %c0_i32_0 : i32, i32
  }
  func.func @transform_6(%arg0: i32) -> (i32, i32, i32) {
    %c0_i32 = arith.constant 0 : i32
    %c0_i32_0 = arith.constant 0 : i32
    %c0_i32_1 = arith.constant 0 : i32
    return %arg0, %c0_i32, %c0_i32_0 : i32, i32, i32
  }
}

module attributes {stable_mosaic.version = 11 : i64} {
  func.func @kernel(%arg0: i32, %arg1: memref<1x256x576xbf16, #tpu.memory_space<vmem>>, %arg2: memref<576x64xbf16, #tpu.memory_space<vmem>>, %arg3: memref<1x64xf32, #tpu.memory_space<vmem>>, %arg4: memref<1x64xf32, #tpu.memory_space<vmem>>, %arg5: memref<1x64xf32, #tpu.memory_space<vmem>>, %arg6: memref<1x64xf32, #tpu.memory_space<vmem>>, %arg7: memref<1x256x64xbf16, #tpu.memory_space<vmem>>, %arg8: memref<1x256x64xbf16, #tpu.memory_space<vmem>>) attributes {dimension_semantics = [#tpu.dimension_semantics<parallel>], iteration_bounds = array<i64: 2>, scalar_prefetch = 0 : i64, scratch_operands = 0 : i64, tpu.core_type = #tpu.core_type<tc>, window_params = [{transform_indices = @transform_0, window_bounds = array<i64: 1, 256, 576>}, {pipeline_mode = #tpu.pipeline_mode<synchronous>, transform_indices = @transform_1, window_bounds = array<i64: 576, 64>}, {pipeline_mode = #tpu.pipeline_mode<synchronous>, transform_indices = @transform_2, window_bounds = array<i64: 1, 64>}, {pipeline_mode = #tpu.pipeline_mode<synchronous>, transform_indices = @transform_3, window_bounds = array<i64: 1, 64>}, {pipeline_mode = #tpu.pipeline_mode<synchronous>, transform_indices = @transform_4, window_bounds = array<i64: 1, 64>}, {pipeline_mode = #tpu.pipeline_mode<synchronous>, transform_indices = @transform_5, window_bounds = array<i64: 1, 64>}, {transform_indices = @transform_6, window_bounds = array<i64: 1, 256, 64>}, {transform_indices = @transform_7, window_bounds = array<i64: 1, 256, 64>}]} {
    %c0 = arith.constant 0 : index
    %c0_0 = arith.constant 0 : index
    %c0_1 = arith.constant 0 : index
    %0 = vector.load %arg1[%c0, %c0_0, %c0_1] : memref<1x256x576xbf16, #tpu.memory_space<vmem>>, vector<1x256x576xbf16>
    %1 = vector.shape_cast %0 : vector<1x256x576xbf16> to vector<256x576xbf16>
    %c0_2 = arith.constant 0 : index
    %c0_3 = arith.constant 0 : index
    %2 = vector.load %arg2[%c0_2, %c0_3] : memref<576x64xbf16, #tpu.memory_space<vmem>>, vector<576x64xbf16>
    %cst = arith.constant dense<0.000000e+00> : vector<256x64xf32>
    %3 = tpu.matmul %1, %2, %cst {dimension_numbers = #tpu.dot_dimension_numbers<[1], [0], [0], [1], [0, 0, 1, 1], [], []>} : vector<256x576xbf16>, vector<576x64xbf16>, vector<256x64xf32> -> vector<256x64xf32>
    %c0_4 = arith.constant 0 : index
    %c0_5 = arith.constant 0 : index
    %4 = vector.load %arg3[%c0_4, %c0_5] : memref<1x64xf32, #tpu.memory_space<vmem>>, vector<1x64xf32>
    %5 = vector.broadcast %4 : vector<1x64xf32> to vector<256x64xf32>
    %6 = arith.addf %3, %5 : vector<256x64xf32>
    %cst_6 = arith.constant dense<0.000000e+00> : vector<64xf32>
    %7 = vector.multi_reduction <add>, %6, %cst_6 [0] : vector<256x64xf32> to vector<64xf32>
    %8 = vector.shape_cast %7 : vector<64xf32> to vector<1x64xf32>
    %cst_7 = arith.constant 3.906250e-03 : f32
    %9 = vector.broadcast %cst_7 : f32 to vector<1x64xf32>
    %10 = arith.mulf %8, %9 : vector<1x64xf32>
    %11 = arith.mulf %6, %6 : vector<256x64xf32>
    %cst_8 = arith.constant dense<0.000000e+00> : vector<64xf32>
    %12 = vector.multi_reduction <add>, %11, %cst_8 [0] : vector<256x64xf32> to vector<64xf32>
    %13 = vector.shape_cast %12 : vector<64xf32> to vector<1x64xf32>
    %cst_9 = arith.constant 3.906250e-03 : f32
    %14 = vector.broadcast %cst_9 : f32 to vector<1x64xf32>
    %15 = arith.mulf %13, %14 : vector<1x64xf32>
    %16 = arith.mulf %10, %10 : vector<1x64xf32>
    %17 = arith.subf %15, %16 : vector<1x64xf32>
    %cst_10 = arith.constant 0.000000e+00 : f32
    %18 = vector.broadcast %cst_10 : f32 to vector<1x64xf32>
    %19 = arith.maximumf %17, %18 : vector<1x64xf32>
    %20 = vector.broadcast %10 : vector<1x64xf32> to vector<256x64xf32>
    %21 = arith.subf %6, %20 : vector<256x64xf32>
    %cst_11 = arith.constant 9.99999974E-6 : f32
    %22 = vector.broadcast %cst_11 : f32 to vector<1x64xf32>
    %23 = arith.addf %19, %22 : vector<1x64xf32>
    %24 = math.rsqrt %23 : vector<1x64xf32>
    %25 = vector.broadcast %24 : vector<1x64xf32> to vector<256x64xf32>
    %26 = arith.mulf %21, %25 : vector<256x64xf32>
    %c0_12 = arith.constant 0 : index
    %c0_13 = arith.constant 0 : index
    %27 = vector.load %arg4[%c0_12, %c0_13] : memref<1x64xf32, #tpu.memory_space<vmem>>, vector<1x64xf32>
    %28 = vector.broadcast %27 : vector<1x64xf32> to vector<256x64xf32>
    %29 = arith.mulf %26, %28 : vector<256x64xf32>
    %c0_14 = arith.constant 0 : index
    %c0_15 = arith.constant 0 : index
    %30 = vector.load %arg5[%c0_14, %c0_15] : memref<1x64xf32, #tpu.memory_space<vmem>>, vector<1x64xf32>
    %31 = vector.broadcast %30 : vector<1x64xf32> to vector<256x64xf32>
    %32 = arith.addf %29, %31 : vector<256x64xf32>
    %c0_16 = arith.constant 0 : index
    %c0_17 = arith.constant 0 : index
    %c0_18 = arith.constant 0 : index
    %33 = vector.load %arg7[%c0_16, %c0_17, %c0_18] : memref<1x256x64xbf16, #tpu.memory_space<vmem>>, vector<1x256x64xbf16>
    %34 = vector.shape_cast %33 : vector<1x256x64xbf16> to vector<256x64xbf16>
    %35 = arith.extf %34 : vector<256x64xbf16> to vector<256x64xf32>
    %36 = arith.addf %32, %35 : vector<256x64xf32>
    %cst_19 = arith.constant 0.000000e+00 : f32
    %37 = vector.broadcast %cst_19 : f32 to vector<256x64xf32>
    %38 = arith.maximumf %36, %37 : vector<256x64xf32>
    %39 = arith.truncf %38 : vector<256x64xf32> to vector<256x64xbf16>
    %c0_20 = arith.constant 0 : index
    %c0_21 = arith.constant 0 : index
    %c0_22 = arith.constant 0 : index
    %40 = vector.load %arg8[%c0_20, %c0_21, %c0_22] : memref<1x256x64xbf16, #tpu.memory_space<vmem>>, vector<1x256x64xbf16>
    %41 = vector.shape_cast %40 : vector<1x256x64xbf16> to vector<256x64xbf16>
    %42 = vector.shape_cast %39 : vector<256x64xbf16> to vector<1x256x64xbf16>
    tpu.vector_store %arg8[%c0_20, %c0_21, %c0_22], %42 {strides = array<i32>} : memref<1x256x64xbf16, #tpu.memory_space<vmem>>, vector<1x256x64xbf16>,
    return
  }
  func.func @transform_0(%arg0: i32) -> (i32, i32, i32) {
    %c0_i32 = arith.constant 0 : i32
    %c0_i32_0 = arith.constant 0 : i32
    %c0_i32_1 = arith.constant 0 : i32
    return %arg0, %c0_i32, %c0_i32_0 : i32, i32, i32
  }
  func.func @transform_1(%arg0: i32) -> (i32, i32) {
    %c0_i32 = arith.constant 0 : i32
    %c0_i32_0 = arith.constant 0 : i32
    %c0_i32_1 = arith.constant 0 : i32
    return %c0_i32, %c0_i32_0 : i32, i32
  }
  func.func @transform_2(%arg0: i32) -> (i32, i32) {
    %c0_i32 = arith.constant 0 : i32
    %c0_i32_0 = arith.constant 0 : i32
    %c0_i32_1 = arith.constant 0 : i32
    return %c0_i32, %c0_i32_0 : i32, i32
  }
  func.func @transform_3(%arg0: i32) -> (i32, i32) {
    %c0_i32 = arith.constant 0 : i32
    %c0_i32_0 = arith.constant 0 : i32
    %c0_i32_1 = arith.constant 0 : i32
    return %c0_i32, %c0_i32_0 : i32, i32
  }
  func.func @transform_4(%arg0: i32) -> (i32, i32) {
    %c0_i32 = arith.constant 0 : i32
    %c0_i32_0 = arith.constant 0 : i32
    %c0_i32_1 = arith.constant 0 : i32
    return %c0_i32, %c0_i32_0 : i32, i32
  }
  func.func @transform_5(%arg0: i32) -> (i32, i32) {
    %c0_i32 = arith.constant 0 : i32
    %c0_i32_0 = arith.constant 0 : i32
    %c0_i32_1 = arith.constant 0 : i32
    return %c0_i32, %c0_i32_0 : i32, i32
  }
  func.func @transform_6(%arg0: i32) -> (i32, i32, i32) {
    %c0_i32 = arith.constant 0 : i32
    %c0_i32_0 = arith.constant 0 : i32
    %c0_i32_1 = arith.constant 0 : i32
    return %arg0, %c0_i32, %c0_i32_0 : i32, i32, i32
  }
  func.func @transform_7(%arg0: i32) -> (i32, i32, i32) {
    %c0_i32 = arith.constant 0 : i32
    %c0_i32_0 = arith.constant 0 : i32
    %c0_i32_1 = arith.constant 0 : i32
    return %arg0, %c0_i32, %c0_i32_0 : i32, i32, i32
  }
}

module attributes {stable_mosaic.version = 11 : i64} {
  func.func @kernel(%arg0: i32, %arg1: memref<1x256x576xbf16, #tpu.memory_space<vmem>>, %arg2: memref<576x64xbf16, #tpu.memory_space<vmem>>, %arg3: memref<1x64xf32, #tpu.memory_space<vmem>>, %arg4: memref<1x64xf32, #tpu.memory_space<vmem>>, %arg5: memref<1x64xf32, #tpu.memory_space<vmem>>, %arg6: memref<1x64xf32, #tpu.memory_space<vmem>>, %arg7: memref<1x256x64xbf16, #tpu.memory_space<vmem>>) attributes {dimension_semantics = [#tpu.dimension_semantics<parallel>], iteration_bounds = array<i64: 2>, scalar_prefetch = 0 : i64, scratch_operands = 0 : i64, tpu.core_type = #tpu.core_type<tc>, window_params = [{transform_indices = @transform_0, window_bounds = array<i64: 1, 256, 576>}, {pipeline_mode = #tpu.pipeline_mode<synchronous>, transform_indices = @transform_1, window_bounds = array<i64: 576, 64>}, {pipeline_mode = #tpu.pipeline_mode<synchronous>, transform_indices = @transform_2, window_bounds = array<i64: 1, 64>}, {pipeline_mode = #tpu.pipeline_mode<synchronous>, transform_indices = @transform_3, window_bounds = array<i64: 1, 64>}, {pipeline_mode = #tpu.pipeline_mode<synchronous>, transform_indices = @transform_4, window_bounds = array<i64: 1, 64>}, {pipeline_mode = #tpu.pipeline_mode<synchronous>, transform_indices = @transform_5, window_bounds = array<i64: 1, 64>}, {transform_indices = @transform_6, window_bounds = array<i64: 1, 256, 64>}]} {
    %c0 = arith.constant 0 : index
    %c0_0 = arith.constant 0 : index
    %c0_1 = arith.constant 0 : index
    %0 = vector.load %arg1[%c0, %c0_0, %c0_1] : memref<1x256x576xbf16, #tpu.memory_space<vmem>>, vector<1x256x576xbf16>
    %1 = vector.shape_cast %0 : vector<1x256x576xbf16> to vector<256x576xbf16>
    %c0_2 = arith.constant 0 : index
    %c0_3 = arith.constant 0 : index
    %2 = vector.load %arg2[%c0_2, %c0_3] : memref<576x64xbf16, #tpu.memory_space<vmem>>, vector<576x64xbf16>
    %cst = arith.constant dense<0.000000e+00> : vector<256x64xf32>
    %3 = tpu.matmul %1, %2, %cst {dimension_numbers = #tpu.dot_dimension_numbers<[1], [0], [0], [1], [0, 0, 1, 1], [], []>} : vector<256x576xbf16>, vector<576x64xbf16>, vector<256x64xf32> -> vector<256x64xf32>
    %c0_4 = arith.constant 0 : index
    %c0_5 = arith.constant 0 : index
    %4 = vector.load %arg3[%c0_4, %c0_5] : memref<1x64xf32, #tpu.memory_space<vmem>>, vector<1x64xf32>
    %5 = vector.broadcast %4 : vector<1x64xf32> to vector<256x64xf32>
    %6 = arith.addf %3, %5 : vector<256x64xf32>
    %cst_6 = arith.constant dense<0.000000e+00> : vector<64xf32>
    %7 = vector.multi_reduction <add>, %6, %cst_6 [0] : vector<256x64xf32> to vector<64xf32>
    %8 = vector.shape_cast %7 : vector<64xf32> to vector<1x64xf32>
    %cst_7 = arith.constant 3.906250e-03 : f32
    %9 = vector.broadcast %cst_7 : f32 to vector<1x64xf32>
    %10 = arith.mulf %8, %9 : vector<1x64xf32>
    %11 = arith.mulf %6, %6 : vector<256x64xf32>
    %cst_8 = arith.constant dense<0.000000e+00> : vector<64xf32>
    %12 = vector.multi_reduction <add>, %11, %cst_8 [0] : vector<256x64xf32> to vector<64xf32>
    %13 = vector.shape_cast %12 : vector<64xf32> to vector<1x64xf32>
    %cst_9 = arith.constant 3.906250e-03 : f32
    %14 = vector.broadcast %cst_9 : f32 to vector<1x64xf32>
    %15 = arith.mulf %13, %14 : vector<1x64xf32>
    %16 = arith.mulf %10, %10 : vector<1x64xf32>
    %17 = arith.subf %15, %16 : vector<1x64xf32>
    %cst_10 = arith.constant 0.000000e+00 : f32
    %18 = vector.broadcast %cst_10 : f32 to vector<1x64xf32>
    %19 = arith.maximumf %17, %18 : vector<1x64xf32>
    %20 = vector.broadcast %10 : vector<1x64xf32> to vector<256x64xf32>
    %21 = arith.subf %6, %20 : vector<256x64xf32>
    %cst_11 = arith.constant 9.99999974E-6 : f32
    %22 = vector.broadcast %cst_11 : f32 to vector<1x64xf32>
    %23 = arith.addf %19, %22 : vector<1x64xf32>
    %24 = math.rsqrt %23 : vector<1x64xf32>
    %25 = vector.broadcast %24 : vector<1x64xf32> to vector<256x64xf32>
    %26 = arith.mulf %21, %25 : vector<256x64xf32>
    %c0_12 = arith.constant 0 : index
    %c0_13 = arith.constant 0 : index
    %27 = vector.load %arg4[%c0_12, %c0_13] : memref<1x64xf32, #tpu.memory_space<vmem>>, vector<1x64xf32>
    %28 = vector.broadcast %27 : vector<1x64xf32> to vector<256x64xf32>
    %29 = arith.mulf %26, %28 : vector<256x64xf32>
    %c0_14 = arith.constant 0 : index
    %c0_15 = arith.constant 0 : index
    %30 = vector.load %arg5[%c0_14, %c0_15] : memref<1x64xf32, #tpu.memory_space<vmem>>, vector<1x64xf32>
    %31 = vector.broadcast %30 : vector<1x64xf32> to vector<256x64xf32>
    %32 = arith.addf %29, %31 : vector<256x64xf32>
    %cst_16 = arith.constant 0.000000e+00 : f32
    %33 = vector.broadcast %cst_16 : f32 to vector<256x64xf32>
    %34 = arith.maximumf %32, %33 : vector<256x64xf32>
    %35 = arith.truncf %34 : vector<256x64xf32> to vector<256x64xbf16>
    %c0_17 = arith.constant 0 : index
    %c0_18 = arith.constant 0 : index
    %c0_19 = arith.constant 0 : index
    %36 = vector.load %arg7[%c0_17, %c0_18, %c0_19] : memref<1x256x64xbf16, #tpu.memory_space<vmem>>, vector<1x256x64xbf16>
    %37 = vector.shape_cast %36 : vector<1x256x64xbf16> to vector<256x64xbf16>
    %38 = vector.shape_cast %35 : vector<256x64xbf16> to vector<1x256x64xbf16>
    tpu.vector_store %arg7[%c0_17, %c0_18, %c0_19], %38 {strides = array<i32>} : memref<1x256x64xbf16, #tpu.memory_space<vmem>>, vector<1x256x64xbf16>,
    return
  }
  func.func @transform_0(%arg0: i32) -> (i32, i32, i32) {
    %c0_i32 = arith.constant 0 : i32
    %c0_i32_0 = arith.constant 0 : i32
    %c0_i32_1 = arith.constant 0 : i32
    return %arg0, %c0_i32, %c0_i32_0 : i32, i32, i32
  }
  func.func @transform_1(%arg0: i32) -> (i32, i32) {
    %c0_i32 = arith.constant 0 : i32
    %c0_i32_0 = arith.constant 0 : i32
    %c0_i32_1 = arith.constant 0 : i32
    return %c0_i32, %c0_i32_0 : i32, i32
  }
  func.func @transform_2(%arg0: i32) -> (i32, i32) {
    %c0_i32 = arith.constant 0 : i32
    %c0_i32_0 = arith.constant 0 : i32
    %c0_i32_1 = arith.constant 0 : i32
    return %c0_i32, %c0_i32_0 : i32, i32
  }
  func.func @transform_3(%arg0: i32) -> (i32, i32) {
    %c0_i32 = arith.constant 0 : i32
    %c0_i32_0 = arith.constant 0 : i32
    %c0_i32_1 = arith.constant 0 : i32
    return %c0_i32, %c0_i32_0 : i32, i32
  }
  func.func @transform_4(%arg0: i32) -> (i32, i32) {
    %c0_i32 = arith.constant 0 : i32
    %c0_i32_0 = arith.constant 0 : i32
    %c0_i32_1 = arith.constant 0 : i32
    return %c0_i32, %c0_i32_0 : i32, i32
  }
  func.func @transform_5(%arg0: i32) -> (i32, i32) {
    %c0_i32 = arith.constant 0 : i32
    %c0_i32_0 = arith.constant 0 : i32
    %c0_i32_1 = arith.constant 0 : i32
    return %c0_i32, %c0_i32_0 : i32, i32
  }
  func.func @transform_6(%arg0: i32) -> (i32, i32, i32) {
    %c0_i32 = arith.constant 0 : i32
    %c0_i32_0 = arith.constant 0 : i32
    %c0_i32_1 = arith.constant 0 : i32
    return %arg0, %c0_i32, %c0_i32_0 : i32, i32, i32
  }
}

module attributes {stable_mosaic.version = 11 : i64} {
  func.func @kernel(%arg0: i32, %arg1: memref<1x256x576xbf16, #tpu.memory_space<vmem>>, %arg2: memref<576x128xbf16, #tpu.memory_space<vmem>>, %arg3: memref<1x128xf32, #tpu.memory_space<vmem>>, %arg4: memref<1x128xf32, #tpu.memory_space<vmem>>, %arg5: memref<1x128xf32, #tpu.memory_space<vmem>>, %arg6: memref<1x128xf32, #tpu.memory_space<vmem>>, %arg7: memref<1x256x128xf32, #tpu.memory_space<vmem>>) attributes {dimension_semantics = [#tpu.dimension_semantics<parallel>], iteration_bounds = array<i64: 2>, scalar_prefetch = 0 : i64, scratch_operands = 0 : i64, tpu.core_type = #tpu.core_type<tc>, window_params = [{transform_indices = @transform_0, window_bounds = array<i64: 1, 256, 576>}, {pipeline_mode = #tpu.pipeline_mode<synchronous>, transform_indices = @transform_1, window_bounds = array<i64: 576, 128>}, {pipeline_mode = #tpu.pipeline_mode<synchronous>, transform_indices = @transform_2, window_bounds = array<i64: 1, 128>}, {pipeline_mode = #tpu.pipeline_mode<synchronous>, transform_indices = @transform_3, window_bounds = array<i64: 1, 128>}, {pipeline_mode = #tpu.pipeline_mode<synchronous>, transform_indices = @transform_4, window_bounds = array<i64: 1, 128>}, {pipeline_mode = #tpu.pipeline_mode<synchronous>, transform_indices = @transform_5, window_bounds = array<i64: 1, 128>}, {transform_indices = @transform_6, window_bounds = array<i64: 1, 256, 128>}]} {
    %c0 = arith.constant 0 : index
    %c0_0 = arith.constant 0 : index
    %c0_1 = arith.constant 0 : index
    %0 = vector.load %arg1[%c0, %c0_0, %c0_1] : memref<1x256x576xbf16, #tpu.memory_space<vmem>>, vector<1x256x576xbf16>
    %1 = vector.shape_cast %0 : vector<1x256x576xbf16> to vector<256x576xbf16>
    %c0_2 = arith.constant 0 : index
    %c0_3 = arith.constant 0 : index
    %2 = vector.load %arg2[%c0_2, %c0_3] : memref<576x128xbf16, #tpu.memory_space<vmem>>, vector<576x128xbf16>
    %cst = arith.constant dense<0.000000e+00> : vector<256x128xf32>
    %3 = tpu.matmul %1, %2, %cst {dimension_numbers = #tpu.dot_dimension_numbers<[1], [0], [0], [1], [0, 0, 1, 1], [], []>} : vector<256x576xbf16>, vector<576x128xbf16>, vector<256x128xf32> -> vector<256x128xf32>
    %c0_4 = arith.constant 0 : index
    %c0_5 = arith.constant 0 : index
    %4 = vector.load %arg3[%c0_4, %c0_5] : memref<1x128xf32, #tpu.memory_space<vmem>>, vector<1x128xf32>
    %5 = vector.broadcast %4 : vector<1x128xf32> to vector<256x128xf32>
    %6 = arith.addf %3, %5 : vector<256x128xf32>
    %c0_6 = arith.constant 0 : index
    %c0_7 = arith.constant 0 : index
    %c0_8 = arith.constant 0 : index
    %7 = vector.load %arg7[%c0_6, %c0_7, %c0_8] : memref<1x256x128xf32, #tpu.memory_space<vmem>>, vector<1x256x128xf32>
    %8 = vector.shape_cast %7 : vector<1x256x128xf32> to vector<256x128xf32>
    %9 = vector.shape_cast %6 : vector<256x128xf32> to vector<1x256x128xf32>
    tpu.vector_store %arg7[%c0_6, %c0_7, %c0_8], %9 {strides = array<i32>} : memref<1x256x128xf32, #tpu.memory_space<vmem>>, vector<1x256x128xf32>,
    return
  }
  func.func @transform_0(%arg0: i32) -> (i32, i32, i32) {
    %c0_i32 = arith.constant 0 : i32
    %c0_i32_0 = arith.constant 0 : i32
    %c0_i32_1 = arith.constant 0 : i32
    return %arg0, %c0_i32, %c0_i32_0 : i32, i32, i32
  }
  func.func @transform_1(%arg0: i32) -> (i32, i32) {
    %c0_i32 = arith.constant 0 : i32
    %c0_i32_0 = arith.constant 0 : i32
    %c0_i32_1 = arith.constant 0 : i32
    return %c0_i32, %c0_i32_0 : i32, i32
  }
  func.func @transform_2(%arg0: i32) -> (i32, i32) {
    %c0_i32 = arith.constant 0 : i32
    %c0_i32_0 = arith.constant 0 : i32
    %c0_i32_1 = arith.constant 0 : i32
    return %c0_i32, %c0_i32_0 : i32, i32
  }
  func.func @transform_3(%arg0: i32) -> (i32, i32) {
    %c0_i32 = arith.constant 0 : i32
    %c0_i32_0 = arith.constant 0 : i32
    %c0_i32_1 = arith.constant 0 : i32
    return %c0_i32, %c0_i32_0 : i32, i32
  }
  func.func @transform_4(%arg0: i32) -> (i32, i32) {
    %c0_i32 = arith.constant 0 : i32
    %c0_i32_0 = arith.constant 0 : i32
    %c0_i32_1 = arith.constant 0 : i32
    return %c0_i32, %c0_i32_0 : i32, i32
  }
  func.func @transform_5(%arg0: i32) -> (i32, i32) {
    %c0_i32 = arith.constant 0 : i32
    %c0_i32_0 = arith.constant 0 : i32
    %c0_i32_1 = arith.constant 0 : i32
    return %c0_i32, %c0_i32_0 : i32, i32
  }
  func.func @transform_6(%arg0: i32) -> (i32, i32, i32) {
    %c0_i32 = arith.constant 0 : i32
    %c0_i32_0 = arith.constant 0 : i32
    %c0_i32_1 = arith.constant 0 : i32
    return %arg0, %c0_i32, %c0_i32_0 : i32, i32, i32
  }
}

</mosaic_0001>

<llo_original>
// kernel: course_sr_forward.14
$region0: #{course_sr_forward.14}
  #allocation0 [shape = 'u32[]', space=smem, size = 0x4, offset = 0x4, fixed_abs, tag = 'smem constant byte address 0x4 - core index']
  #allocation1 [shape = 'u32[144,128]{1,0:T(1,128)}', space=vmem, size = 0x12000, scoped, tag = 'internal scratch']
  %s0 = inlined_call_operand.vmem [shape: bf16[2,256,32], index: 0, kind: input, shape index: {}]
  %s1 = inlined_call_operand.vmem [shape: bf16[32,64], index: 1, kind: input, shape index: {}]
  %s2 = inlined_call_operand.vmem [shape: f32[1,64], index: 2, kind: input, shape index: {}]
  %s3 = inlined_call_operand.vmem [shape: f32[1,64], index: 3, kind: input, shape index: {}]
  %s4 = inlined_call_operand.vmem [shape: f32[1,64], index: 4, kind: input, shape index: {}]
  %s5 = inlined_call_operand.vmem [shape: f32[1,64], index: 5, kind: input, shape index: {}]
  %s6 = inlined_call_operand.vmem [shape: bf16[2,256,64], index: 6, kind: output, shape index: {}]
  %s7 = sld [smem:[#allocation0]]
  $region57: #{course_sr_forward.14} parent=0
    _
  %s9 = ssub.s32 1, %s7
  %s10 = scalar_select 0, %s9, %s7
  loop: start=0, step=1, limit=4
  $region2: #{course_sr_forward.14} parent=0 // loop_pre_header
    _
  $region3: #{course_sr_forward.14} parent=0 // loop_header
    %s12 = sphi 0, %s16
    %p13 = scmp.ge.s32.totalorder %s12, 4
    %s22 = sphi 0, %s24
    %s25 = sphi 0, %s22
    %s26 = sphi 0, %s25
    %s42 = sphi 0, %s26
    %s46 = sphi 0, %s46
    %s48 = sphi 0, %s46
    %s49 = sphi 0, %s48
    %s63 = sphi 0, %s49
    %s67 = sphi 0, %s67
    %s69 = sphi 0, %s67
    %s70 = sphi 0, %s69
    %s84 = sphi 0, %s70
    %s88 = sphi 0, %s88
    %s90 = sphi 0, %s88
    %s91 = sphi 0, %s90
    %s105 = sphi 0, %s91
    %s109 = sphi 0, %s109
    %s111 = sphi 0, %s109
    %s112 = sphi 0, %s111
    %s126 = sphi 0, %s112
    %s130 = sphi 0, %s130
    %s132 = sphi 0, %s130
    %s133 = sphi 0, %s132
    %s147 = sphi 0, %s133
    %s153 = sphi 0, %s155
    %s156 = sphi 0, %s153
    %s157 = sphi 0, %s156
    %s173 = sphi 0, %s157
  $region4: #{course_sr_forward.14} parent=0 // loop_header_branch
    %15 = sbr.rel (%p13) target = $region8
  $region5: #{course_sr_forward.14} parent=0 // loop_body
    %s17 = ssub.s32 %s12, 1
    %s18 = ssub.s32 %s12, 2
    %s19 = sadd.s32 %s12, 1
    %s20 = ssub.s32 %s12, %s19
    %p21 = scmp.eq.s32.totalorder %s20, 0
    %s23 = sadd.s32 %s22, 1
    %s24 = scalar_select %p21, %s22, %s23
    %p27 = pneg %p21
    %p28 = scmp.eq.s32.totalorder %s12, 1
    %p29 = por %p27, %p28
    %p30 = scmp.ne.s32.totalorder %s22, %s25
    %p31 = scmp.eq.s32.totalorder %s12, 0
    %p32 = por %p30, %p31
    %p33 = scmp.ne.s32.totalorder %s22, %s25
    %p34 = scmp.eq.s32.totalorder %s17, 1
    %p35 = por %p33, %p34
    %p36 = scmp.ne.s32.totalorder %s25, %s26
    %p37 = scmp.eq.s32.totalorder %s17, 0
    %p38 = por %p36, %p37
    %p39 = scmp.ne.s32.totalorder %s25, %s26
    %p40 = scmp.eq.s32.totalorder %s18, 1
    %p41 = por %p39, %p40
    %p43 = scmp.ne.s32.totalorder %s26, %s42
    %p44 = scmp.eq.s32.totalorder %s18, 0
    %p45 = por %p43, %p44
    %s47 = sadd.s32 %s46, 1
    %p50 = scmp.eq.s32.totalorder %s12, 1
    %p51 = scmp.ne.s32.totalorder %s46, %s48
    %p52 = scmp.eq.s32.totalorder %s12, 0
    %p53 = por %p51, %p52
    %p54 = scmp.ne.s32.totalorder %s46, %s48
    %p55 = scmp.eq.s32.totalorder %s17, 1
    %p56 = por %p54, %p55
    %p57 = scmp.ne.s32.totalorder %s48, %s49
    %p58 = scmp.eq.s32.totalorder %s17, 0
    %p59 = por %p57, %p58
    %p60 = scmp.ne.s32.totalorder %s48, %s49
    %p61 = scmp.eq.s32.totalorder %s18, 1
    %p62 = por %p60, %p61
    %p64 = scmp.ne.s32.totalorder %s49, %s63
    %p65 = scmp.eq.s32.totalorder %s18, 0
    %p66 = por %p64, %p65
    %s68 = sadd.s32 %s67, 1
    %p71 = scmp.eq.s32.totalorder %s12, 1
    %p72 = scmp.ne.s32.totalorder %s67, %s69
    %p73 = scmp.eq.s32.totalorder %s12, 0
    %p74 = por %p72, %p73
    %p75 = scmp.ne.s32.totalorder %s67, %s69
    %p76 = scmp.eq.s32.totalorder %s17, 1
    %p77 = por %p75, %p76
    %p78 = scmp.ne.s32.totalorder %s69, %s70
    %p79 = scmp.eq.s32.totalorder %s17, 0
    %p80 = por %p78, %p79
    %p81 = scmp.ne.s32.totalorder %s69, %s70
    %p82 = scmp.eq.s32.totalorder %s18, 1
    %p83 = por %p81, %p82
    %p85 = scmp.ne.s32.totalorder %s70, %s84
    %p86 = scmp.eq.s32.totalorder %s18, 0
    %p87 = por %p85, %p86
    %s89 = sadd.s32 %s88, 1
    %p92 = scmp.eq.s32.totalorder %s12, 1
    %p93 = scmp.ne.s32.totalorder %s88, %s90
    %p94 = scmp.eq.s32.totalorder %s12, 0
    %p95 = por %p93, %p94
    %p96 = scmp.ne.s32.totalorder %s88, %s90
    %p97 = scmp.eq.s32.totalorder %s17, 1
    %p98 = por %p96, %p97
    %p99 = scmp.ne.s32.totalorder %s90, %s91
    %p100 = scmp.eq.s32.totalorder %s17, 0
    %p101 = por %p99, %p100
    %p102 = scmp.ne.s32.totalorder %s90, %s91
    %p103 = scmp.eq.s32.totalorder %s18, 1
    %p104 = por %p102, %p103
    %p106 = scmp.ne.s32.totalorder %s91, %s105
    %p107 = scmp.eq.s32.totalorder %s18, 0
    %p108 = por %p106, %p107
    %s110 = sadd.s32 %s109, 1
    %p113 = scmp.eq.s32.totalorder %s12, 1
    %p114 = scmp.ne.s32.totalorder %s109, %s111
    %p115 = scmp.eq.s32.totalorder %s12, 0
    %p116 = por %p114, %p115
    %p117 = scmp.ne.s32.totalorder %s109, %s111
    %p118 = scmp.eq.s32.totalorder %s17, 1
    %p119 = por %p117, %p118
    %p120 = scmp.ne.s32.totalorder %s111, %s112
    %p121 = scmp.eq.s32.totalorder %s17, 0
    %p122 = por %p120, %p121
    %p123 = scmp.ne.s32.totalorder %s111, %s112
    %p124 = scmp.eq.s32.totalorder %s18, 1
    %p125 = por %p123, %p124
    %p127 = scmp.ne.s32.totalorder %s112, %s126
    %p128 = scmp.eq.s32.totalorder %s18, 0
    %p129 = por %p127, %p128
    %s131 = sadd.s32 %s130, 1
    %p134 = scmp.eq.s32.totalorder %s12, 1
    %p135 = scmp.ne.s32.totalorder %s130, %s132
    %p136 = scmp.eq.s32.totalorder %s12, 0
    %p137 = por %p135, %p136
    %p138 = scmp.ne.s32.totalorder %s130, %s132
    %p139 = scmp.eq.s32.totalorder %s17, 1
    %p140 = por %p138, %p139
    %p141 = scmp.ne.s32.totalorder %s132, %s133
    %p142 = scmp.eq.s32.totalorder %s17, 0
    %p143 = por %p141, %p142
    %p144 = scmp.ne.s32.totalorder %s132, %s133
    %p145 = scmp.eq.s32.totalorder %s18, 1
    %p146 = por %p144, %p145
    %p148 = scmp.ne.s32.totalorder %s133, %s147
    %p149 = scmp.eq.s32.totalorder %s18, 0
    %p150 = por %p148, %p149
    %s151 = ssub.s32 %s12, %s19
    %p152 = scmp.eq.s32.totalorder %s151, 0
    %s154 = sadd.s32 %s153, 1
    %s155 = scalar_select %p152, %s153, %s154
    %p158 = pneg %p152
    %p159 = scmp.eq.s32.totalorder %s12, 1
    %p160 = por %p158, %p159
    %p161 = scmp.ne.s32.totalorder %s153, %s156
    %p162 = scmp.eq.s32.totalorder %s12, 0
    %p163 = por %p161, %p162
    %p164 = scmp.ne.s32.totalorder %s153, %s156
    %p165 = scmp.eq.s32.totalorder %s17, 1
    %p166 = por %p164, %p165
    %p167 = scmp.ne.s32.totalorder %s156, %s157
    %p168 = scmp.eq.s32.totalorder %s17, 0
    %p169 = por %p167, %p168
    %p170 = scmp.ne.s32.totalorder %s156, %s157
    %p171 = scmp.eq.s32.totalorder %s18, 1
    %p172 = por %p170, %p171
    %p174 = scmp.ne.s32.totalorder %s157, %s173
    %p175 = scmp.eq.s32.totalorder %s18, 0
    %p176 = por %p174, %p175
    %p177 = scmp.le.s32.totalorder 1, %s12
    %p178 = scmp.lt.s32.totalorder %s12, 3
    %p179 = pnand %p177, %p178
    %p180 = pneg %p179
    // Predicated region
    $region9: #{course_sr_forward.14} parent=5 // pred_check
      _
    $region10: #{course_sr_forward.14} parent=5 // pred_check_branch
      %182 = sbr.rel (%p179) target = $region12
    $region11: #{course_sr_forward.14} parent=5 // pred_region
      %s183 = ssub.s32 %s12, 1
      // Predicated region
      $region13: #{course_sr_forward.14} parent=11 // pred_check
        %p184 = pneg %p59
      $region14: #{course_sr_forward.14} parent=11 // pred_check_branch
        %186 = sbr.rel (%p184) target = $region16
      $region15: #{course_sr_forward.14} parent=11 // pred_region
        _
      $region16: #{course_sr_forward.14} parent=11 // pred_fallthru
        _
      // Predicated region
      $region17: #{course_sr_forward.14} parent=11 // pred_check
        %p187 = pneg %p80
      $region18: #{course_sr_forward.14} parent=11 // pred_check_branch
        %189 = sbr.rel (%p187) target = $region20
      $region19: #{course_sr_forward.14} parent=11 // pred_region
        _
      $region20: #{course_sr_forward.14} parent=11 // pred_fallthru
        _
      // Predicated region
      $region21: #{course_sr_forward.14} parent=11 // pred_check
        %p190 = pneg %p101
      $region22: #{course_sr_forward.14} parent=11 // pred_check_branch
        %192 = sbr.rel (%p190) target = $region24
      $region23: #{course_sr_forward.14} parent=11 // pred_region
        _
      $region24: #{course_sr_forward.14} parent=11 // pred_fallthru
        _
      // Predicated region
      $region25: #{course_sr_forward.14} parent=11 // pred_check
        %p193 = pneg %p122
      $region26: #{course_sr_forward.14} parent=11 // pred_check_branch
        %195 = sbr.rel (%p193) target = $region28
      $region27: #{course_sr_forward.14} parent=11 // pred_region
        _
      $region28: #{course_sr_forward.14} parent=11 // pred_fallthru
        _
      // Predicated region
      $region29: #{course_sr_forward.14} parent=11 // pred_check
        %p196 = pneg %p143
      $region30: #{course_sr_forward.14} parent=11 // pred_check_branch
        %198 = sbr.rel (%p196) target = $region32
      $region31: #{course_sr_forward.14} parent=11 // pred_region
        _
      $region32: #{course_sr_forward.14} parent=11 // pred_fallthru
        _
    $region12: #{course_sr_forward.14} parent=5 // pred_fallthru
      _
    %p199 = scmp.lt.s32.totalorder %s12, 2
    // Predicated region
    $region33: #{course_sr_forward.14} parent=5 // pred_check
      %p200 = pneg %p199
    $region34: #{course_sr_forward.14} parent=5 // pred_check_branch
      %202 = sbr.rel (%p200) target = $region36
    $region35: #{course_sr_forward.14} parent=5 // pred_region
      // Predicated region
      $region37: #{course_sr_forward.14} parent=35 // pred_check
        %p203 = pneg %p32
      $region38: #{course_sr_forward.14} parent=35 // pred_check_branch
        %205 = sbr.rel (%p203) target = $region40
      $region39: #{course_sr_forward.14} parent=35 // pred_region
        %p206 = scmp.lt.s32.totalorder %s12, 1
        %s207 = scalar_select %p206, %s12, 1
        %s208 = smul.addr %s207, 32
        %s209 = smul.addr %s208, 4
        %s210 = scalar_lea.vmem %s0, %s209
      $region40: #{course_sr_forward.14} parent=35 // pred_fallthru
        _
    $region36: #{course_sr_forward.14} parent=5 // pred_fallthru
      _
    %p211 = scmp.le.s32.totalorder 1, %s12
    %p212 = scmp.lt.s32.totalorder %s12, 3
    %p213 = pnand %p211, %p212
    %p214 = pneg %p213
    // Predicated region
    $region41: #{course_sr_forward.14} parent=5 // pred_check
      _
    $region42: #{course_sr_forward.14} parent=5 // pred_check_branch
      %216 = sbr.rel (%p213) target = $region44
    $region43: #{course_sr_forward.14} parent=5 // pred_region
      %s217 = ssub.s32 %s12, 1
      %p218 = scmp.lt.s32.totalorder %s17, 1
      %s219 = scalar_select %p218, %s17, 1
      %s220 = smul.addr %s219, 32
      %s221 = smul.addr %s220, 4
      %s222 = scalar_lea.vmem %s0, %s221
      %p223 = pneg %p38
      %p224 = pneg %p35
      %p225 = pneg %p59
      %p226 = pneg %p56
      %p227 = pneg %p80
      %p228 = pneg %p77
      %p229 = pneg %p101
      %p230 = pneg %p98
      %p231 = pneg %p122
      %p232 = pneg %p119
      %p233 = pneg %p143
      %p234 = pneg %p140
      %p235 = pneg %p169
      %p236 = pneg %p166
      %p237 = scmp.lt.s32.totalorder %s17, 1
      %s238 = scalar_select %p237, %s17, 1
      %s239 = smul.addr %s238, 32
      %s240 = smul.addr %s239, 4
      %s241 = scalar_lea.vmem %s6, %s240
      %p242 = scmp.lt.s32.totalorder %s17, 1
      %s243 = scalar_select %p242, %s17, 1
      %s244 = smul.addr %s243, 32
      %s245 = smul.addr %s244, 4
      %s246 = scalar_lea.vmem %s0, %s245
      %p247 = scmp.lt.s32.totalorder %s17, 1
      %s248 = scalar_select %p247, %s17, 1
      %s249 = smul.addr %s248, 32
      %s250 = smul.addr %s249, 4
      %s251 = scalar_lea.vmem %s6, %s250
      %v253 = vld [vmem:[%s246] sm:$0xf]
      %v254 = vld [vmem:[%s246 + $0x4] sm:$0xf]
      %v255 = vld [vmem:[%s246 + $0x8] sm:$0xf]
      %v256 = vld [vmem:[%s246 + $0xc] sm:$0xf]
      %v257 = vld [vmem:[%s246 + $0x10] sm:$0xf]
      %v258 = vld [vmem:[%s246 + $0x14] sm:$0xf]
      %v259 = vld [vmem:[%s246 + $0x18] sm:$0xf]
      %v260 = vld [vmem:[%s246 + $0x1c] sm:$0xf]
      %v261 = vld [vmem:[%s246 + $0x20] sm:$0xf]
      %v262 = vld [vmem:[%s246 + $0x24] sm:$0xf]
      %v263 = vld [vmem:[%s246 + $0x28] sm:$0xf]
      %v264 = vld [vmem:[%s246 + $0x2c] sm:$0xf]
      %v265 = vld [vmem:[%s246 + $0x30] sm:$0xf]
      %v266 = vld [vmem:[%s246 + $0x34] sm:$0xf]
      %v267 = vld [vmem:[%s246 + $0x38] sm:$0xf]
      %v268 = vld [vmem:[%s246 + $0x3c] sm:$0xf]
      %v269 = vld [vmem:[%s246 + $0x40] sm:$0xf]
      %v270 = vld [vmem:[%s246 + $0x44] sm:$0xf]
      %v271 = vld [vmem:[%s246 + $0x48] sm:$0xf]
      %v272 = vld [vmem:[%s246 + $0x4c] sm:$0xf]
      %v273 = vld [vmem:[%s246 + $0x50] sm:$0xf]
      %v274 = vld [vmem:[%s246 + $0x54] sm:$0xf]
      %v275 = vld [vmem:[%s246 + $0x58] sm:$0xf]
      %v276 = vld [vmem:[%s246 + $0x5c] sm:$0xf]
      %v277 = vld [vmem:[%s246 + $0x60] sm:$0xf]
      %v278 = vld [vmem:[%s246 + $0x64] sm:$0xf]
      %v279 = vld [vmem:[%s246 + $0x68] sm:$0xf]
      %v280 = vld [vmem:[%s246 + $0x6c] sm:$0xf]
      %v281 = vld [vmem:[%s246 + $0x70] sm:$0xf]
      %v282 = vld [vmem:[%s246 + $0x74] sm:$0xf]
      %v283 = vld [vmem:[%s246 + $0x78] sm:$0xf]
      %v284 = vld [vmem:[%s246 + $0x7c] sm:$0xf]
      %v285 = vld [vmem:[%s1] sm:$0xf]
      %v286 = vld [vmem:[%s1 + $0x4] sm:$0xf]
      %v287 = vld [vmem:[%s1 + $0x8] sm:$0xf]
      %v288 = vld [vmem:[%s1 + $0xc] sm:$0xf]
      %v289 = vld [vmem:[%s2] sm:$0x1]
      %v291 = vlaneseq
      %v292 = vshrl.u32 %v291, 7
      %v293 = vsub.s32 0, %v292
      %v294 = vrot.slane %v289, %v293
      %v328 = vunpack.c.l.b16 %v253
      %v329 = vunpack.c.l.b16 %v254
      %v330 = vunpack.c.l.b16 %v255
      %v331 = vunpack.c.l.b16 %v256
      %v332 = vunpack.c.l.b16 %v257
      %v333 = vunpack.c.l.b16 %v258
      %v334 = vunpack.c.l.b16 %v259
      %v335 = vunpack.c.l.b16 %v260
      %v336 = vunpack.c.l.b16 %v261
      %v337 = vunpack.c.l.b16 %v262
      %v338 = vunpack.c.l.b16 %v263
      %v339 = vunpack.c.l.b16 %v264
      %v340 = vunpack.c.l.b16 %v265
      %v341 = vunpack.c.l.b16 %v266
      %v342 = vunpack.c.l.b16 %v267
      %v343 = vunpack.c.l.b16 %v268
      %v344 = vunpack.c.l.b16 %v269
      %v345 = vunpack.c.l.b16 %v270
      %v346 = vunpack.c.l.b16 %v271
      %v347 = vunpack.c.l.b16 %v272
      %v348 = vunpack.c.l.b16 %v273
      %v349 = vunpack.c.l.b16 %v274
      %v350 = vunpack.c.l.b16 %v275
      %v351 = vunpack.c.l.b16 %v276
      %v352 = vunpack.c.l.b16 %v277
      %v353 = vunpack.c.l.b16 %v278
      %v354 = vunpack.c.l.b16 %v279
      %v355 = vunpack.c.l.b16 %v280
      %v356 = vunpack.c.l.b16 %v281
      %v357 = vunpack.c.l.b16 %v282
      %v358 = vunpack.c.l.b16 %v283
      %v359 = vunpack.c.l.b16 %v284
      %v360 = vpack.c.b16 %v329, %v328
      %v361 = vpack.c.b16 %v331, %v330
      %v362 = vpack.c.b16 %v333, %v332
      %v363 = vpack.c.b16 %v335, %v334
      %v364 = vpack.c.b16 %v337, %v336
      %v365 = vpack.c.b16 %v339, %v338
      %v366 = vpack.c.b16 %v341, %v340
      %v367 = vpack.c.b16 %v343, %v342
      %v368 = vpack.c.b16 %v345, %v344
      %v369 = vpack.c.b16 %v347, %v346
      %v370 = vpack.c.b16 %v349, %v348
      %v371 = vpack.c.b16 %v351, %v350
      %v372 = vpack.c.b16 %v353, %v352
      %v373 = vpack.c.b16 %v355, %v354
      %v374 = vpack.c.b16 %v357, %v356
      %v375 = vpack.c.b16 %v359, %v358
      %v380 = vunpack.c.l.b16 %v285
      %v381 = vunpack.c.l.b16 %v286
      %v382 = vunpack.c.l.b16 %v287
      %v383 = vunpack.c.l.b16 %v288
      %v384 = vpack.c.b16 %v381, %v380
      %v385 = vpack.c.b16 %v383, %v382
      %vm388 = vcmask 261120
      %v390 = vsel %vm388, %v360, 0
      %v393 = vsel %vm388, %v361, 0
      %v396 = vsel %vm388, %v362, 0
      %v399 = vsel %vm388, %v363, 0
      %v402 = vsel %vm388, %v364, 0
      %v405 = vsel %vm388, %v365, 0
      %v408 = vsel %vm388, %v366, 0
      %v411 = vsel %vm388, %v367, 0
      %v414 = vsel %vm388, %v368, 0
      %v417 = vsel %vm388, %v369, 0
      %v420 = vsel %vm388, %v370, 0
      %v423 = vsel %vm388, %v371, 0
      %v426 = vsel %vm388, %v372, 0
      %v429 = vsel %vm388, %v373, 0
      %v432 = vsel %vm388, %v374, 0
      %v435 = vsel %vm388, %v375, 0
      %437 = vmatprep.subr.bf16.mxu0 0
      %438 = vmatpush1.bf16.msra.mxu0 0
      %439 = vmatprep.subr.bf16.mxu0 0
      %440 = vmatpush1.bf16.msra.mxu0 0
      %441 = vmatprep.subr.bf16.mxu0 0
      %442 = vmatpush1.bf16.msra.mxu0 0
      %443 = vmatprep.subr.bf16.mxu0 0
      %444 = vmatpush1.bf16.msra.mxu0 0
      %445 = vmatprep.subr.bf16.mxu0 0
      %446 = vmatpush1.bf16.msra.mxu0 0
      %447 = vmatprep.subr.bf16.mxu0 0
      %448 = vmatpush1.bf16.msra.mxu0 0
      %449 = vmatprep.subr.bf16.mxu0 0
      %450 = vmatpush1.bf16.msra.mxu0 %v385
      %451 = vmatprep.subr.bf16.mxu0 0
      %452 = vmatpush1.bf16.msra.mxu0 %v384
      %453 = vmatprep.subr.bf16.mxu0 0
      %454 = vmatpush2.bf16.msra.mxu0 0
      %455 = vmatprep.subr.bf16.mxu0 0
      %456 = vmatpush2.bf16.msra.mxu0 0
      %457 = vmatprep.subr.bf16.mxu0 0
      %458 = vmatpush2.bf16.msra.mxu0 0
      %459 = vmatprep.subr.bf16.mxu0 0
      %460 = vmatpush2.bf16.msra.mxu0 0
      %461 = vmatprep.subr.bf16.mxu0 0
      %462 = vmatpush2.bf16.msra.mxu0 0
      %463 = vmatprep.subr.bf16.mxu0 0
      %464 = vmatpush2.bf16.msra.mxu0 0
      %465 = vmatprep.subr.bf16.mxu0 0
      %466 = vmatpush2.bf16.msra.mxu0 0
      %467 = vmatprep.subr.bf16.mxu0 0
      %468 = vmatpush2.bf16.msra.mxu0 0
      %469 = vmatprep.mubr.bf16.mxu0 0
      %470 = vmatmul.mubr.bf16.gmra.mxu0 %v390
      %v471 = vpop.f32.mrf.mxu0
      %v472 = vadd.f32 %v294, %v471
      %v473 = vpop.f32.mrf.mxu0
      %v474 = vpop.f32.mrf.mxu0
      %v475 = vadd.f32 %v294, %v474
      %v476 = vpop.f32.mrf.mxu0
      %477 = vmatprep.mubr.bf16.mxu0 0
      %478 = vmatmul.mubr.bf16.gmra.mxu0 %v393
      %v479 = vpop.f32.mrf.mxu0
      %v480 = vadd.f32 %v294, %v479
      %v481 = vpop.f32.mrf.mxu0
      %v482 = vpop.f32.mrf.mxu0
      %v483 = vadd.f32 %v294, %v482
      %v484 = vpop.f32.mrf.mxu0
      %485 = vmatprep.mubr.bf16.mxu0 0
      %486 = vmatmul.mubr.bf16.gmra.mxu0 %v396
      %v487 = vpop.f32.mrf.mxu0
      %v488 = vadd.f32 %v294, %v487
      %v489 = vpop.f32.mrf.mxu0
      %v490 = vpop.f32.mrf.mxu0
      %v491 = vadd.f32 %v294, %v490
      %v492 = vpop.f32.mrf.mxu0
      %493 = vmatprep.mubr.bf16.mxu0 0
      %494 = vmatmul.mubr.bf16.gmra.mxu0 %v399
      %v495 = vpop.f32.mrf.mxu0
      %v496 = vadd.f32 %v294, %v495
      %v497 = vpop.f32.mrf.mxu0
      %v498 = vpop.f32.mrf.mxu0
      %v499 = vadd.f32 %v294, %v498
      %v500 = vpop.f32.mrf.mxu0
      %501 = vmatprep.mubr.bf16.mxu0 0
      %502 = vmatmul.mubr.bf16.gmra.mxu0 %v402
      %v503 = vpop.f32.mrf.mxu0
      %v504 = vadd.f32 %v294, %v503
      %v505 = vpop.f32.mrf.mxu0
      %v506 = vpop.f32.mrf.mxu0
      %v507 = vadd.f32 %v294, %v506
      %v508 = vpop.f32.mrf.mxu0
      %509 = vmatprep.mubr.bf16.mxu0 0
      %510 = vmatmul.mubr.bf16.gmra.mxu0 %v405
      %v511 = vpop.f32.mrf.mxu0
      %v512 = vadd.f32 %v294, %v511
      %v513 = vpop.f32.mrf.mxu0
      %v514 = vpop.f32.mrf.mxu0
      %v515 = vadd.f32 %v294, %v514
      %v516 = vpop.f32.mrf.mxu0
      %517 = vmatprep.mubr.bf16.mxu0 0
      %518 = vmatmul.mubr.bf16.gmra.mxu0 %v408
      %v519 = vpop.f32.mrf.mxu0
      %v520 = vadd.f32 %v294, %v519
      %v521 = vpop.f32.mrf.mxu0
      %v522 = vpop.f32.mrf.mxu0
      %v523 = vadd.f32 %v294, %v522
      %v524 = vpop.f32.mrf.mxu0
      %525 = vmatprep.mubr.bf16.mxu0 0
      %526 = vmatmul.mubr.bf16.gmra.mxu0 %v411
      %v527 = vpop.f32.mrf.mxu0
      %v528 = vadd.f32 %v294, %v527
      %v529 = vpop.f32.mrf.mxu0
      %v530 = vpop.f32.mrf.mxu0
      %v531 = vadd.f32 %v294, %v530
      %v532 = vpop.f32.mrf.mxu0
      %533 = vmatprep.mubr.bf16.mxu0 0
      %534 = vmatmul.mubr.bf16.gmra.mxu0 %v414
      %v535 = vpop.f32.mrf.mxu0
      %v536 = vadd.f32 %v294, %v535
      %v537 = vpop.f32.mrf.mxu0
      %v538 = vpop.f32.mrf.mxu0
      %v539 = vadd.f32 %v294, %v538
      %v540 = vpop.f32.mrf.mxu0
      %541 = vmatprep.mubr.bf16.mxu0 0
      %542 = vmatmul.mubr.bf16.gmra.mxu0 %v417
      %v543 = vpop.f32.mrf.mxu0
      %v544 = vadd.f32 %v294, %v543
      %v545 = vpop.f32.mrf.mxu0
      %v546 = vpop.f32.mrf.mxu0
      %v547 = vadd.f32 %v294, %v546
      %v548 = vpop.f32.mrf.mxu0
      %549 = vmatprep.mubr.bf16.mxu0 0
      %550 = vmatmul.mubr.bf16.gmra.mxu0 %v420
      %v551 = vpop.f32.mrf.mxu0
      %v552 = vadd.f32 %v294, %v551
      %v553 = vpop.f32.mrf.mxu0
      %v554 = vpop.f32.mrf.mxu0
      %v555 = vadd.f32 %v294, %v554
      %v556 = vpop.f32.mrf.mxu0
      %557 = vmatprep.mubr.bf16.mxu0 0
      %558 = vmatmul.mubr.bf16.gmra.mxu0 %v423
      %v559 = vpop.f32.mrf.mxu0
      %v560 = vadd.f32 %v294, %v559
      %v561 = vpop.f32.mrf.mxu0
      %v562 = vpop.f32.mrf.mxu0
      %v563 = vadd.f32 %v294, %v562
      %v564 = vpop.f32.mrf.mxu0
      %565 = vmatprep.mubr.bf16.mxu0 0
      %566 = vmatmul.mubr.bf16.gmra.mxu0 %v426
      %v567 = vpop.f32.mrf.mxu0
      %v568 = vadd.f32 %v294, %v567
      %v569 = vpop.f32.mrf.mxu0
      %v570 = vpop.f32.mrf.mxu0
      %v571 = vadd.f32 %v294, %v570
      %v572 = vpop.f32.mrf.mxu0
      %573 = vmatprep.mubr.bf16.mxu0 0
      %574 = vmatmul.mubr.bf16.gmra.mxu0 %v429
      %v575 = vpop.f32.mrf.mxu0
      %v576 = vadd.f32 %v294, %v575
      %v577 = vpop.f32.mrf.mxu0
      %v578 = vpop.f32.mrf.mxu0
      %v579 = vadd.f32 %v294, %v578
      %v580 = vpop.f32.mrf.mxu0
      %581 = vmatprep.mubr.bf16.mxu0 0
      %582 = vmatmul.mubr.bf16.gmra.mxu0 %v432
      %v583 = vpop.f32.mrf.mxu0
      %v584 = vadd.f32 %v294, %v583
      %v585 = vpop.f32.mrf.mxu0
      %v586 = vpop.f32.mrf.mxu0
      %v587 = vadd.f32 %v294, %v586
      %v588 = vpop.f32.mrf.mxu0
      %589 = vmatprep.mubr.bf16.mxu0 0
      %590 = vmatmul.mubr.bf16.gmra.mxu0 %v435
      %v591 = vpop.f32.mrf.mxu0
      %v592 = vadd.f32 %v294, %v591
      %v593 = vpop.f32.mrf.mxu0
      %v594 = vpop.f32.mrf.mxu0
      %v595 = vadd.f32 %v294, %v594
      %v596 = vpop.f32.mrf.mxu0
      %597 = vdwg.mxu0
      %vm598 = vcmask 523264
      %v599 = vsel %vm598, %v472, 0.0
      %v600 = vsel %vm598, %v475, 0.0
      %v601 = vadd.f32 %v599, %v600
      %v602 = vsel %vm598, %v480, 0.0
      %v603 = vadd.f32 %v601, %v602
      %v604 = vsel %vm598, %v483, 0.0
      %v605 = vadd.f32 %v603, %v604
      %v606 = vsel %vm598, %v488, 0.0
      %v607 = vadd.f32 %v605, %v606
      %v608 = vsel %vm598, %v491, 0.0
      %v609 = vadd.f32 %v607, %v608
      %v610 = vsel %vm598, %v496, 0.0
      %v611 = vadd.f32 %v609, %v610
      %v612 = vsel %vm598, %v499, 0.0
      %v613 = vadd.f32 %v611, %v612
      %v614 = vsel %vm598, %v504, 0.0
      %v615 = vadd.f32 %v613, %v614
      %v616 = vsel %vm598, %v507, 0.0
      %v617 = vadd.f32 %v615, %v616
      %v618 = vsel %vm598, %v512, 0.0
      %v619 = vadd.f32 %v617, %v618
      %v620 = vsel %vm598, %v515, 0.0
      %v621 = vadd.f32 %v619, %v620
      %v622 = vsel %vm598, %v520, 0.0
      %v623 = vadd.f32 %v621, %v622
      %v624 = vsel %vm598, %v523, 0.0
      %v625 = vadd.f32 %v623, %v624
      %v626 = vsel %vm598, %v528, 0.0
      %v627 = vadd.f32 %v625, %v626
      %v628 = vsel %vm598, %v531, 0.0
      %v629 = vadd.f32 %v627, %v628
      %v630 = vsel %vm598, %v536, 0.0
      %v631 = vadd.f32 %v629, %v630
      %v632 = vsel %vm598, %v539, 0.0
      %v633 = vadd.f32 %v631, %v632
      %v634 = vsel %vm598, %v544, 0.0
      %v635 = vadd.f32 %v633, %v634
      %v636 = vsel %vm598, %v547, 0.0
      %v637 = vadd.f32 %v635, %v636
      %v638 = vsel %vm598, %v552, 0.0
      %v639 = vadd.f32 %v637, %v638
      %v640 = vsel %vm598, %v555, 0.0
      %v641 = vadd.f32 %v639, %v640
      %v642 = vsel %vm598, %v560, 0.0
      %v643 = vadd.f32 %v641, %v642
      %v644 = vsel %vm598, %v563, 0.0
      %v645 = vadd.f32 %v643, %v644
      %v646 = vsel %vm598, %v568, 0.0
      %v647 = vadd.f32 %v645, %v646
      %v648 = vsel %vm598, %v571, 0.0
      %v649 = vadd.f32 %v647, %v648
      %v650 = vsel %vm598, %v576, 0.0
      %v651 = vadd.f32 %v649, %v650
      %v652 = vsel %vm598, %v579, 0.0
      %v653 = vadd.f32 %v651, %v652
      %v654 = vsel %vm598, %v584, 0.0
      %v655 = vadd.f32 %v653, %v654
      %v656 = vsel %vm598, %v587, 0.0
      %v657 = vadd.f32 %v655, %v656
      %v658 = vsel %vm598, %v592, 0.0
      %v659 = vadd.f32 %v657, %v658
      %v660 = vsel %vm598, %v595, 0.0
      %v661 = vadd.f32 %v659, %v660
      %v662 = vrot.slane %v661, 4
      %v663 = vadd.f32 %v661, %v662
      %v664 = vrot.slane %v663, 2
      %v665 = vadd.f32 %v663, %v664
      %v666 = vrot.slane %v665, 1
      %v667 = vadd.f32 %v665, %v666
      %v668 = vmul.f32 %v667, 0.00390625
      %v669 = vmul.f32 %v472, %v472
      %v670 = vmul.f32 %v475, %v475
      %v671 = vmul.f32 %v480, %v480
      %v672 = vmul.f32 %v483, %v483
      %v673 = vmul.f32 %v488, %v488
      %v674 = vmul.f32 %v491, %v491
      %v675 = vmul.f32 %v496, %v496
      %v676 = vmul.f32 %v499, %v499
      %v677 = vmul.f32 %v504, %v504
      %v678 = vmul.f32 %v507, %v507
      %v679 = vmul.f32 %v512, %v512
      %v680 = vmul.f32 %v515, %v515
      %v681 = vmul.f32 %v520, %v520
      %v682 = vmul.f32 %v523, %v523
      %v683 = vmul.f32 %v528, %v528
      %v684 = vmul.f32 %v531, %v531
      %v685 = vmul.f32 %v536, %v536
      %v686 = vmul.f32 %v539, %v539
      %v687 = vmul.f32 %v544, %v544
      %v688 = vmul.f32 %v547, %v547
      %v689 = vmul.f32 %v552, %v552
      %v690 = vmul.f32 %v555, %v555
      %v691 = vmul.f32 %v560, %v560
      %v692 = vmul.f32 %v563, %v563
      %v693 = vmul.f32 %v568, %v568
      %v694 = vmul.f32 %v571, %v571
      %v695 = vmul.f32 %v576, %v576
      %v696 = vmul.f32 %v579, %v579
      %v697 = vmul.f32 %v584, %v584
      %v698 = vmul.f32 %v587, %v587
      %v699 = vmul.f32 %v592, %v592
      %v700 = vmul.f32 %v595, %v595
      %v701 = vsel %vm598, %v669, 0.0
      %v702 = vsel %vm598, %v670, 0.0
      %v703 = vadd.f32 %v701, %v702
      %v704 = vsel %vm598, %v671, 0.0
      %v705 = vadd.f32 %v703, %v704
      %v706 = vsel %vm598, %v672, 0.0
      %v707 = vadd.f32 %v705, %v706
      %v708 = vsel %vm598, %v673, 0.0
      %v709 = vadd.f32 %v707, %v708
      %v710 = vsel %vm598, %v674, 0.0
      %v711 = vadd.f32 %v709, %v710
      %v712 = vsel %vm598, %v675, 0.0
      %v713 = vadd.f32 %v711, %v712
      %v714 = vsel %vm598, %v676, 0.0
      %v715 = vadd.f32 %v713, %v714
      %v716 = vsel %vm598, %v677, 0.0
      %v717 = vadd.f32 %v715, %v716
      %v718 = vsel %vm598, %v678, 0.0
      %v719 = vadd.f32 %v717, %v718
      %v720 = vsel %vm598, %v679, 0.0
      %v721 = vadd.f32 %v719, %v720
      %v722 = vsel %vm598, %v680, 0.0
      %v723 = vadd.f32 %v721, %v722
      %v724 = vsel %vm598, %v681, 0.0
      %v725 = vadd.f32 %v723, %v724
      %v726 = vsel %vm598, %v682, 0.0
      %v727 = vadd.f32 %v725, %v726
      %v728 = vsel %vm598, %v683, 0.0
      %v729 = vadd.f32 %v727, %v728
      %v730 = vsel %vm598, %v684, 0.0
      %v731 = vadd.f32 %v729, %v730
      %v732 = vsel %vm598, %v685, 0.0
      %v733 = vadd.f32 %v731, %v732
      %v734 = vsel %vm598, %v686, 0.0
      %v735 = vadd.f32 %v733, %v734
      %v736 = vsel %vm598, %v687, 0.0
      %v737 = vadd.f32 %v735, %v736
      %v738 = vsel %vm598, %v688, 0.0
      %v739 = vadd.f32 %v737, %v738
      %v740 = vsel %vm598, %v689, 0.0
      %v741 = vadd.f32 %v739, %v740
      %v742 = vsel %vm598, %v690, 0.0
      %v743 = vadd.f32 %v741, %v742
      %v744 = vsel %vm598, %v691, 0.0
      %v745 = vadd.f32 %v743, %v744
      %v746 = vsel %vm598, %v692, 0.0
      %v747 = vadd.f32 %v745, %v746
      %v748 = vsel %vm598, %v693, 0.0
      %v749 = vadd.f32 %v747, %v748
      %v750 = vsel %vm598, %v694, 0.0
      %v751 = vadd.f32 %v749, %v750
      %v752 = vsel %vm598, %v695, 0.0
      %v753 = vadd.f32 %v751, %v752
      %v754 = vsel %vm598, %v696, 0.0
      %v755 = vadd.f32 %v753, %v754
      %v756 = vsel %vm598, %v697, 0.0
      %v757 = vadd.f32 %v755, %v756
      %v758 = vsel %vm598, %v698, 0.0
      %v759 = vadd.f32 %v757, %v758
      %v760 = vsel %vm598, %v699, 0.0
      %v761 = vadd.f32 %v759, %v760
      %v762 = vsel %vm598, %v700, 0.0
      %v763 = vadd.f32 %v761, %v762
      %v764 = vrot.slane %v763, 4
      %v765 = vadd.f32 %v763, %v764
      %v766 = vrot.slane %v765, 2
      %v767 = vadd.f32 %v765, %v766
      %v768 = vrot.slane %v767, 1
      %v769 = vadd.f32 %v767, %v768
      %v770 = vmul.f32 %v769, 0.00390625
      %v771 = vmul.f32 %v668, %v668
      %v772 = vsub.f32 %v770, %v771
      %v773 = vmax.f32 %v772, 0.0
      %v774 = vsub.f32 %v472, %v668
      %v775 = vsub.f32 %v475, %v668
      %v776 = vsub.f32 %v480, %v668
      %v777 = vsub.f32 %v483, %v668
      %v778 = vsub.f32 %v488, %v668
      %v779 = vsub.f32 %v491, %v668
      %v780 = vsub.f32 %v496, %v668
      %v781 = vsub.f32 %v499, %v668
      %v782 = vsub.f32 %v504, %v668
      %v783 = vsub.f32 %v507, %v668
      %v784 = vsub.f32 %v512, %v668
      %v785 = vsub.f32 %v515, %v668
      %v786 = vsub.f32 %v520, %v668
      %v787 = vsub.f32 %v523, %v668
      %v788 = vsub.f32 %v528, %v668
      %v789 = vsub.f32 %v531, %v668
      %v790 = vsub.f32 %v536, %v668
      %v791 = vsub.f32 %v539, %v668
      %v792 = vsub.f32 %v544, %v668
      %v793 = vsub.f32 %v547, %v668
      %v794 = vsub.f32 %v552, %v668
      %v795 = vsub.f32 %v555, %v668
      %v796 = vsub.f32 %v560, %v668
      %v797 = vsub.f32 %v563, %v668
      %v798 = vsub.f32 %v568, %v668
      %v799 = vsub.f32 %v571, %v668
      %v800 = vsub.f32 %v576, %v668
      %v801 = vsub.f32 %v579, %v668
      %v802 = vsub.f32 %v584, %v668
      %v803 = vsub.f32 %v587, %v668
      %v804 = vsub.f32 %v592, %v668
      %v805 = vsub.f32 %v595, %v668
      %v806 = vadd.f32 %v773, 1e-05
      %v807 = vrsqrt.pop %v806
      %v808 = vmul.f32 %v774, %v807
      %v809 = vmul.f32 %v775, %v807
      %v810 = vmul.f32 %v776, %v807
      %v811 = vmul.f32 %v777, %v807
      %v812 = vmul.f32 %v778, %v807
      %v813 = vmul.f32 %v779, %v807
      %v814 = vmul.f32 %v780, %v807
      %v815 = vmul.f32 %v781, %v807
      %v816 = vmul.f32 %v782, %v807
      %v817 = vmul.f32 %v783, %v807
      %v818 = vmul.f32 %v784, %v807
      %v819 = vmul.f32 %v785, %v807
      %v820 = vmul.f32 %v786, %v807
      %v821 = vmul.f32 %v787, %v807
      %v822 = vmul.f32 %v788, %v807
      %v823 = vmul.f32 %v789, %v807
      %v824 = vmul.f32 %v790, %v807
      %v825 = vmul.f32 %v791, %v807
      %v826 = vmul.f32 %v792, %v807
      %v827 = vmul.f32 %v793, %v807
      %v828 = vmul.f32 %v794, %v807
      %v829 = vmul.f32 %v795, %v807
      %v830 = vmul.f32 %v796, %v807
      %v831 = vmul.f32 %v797, %v807
      %v832 = vmul.f32 %v798, %v807
      %v833 = vmul.f32 %v799, %v807
      %v834 = vmul.f32 %v800, %v807
      %v835 = vmul.f32 %v801, %v807
      %v836 = vmul.f32 %v802, %v807
      %v837 = vmul.f32 %v803, %v807
      %v838 = vmul.f32 %v804, %v807
      %v839 = vmul.f32 %v805, %v807
      %v840 = vld [vmem:[%s3] sm:$0x1]
      %v842 = vlaneseq
      %v843 = vshrl.u32 %v842, 7
      %v844 = vsub.s32 0, %v843
      %v845 = vrot.slane %v840, %v844
      %v847 = vmul.f32 %v808, %v845
      %v848 = vmul.f32 %v809, %v845
      %v849 = vmul.f32 %v810, %v845
      %v850 = vmul.f32 %v811, %v845
      %v851 = vmul.f32 %v812, %v845
      %v852 = vmul.f32 %v813, %v845
      %v853 = vmul.f32 %v814, %v845
      %v854 = vmul.f32 %v815, %v845
      %v855 = vmul.f32 %v816, %v845
      %v856 = vmul.f32 %v817, %v845
      %v857 = vmul.f32 %v818, %v845
      %v858 = vmul.f32 %v819, %v845
      %v859 = vmul.f32 %v820, %v845
      %v860 = vmul.f32 %v821, %v845
      %v861 = vmul.f32 %v822, %v845
      %v862 = vmul.f32 %v823, %v845
      %v863 = vmul.f32 %v824, %v845
      %v864 = vmul.f32 %v825, %v845
      %v865 = vmul.f32 %v826, %v845
      %v866 = vmul.f32 %v827, %v845
      %v867 = vmul.f32 %v828, %v845
      %v868 = vmul.f32 %v829, %v845
      %v869 = vmul.f32 %v830, %v845
      %v870 = vmul.f32 %v831, %v845
      %v871 = vmul.f32 %v832, %v845
      %v872 = vmul.f32 %v833, %v845
      %v873 = vmul.f32 %v834, %v845
      %v874 = vmul.f32 %v835, %v845
      %v875 = vmul.f32 %v836, %v845
      %v876 = vmul.f32 %v837, %v845
      %v877 = vmul.f32 %v838, %v845
      %v878 = vmul.f32 %v839, %v845
      %v879 = vld [vmem:[%s4] sm:$0x1]
      %v881 = vlaneseq
      %v882 = vshrl.u32 %v881, 7
      %v883 = vsub.s32 0, %v882
      %v884 = vrot.slane %v879, %v883
      %v886 = vadd.f32 %v847, %v884
      %v887 = vadd.f32 %v848, %v884
      %v888 = vadd.f32 %v849, %v884
      %v889 = vadd.f32 %v850, %v884
      %v890 = vadd.f32 %v851, %v884
      %v891 = vadd.f32 %v852, %v884
      %v892 = vadd.f32 %v853, %v884
      %v893 = vadd.f32 %v854, %v884
      %v894 = vadd.f32 %v855, %v884
      %v895 = vadd.f32 %v856, %v884
      %v896 = vadd.f32 %v857, %v884
      %v897 = vadd.f32 %v858, %v884
      %v898 = vadd.f32 %v859, %v884
      %v899 = vadd.f32 %v860, %v884
      %v900 = vadd.f32 %v861, %v884
      %v901 = vadd.f32 %v862, %v884
      %v902 = vadd.f32 %v863, %v884
      %v903 = vadd.f32 %v864, %v884
      %v904 = vadd.f32 %v865, %v884
      %v905 = vadd.f32 %v866, %v884
      %v906 = vadd.f32 %v867, %v884
      %v907 = vadd.f32 %v868, %v884
      %v908 = vadd.f32 %v869, %v884
      %v909 = vadd.f32 %v870, %v884
      %v910 = vadd.f32 %v871, %v884
      %v911 = vadd.f32 %v872, %v884
      %v912 = vadd.f32 %v873, %v884
      %v913 = vadd.f32 %v874, %v884
      %v914 = vadd.f32 %v875, %v884
      %v915 = vadd.f32 %v876, %v884
      %v916 = vadd.f32 %v877, %v884
      %v917 = vadd.f32 %v878, %v884
      %vm918 = vcmp.ge.f32.partialorder %v886, 0.0
      %vm919 = vcmp.ge.f32.partialorder %v887, 0.0
      %vm920 = vcmp.ge.f32.partialorder %v888, 0.0
      %vm921 = vcmp.ge.f32.partialorder %v889, 0.0
      %vm922 = vcmp.ge.f32.partialorder %v890, 0.0
      %vm923 = vcmp.ge.f32.partialorder %v891, 0.0
      %vm924 = vcmp.ge.f32.partialorder %v892, 0.0
      %vm925 = vcmp.ge.f32.partialorder %v893, 0.0
      %vm926 = vcmp.ge.f32.partialorder %v894, 0.0
      %vm927 = vcmp.ge.f32.partialorder %v895, 0.0
      %vm928 = vcmp.ge.f32.partialorder %v896, 0.0
      %vm929 = vcmp.ge.f32.partialorder %v897, 0.0
      %vm930 = vcmp.ge.f32.partialorder %v898, 0.0
      %vm931 = vcmp.ge.f32.partialorder %v899, 0.0
      %vm932 = vcmp.ge.f32.partialorder %v900, 0.0
      %vm933 = vcmp.ge.f32.partialorder %v901, 0.0
      %vm934 = vcmp.ge.f32.partialorder %v902, 0.0
      %vm935 = vcmp.ge.f32.partialorder %v903, 0.0
      %vm936 = vcmp.ge.f32.partialorder %v904, 0.0
      %vm937 = vcmp.ge.f32.partialorder %v905, 0.0
      %vm938 = vcmp.ge.f32.partialorder %v906, 0.0
      %vm939 = vcmp.ge.f32.partialorder %v907, 0.0
      %vm940 = vcmp.ge.f32.partialorder %v908, 0.0
      %vm941 = vcmp.ge.f32.partialorder %v909, 0.0
      %vm942 = vcmp.ge.f32.partialorder %v910, 0.0
      %vm943 = vcmp.ge.f32.partialorder %v911, 0.0
      %vm944 = vcmp.ge.f32.partialorder %v912, 0.0
      %vm945 = vcmp.ge.f32.partialorder %v913, 0.0
      %vm946 = vcmp.ge.f32.partialorder %v914, 0.0
      %vm947 = vcmp.ge.f32.partialorder %v915, 0.0
      %vm948 = vcmp.ge.f32.partialorder %v916, 0.0
      %vm949 = vcmp.ge.f32.partialorder %v917, 0.0
      %v950 = vld [vmem:[%s5] sm:$0x1]
      %v952 = vlaneseq
      %v953 = vshrl.u32 %v952, 7
      %v954 = vsub.s32 0, %v953
      %v955 = vrot.slane %v950, %v954
      %v957 = vmul.f32 %v955, %v886
      %v958 = vmul.f32 %v955, %v887
      %v959 = vmul.f32 %v955, %v888
      %v960 = vmul.f32 %v955, %v889
      %v961 = vmul.f32 %v955, %v890
      %v962 = vmul.f32 %v955, %v891
      %v963 = vmul.f32 %v955, %v892
      %v964 = vmul.f32 %v955, %v893
      %v965 = vmul.f32 %v955, %v894
      %v966 = vmul.f32 %v955, %v895
      %v967 = vmul.f32 %v955, %v896
      %v968 = vmul.f32 %v955, %v897
      %v969 = vmul.f32 %v955, %v898
      %v970 = vmul.f32 %v955, %v899
      %v971 = vmul.f32 %v955, %v900
      %v972 = vmul.f32 %v955, %v901
      %v973 = vmul.f32 %v955, %v902
      %v974 = vmul.f32 %v955, %v903
      %v975 = vmul.f32 %v955, %v904
      %v976 = vmul.f32 %v955, %v905
      %v977 = vmul.f32 %v955, %v906
      %v978 = vmul.f32 %v955, %v907
      %v979 = vmul.f32 %v955, %v908
      %v980 = vmul.f32 %v955, %v909
      %v981 = vmul.f32 %v955, %v910
      %v982 = vmul.f32 %v955, %v911
      %v983 = vmul.f32 %v955, %v912
      %v984 = vmul.f32 %v955, %v913
      %v985 = vmul.f32 %v955, %v914
      %v986 = vmul.f32 %v955, %v915
      %v987 = vmul.f32 %v955, %v916
      %v988 = vmul.f32 %v955, %v917
      %v989 = vsel %vm918, %v886, %v957
      %v990 = vsel %vm919, %v887, %v958
      %v991 = vsel %vm920, %v888, %v959
      %v992 = vsel %vm921, %v889, %v960
      %v993 = vsel %vm922, %v890, %v961
      %v994 = vsel %vm923, %v891, %v962
      %v995 = vsel %vm924, %v892, %v963
      %v996 = vsel %vm925, %v893, %v964
      %v997 = vsel %vm926, %v894, %v965
      %v998 = vsel %vm927, %v895, %v966
      %v999 = vsel %vm928, %v896, %v967
      %v1000 = vsel %vm929, %v897, %v968
      %v1001 = vsel %vm930, %v898, %v969
      %v1002 = vsel %vm931, %v899, %v970
      %v1003 = vsel %vm932, %v900, %v971
      %v1004 = vsel %vm933, %v901, %v972
      %v1005 = vsel %vm934, %v902, %v973
      %v1006 = vsel %vm935, %v903, %v974
      %v1007 = vsel %vm936, %v904, %v975
      %v1008 = vsel %vm937, %v905, %v976
      %v1009 = vsel %vm938, %v906, %v977
      %v1010 = vsel %vm939, %v907, %v978
      %v1011 = vsel %vm940, %v908, %v979
      %v1012 = vsel %vm941, %v909, %v980
      %v1013 = vsel %vm942, %v910, %v981
      %v1014 = vsel %vm943, %v911, %v982
      %v1015 = vsel %vm944, %v912, %v983
      %v1016 = vsel %vm945, %v913, %v984
      %v1017 = vsel %vm946, %v914, %v985
      %v1018 = vsel %vm947, %v915, %v986
      %v1019 = vsel %vm948, %v916, %v987
      %v1020 = vsel %vm949, %v917, %v988
      %v1021 = vpack.c.bf16 %v990, %v989
      %v1022 = vpack.c.bf16 %v992, %v991
      %v1023 = vpack.c.bf16 %v994, %v993
      %v1024 = vpack.c.bf16 %v996, %v995
      %v1025 = vpack.c.bf16 %v998, %v997
      %v1026 = vpack.c.bf16 %v1000, %v999
      %v1027 = vpack.c.bf16 %v1002, %v1001
      %v1028 = vpack.c.bf16 %v1004, %v1003
      %v1029 = vpack.c.bf16 %v1006, %v1005
      %v1030 = vpack.c.bf16 %v1008, %v1007
      %v1031 = vpack.c.bf16 %v1010, %v1009
      %v1032 = vpack.c.bf16 %v1012, %v1011
      %v1033 = vpack.c.bf16 %v1014, %v1013
      %v1034 = vpack.c.bf16 %v1016, %v1015
      %v1035 = vpack.c.bf16 %v1018, %v1017
      %v1036 = vpack.c.bf16 %v1020, %v1019
      %v1053 = vunpack.c.l.b16 %v1021
      %v1054 = vunpack.c.h.b16 %v1021
      %v1055 = vunpack.c.l.b16 %v1022
      %v1056 = vunpack.c.h.b16 %v1022
      %v1057 = vunpack.c.l.b16 %v1023
      %v1058 = vunpack.c.h.b16 %v1023
      %v1059 = vunpack.c.l.b16 %v1024
      %v1060 = vunpack.c.h.b16 %v1024
      %v1061 = vunpack.c.l.b16 %v1025
      %v1062 = vunpack.c.h.b16 %v1025
      %v1063 = vunpack.c.l.b16 %v1026
      %v1064 = vunpack.c.h.b16 %v1026
      %v1065 = vunpack.c.l.b16 %v1027
      %v1066 = vunpack.c.h.b16 %v1027
      %v1067 = vunpack.c.l.b16 %v1028
      %v1068 = vunpack.c.h.b16 %v1028
      %v1069 = vunpack.c.l.b16 %v1029
      %v1070 = vunpack.c.h.b16 %v1029
      %v1071 = vunpack.c.l.b16 %v1030
      %v1072 = vunpack.c.h.b16 %v1030
      %v1073 = vunpack.c.l.b16 %v1031
      %v1074 = vunpack.c.h.b16 %v1031
      %v1075 = vunpack.c.l.b16 %v1032
      %v1076 = vunpack.c.h.b16 %v1032
      %v1077 = vunpack.c.l.b16 %v1033
      %v1078 = vunpack.c.h.b16 %v1033
      %v1079 = vunpack.c.l.b16 %v1034
      %v1080 = vunpack.c.h.b16 %v1034
      %v1081 = vunpack.c.l.b16 %v1035
      %v1082 = vunpack.c.h.b16 %v1035
      %v1083 = vunpack.c.l.b16 %v1036
      %v1084 = vunpack.c.h.b16 %v1036
      %v1085 = vpack.c.b16 %v1053, %v1053
      %v1086 = vpack.c.b16 %v1054, %v1054
      %v1087 = vpack.c.b16 %v1055, %v1055
      %v1088 = vpack.c.b16 %v1056, %v1056
      %v1089 = vpack.c.b16 %v1057, %v1057
      %v1090 = vpack.c.b16 %v1058, %v1058
      %v1091 = vpack.c.b16 %v1059, %v1059
      %v1092 = vpack.c.b16 %v1060, %v1060
      %v1093 = vpack.c.b16 %v1061, %v1061
      %v1094 = vpack.c.b16 %v1062, %v1062
      %v1095 = vpack.c.b16 %v1063, %v1063
      %v1096 = vpack.c.b16 %v1064, %v1064
      %v1097 = vpack.c.b16 %v1065, %v1065
      %v1098 = vpack.c.b16 %v1066, %v1066
      %v1099 = vpack.c.b16 %v1067, %v1067
      %v1100 = vpack.c.b16 %v1068, %v1068
      %v1101 = vpack.c.b16 %v1069, %v1069
      %v1102 = vpack.c.b16 %v1070, %v1070
      %v1103 = vpack.c.b16 %v1071, %v1071
      %v1104 = vpack.c.b16 %v1072, %v1072
      %v1105 = vpack.c.b16 %v1073, %v1073
      %v1106 = vpack.c.b16 %v1074, %v1074
      %v1107 = vpack.c.b16 %v1075, %v1075
      %v1108 = vpack.c.b16 %v1076, %v1076
      %v1109 = vpack.c.b16 %v1077, %v1077
      %v1110 = vpack.c.b16 %v1078, %v1078
      %v1111 = vpack.c.b16 %v1079, %v1079
      %v1112 = vpack.c.b16 %v1080, %v1080
      %v1113 = vpack.c.b16 %v1081, %v1081
      %v1114 = vpack.c.b16 %v1082, %v1082
      %v1115 = vpack.c.b16 %v1083, %v1083
      %v1116 = vpack.c.b16 %v1084, %v1084
      %vm1149 = vcmask 519168
      %1150 = vst.msk [vmem:[%s251] sm:$0xf] %vm1149, %v1085
      %1151 = vst.msk [vmem:[%s251 + $0x4] sm:$0xf] %vm1149, %v1086
      %1152 = vst.msk [vmem:[%s251 + $0x8] sm:$0xf] %vm1149, %v1087
      %1153 = vst.msk [vmem:[%s251 + $0xc] sm:$0xf] %vm1149, %v1088
      %1154 = vst.msk [vmem:[%s251 + $0x10] sm:$0xf] %vm1149, %v1089
      %1155 = vst.msk [vmem:[%s251 + $0x14] sm:$0xf] %vm1149, %v1090
      %1156 = vst.msk [vmem:[%s251 + $0x18] sm:$0xf] %vm1149, %v1091
      %1157 = vst.msk [vmem:[%s251 + $0x1c] sm:$0xf] %vm1149, %v1092
      %1158 = vst.msk [vmem:[%s251 + $0x20] sm:$0xf] %vm1149, %v1093
      %1159 = vst.msk [vmem:[%s251 + $0x24] sm:$0xf] %vm1149, %v1094
      %1160 = vst.msk [vmem:[%s251 + $0x28] sm:$0xf] %vm1149, %v1095
      %1161 = vst.msk [vmem:[%s251 + $0x2c] sm:$0xf] %vm1149, %v1096
      %1162 = vst.msk [vmem:[%s251 + $0x30] sm:$0xf] %vm1149, %v1097
      %1163 = vst.msk [vmem:[%s251 + $0x34] sm:$0xf] %vm1149, %v1098
      %1164 = vst.msk [vmem:[%s251 + $0x38] sm:$0xf] %vm1149, %v1099
      %1165 = vst.msk [vmem:[%s251 + $0x3c] sm:$0xf] %vm1149, %v1100
      %1166 = vst.msk [vmem:[%s251 + $0x40] sm:$0xf] %vm1149, %v1101
      %1167 = vst.msk [vmem:[%s251 + $0x44] sm:$0xf] %vm1149, %v1102
      %1168 = vst.msk [vmem:[%s251 + $0x48] sm:$0xf] %vm1149, %v1103
      %1169 = vst.msk [vmem:[%s251 + $0x4c] sm:$0xf] %vm1149, %v1104
      %1170 = vst.msk [vmem:[%s251 + $0x50] sm:$0xf] %vm1149, %v1105
      %1171 = vst.msk [vmem:[%s251 + $0x54] sm:$0xf] %vm1149, %v1106
      %1172 = vst.msk [vmem:[%s251 + $0x58] sm:$0xf] %vm1149, %v1107
      %1173 = vst.msk [vmem:[%s251 + $0x5c] sm:$0xf] %vm1149, %v1108
      %1174 = vst.msk [vmem:[%s251 + $0x60] sm:$0xf] %vm1149, %v1109
      %1175 = vst.msk [vmem:[%s251 + $0x64] sm:$0xf] %vm1149, %v1110
      %1176 = vst.msk [vmem:[%s251 + $0x68] sm:$0xf] %vm1149, %v1111
      %1177 = vst.msk [vmem:[%s251 + $0x6c] sm:$0xf] %vm1149, %v1112
      %1178 = vst.msk [vmem:[%s251 + $0x70] sm:$0xf] %vm1149, %v1113
      %1179 = vst.msk [vmem:[%s251 + $0x74] sm:$0xf] %vm1149, %v1114
      %1180 = vst.msk [vmem:[%s251 + $0x78] sm:$0xf] %vm1149, %v1115
      %1181 = vst.msk [vmem:[%s251 + $0x7c] sm:$0xf] %vm1149, %v1116
      %p1182 = scmp.lt.s32.totalorder %s17, 1
      %s1183 = scalar_select %p1182, %s17, 1
      %s1184 = smul.addr %s1183, 32
      %s1185 = smul.addr %s1184, 4
      %s1186 = scalar_lea.vmem %s6, %s1185
      // Predicated region
      $region45: #{course_sr_forward.14} parent=43 // pred_check
        %p1187 = pneg %p166
      $region46: #{course_sr_forward.14} parent=43 // pred_check_branch
        %1189 = sbr.rel (%p1187) target = $region48
      $region47: #{course_sr_forward.14} parent=43 // pred_region
        _
      $region48: #{course_sr_forward.14} parent=43 // pred_fallthru
        _
    $region44: #{course_sr_forward.14} parent=5 // pred_fallthru
      _
    %p1190 = scmp.le.s32.totalorder 2, %s12
    // Predicated region
    $region49: #{course_sr_forward.14} parent=5 // pred_check
      %p1191 = pneg %p1190
    $region50: #{course_sr_forward.14} parent=5 // pred_check_branch
      %1193 = sbr.rel (%p1191) target = $region52
    $region51: #{course_sr_forward.14} parent=5 // pred_region
      %s1194 = ssub.s32 %s12, 2
      // Predicated region
      $region53: #{course_sr_forward.14} parent=51 // pred_check
        %p1195 = pneg %p172
      $region54: #{course_sr_forward.14} parent=51 // pred_check_branch
        %1197 = sbr.rel (%p1195) target = $region56
      $region55: #{course_sr_forward.14} parent=51 // pred_region
        %p1198 = scmp.lt.s32.totalorder %s18, 1
        %s1199 = scalar_select %p1198, %s18, 1
        %s1200 = smul.addr %s1199, 32
        %s1201 = smul.addr %s1200, 4
        %s1202 = scalar_lea.vmem %s6, %s1201
      $region56: #{course_sr_forward.14} parent=51 // pred_fallthru
        _
    $region52: #{course_sr_forward.14} parent=5 // pred_fallthru
      _
  $region6: #{course_sr_forward.14} parent=0 // loop_footer
    %s16 = sadd.s32 1, %s12
  $region7: #{course_sr_forward.14} parent=0 // loop_footer_branch
    %11 = sbr.rel target = $region3
  $region8: #{course_sr_forward.14} parent=0 // loop_exit
    _

// kernel: course_sr_forward.16
$region0: #{course_sr_forward.16}
  #allocation0 [shape = 'u32[]', space=smem, size = 0x4, offset = 0x4, fixed_abs, tag = 'smem constant byte address 0x4 - core index']
  #allocation1 [shape = 'u32[144,128]{1,0:T(1,128)}', space=vmem, size = 0x12000, scoped, tag = 'internal scratch']
  %s0 = inlined_call_operand.vmem [shape: bf16[2,256,576], index: 0, kind: input, shape index: {}]
  %s1 = inlined_call_operand.vmem [shape: bf16[576,64], index: 1, kind: input, shape index: {}]
  %s2 = inlined_call_operand.vmem [shape: f32[1,64], index: 2, kind: input, shape index: {}]
  %s3 = inlined_call_operand.vmem [shape: f32[1,64], index: 3, kind: input, shape index: {}]
  %s4 = inlined_call_operand.vmem [shape: f32[1,64], index: 4, kind: input, shape index: {}]
  %s5 = inlined_call_operand.vmem [shape: f32[1,64], index: 5, kind: input, shape index: {}]
  %s6 = inlined_call_operand.vmem [shape: bf16[2,256,64], index: 6, kind: input, shape index: {}]
  %s7 = inlined_call_operand.vmem [shape: bf16[2,256,64], index: 7, kind: output, shape index: {}]
  %s8 = sld [smem:[#allocation0]]
  $region61: #{course_sr_forward.16} parent=0
    _
  %s10 = ssub.s32 1, %s8
  %s11 = scalar_select 0, %s10, %s8
  loop: start=0, step=1, limit=4
  $region2: #{course_sr_forward.16} parent=0 // loop_pre_header
    _
  $region3: #{course_sr_forward.16} parent=0 // loop_header
    %s13 = sphi 0, %s17
    %p14 = scmp.ge.s32.totalorder %s13, 4
    %s23 = sphi 0, %s25
    %s26 = sphi 0, %s23
    %s27 = sphi 0, %s26
    %s43 = sphi 0, %s27
    %s47 = sphi 0, %s47
    %s49 = sphi 0, %s47
    %s50 = sphi 0, %s49
    %s64 = sphi 0, %s50
    %s68 = sphi 0, %s68
    %s70 = sphi 0, %s68
    %s71 = sphi 0, %s70
    %s85 = sphi 0, %s71
    %s89 = sphi 0, %s89
    %s91 = sphi 0, %s89
    %s92 = sphi 0, %s91
    %s106 = sphi 0, %s92
    %s110 = sphi 0, %s110
    %s112 = sphi 0, %s110
    %s113 = sphi 0, %s112
    %s127 = sphi 0, %s113
    %s131 = sphi 0, %s131
    %s133 = sphi 0, %s131
    %s134 = sphi 0, %s133
    %s148 = sphi 0, %s134
    %s154 = sphi 0, %s156
    %s157 = sphi 0, %s154
    %s158 = sphi 0, %s157
    %s174 = sphi 0, %s158
    %s180 = sphi 0, %s182
    %s183 = sphi 0, %s180
    %s184 = sphi 0, %s183
    %s200 = sphi 0, %s184
  $region4: #{course_sr_forward.16} parent=0 // loop_header_branch
    %16 = sbr.rel (%p14) target = $region8
  $region5: #{course_sr_forward.16} parent=0 // loop_body
    %s18 = ssub.s32 %s13, 1
    %s19 = ssub.s32 %s13, 2
    %s20 = sadd.s32 %s13, 1
    %s21 = ssub.s32 %s13, %s20
    %p22 = scmp.eq.s32.totalorder %s21, 0
    %s24 = sadd.s32 %s23, 1
    %s25 = scalar_select %p22, %s23, %s24
    %p28 = pneg %p22
    %p29 = scmp.eq.s32.totalorder %s13, 1
    %p30 = por %p28, %p29
    %p31 = scmp.ne.s32.totalorder %s23, %s26
    %p32 = scmp.eq.s32.totalorder %s13, 0
    %p33 = por %p31, %p32
    %p34 = scmp.ne.s32.totalorder %s23, %s26
    %p35 = scmp.eq.s32.totalorder %s18, 1
    %p36 = por %p34, %p35
    %p37 = scmp.ne.s32.totalorder %s26, %s27
    %p38 = scmp.eq.s32.totalorder %s18, 0
    %p39 = por %p37, %p38
    %p40 = scmp.ne.s32.totalorder %s26, %s27
    %p41 = scmp.eq.s32.totalorder %s19, 1
    %p42 = por %p40, %p41
    %p44 = scmp.ne.s32.totalorder %s27, %s43
    %p45 = scmp.eq.s32.totalorder %s19, 0
    %p46 = por %p44, %p45
    %s48 = sadd.s32 %s47, 1
    %p51 = scmp.eq.s32.totalorder %s13, 1
    %p52 = scmp.ne.s32.totalorder %s47, %s49
    %p53 = scmp.eq.s32.totalorder %s13, 0
    %p54 = por %p52, %p53
    %p55 = scmp.ne.s32.totalorder %s47, %s49
    %p56 = scmp.eq.s32.totalorder %s18, 1
    %p57 = por %p55, %p56
    %p58 = scmp.ne.s32.totalorder %s49, %s50
    %p59 = scmp.eq.s32.totalorder %s18, 0
    %p60 = por %p58, %p59
    %p61 = scmp.ne.s32.totalorder %s49, %s50
    %p62 = scmp.eq.s32.totalorder %s19, 1
    %p63 = por %p61, %p62
    %p65 = scmp.ne.s32.totalorder %s50, %s64
    %p66 = scmp.eq.s32.totalorder %s19, 0
    %p67 = por %p65, %p66
    %s69 = sadd.s32 %s68, 1
    %p72 = scmp.eq.s32.totalorder %s13, 1
    %p73 = scmp.ne.s32.totalorder %s68, %s70
    %p74 = scmp.eq.s32.totalorder %s13, 0
    %p75 = por %p73, %p74
    %p76 = scmp.ne.s32.totalorder %s68, %s70
    %p77 = scmp.eq.s32.totalorder %s18, 1
    %p78 = por %p76, %p77
    %p79 = scmp.ne.s32.totalorder %s70, %s71
    %p80 = scmp.eq.s32.totalorder %s18, 0
    %p81 = por %p79, %p80
    %p82 = scmp.ne.s32.totalorder %s70, %s71
    %p83 = scmp.eq.s32.totalorder %s19, 1
    %p84 = por %p82, %p83
    %p86 = scmp.ne.s32.totalorder %s71, %s85
    %p87 = scmp.eq.s32.totalorder %s19, 0
    %p88 = por %p86, %p87
    %s90 = sadd.s32 %s89, 1
    %p93 = scmp.eq.s32.totalorder %s13, 1
    %p94 = scmp.ne.s32.totalorder %s89, %s91
    %p95 = scmp.eq.s32.totalorder %s13, 0
    %p96 = por %p94, %p95
    %p97 = scmp.ne.s32.totalorder %s89, %s91
    %p98 = scmp.eq.s32.totalorder %s18, 1
    %p99 = por %p97, %p98
    %p100 = scmp.ne.s32.totalorder %s91, %s92
    %p101 = scmp.eq.s32.totalorder %s18, 0
    %p102 = por %p100, %p101
    %p103 = scmp.ne.s32.totalorder %s91, %s92
    %p104 = scmp.eq.s32.totalorder %s19, 1
    %p105 = por %p103, %p104
    %p107 = scmp.ne.s32.totalorder %s92, %s106
    %p108 = scmp.eq.s32.totalorder %s19, 0
    %p109 = por %p107, %p108
    %s111 = sadd.s32 %s110, 1
    %p114 = scmp.eq.s32.totalorder %s13, 1
    %p115 = scmp.ne.s32.totalorder %s110, %s112
    %p116 = scmp.eq.s32.totalorder %s13, 0
    %p117 = por %p115, %p116
    %p118 = scmp.ne.s32.totalorder %s110, %s112
    %p119 = scmp.eq.s32.totalorder %s18, 1
    %p120 = por %p118, %p119
    %p121 = scmp.ne.s32.totalorder %s112, %s113
    %p122 = scmp.eq.s32.totalorder %s18, 0
    %p123 = por %p121, %p122
    %p124 = scmp.ne.s32.totalorder %s112, %s113
    %p125 = scmp.eq.s32.totalorder %s19, 1
    %p126 = por %p124, %p125
    %p128 = scmp.ne.s32.totalorder %s113, %s127
    %p129 = scmp.eq.s32.totalorder %s19, 0
    %p130 = por %p128, %p129
    %s132 = sadd.s32 %s131, 1
    %p135 = scmp.eq.s32.totalorder %s13, 1
    %p136 = scmp.ne.s32.totalorder %s131, %s133
    %p137 = scmp.eq.s32.totalorder %s13, 0
    %p138 = por %p136, %p137
    %p139 = scmp.ne.s32.totalorder %s131, %s133
    %p140 = scmp.eq.s32.totalorder %s18, 1
    %p141 = por %p139, %p140
    %p142 = scmp.ne.s32.totalorder %s133, %s134
    %p143 = scmp.eq.s32.totalorder %s18, 0
    %p144 = por %p142, %p143
    %p145 = scmp.ne.s32.totalorder %s133, %s134
    %p146 = scmp.eq.s32.totalorder %s19, 1
    %p147 = por %p145, %p146
    %p149 = scmp.ne.s32.totalorder %s134, %s148
    %p150 = scmp.eq.s32.totalorder %s19, 0
    %p151 = por %p149, %p150
    %s152 = ssub.s32 %s13, %s20
    %p153 = scmp.eq.s32.totalorder %s152, 0
    %s155 = sadd.s32 %s154, 1
    %s156 = scalar_select %p153, %s154, %s155
    %p159 = pneg %p153
    %p160 = scmp.eq.s32.totalorder %s13, 1
    %p161 = por %p159, %p160
    %p162 = scmp.ne.s32.totalorder %s154, %s157
    %p163 = scmp.eq.s32.totalorder %s13, 0
    %p164 = por %p162, %p163
    %p165 = scmp.ne.s32.totalorder %s154, %s157
    %p166 = scmp.eq.s32.totalorder %s18, 1
    %p167 = por %p165, %p166
    %p168 = scmp.ne.s32.totalorder %s157, %s158
    %p169 = scmp.eq.s32.totalorder %s18, 0
    %p170 = por %p168, %p169
    %p171 = scmp.ne.s32.totalorder %s157, %s158
    %p172 = scmp.eq.s32.totalorder %s19, 1
    %p173 = por %p171, %p172
    %p175 = scmp.ne.s32.totalorder %s158, %s174
    %p176 = scmp.eq.s32.totalorder %s19, 0
    %p177 = por %p175, %p176
    %s178 = ssub.s32 %s13, %s20
    %p179 = scmp.eq.s32.totalorder %s178, 0
    %s181 = sadd.s32 %s180, 1
    %s182 = scalar_select %p179, %s180, %s181
    %p185 = pneg %p179
    %p186 = scmp.eq.s32.totalorder %s13, 1
    %p187 = por %p185, %p186
    %p188 = scmp.ne.s32.totalorder %s180, %s183
    %p189 = scmp.eq.s32.totalorder %s13, 0
    %p190 = por %p188, %p189
    %p191 = scmp.ne.s32.totalorder %s180, %s183
    %p192 = scmp.eq.s32.totalorder %s18, 1
    %p193 = por %p191, %p192
    %p194 = scmp.ne.s32.totalorder %s183, %s184
    %p195 = scmp.eq.s32.totalorder %s18, 0
    %p196 = por %p194, %p195
    %p197 = scmp.ne.s32.totalorder %s183, %s184
    %p198 = scmp.eq.s32.totalorder %s19, 1
    %p199 = por %p197, %p198
    %p201 = scmp.ne.s32.totalorder %s184, %s200
    %p202 = scmp.eq.s32.totalorder %s19, 0
    %p203 = por %p201, %p202
    %p204 = scmp.le.s32.totalorder 1, %s13
    %p205 = scmp.lt.s32.totalorder %s13, 3
    %p206 = pnand %p204, %p205
    %p207 = pneg %p206
    // Predicated region
    $region9: #{course_sr_forward.16} parent=5 // pred_check
      _
    $region10: #{course_sr_forward.16} parent=5 // pred_check_branch
      %209 = sbr.rel (%p206) target = $region12
    $region11: #{course_sr_forward.16} parent=5 // pred_region
      %s210 = ssub.s32 %s13, 1
      // Predicated region
      $region13: #{course_sr_forward.16} parent=11 // pred_check
        %p211 = pneg %p60
      $region14: #{course_sr_forward.16} parent=11 // pred_check_branch
        %213 = sbr.rel (%p211) target = $region16
      $region15: #{course_sr_forward.16} parent=11 // pred_region
        _
      $region16: #{course_sr_forward.16} parent=11 // pred_fallthru
        _
      // Predicated region
      $region17: #{course_sr_forward.16} parent=11 // pred_check
        %p214 = pneg %p81
      $region18: #{course_sr_forward.16} parent=11 // pred_check_branch
        %216 = sbr.rel (%p214) target = $region20
      $region19: #{course_sr_forward.16} parent=11 // pred_region
        _
      $region20: #{course_sr_forward.16} parent=11 // pred_fallthru
        _
      // Predicated region
      $region21: #{course_sr_forward.16} parent=11 // pred_check
        %p217 = pneg %p102
      $region22: #{course_sr_forward.16} parent=11 // pred_check_branch
        %219 = sbr.rel (%p217) target = $region24
      $region23: #{course_sr_forward.16} parent=11 // pred_region
        _
      $region24: #{course_sr_forward.16} parent=11 // pred_fallthru
        _
      // Predicated region
      $region25: #{course_sr_forward.16} parent=11 // pred_check
        %p220 = pneg %p123
      $region26: #{course_sr_forward.16} parent=11 // pred_check_branch
        %222 = sbr.rel (%p220) target = $region28
      $region27: #{course_sr_forward.16} parent=11 // pred_region
        _
      $region28: #{course_sr_forward.16} parent=11 // pred_fallthru
        _
      // Predicated region
      $region29: #{course_sr_forward.16} parent=11 // pred_check
        %p223 = pneg %p144
      $region30: #{course_sr_forward.16} parent=11 // pred_check_branch
        %225 = sbr.rel (%p223) target = $region32
      $region31: #{course_sr_forward.16} parent=11 // pred_region
        _
      $region32: #{course_sr_forward.16} parent=11 // pred_fallthru
        _
    $region12: #{course_sr_forward.16} parent=5 // pred_fallthru
      _
    %p226 = scmp.lt.s32.totalorder %s13, 2
    // Predicated region
    $region33: #{course_sr_forward.16} parent=5 // pred_check
      %p227 = pneg %p226
    $region34: #{course_sr_forward.16} parent=5 // pred_check_branch
      %229 = sbr.rel (%p227) target = $region36
    $region35: #{course_sr_forward.16} parent=5 // pred_region
      // Predicated region
      $region37: #{course_sr_forward.16} parent=35 // pred_check
        %p230 = pneg %p33
      $region38: #{course_sr_forward.16} parent=35 // pred_check_branch
        %232 = sbr.rel (%p230) target = $region40
      $region39: #{course_sr_forward.16} parent=35 // pred_region
        %p233 = scmp.lt.s32.totalorder %s13, 1
        %s234 = scalar_select %p233, %s13, 1
        %s235 = smul.addr %s234, 160
        %s236 = smul.addr %s235, 4
        %s237 = scalar_lea.vmem %s0, %s236
      $region40: #{course_sr_forward.16} parent=35 // pred_fallthru
        _
      // Predicated region
      $region41: #{course_sr_forward.16} parent=35 // pred_check
        %p238 = pneg %p164
      $region42: #{course_sr_forward.16} parent=35 // pred_check_branch
        %240 = sbr.rel (%p238) target = $region44
      $region43: #{course_sr_forward.16} parent=35 // pred_region
        %p241 = scmp.lt.s32.totalorder %s13, 1
        %s242 = scalar_select %p241, %s13, 1
        %s243 = smul.addr %s242, 32
        %s244 = smul.addr %s243, 4
        %s245 = scalar_lea.vmem %s6, %s244
      $region44: #{course_sr_forward.16} parent=35 // pred_fallthru
        _
    $region36: #{course_sr_forward.16} parent=5 // pred_fallthru
      _
    %p246 = scmp.le.s32.totalorder 1, %s13
    %p247 = scmp.lt.s32.totalorder %s13, 3
    %p248 = pnand %p246, %p247
    %p249 = pneg %p248
    // Predicated region
    $region45: #{course_sr_forward.16} parent=5 // pred_check
      _
    $region46: #{course_sr_forward.16} parent=5 // pred_check_branch
      %251 = sbr.rel (%p248) target = $region48
    $region47: #{course_sr_forward.16} parent=5 // pred_region
      %s252 = ssub.s32 %s13, 1
      %p253 = scmp.lt.s32.totalorder %s18, 1
      %s254 = scalar_select %p253, %s18, 1
      %s255 = smul.addr %s254, 160
      %s256 = smul.addr %s255, 4
      %s257 = scalar_lea.vmem %s0, %s256
      %p258 = pneg %p39
      %p259 = pneg %p36
      %p260 = pneg %p60
      %p261 = pneg %p57
      %p262 = pneg %p81
      %p263 = pneg %p78
      %p264 = pneg %p102
      %p265 = pneg %p99
      %p266 = pneg %p123
      %p267 = pneg %p120
      %p268 = pneg %p144
      %p269 = pneg %p141
      %p270 = scmp.lt.s32.totalorder %s18, 1
      %s271 = scalar_select %p270, %s18, 1
      %s272 = smul.addr %s271, 32
      %s273 = smul.addr %s272, 4
      %s274 = scalar_lea.vmem %s6, %s273
      %p275 = pneg %p170
      %p276 = pneg %p167
      %p277 = pneg %p196
      %p278 = pneg %p193
      %p279 = scmp.lt.s32.totalorder %s18, 1
      %s280 = scalar_select %p279, %s18, 1
      %s281 = smul.addr %s280, 32
      %s282 = smul.addr %s281, 4
      %s283 = scalar_lea.vmem %s7, %s282
      %p284 = scmp.lt.s32.totalorder %s18, 1
      %s285 = scalar_select %p284, %s18, 1
      %s286 = smul.addr %s285, 160
      %s287 = smul.addr %s286, 4
      %s288 = scalar_lea.vmem %s0, %s287
      %p289 = scmp.lt.s32.totalorder %s18, 1
      %s290 = scalar_select %p289, %s18, 1
      %s291 = smul.addr %s290, 32
      %s292 = smul.addr %s291, 4
      %s293 = scalar_lea.vmem %s6, %s292
      %p294 = scmp.lt.s32.totalorder %s18, 1
      %s295 = scalar_select %p294, %s18, 1
      %s296 = smul.addr %s295, 32
      %s297 = smul.addr %s296, 4
      %s298 = scalar_lea.vmem %s7, %s297
      %v300 = vld [vmem:[%s288] sm:$0xff]
      %v301 = vld [vmem:[%s288 + $0x8] sm:$0xff]
      %v302 = vld [vmem:[%s288 + $0x10] sm:$0xf]
      %v303 = vld [vmem:[%s288 + $0x14] sm:$0xff]
      %v304 = vld [vmem:[%s288 + $0x1c] sm:$0xff]
      %v305 = vld [vmem:[%s288 + $0x24] sm:$0xf]
      %v306 = vld [vmem:[%s288 + $0x28] sm:$0xff]
      %v307 = vld [vmem:[%s288 + $0x30] sm:$0xff]
      %v308 = vld [vmem:[%s288 + $0x38] sm:$0xf]
      %v309 = vld [vmem:[%s288 + $0x3c] sm:$0xff]
      %v310 = vld [vmem:[%s288 + $0x44] sm:$0xff]
      %v311 = vld [vmem:[%s288 + $0x4c] sm:$0xf]
      %v312 = vld [vmem:[%s288 + $0x50] sm:$0xff]
      %v313 = vld [vmem:[%s288 + $0x58] sm:$0xff]
      %v314 = vld [vmem:[%s288 + $0x60] sm:$0xf]
      %v315 = vld [vmem:[%s288 + $0x64] sm:$0xff]
      %v316 = vld [vmem:[%s288 + $0x6c] sm:$0xff]
      %v317 = vld [vmem:[%s288 + $0x74] sm:$0xf]
      %v318 = vld [vmem:[%s288 + $0x78] sm:$0xff]
      %v319 = vld [vmem:[%s288 + $0x80] sm:$0xff]
      %v320 = vld [vmem:[%s288 + $0x88] sm:$0xf]
      %v321 = vld [vmem:[%s288 + $0x8c] sm:$0xff]
      %v322 = vld [vmem:[%s288 + $0x94] sm:$0xff]
      %v323 = vld [vmem:[%s288 + $0x9c] sm:$0xf]
      %v324 = vld [vmem:[%s288 + $0xa0] sm:$0xff]
      %v325 = vld [vmem:[%s288 + $0xa8] sm:$0xff]
      %v326 = vld [vmem:[%s288 + $0xb0] sm:$0xf]
      %v327 = vld [vmem:[%s288 + $0xb4] sm:$0xff]
      %v328 = vld [vmem:[%s288 + $0xbc] sm:$0xff]
      %v329 = vld [vmem:[%s288 + $0xc4] sm:$0xf]
      %v330 = vld [vmem:[%s288 + $0xc8] sm:$0xff]
      %v331 = vld [vmem:[%s288 + $0xd0] sm:$0xff]
      %v332 = vld [vmem:[%s288 + $0xd8] sm:$0xf]
      %v333 = vld [vmem:[%s288 + $0xdc] sm:$0xff]
      %v334 = vld [vmem:[%s288 + $0xe4] sm:$0xff]
      %v335 = vld [vmem:[%s288 + $0xec] sm:$0xf]
      %v336 = vld [vmem:[%s288 + $0xf0] sm:$0xff]
      %v337 = vld [vmem:[%s288 + $0xf8] sm:$0xff]
      %v338 = vld [vmem:[%s288 + $0x100] sm:$0xf]
      %v339 = vld [vmem:[%s288 + $0x104] sm:$0xff]
      %v340 = vld [vmem:[%s288 + $0x10c] sm:$0xff]
      %v341 = vld [vmem:[%s288 + $0x114] sm:$0xf]
      %v342 = vld [vmem:[%s288 + $0x118] sm:$0xff]
      %v343 = vld [vmem:[%s288 + $0x120] sm:$0xff]
      %v344 = vld [vmem:[%s288 + $0x128] sm:$0xf]
      %v345 = vld [vmem:[%s288 + $0x12c] sm:$0xff]
      %v346 = vld [vmem:[%s288 + $0x134] sm:$0xff]
      %v347 = vld [vmem:[%s288 + $0x13c] sm:$0xf]
      %v348 = vld [vmem:[%s288 + $0x140] sm:$0xff]
      %v349 = vld [vmem:[%s288 + $0x148] sm:$0xff]
      %v350 = vld [vmem:[%s288 + $0x150] sm:$0xf]
      %v351 = vld [vmem:[%s288 + $0x154] sm:$0xff]
      %v352 = vld [vmem:[%s288 + $0x15c] sm:$0xff]
      %v353 = vld [vmem:[%s288 + $0x164] sm:$0xf]
      %v354 = vld [vmem:[%s288 + $0x168] sm:$0xff]
      %v355 = vld [vmem:[%s288 + $0x170] sm:$0xff]
      %v356 = vld [vmem:[%s288 + $0x178] sm:$0xf]
      %v357 = vld [vmem:[%s288 + $0x17c] sm:$0xff]
      %v358 = vld [vmem:[%s288 + $0x184] sm:$0xff]
      %v359 = vld [vmem:[%s288 + $0x18c] sm:$0xf]
      %v360 = vld [vmem:[%s288 + $0x190] sm:$0xff]
      %v361 = vld [vmem:[%s288 + $0x198] sm:$0xff]
      %v362 = vld [vmem:[%s288 + $0x1a0] sm:$0xf]
      %v363 = vld [vmem:[%s288 + $0x1a4] sm:$0xff]
      %v364 = vld [vmem:[%s288 + $0x1ac] sm:$0xff]
      %v365 = vld [vmem:[%s288 + $0x1b4] sm:$0xf]
      %v366 = vld [vmem:[%s288 + $0x1b8] sm:$0xff]
      %v367 = vld [vmem:[%s288 + $0x1c0] sm:$0xff]
      %v368 = vld [vmem:[%s288 + $0x1c8] sm:$0xf]
      %v369 = vld [vmem:[%s288 + $0x1cc] sm:$0xff]
      %v370 = vld [vmem:[%s288 + $0x1d4] sm:$0xff]
      %v371 = vld [vmem:[%s288 + $0x1dc] sm:$0xf]
      %v372 = vld [vmem:[%s288 + $0x1e0] sm:$0xff]
      %v373 = vld [vmem:[%s288 + $0x1e8] sm:$0xff]
      %v374 = vld [vmem:[%s288 + $0x1f0] sm:$0xf]
      %v375 = vld [vmem:[%s288 + $0x1f4] sm:$0xff]
      %v376 = vld [vmem:[%s288 + $0x1fc] sm:$0xff]
      %v377 = vld [vmem:[%s288 + $0x204] sm:$0xf]
      %v378 = vld [vmem:[%s288 + $0x208] sm:$0xff]
      %v379 = vld [vmem:[%s288 + $0x210] sm:$0xff]
      %v380 = vld [vmem:[%s288 + $0x218] sm:$0xf]
      %v381 = vld [vmem:[%s288 + $0x21c] sm:$0xff]
      %v382 = vld [vmem:[%s288 + $0x224] sm:$0xff]
      %v383 = vld [vmem:[%s288 + $0x22c] sm:$0xf]
      %v384 = vld [vmem:[%s288 + $0x230] sm:$0xff]
      %v385 = vld [vmem:[%s288 + $0x238] sm:$0xff]
      %v386 = vld [vmem:[%s288 + $0x240] sm:$0xf]
      %v387 = vld [vmem:[%s288 + $0x244] sm:$0xff]
      %v388 = vld [vmem:[%s288 + $0x24c] sm:$0xff]
      %v389 = vld [vmem:[%s288 + $0x254] sm:$0xf]
      %v390 = vld [vmem:[%s288 + $0x258] sm:$0xff]
      %v391 = vld [vmem:[%s288 + $0x260] sm:$0xff]
      %v392 = vld [vmem:[%s288 + $0x268] sm:$0xf]
      %v393 = vld [vmem:[%s288 + $0x26c] sm:$0xff]
      %v394 = vld [vmem:[%s288 + $0x274] sm:$0xff]
      %v395 = vld [vmem:[%s288 + $0x27c] sm:$0xf]
      %v396 = vld [vmem:[%s1] sm:$0xf]
      %v397 = vld [vmem:[%s1 + $0x4] sm:$0xf]
      %v398 = vld [vmem:[%s1 + $0x8] sm:$0xf]
      %v399 = vld [vmem:[%s1 + $0xc] sm:$0xf]
      %v400 = vld [vmem:[%s1 + $0x10] sm:$0xf]
      %v401 = vld [vmem:[%s1 + $0x14] sm:$0xf]
      %v402 = vld [vmem:[%s1 + $0x18] sm:$0xf]
      %v403 = vld [vmem:[%s1 + $0x1c] sm:$0xf]
      %v404 = vld [vmem:[%s1 + $0x20] sm:$0xf]
      %v405 = vld [vmem:[%s1 + $0x24] sm:$0xf]
      %v406 = vld [vmem:[%s1 + $0x28] sm:$0xf]
      %v407 = vld [vmem:[%s1 + $0x2c] sm:$0xf]
      %v408 = vld [vmem:[%s1 + $0x30] sm:$0xf]
      %v409 = vld [vmem:[%s1 + $0x34] sm:$0xf]
      %v410 = vld [vmem:[%s1 + $0x38] sm:$0xf]
      %v411 = vld [vmem:[%s1 + $0x3c] sm:$0xf]
      %v412 = vld [vmem:[%s1 + $0x40] sm:$0xf]
      %v413 = vld [vmem:[%s1 + $0x44] sm:$0xf]
      %v414 = vld [vmem:[%s1 + $0x48] sm:$0xf]
      %v415 = vld [vmem:[%s1 + $0x4c] sm:$0xf]
      %v416 = vld [vmem:[%s1 + $0x50] sm:$0xf]
      %v417 = vld [vmem:[%s1 + $0x54] sm:$0xf]
      %v418 = vld [vmem:[%s1 + $0x58] sm:$0xf]
      %v419 = vld [vmem:[%s1 + $0x5c] sm:$0xf]
      %v420 = vld [vmem:[%s1 + $0x60] sm:$0xf]
      %v421 = vld [vmem:[%s1 + $0x64] sm:$0xf]
      %v422 = vld [vmem:[%s1 + $0x68] sm:$0xf]
      %v423 = vld [vmem:[%s1 + $0x6c] sm:$0xf]
      %v424 = vld [vmem:[%s1 + $0x70] sm:$0xf]
      %v425 = vld [vmem:[%s1 + $0x74] sm:$0xf]
      %v426 = vld [vmem:[%s1 + $0x78] sm:$0xf]
      %v427 = vld [vmem:[%s1 + $0x7c] sm:$0xf]
      %v428 = vld [vmem:[%s1 + $0x80] sm:$0xf]
      %v429 = vld [vmem:[%s1 + $0x84] sm:$0xf]
      %v430 = vld [vmem:[%s1 + $0x88] sm:$0xf]
      %v431 = vld [vmem:[%s1 + $0x8c] sm:$0xf]
      %v432 = vld [vmem:[%s1 + $0x90] sm:$0xf]
      %v433 = vld [vmem:[%s1 + $0x94] sm:$0xf]
      %v434 = vld [vmem:[%s1 + $0x98] sm:$0xf]
      %v435 = vld [vmem:[%s1 + $0x9c] sm:$0xf]
      %v436 = vld [vmem:[%s1 + $0xa0] sm:$0xf]
      %v437 = vld [vmem:[%s1 + $0xa4] sm:$0xf]
      %v438 = vld [vmem:[%s1 + $0xa8] sm:$0xf]
      %v439 = vld [vmem:[%s1 + $0xac] sm:$0xf]
      %v440 = vld [vmem:[%s1 + $0xb0] sm:$0xf]
      %v441 = vld [vmem:[%s1 + $0xb4] sm:$0xf]
      %v442 = vld [vmem:[%s1 + $0xb8] sm:$0xf]
      %v443 = vld [vmem:[%s1 + $0xbc] sm:$0xf]
      %v444 = vld [vmem:[%s1 + $0xc0] sm:$0xf]
      %v445 = vld [vmem:[%s1 + $0xc4] sm:$0xf]
      %v446 = vld [vmem:[%s1 + $0xc8] sm:$0xf]
      %v447 = vld [vmem:[%s1 + $0xcc] sm:$0xf]
      %v448 = vld [vmem:[%s1 + $0xd0] sm:$0xf]
      %v449 = vld [vmem:[%s1 + $0xd4] sm:$0xf]
      %v450 = vld [vmem:[%s1 + $0xd8] sm:$0xf]
      %v451 = vld [vmem:[%s1 + $0xdc] sm:$0xf]
      %v452 = vld [vmem:[%s1 + $0xe0] sm:$0xf]
      %v453 = vld [vmem:[%s1 + $0xe4] sm:$0xf]
      %v454 = vld [vmem:[%s1 + $0xe8] sm:$0xf]
      %v455 = vld [vmem:[%s1 + $0xec] sm:$0xf]
      %v456 = vld [vmem:[%s1 + $0xf0] sm:$0xf]
      %v457 = vld [vmem:[%s1 + $0xf4] sm:$0xf]
      %v458 = vld [vmem:[%s1 + $0xf8] sm:$0xf]
      %v459 = vld [vmem:[%s1 + $0xfc] sm:$0xf]
      %v460 = vld [vmem:[%s1 + $0x100] sm:$0xf]
      %v461 = vld [vmem:[%s1 + $0x104] sm:$0xf]
      %v462 = vld [vmem:[%s1 + $0x108] sm:$0xf]
      %v463 = vld [vmem:[%s1 + $0x10c] sm:$0xf]
      %v464 = vld [vmem:[%s1 + $0x110] sm:$0xf]
      %v465 = vld [vmem:[%s1 + $0x114] sm:$0xf]
      %v466 = vld [vmem:[%s1 + $0x118] sm:$0xf]
      %v467 = vld [vmem:[%s1 + $0x11c] sm:$0xf]
      %v468 = vld [vmem:[%s2] sm:$0x1]
      %v470 = vlaneseq
      %v471 = vshrl.u32 %v470, 7
      %v472 = vsub.s32 0, %v471
      %v473 = vrot.slane %v468, %v472
      %v571 = vunpack.c.l.b16 %v300
      %v572 = vunpack.c.h.b16 %v300
      %v573 = vunpack.c.l.b16 %v301
      %v574 = vunpack.c.h.b16 %v301
      %v575 = vunpack.c.l.b16 %v302
      %v576 = vunpack.c.l.b16 %v303
      %v577 = vunpack.c.h.b16 %v303
      %v578 = vunpack.c.l.b16 %v304
      %v579 = vunpack.c.h.b16 %v304
      %v580 = vunpack.c.l.b16 %v305
      %v581 = vunpack.c.l.b16 %v306
      %v582 = vunpack.c.h.b16 %v306
      %v583 = vunpack.c.l.b16 %v307
      %v584 = vunpack.c.h.b16 %v307
      %v585 = vunpack.c.l.b16 %v308
      %v586 = vunpack.c.l.b16 %v309
      %v587 = vunpack.c.h.b16 %v309
      %v588 = vunpack.c.l.b16 %v310
      %v589 = vunpack.c.h.b16 %v310
      %v590 = vunpack.c.l.b16 %v311
      %v591 = vunpack.c.l.b16 %v312
      %v592 = vunpack.c.h.b16 %v312
      %v593 = vunpack.c.l.b16 %v313
      %v594 = vunpack.c.h.b16 %v313
      %v595 = vunpack.c.l.b16 %v314
      %v596 = vunpack.c.l.b16 %v315
      %v597 = vunpack.c.h.b16 %v315
      %v598 = vunpack.c.l.b16 %v316
      %v599 = vunpack.c.h.b16 %v316
      %v600 = vunpack.c.l.b16 %v317
      %v601 = vunpack.c.l.b16 %v318
      %v602 = vunpack.c.h.b16 %v318
      %v603 = vunpack.c.l.b16 %v319
      %v604 = vunpack.c.h.b16 %v319
      %v605 = vunpack.c.l.b16 %v320
      %v606 = vunpack.c.l.b16 %v321
      %v607 = vunpack.c.h.b16 %v321
      %v608 = vunpack.c.l.b16 %v322
      %v609 = vunpack.c.h.b16 %v322
      %v610 = vunpack.c.l.b16 %v323
      %v611 = vunpack.c.l.b16 %v324
      %v612 = vunpack.c.h.b16 %v324
      %v613 = vunpack.c.l.b16 %v325
      %v614 = vunpack.c.h.b16 %v325
      %v615 = vunpack.c.l.b16 %v326
      %v616 = vunpack.c.l.b16 %v327
      %v617 = vunpack.c.h.b16 %v327
      %v618 = vunpack.c.l.b16 %v328
      %v619 = vunpack.c.h.b16 %v328
      %v620 = vunpack.c.l.b16 %v329
      %v621 = vunpack.c.l.b16 %v330
      %v622 = vunpack.c.h.b16 %v330
      %v623 = vunpack.c.l.b16 %v331
      %v624 = vunpack.c.h.b16 %v331
      %v625 = vunpack.c.l.b16 %v332
      %v626 = vunpack.c.l.b16 %v333
      %v627 = vunpack.c.h.b16 %v333
      %v628 = vunpack.c.l.b16 %v334
      %v629 = vunpack.c.h.b16 %v334
      %v630 = vunpack.c.l.b16 %v335
      %v631 = vunpack.c.l.b16 %v336
      %v632 = vunpack.c.h.b16 %v336
      %v633 = vunpack.c.l.b16 %v337
      %v634 = vunpack.c.h.b16 %v337
      %v635 = vunpack.c.l.b16 %v338
      %v636 = vunpack.c.l.b16 %v339
      %v637 = vunpack.c.h.b16 %v339
      %v638 = vunpack.c.l.b16 %v340
      %v639 = vunpack.c.h.b16 %v340
      %v640 = vunpack.c.l.b16 %v341
      %v641 = vunpack.c.l.b16 %v342
      %v642 = vunpack.c.h.b16 %v342
      %v643 = vunpack.c.l.b16 %v343
      %v644 = vunpack.c.h.b16 %v343
      %v645 = vunpack.c.l.b16 %v344
      %v646 = vunpack.c.l.b16 %v345
      %v647 = vunpack.c.h.b16 %v345
      %v648 = vunpack.c.l.b16 %v346
      %v649 = vunpack.c.h.b16 %v346
      %v650 = vunpack.c.l.b16 %v347
      %v651 = vunpack.c.l.b16 %v348
      %v652 = vunpack.c.h.b16 %v348
      %v653 = vunpack.c.l.b16 %v349
      %v654 = vunpack.c.h.b16 %v349
      %v655 = vunpack.c.l.b16 %v350
      %v656 = vunpack.c.l.b16 %v351
      %v657 = vunpack.c.h.b16 %v351
      %v658 = vunpack.c.l.b16 %v352
      %v659 = vunpack.c.h.b16 %v352
      %v660 = vunpack.c.l.b16 %v353
      %v661 = vunpack.c.l.b16 %v354
      %v662 = vunpack.c.h.b16 %v354
      %v663 = vunpack.c.l.b16 %v355
      %v664 = vunpack.c.h.b16 %v355
      %v665 = vunpack.c.l.b16 %v356
      %v666 = vunpack.c.l.b16 %v357
      %v667 = vunpack.c.h.b16 %v357
      %v668 = vunpack.c.l.b16 %v358
      %v669 = vunpack.c.h.b16 %v358
      %v670 = vunpack.c.l.b16 %v359
      %v671 = vunpack.c.l.b16 %v360
      %v672 = vunpack.c.h.b16 %v360
      %v673 = vunpack.c.l.b16 %v361
      %v674 = vunpack.c.h.b16 %v361
      %v675 = vunpack.c.l.b16 %v362
      %v676 = vunpack.c.l.b16 %v363
      %v677 = vunpack.c.h.b16 %v363
      %v678 = vunpack.c.l.b16 %v364
      %v679 = vunpack.c.h.b16 %v364
      %v680 = vunpack.c.l.b16 %v365
      %v681 = vunpack.c.l.b16 %v366
      %v682 = vunpack.c.h.b16 %v366
      %v683 = vunpack.c.l.b16 %v367
      %v684 = vunpack.c.h.b16 %v367
      %v685 = vunpack.c.l.b16 %v368
      %v686 = vunpack.c.l.b16 %v369
      %v687 = vunpack.c.h.b16 %v369
      %v688 = vunpack.c.l.b16 %v370
      %v689 = vunpack.c.h.b16 %v370
      %v690 = vunpack.c.l.b16 %v371
      %v691 = vunpack.c.l.b16 %v372
      %v692 = vunpack.c.h.b16 %v372
      %v693 = vunpack.c.l.b16 %v373
      %v694 = vunpack.c.h.b16 %v373
      %v695 = vunpack.c.l.b16 %v374
      %v696 = vunpack.c.l.b16 %v375
      %v697 = vunpack.c.h.b16 %v375
      %v698 = vunpack.c.l.b16 %v376
      %v699 = vunpack.c.h.b16 %v376
      %v700 = vunpack.c.l.b16 %v377
      %v701 = vunpack.c.l.b16 %v378
      %v702 = vunpack.c.h.b16 %v378
      %v703 = vunpack.c.l.b16 %v379
      %v704 = vunpack.c.h.b16 %v379
      %v705 = vunpack.c.l.b16 %v380
      %v706 = vunpack.c.l.b16 %v381
      %v707 = vunpack.c.h.b16 %v381
      %v708 = vunpack.c.l.b16 %v382
      %v709 = vunpack.c.h.b16 %v382
      %v710 = vunpack.c.l.b16 %v383
      %v711 = vunpack.c.l.b16 %v384
      %v712 = vunpack.c.h.b16 %v384
      %v713 = vunpack.c.l.b16 %v385
      %v714 = vunpack.c.h.b16 %v385
      %v715 = vunpack.c.l.b16 %v386
      %v716 = vunpack.c.l.b16 %v387
      %v717 = vunpack.c.h.b16 %v387
      %v718 = vunpack.c.l.b16 %v388
      %v719 = vunpack.c.h.b16 %v388
      %v720 = vunpack.c.l.b16 %v389
      %v721 = vunpack.c.l.b16 %v390
      %v722 = vunpack.c.h.b16 %v390
      %v723 = vunpack.c.l.b16 %v391
      %v724 = vunpack.c.h.b16 %v391
      %v725 = vunpack.c.l.b16 %v392
      %v726 = vunpack.c.l.b16 %v393
      %v727 = vunpack.c.h.b16 %v393
      %v728 = vunpack.c.l.b16 %v394
      %v729 = vunpack.c.h.b16 %v394
      %v730 = vunpack.c.l.b16 %v395
      %v731 = vpack.c.b16 %v576, %v571
      %v732 = vpack.c.b16 %v577, %v572
      %v733 = vpack.c.b16 %v578, %v573
      %v734 = vpack.c.b16 %v579, %v574
      %v735 = vpack.c.b16 %v580, %v575
      %v736 = vpack.c.b16 %v586, %v581
      %v737 = vpack.c.b16 %v587, %v582
      %v738 = vpack.c.b16 %v588, %v583
      %v739 = vpack.c.b16 %v589, %v584
      %v740 = vpack.c.b16 %v590, %v585
      %v741 = vpack.c.b16 %v596, %v591
      %v742 = vpack.c.b16 %v597, %v592
      %v743 = vpack.c.b16 %v598, %v593
      %v744 = vpack.c.b16 %v599, %v594
      %v745 = vpack.c.b16 %v600, %v595
      %v746 = vpack.c.b16 %v606, %v601
      %v747 = vpack.c.b16 %v607, %v602
      %v748 = vpack.c.b16 %v608, %v603
      %v749 = vpack.c.b16 %v609, %v604
      %v750 = vpack.c.b16 %v610, %v605
      %v751 = vpack.c.b16 %v616, %v611
      %v752 = vpack.c.b16 %v617, %v612
      %v753 = vpack.c.b16 %v618, %v613
      %v754 = vpack.c.b16 %v619, %v614
      %v755 = vpack.c.b16 %v620, %v615
      %v756 = vpack.c.b16 %v626, %v621
      %v757 = vpack.c.b16 %v627, %v622
      %v758 = vpack.c.b16 %v628, %v623
      %v759 = vpack.c.b16 %v629, %v624
      %v760 = vpack.c.b16 %v630, %v625
      %v761 = vpack.c.b16 %v636, %v631
      %v762 = vpack.c.b16 %v637, %v632
      %v763 = vpack.c.b16 %v638, %v633
      %v764 = vpack.c.b16 %v639, %v634
      %v765 = vpack.c.b16 %v640, %v635
      %v766 = vpack.c.b16 %v646, %v641
      %v767 = vpack.c.b16 %v647, %v642
      %v768 = vpack.c.b16 %v648, %v643
      %v769 = vpack.c.b16 %v649, %v644
      %v770 = vpack.c.b16 %v650, %v645
      %v771 = vpack.c.b16 %v656, %v651
      %v772 = vpack.c.b16 %v657, %v652
      %v773 = vpack.c.b16 %v658, %v653
      %v774 = vpack.c.b16 %v659, %v654
      %v775 = vpack.c.b16 %v660, %v655
      %v776 = vpack.c.b16 %v666, %v661
      %v777 = vpack.c.b16 %v667, %v662
      %v778 = vpack.c.b16 %v668, %v663
      %v779 = vpack.c.b16 %v669, %v664
      %v780 = vpack.c.b16 %v670, %v665
      %v781 = vpack.c.b16 %v676, %v671
      %v782 = vpack.c.b16 %v677, %v672
      %v783 = vpack.c.b16 %v678, %v673
      %v784 = vpack.c.b16 %v679, %v674
      %v785 = vpack.c.b16 %v680, %v675
      %v786 = vpack.c.b16 %v686, %v681
      %v787 = vpack.c.b16 %v687, %v682
      %v788 = vpack.c.b16 %v688, %v683
      %v789 = vpack.c.b16 %v689, %v684
      %v790 = vpack.c.b16 %v690, %v685
      %v791 = vpack.c.b16 %v696, %v691
      %v792 = vpack.c.b16 %v697, %v692
      %v793 = vpack.c.b16 %v698, %v693
      %v794 = vpack.c.b16 %v699, %v694
      %v795 = vpack.c.b16 %v700, %v695
      %v796 = vpack.c.b16 %v706, %v701
      %v797 = vpack.c.b16 %v707, %v702
      %v798 = vpack.c.b16 %v708, %v703
      %v799 = vpack.c.b16 %v709, %v704
      %v800 = vpack.c.b16 %v710, %v705
      %v801 = vpack.c.b16 %v716, %v711
      %v802 = vpack.c.b16 %v717, %v712
      %v803 = vpack.c.b16 %v718, %v713
      %v804 = vpack.c.b16 %v719, %v714
      %v805 = vpack.c.b16 %v720, %v715
      %v806 = vpack.c.b16 %v726, %v721
      %v807 = vpack.c.b16 %v727, %v722
      %v808 = vpack.c.b16 %v728, %v723
      %v809 = vpack.c.b16 %v729, %v724
      %v810 = vpack.c.b16 %v730, %v725
      %v947 = vunpack.c.l.b16 %v396
      %v948 = vunpack.c.l.b16 %v397
      %v949 = vunpack.c.l.b16 %v398
      %v950 = vunpack.c.l.b16 %v399
      %v951 = vunpack.c.l.b16 %v400
      %v952 = vunpack.c.l.b16 %v401
      %v953 = vunpack.c.l.b16 %v402
      %v954 = vunpack.c.l.b16 %v403
      %v955 = vunpack.c.l.b16 %v404
      %v956 = vunpack.c.l.b16 %v405
      %v957 = vunpack.c.l.b16 %v406
      %v958 = vunpack.c.l.b16 %v407
      %v959 = vunpack.c.l.b16 %v408
      %v960 = vunpack.c.l.b16 %v409
      %v961 = vunpack.c.l.b16 %v410
      %v962 = vunpack.c.l.b16 %v411
      %v963 = vunpack.c.l.b16 %v412
      %v964 = vunpack.c.l.b16 %v413
      %v965 = vunpack.c.l.b16 %v414
      %v966 = vunpack.c.l.b16 %v415
      %v967 = vunpack.c.l.b16 %v416
      %v968 = vunpack.c.l.b16 %v417
      %v969 = vunpack.c.l.b16 %v418
      %v970 = vunpack.c.l.b16 %v419
      %v971 = vunpack.c.l.b16 %v420
      %v972 = vunpack.c.l.b16 %v421
      %v973 = vunpack.c.l.b16 %v422
      %v974 = vunpack.c.l.b16 %v423
      %v975 = vunpack.c.l.b16 %v424
      %v976 = vunpack.c.l.b16 %v425
      %v977 = vunpack.c.l.b16 %v426
      %v978 = vunpack.c.l.b16 %v427
      %v979 = vunpack.c.l.b16 %v428
      %v980 = vunpack.c.l.b16 %v429
      %v981 = vunpack.c.l.b16 %v430
      %v982 = vunpack.c.l.b16 %v431
      %v983 = vunpack.c.l.b16 %v432
      %v984 = vunpack.c.l.b16 %v433
      %v985 = vunpack.c.l.b16 %v434
      %v986 = vunpack.c.l.b16 %v435
      %v987 = vunpack.c.l.b16 %v436
      %v988 = vunpack.c.l.b16 %v437
      %v989 = vunpack.c.l.b16 %v438
      %v990 = vunpack.c.l.b16 %v439
      %v991 = vunpack.c.l.b16 %v440
      %v992 = vunpack.c.l.b16 %v441
      %v993 = vunpack.c.l.b16 %v442
      %v994 = vunpack.c.l.b16 %v443
      %v995 = vunpack.c.l.b16 %v444
      %v996 = vunpack.c.l.b16 %v445
      %v997 = vunpack.c.l.b16 %v446
      %v998 = vunpack.c.l.b16 %v447
      %v999 = vunpack.c.l.b16 %v448
      %v1000 = vunpack.c.l.b16 %v449
      %v1001 = vunpack.c.l.b16 %v450
      %v1002 = vunpack.c.l.b16 %v451
      %v1003 = vunpack.c.l.b16 %v452
      %v1004 = vunpack.c.l.b16 %v453
      %v1005 = vunpack.c.l.b16 %v454
      %v1006 = vunpack.c.l.b16 %v455
      %v1007 = vunpack.c.l.b16 %v456
      %v1008 = vunpack.c.l.b16 %v457
      %v1009 = vunpack.c.l.b16 %v458
      %v1010 = vunpack.c.l.b16 %v459
      %v1011 = vunpack.c.l.b16 %v460
      %v1012 = vunpack.c.l.b16 %v461
      %v1013 = vunpack.c.l.b16 %v462
      %v1014 = vunpack.c.l.b16 %v463
      %v1015 = vunpack.c.l.b16 %v464
      %v1016 = vunpack.c.l.b16 %v465
      %v1017 = vunpack.c.l.b16 %v466
      %v1018 = vunpack.c.l.b16 %v467
      %v1019 = vpack.c.b16 %v948, %v947
      %v1020 = vpack.c.b16 %v950, %v949
      %v1021 = vpack.c.b16 %v952, %v951
      %v1022 = vpack.c.b16 %v954, %v953
      %v1023 = vpack.c.b16 %v956, %v955
      %v1024 = vpack.c.b16 %v958, %v957
      %v1025 = vpack.c.b16 %v960, %v959
      %v1026 = vpack.c.b16 %v962, %v961
      %v1027 = vpack.c.b16 %v964, %v963
      %v1028 = vpack.c.b16 %v966, %v965
      %v1029 = vpack.c.b16 %v968, %v967
      %v1030 = vpack.c.b16 %v970, %v969
      %v1031 = vpack.c.b16 %v972, %v971
      %v1032 = vpack.c.b16 %v974, %v973
      %v1033 = vpack.c.b16 %v976, %v975
      %v1034 = vpack.c.b16 %v978, %v977
      %v1035 = vpack.c.b16 %v980, %v979
      %v1036 = vpack.c.b16 %v982, %v981
      %v1037 = vpack.c.b16 %v984, %v983
      %v1038 = vpack.c.b16 %v986, %v985
      %v1039 = vpack.c.b16 %v988, %v987
      %v1040 = vpack.c.b16 %v990, %v989
      %v1041 = vpack.c.b16 %v992, %v991
      %v1042 = vpack.c.b16 %v994, %v993
      %v1043 = vpack.c.b16 %v996, %v995
      %v1044 = vpack.c.b16 %v998, %v997
      %v1045 = vpack.c.b16 %v1000, %v999
      %v1046 = vpack.c.b16 %v1002, %v1001
      %v1047 = vpack.c.b16 %v1004, %v1003
      %v1048 = vpack.c.b16 %v1006, %v1005
      %v1049 = vpack.c.b16 %v1008, %v1007
      %v1050 = vpack.c.b16 %v1010, %v1009
      %v1051 = vpack.c.b16 %v1012, %v1011
      %v1052 = vpack.c.b16 %v1014, %v1013
      %v1053 = vpack.c.b16 %v1016, %v1015
      %v1054 = vpack.c.b16 %v1018, %v1017
      %vm1091 = vcmask 523264
      %v1093 = vsel %vm1091, %v735, 0
      %v1096 = vsel %vm1091, %v740, 0
      %v1099 = vsel %vm1091, %v745, 0
      %v1102 = vsel %vm1091, %v750, 0
      %v1105 = vsel %vm1091, %v755, 0
      %v1108 = vsel %vm1091, %v760, 0
      %v1111 = vsel %vm1091, %v765, 0
      %v1114 = vsel %vm1091, %v770, 0
      %v1117 = vsel %vm1091, %v775, 0
      %v1120 = vsel %vm1091, %v780, 0
      %v1123 = vsel %vm1091, %v785, 0
      %v1126 = vsel %vm1091, %v790, 0
      %v1129 = vsel %vm1091, %v795, 0
      %v1132 = vsel %vm1091, %v800, 0
      %v1135 = vsel %vm1091, %v805, 0
      %v1138 = vsel %vm1091, %v810, 0
      %1140 = vmatprep.subr.bf16.mxu0 0
      %1141 = vmatpush1.bf16.msra.mxu0 %v1026
      %1142 = vmatprep.subr.bf16.mxu0 0
      %1143 = vmatpush1.bf16.msra.mxu0 %v1025
      %1144 = vmatprep.subr.bf16.mxu0 0
      %1145 = vmatpush1.bf16.msra.mxu0 %v1024
      %1146 = vmatprep.subr.bf16.mxu0 0
      %1147 = vmatpush1.bf16.msra.mxu0 %v1023
      %1148 = vmatprep.subr.bf16.mxu0 0
      %1149 = vmatpush1.bf16.msra.mxu0 %v1022
      %1150 = vmatprep.subr.bf16.mxu0 0
      %1151 = vmatpush1.bf16.msra.mxu0 %v1021
      %1152 = vmatprep.subr.bf16.mxu0 0
      %1153 = vmatpush1.bf16.msra.mxu0 %v1020
      %1154 = vmatprep.subr.bf16.mxu0 0
      %1155 = vmatpush1.bf16.msra.mxu0 %v1019
      %1156 = vmatprep.subr.bf16.mxu0 0
      %1157 = vmatpush2.bf16.msra.mxu0 %v1034
      %1158 = vmatprep.subr.bf16.mxu0 0
      %1159 = vmatpush2.bf16.msra.mxu0 %v1033
      %1160 = vmatprep.subr.bf16.mxu0 0
      %1161 = vmatpush2.bf16.msra.mxu0 %v1032
      %1162 = vmatprep.subr.bf16.mxu0 0
      %1163 = vmatpush2.bf16.msra.mxu0 %v1031
      %1164 = vmatprep.subr.bf16.mxu0 0
      %1165 = vmatpush2.bf16.msra.mxu0 %v1030
      %1166 = vmatprep.subr.bf16.mxu0 0
      %1167 = vmatpush2.bf16.msra.mxu0 %v1029
      %1168 = vmatprep.subr.bf16.mxu0 0
      %1169 = vmatpush2.bf16.msra.mxu0 %v1028
      %1170 = vmatprep.subr.bf16.mxu0 0
      %1171 = vmatpush2.bf16.msra.mxu0 %v1027
      %1172 = vmatprep.mubr.bf16.mxu0 %v732
      %1173 = vmatmul.mubr.bf16.gmra.mxu0 %v731
      %v1174 = vpop.f32.mrf.mxu0
      %v1175 = vadd.f32 %v473, %v1174
      %v1176 = vpop.f32.mrf.mxu0
      %v1177 = vpop.f32.mrf.mxu0
      %v1178 = vadd.f32 %v473, %v1177
      %v1179 = vpop.f32.mrf.mxu0
      %1180 = vmatprep.mubr.bf16.mxu0 %v737
      %1181 = vmatmul.mubr.bf16.gmra.mxu0 %v736
      %v1182 = vpop.f32.mrf.mxu0
      %v1183 = vadd.f32 %v473, %v1182
      %v1184 = vpop.f32.mrf.mxu0
      %v1185 = vpop.f32.mrf.mxu0
      %v1186 = vadd.f32 %v473, %v1185
      %v1187 = vpop.f32.mrf.mxu0
      %1188 = vmatprep.mubr.bf16.mxu0 %v742
      %1189 = vmatmul.mubr.bf16.gmra.mxu0 %v741
      %v1190 = vpop.f32.mrf.mxu0
      %v1191 = vadd.f32 %v473, %v1190
      %v1192 = vpop.f32.mrf.mxu0
      %v1193 = vpop.f32.mrf.mxu0
      %v1194 = vadd.f32 %v473, %v1193
      %v1195 = vpop.f32.mrf.mxu0
      %1196 = vmatprep.mubr.bf16.mxu0 %v747
      %1197 = vmatmul.mubr.bf16.gmra.mxu0 %v746
      %v1198 = vpop.f32.mrf.mxu0
      %v1199 = vadd.f32 %v473, %v1198
      %v1200 = vpop.f32.mrf.mxu0
      %v1201 = vpop.f32.mrf.mxu0
      %v1202 = vadd.f32 %v473, %v1201
      %v1203 = vpop.f32.mrf.mxu0
      %1204 = vmatprep.mubr.bf16.mxu0 %v752
      %1205 = vmatmul.mubr.bf16.gmra.mxu0 %v751
      %v1206 = vpop.f32.mrf.mxu0
      %v1207 = vadd.f32 %v473, %v1206
      %v1208 = vpop.f32.mrf.mxu0
      %v1209 = vpop.f32.mrf.mxu0
      %v1210 = vadd.f32 %v473, %v1209
      %v1211 = vpop.f32.mrf.mxu0
      %1212 = vmatprep.mubr.bf16.mxu0 %v757
      %1213 = vmatmul.mubr.bf16.gmra.mxu0 %v756
      %v1214 = vpop.f32.mrf.mxu0
      %v1215 = vadd.f32 %v473, %v1214
      %v1216 = vpop.f32.mrf.mxu0
      %v1217 = vpop.f32.mrf.mxu0
      %v1218 = vadd.f32 %v473, %v1217
      %v1219 = vpop.f32.mrf.mxu0
      %1220 = vmatprep.mubr.bf16.mxu0 %v762
      %1221 = vmatmul.mubr.bf16.gmra.mxu0 %v761
      %v1222 = vpop.f32.mrf.mxu0
      %v1223 = vadd.f32 %v473, %v1222
      %v1224 = vpop.f32.mrf.mxu0
      %v1225 = vpop.f32.mrf.mxu0
      %v1226 = vadd.f32 %v473, %v1225
      %v1227 = vpop.f32.mrf.mxu0
      %1228 = vmatprep.mubr.bf16.mxu0 %v767
      %1229 = vmatmul.mubr.bf16.gmra.mxu0 %v766
      %v1230 = vpop.f32.mrf.mxu0
      %v1231 = vadd.f32 %v473, %v1230
      %v1232 = vpop.f32.mrf.mxu0
      %v1233 = vpop.f32.mrf.mxu0
      %v1234 = vadd.f32 %v473, %v1233
      %v1235 = vpop.f32.mrf.mxu0
      %1236 = vmatprep.mubr.bf16.mxu0 %v772
      %1237 = vmatmul.mubr.bf16.gmra.mxu0 %v771
      %v1238 = vpop.f32.mrf.mxu0
      %v1239 = vadd.f32 %v473, %v1238
      %v1240 = vpop.f32.mrf.mxu0
      %v1241 = vpop.f32.mrf.mxu0
      %v1242 = vadd.f32 %v473, %v1241
      %v1243 = vpop.f32.mrf.mxu0
      %1244 = vmatprep.mubr.bf16.mxu0 %v777
      %1245 = vmatmul.mubr.bf16.gmra.mxu0 %v776
      %v1246 = vpop.f32.mrf.mxu0
      %v1247 = vadd.f32 %v473, %v1246
      %v1248 = vpop.f32.mrf.mxu0
      %v1249 = vpop.f32.mrf.mxu0
      %v1250 = vadd.f32 %v473, %v1249
      %v1251 = vpop.f32.mrf.mxu0
      %1252 = vmatprep.mubr.bf16.mxu0 %v782
      %1253 = vmatmul.mubr.bf16.gmra.mxu0 %v781
      %v1254 = vpop.f32.mrf.mxu0
      %v1255 = vadd.f32 %v473, %v1254
      %v1256 = vpop.f32.mrf.mxu0
      %v1257 = vpop.f32.mrf.mxu0
      %v1258 = vadd.f32 %v473, %v1257
      %v1259 = vpop.f32.mrf.mxu0
      %1260 = vmatprep.mubr.bf16.mxu0 %v787
      %1261 = vmatmul.mubr.bf16.gmra.mxu0 %v786
      %v1262 = vpop.f32.mrf.mxu0
      %v1263 = vadd.f32 %v473, %v1262
      %v1264 = vpop.f32.mrf.mxu0
      %v1265 = vpop.f32.mrf.mxu0
      %v1266 = vadd.f32 %v473, %v1265
      %v1267 = vpop.f32.mrf.mxu0
      %1268 = vmatprep.mubr.bf16.mxu0 %v792
      %1269 = vmatmul.mubr.bf16.gmra.mxu0 %v791
      %v1270 = vpop.f32.mrf.mxu0
      %v1271 = vadd.f32 %v473, %v1270
      %v1272 = vpop.f32.mrf.mxu0
      %v1273 = vpop.f32.mrf.mxu0
      %v1274 = vadd.f32 %v473, %v1273
      %v1275 = vpop.f32.mrf.mxu0
      %1276 = vmatprep.mubr.bf16.mxu0 %v797
      %1277 = vmatmul.mubr.bf16.gmra.mxu0 %v796
      %v1278 = vpop.f32.mrf.mxu0
      %v1279 = vadd.f32 %v473, %v1278
      %v1280 = vpop.f32.mrf.mxu0
      %v1281 = vpop.f32.mrf.mxu0
      %v1282 = vadd.f32 %v473, %v1281
      %v1283 = vpop.f32.mrf.mxu0
      %1284 = vmatprep.mubr.bf16.mxu0 %v802
      %1285 = vmatmul.mubr.bf16.gmra.mxu0 %v801
      %v1286 = vpop.f32.mrf.mxu0
      %v1287 = vadd.f32 %v473, %v1286
      %v1288 = vpop.f32.mrf.mxu0
      %v1289 = vpop.f32.mrf.mxu0
      %v1290 = vadd.f32 %v473, %v1289
      %v1291 = vpop.f32.mrf.mxu0
      %1292 = vmatprep.mubr.bf16.mxu0 %v807
      %1293 = vmatmul.mubr.bf16.gmra.mxu0 %v806
      %v1294 = vpop.f32.mrf.mxu0
      %v1295 = vadd.f32 %v473, %v1294
      %v1296 = vpop.f32.mrf.mxu0
      %v1297 = vpop.f32.mrf.mxu0
      %v1298 = vadd.f32 %v473, %v1297
      %v1299 = vpop.f32.mrf.mxu0
      %1300 = vdwg.mxu0
      %1301 = vmatprep.subr.bf16.mxu0 0
      %1302 = vmatpush1.bf16.msra.mxu0 %v1042
      %1303 = vmatprep.subr.bf16.mxu0 0
      %1304 = vmatpush1.bf16.msra.mxu0 %v1041
      %1305 = vmatprep.subr.bf16.mxu0 0
      %1306 = vmatpush1.bf16.msra.mxu0 %v1040
      %1307 = vmatprep.subr.bf16.mxu0 0
      %1308 = vmatpush1.bf16.msra.mxu0 %v1039
      %1309 = vmatprep.subr.bf16.mxu0 0
      %1310 = vmatpush1.bf16.msra.mxu0 %v1038
      %1311 = vmatprep.subr.bf16.mxu0 0
      %1312 = vmatpush1.bf16.msra.mxu0 %v1037
      %1313 = vmatprep.subr.bf16.mxu0 0
      %1314 = vmatpush1.bf16.msra.mxu0 %v1036
      %1315 = vmatprep.subr.bf16.mxu0 0
      %1316 = vmatpush1.bf16.msra.mxu0 %v1035
      %1317 = vmatprep.subr.bf16.mxu0 0
      %1318 = vmatpush2.bf16.msra.mxu0 %v1050
      %1319 = vmatprep.subr.bf16.mxu0 0
      %1320 = vmatpush2.bf16.msra.mxu0 %v1049
      %1321 = vmatprep.subr.bf16.mxu0 0
      %1322 = vmatpush2.bf16.msra.mxu0 %v1048
      %1323 = vmatprep.subr.bf16.mxu0 0
      %1324 = vmatpush2.bf16.msra.mxu0 %v1047
      %1325 = vmatprep.subr.bf16.mxu0 0
      %1326 = vmatpush2.bf16.msra.mxu0 %v1046
      %1327 = vmatprep.subr.bf16.mxu0 0
      %1328 = vmatpush2.bf16.msra.mxu0 %v1045
      %1329 = vmatprep.subr.bf16.mxu0 0
      %1330 = vmatpush2.bf16.msra.mxu0 %v1044
      %1331 = vmatprep.subr.bf16.mxu0 0
      %1332 = vmatpush2.bf16.msra.mxu0 %v1043
      %1333 = vmatprep.mubr.bf16.mxu0 %v734
      %1334 = vmatmul.mubr.bf16.gmra.mxu0 %v733
      %v1335 = vpop.f32.mrf.mxu0
      %v1336 = vadd.f32 %v1175, %v1335
      %v1337 = vpop.f32.mrf.mxu0
      %v1338 = vpop.f32.mrf.mxu0
      %v1339 = vadd.f32 %v1178, %v1338
      %v1340 = vpop.f32.mrf.mxu0
      %1341 = vmatprep.mubr.bf16.mxu0 %v739
      %1342 = vmatmul.mubr.bf16.gmra.mxu0 %v738
      %v1343 = vpop.f32.mrf.mxu0
      %v1344 = vadd.f32 %v1183, %v1343
      %v1345 = vpop.f32.mrf.mxu0
      %v1346 = vpop.f32.mrf.mxu0
      %v1347 = vadd.f32 %v1186, %v1346
      %v1348 = vpop.f32.mrf.mxu0
      %1349 = vmatprep.mubr.bf16.mxu0 %v744
      %1350 = vmatmul.mubr.bf16.gmra.mxu0 %v743
      %v1351 = vpop.f32.mrf.mxu0
      %v1352 = vadd.f32 %v1191, %v1351
      %v1353 = vpop.f32.mrf.mxu0
      %v1354 = vpop.f32.mrf.mxu0
      %v1355 = vadd.f32 %v1194, %v1354
      %v1356 = vpop.f32.mrf.mxu0
      %1357 = vmatprep.mubr.bf16.mxu0 %v749
      %1358 = vmatmul.mubr.bf16.gmra.mxu0 %v748
      %v1359 = vpop.f32.mrf.mxu0
      %v1360 = vadd.f32 %v1199, %v1359
      %v1361 = vpop.f32.mrf.mxu0
      %v1362 = vpop.f32.mrf.mxu0
      %v1363 = vadd.f32 %v1202, %v1362
      %v1364 = vpop.f32.mrf.mxu0
      %1365 = vmatprep.mubr.bf16.mxu0 %v754
      %1366 = vmatmul.mubr.bf16.gmra.mxu0 %v753
      %v1367 = vpop.f32.mrf.mxu0
      %v1368 = vadd.f32 %v1207, %v1367
      %v1369 = vpop.f32.mrf.mxu0
      %v1370 = vpop.f32.mrf.mxu0
      %v1371 = vadd.f32 %v1210, %v1370
      %v1372 = vpop.f32.mrf.mxu0
      %1373 = vmatprep.mubr.bf16.mxu0 %v759
      %1374 = vmatmul.mubr.bf16.gmra.mxu0 %v758
      %v1375 = vpop.f32.mrf.mxu0
      %v1376 = vadd.f32 %v1215, %v1375
      %v1377 = vpop.f32.mrf.mxu0
      %v1378 = vpop.f32.mrf.mxu0
      %v1379 = vadd.f32 %v1218, %v1378
      %v1380 = vpop.f32.mrf.mxu0
      %1381 = vmatprep.mubr.bf16.mxu0 %v764
      %1382 = vmatmul.mubr.bf16.gmra.mxu0 %v763
      %v1383 = vpop.f32.mrf.mxu0
      %v1384 = vadd.f32 %v1223, %v1383
      %v1385 = vpop.f32.mrf.mxu0
      %v1386 = vpop.f32.mrf.mxu0
      %v1387 = vadd.f32 %v1226, %v1386
      %v1388 = vpop.f32.mrf.mxu0
      %1389 = vmatprep.mubr.bf16.mxu0 %v769
      %1390 = vmatmul.mubr.bf16.gmra.mxu0 %v768
      %v1391 = vpop.f32.mrf.mxu0
      %v1392 = vadd.f32 %v1231, %v1391
      %v1393 = vpop.f32.mrf.mxu0
      %v1394 = vpop.f32.mrf.mxu0
      %v1395 = vadd.f32 %v1234, %v1394
      %v1396 = vpop.f32.mrf.mxu0
      %1397 = vmatprep.mubr.bf16.mxu0 %v774
      %1398 = vmatmul.mubr.bf16.gmra.mxu0 %v773
      %v1399 = vpop.f32.mrf.mxu0
      %v1400 = vadd.f32 %v1239, %v1399
      %v1401 = vpop.f32.mrf.mxu0
      %v1402 = vpop.f32.mrf.mxu0
      %v1403 = vadd.f32 %v1242, %v1402
      %v1404 = vpop.f32.mrf.mxu0
      %1405 = vmatprep.mubr.bf16.mxu0 %v779
      %1406 = vmatmul.mubr.bf16.gmra.mxu0 %v778
      %v1407 = vpop.f32.mrf.mxu0
      %v1408 = vadd.f32 %v1247, %v1407
      %v1409 = vpop.f32.mrf.mxu0
      %v1410 = vpop.f32.mrf.mxu0
      %v1411 = vadd.f32 %v1250, %v1410
      %v1412 = vpop.f32.mrf.mxu0
      %1413 = vmatprep.mubr.bf16.mxu0 %v784
      %1414 = vmatmul.mubr.bf16.gmra.mxu0 %v783
      %v1415 = vpop.f32.mrf.mxu0
      %v1416 = vadd.f32 %v1255, %v1415
      %v1417 = vpop.f32.mrf.mxu0
      %v1418 = vpop.f32.mrf.mxu0
      %v1419 = vadd.f32 %v1258, %v1418
      %v1420 = vpop.f32.mrf.mxu0
      %1421 = vmatprep.mubr.bf16.mxu0 %v789
      %1422 = vmatmul.mubr.bf16.gmra.mxu0 %v788
      %v1423 = vpop.f32.mrf.mxu0
      %v1424 = vadd.f32 %v1263, %v1423
      %v1425 = vpop.f32.mrf.mxu0
      %v1426 = vpop.f32.mrf.mxu0
      %v1427 = vadd.f32 %v1266, %v1426
      %v1428 = vpop.f32.mrf.mxu0
      %1429 = vmatprep.mubr.bf16.mxu0 %v794
      %1430 = vmatmul.mubr.bf16.gmra.mxu0 %v793
      %v1431 = vpop.f32.mrf.mxu0
      %v1432 = vadd.f32 %v1271, %v1431
      %v1433 = vpop.f32.mrf.mxu0
      %v1434 = vpop.f32.mrf.mxu0
      %v1435 = vadd.f32 %v1274, %v1434
      %v1436 = vpop.f32.mrf.mxu0
      %1437 = vmatprep.mubr.bf16.mxu0 %v799
      %1438 = vmatmul.mubr.bf16.gmra.mxu0 %v798
      %v1439 = vpop.f32.mrf.mxu0
      %v1440 = vadd.f32 %v1279, %v1439
      %v1441 = vpop.f32.mrf.mxu0
      %v1442 = vpop.f32.mrf.mxu0
      %v1443 = vadd.f32 %v1282, %v1442
      %v1444 = vpop.f32.mrf.mxu0
      %1445 = vmatprep.mubr.bf16.mxu0 %v804
      %1446 = vmatmul.mubr.bf16.gmra.mxu0 %v803
      %v1447 = vpop.f32.mrf.mxu0
      %v1448 = vadd.f32 %v1287, %v1447
      %v1449 = vpop.f32.mrf.mxu0
      %v1450 = vpop.f32.mrf.mxu0
      %v1451 = vadd.f32 %v1290, %v1450
      %v1452 = vpop.f32.mrf.mxu0
      %1453 = vmatprep.mubr.bf16.mxu0 %v809
      %1454 = vmatmul.mubr.bf16.gmra.mxu0 %v808
      %v1455 = vpop.f32.mrf.mxu0
      %v1456 = vadd.f32 %v1295, %v1455
      %v1457 = vpop.f32.mrf.mxu0
      %v1458 = vpop.f32.mrf.mxu0
      %v1459 = vadd.f32 %v1298, %v1458
      %v1460 = vpop.f32.mrf.mxu0
      %1461 = vdwg.mxu0
      %1462 = vmatprep.subr.bf16.mxu0 0
      %1463 = vmatpush1.bf16.msra.mxu0 0
      %1464 = vmatprep.subr.bf16.mxu0 0
      %1465 = vmatpush1.bf16.msra.mxu0 0
      %1466 = vmatprep.subr.bf16.mxu0 0
      %1467 = vmatpush1.bf16.msra.mxu0 0
      %1468 = vmatprep.subr.bf16.mxu0 0
      %1469 = vmatpush1.bf16.msra.mxu0 0
      %1470 = vmatprep.subr.bf16.mxu0 0
      %1471 = vmatpush1.bf16.msra.mxu0 %v1054
      %1472 = vmatprep.subr.bf16.mxu0 0
      %1473 = vmatpush1.bf16.msra.mxu0 %v1053
      %1474 = vmatprep.subr.bf16.mxu0 0
      %1475 = vmatpush1.bf16.msra.mxu0 %v1052
      %1476 = vmatprep.subr.bf16.mxu0 0
      %1477 = vmatpush1.bf16.msra.mxu0 %v1051
      %1478 = vmatprep.subr.bf16.mxu0 0
      %1479 = vmatpush2.bf16.msra.mxu0 0
      %1480 = vmatprep.subr.bf16.mxu0 0
      %1481 = vmatpush2.bf16.msra.mxu0 0
      %1482 = vmatprep.subr.bf16.mxu0 0
      %1483 = vmatpush2.bf16.msra.mxu0 0
      %1484 = vmatprep.subr.bf16.mxu0 0
      %1485 = vmatpush2.bf16.msra.mxu0 0
      %1486 = vmatprep.subr.bf16.mxu0 0
      %1487 = vmatpush2.bf16.msra.mxu0 0
      %1488 = vmatprep.subr.bf16.mxu0 0
      %1489 = vmatpush2.bf16.msra.mxu0 0
      %1490 = vmatprep.subr.bf16.mxu0 0
      %1491 = vmatpush2.bf16.msra.mxu0 0
      %1492 = vmatprep.subr.bf16.mxu0 0
      %1493 = vmatpush2.bf16.msra.mxu0 0
      %1494 = vmatprep.mubr.bf16.mxu0 0
      %1495 = vmatmul.mubr.bf16.gmra.mxu0 %v1093
      %v1496 = vpop.f32.mrf.mxu0
      %v1497 = vadd.f32 %v1336, %v1496
      %v1498 = vpop.f32.mrf.mxu0
      %v1499 = vpop.f32.mrf.mxu0
      %v1500 = vadd.f32 %v1339, %v1499
      %v1501 = vpop.f32.mrf.mxu0
      %1502 = vmatprep.mubr.bf16.mxu0 0
      %1503 = vmatmul.mubr.bf16.gmra.mxu0 %v1096
      %v1504 = vpop.f32.mrf.mxu0
      %v1505 = vadd.f32 %v1344, %v1504
      %v1506 = vpop.f32.mrf.mxu0
      %v1507 = vpop.f32.mrf.mxu0
      %v1508 = vadd.f32 %v1347, %v1507
      %v1509 = vpop.f32.mrf.mxu0
      %1510 = vmatprep.mubr.bf16.mxu0 0
      %1511 = vmatmul.mubr.bf16.gmra.mxu0 %v1099
      %v1512 = vpop.f32.mrf.mxu0
      %v1513 = vadd.f32 %v1352, %v1512
      %v1514 = vpop.f32.mrf.mxu0
      %v1515 = vpop.f32.mrf.mxu0
      %v1516 = vadd.f32 %v1355, %v1515
      %v1517 = vpop.f32.mrf.mxu0
      %1518 = vmatprep.mubr.bf16.mxu0 0
      %1519 = vmatmul.mubr.bf16.gmra.mxu0 %v1102
      %v1520 = vpop.f32.mrf.mxu0
      %v1521 = vadd.f32 %v1360, %v1520
      %v1522 = vpop.f32.mrf.mxu0
      %v1523 = vpop.f32.mrf.mxu0
      %v1524 = vadd.f32 %v1363, %v1523
      %v1525 = vpop.f32.mrf.mxu0
      %1526 = vmatprep.mubr.bf16.mxu0 0
      %1527 = vmatmul.mubr.bf16.gmra.mxu0 %v1105
      %v1528 = vpop.f32.mrf.mxu0
      %v1529 = vadd.f32 %v1368, %v1528
      %v1530 = vpop.f32.mrf.mxu0
      %v1531 = vpop.f32.mrf.mxu0
      %v1532 = vadd.f32 %v1371, %v1531
      %v1533 = vpop.f32.mrf.mxu0
      %1534 = vmatprep.mubr.bf16.mxu0 0
      %1535 = vmatmul.mubr.bf16.gmra.mxu0 %v1108
      %v1536 = vpop.f32.mrf.mxu0
      %v1537 = vadd.f32 %v1376, %v1536
      %v1538 = vpop.f32.mrf.mxu0
      %v1539 = vpop.f32.mrf.mxu0
      %v1540 = vadd.f32 %v1379, %v1539
      %v1541 = vpop.f32.mrf.mxu0
      %1542 = vmatprep.mubr.bf16.mxu0 0
      %1543 = vmatmul.mubr.bf16.gmra.mxu0 %v1111
      %v1544 = vpop.f32.mrf.mxu0
      %v1545 = vadd.f32 %v1384, %v1544
      %v1546 = vpop.f32.mrf.mxu0
      %v1547 = vpop.f32.mrf.mxu0
      %v1548 = vadd.f32 %v1387, %v1547
      %v1549 = vpop.f32.mrf.mxu0
      %1550 = vmatprep.mubr.bf16.mxu0 0
      %1551 = vmatmul.mubr.bf16.gmra.mxu0 %v1114
      %v1552 = vpop.f32.mrf.mxu0
      %v1553 = vadd.f32 %v1392, %v1552
      %v1554 = vpop.f32.mrf.mxu0
      %v1555 = vpop.f32.mrf.mxu0
      %v1556 = vadd.f32 %v1395, %v1555
      %v1557 = vpop.f32.mrf.mxu0
      %1558 = vmatprep.mubr.bf16.mxu0 0
      %1559 = vmatmul.mubr.bf16.gmra.mxu0 %v1117
      %v1560 = vpop.f32.mrf.mxu0
      %v1561 = vadd.f32 %v1400, %v1560
      %v1562 = vpop.f32.mrf.mxu0
      %v1563 = vpop.f32.mrf.mxu0
      %v1564 = vadd.f32 %v1403, %v1563
      %v1565 = vpop.f32.mrf.mxu0
      %1566 = vmatprep.mubr.bf16.mxu0 0
      %1567 = vmatmul.mubr.bf16.gmra.mxu0 %v1120
      %v1568 = vpop.f32.mrf.mxu0
      %v1569 = vadd.f32 %v1408, %v1568
      %v1570 = vpop.f32.mrf.mxu0
      %v1571 = vpop.f32.mrf.mxu0
      %v1572 = vadd.f32 %v1411, %v1571
      %v1573 = vpop.f32.mrf.mxu0
      %1574 = vmatprep.mubr.bf16.mxu0 0
      %1575 = vmatmul.mubr.bf16.gmra.mxu0 %v1123
      %v1576 = vpop.f32.mrf.mxu0
      %v1577 = vadd.f32 %v1416, %v1576
      %v1578 = vpop.f32.mrf.mxu0
      %v1579 = vpop.f32.mrf.mxu0
      %v1580 = vadd.f32 %v1419, %v1579
      %v1581 = vpop.f32.mrf.mxu0
      %1582 = vmatprep.mubr.bf16.mxu0 0
      %1583 = vmatmul.mubr.bf16.gmra.mxu0 %v1126
      %v1584 = vpop.f32.mrf.mxu0
      %v1585 = vadd.f32 %v1424, %v1584
      %v1586 = vpop.f32.mrf.mxu0
      %v1587 = vpop.f32.mrf.mxu0
      %v1588 = vadd.f32 %v1427, %v1587
      %v1589 = vpop.f32.mrf.mxu0
      %1590 = vmatprep.mubr.bf16.mxu0 0
      %1591 = vmatmul.mubr.bf16.gmra.mxu0 %v1129
      %v1592 = vpop.f32.mrf.mxu0
      %v1593 = vadd.f32 %v1432, %v1592
      %v1594 = vpop.f32.mrf.mxu0
      %v1595 = vpop.f32.mrf.mxu0
      %v1596 = vadd.f32 %v1435, %v1595
      %v1597 = vpop.f32.mrf.mxu0
      %1598 = vmatprep.mubr.bf16.mxu0 0
      %1599 = vmatmul.mubr.bf16.gmra.mxu0 %v1132
      %v1600 = vpop.f32.mrf.mxu0
      %v1601 = vadd.f32 %v1440, %v1600
      %v1602 = vpop.f32.mrf.mxu0
      %v1603 = vpop.f32.mrf.mxu0
      %v1604 = vadd.f32 %v1443, %v1603
      %v1605 = vpop.f32.mrf.mxu0
      %1606 = vmatprep.mubr.bf16.mxu0 0
      %1607 = vmatmul.mubr.bf16.gmra.mxu0 %v1135
      %v1608 = vpop.f32.mrf.mxu0
      %v1609 = vadd.f32 %v1448, %v1608
      %v1610 = vpop.f32.mrf.mxu0
      %v1611 = vpop.f32.mrf.mxu0
      %v1612 = vadd.f32 %v1451, %v1611
      %v1613 = vpop.f32.mrf.mxu0
      %1614 = vmatprep.mubr.bf16.mxu0 0
      %1615 = vmatmul.mubr.bf16.gmra.mxu0 %v1138
      %v1616 = vpop.f32.mrf.mxu0
      %v1617 = vadd.f32 %v1456, %v1616
      %v1618 = vpop.f32.mrf.mxu0
      %v1619 = vpop.f32.mrf.mxu0
      %v1620 = vadd.f32 %v1459, %v1619
      %v1621 = vpop.f32.mrf.mxu0
      %1622 = vdwg.mxu0
      %v1623 = vsel %vm1091, %v1497, 0.0
      %v1624 = vsel %vm1091, %v1500, 0.0
      %v1625 = vadd.f32 %v1623, %v1624
      %v1626 = vsel %vm1091, %v1505, 0.0
      %v1627 = vadd.f32 %v1625, %v1626
      %v1628 = vsel %vm1091, %v1508, 0.0
      %v1629 = vadd.f32 %v1627, %v1628
      %v1630 = vsel %vm1091, %v1513, 0.0
      %v1631 = vadd.f32 %v1629, %v1630
      %v1632 = vsel %vm1091, %v1516, 0.0
      %v1633 = vadd.f32 %v1631, %v1632
      %v1634 = vsel %vm1091, %v1521, 0.0
      %v1635 = vadd.f32 %v1633, %v1634
      %v1636 = vsel %vm1091, %v1524, 0.0
      %v1637 = vadd.f32 %v1635, %v1636
      %v1638 = vsel %vm1091, %v1529, 0.0
      %v1639 = vadd.f32 %v1637, %v1638
      %v1640 = vsel %vm1091, %v1532, 0.0
      %v1641 = vadd.f32 %v1639, %v1640
      %v1642 = vsel %vm1091, %v1537, 0.0
      %v1643 = vadd.f32 %v1641, %v1642
      %v1644 = vsel %vm1091, %v1540, 0.0
      %v1645 = vadd.f32 %v1643, %v1644
      %v1646 = vsel %vm1091, %v1545, 0.0
      %v1647 = vadd.f32 %v1645, %v1646
      %v1648 = vsel %vm1091, %v1548, 0.0
      %v1649 = vadd.f32 %v1647, %v1648
      %v1650 = vsel %vm1091, %v1553, 0.0
      %v1651 = vadd.f32 %v1649, %v1650
      %v1652 = vsel %vm1091, %v1556, 0.0
      %v1653 = vadd.f32 %v1651, %v1652
      %v1654 = vsel %vm1091, %v1561, 0.0
      %v1655 = vadd.f32 %v1653, %v1654
      %v1656 = vsel %vm1091, %v1564, 0.0
      %v1657 = vadd.f32 %v1655, %v1656
      %v1658 = vsel %vm1091, %v1569, 0.0
      %v1659 = vadd.f32 %v1657, %v1658
      %v1660 = vsel %vm1091, %v1572, 0.0
      %v1661 = vadd.f32 %v1659, %v1660
      %v1662 = vsel %vm1091, %v1577, 0.0
      %v1663 = vadd.f32 %v1661, %v1662
      %v1664 = vsel %vm1091, %v1580, 0.0
      %v1665 = vadd.f32 %v1663, %v1664
      %v1666 = vsel %vm1091, %v1585, 0.0
      %v1667 = vadd.f32 %v1665, %v1666
      %v1668 = vsel %vm1091, %v1588, 0.0
      %v1669 = vadd.f32 %v1667, %v1668
      %v1670 = vsel %vm1091, %v1593, 0.0
      %v1671 = vadd.f32 %v1669, %v1670
      %v1672 = vsel %vm1091, %v1596, 0.0
      %v1673 = vadd.f32 %v1671, %v1672
      %v1674 = vsel %vm1091, %v1601, 0.0
      %v1675 = vadd.f32 %v1673, %v1674
      %v1676 = vsel %vm1091, %v1604, 0.0
      %v1677 = vadd.f32 %v1675, %v1676
      %v1678 = vsel %vm1091, %v1609, 0.0
      %v1679 = vadd.f32 %v1677, %v1678
      %v1680 = vsel %vm1091, %v1612, 0.0
      %v1681 = vadd.f32 %v1679, %v1680
      %v1682 = vsel %vm1091, %v1617, 0.0
      %v1683 = vadd.f32 %v1681, %v1682
      %v1684 = vsel %vm1091, %v1620, 0.0
      %v1685 = vadd.f32 %v1683, %v1684
      %v1686 = vrot.slane %v1685, 4
      %v1687 = vadd.f32 %v1685, %v1686
      %v1688 = vrot.slane %v1687, 2
      %v1689 = vadd.f32 %v1687, %v1688
      %v1690 = vrot.slane %v1689, 1
      %v1691 = vadd.f32 %v1689, %v1690
      %v1692 = vmul.f32 %v1691, 0.00390625
      %v1693 = vmul.f32 %v1497, %v1497
      %v1694 = vmul.f32 %v1500, %v1500
      %v1695 = vmul.f32 %v1505, %v1505
      %v1696 = vmul.f32 %v1508, %v1508
      %v1697 = vmul.f32 %v1513, %v1513
      %v1698 = vmul.f32 %v1516, %v1516
      %v1699 = vmul.f32 %v1521, %v1521
      %v1700 = vmul.f32 %v1524, %v1524
      %v1701 = vmul.f32 %v1529, %v1529
      %v1702 = vmul.f32 %v1532, %v1532
      %v1703 = vmul.f32 %v1537, %v1537
      %v1704 = vmul.f32 %v1540, %v1540
      %v1705 = vmul.f32 %v1545, %v1545
      %v1706 = vmul.f32 %v1548, %v1548
      %v1707 = vmul.f32 %v1553, %v1553
      %v1708 = vmul.f32 %v1556, %v1556
      %v1709 = vmul.f32 %v1561, %v1561
      %v1710 = vmul.f32 %v1564, %v1564
      %v1711 = vmul.f32 %v1569, %v1569
      %v1712 = vmul.f32 %v1572, %v1572
      %v1713 = vmul.f32 %v1577, %v1577
      %v1714 = vmul.f32 %v1580, %v1580
      %v1715 = vmul.f32 %v1585, %v1585
      %v1716 = vmul.f32 %v1588, %v1588
      %v1717 = vmul.f32 %v1593, %v1593
      %v1718 = vmul.f32 %v1596, %v1596
      %v1719 = vmul.f32 %v1601, %v1601
      %v1720 = vmul.f32 %v1604, %v1604
      %v1721 = vmul.f32 %v1609, %v1609
      %v1722 = vmul.f32 %v1612, %v1612
      %v1723 = vmul.f32 %v1617, %v1617
      %v1724 = vmul.f32 %v1620, %v1620
      %v1725 = vsel %vm1091, %v1693, 0.0
      %v1726 = vsel %vm1091, %v1694, 0.0
      %v1727 = vadd.f32 %v1725, %v1726
      %v1728 = vsel %vm1091, %v1695, 0.0
      %v1729 = vadd.f32 %v1727, %v1728
      %v1730 = vsel %vm1091, %v1696, 0.0
      %v1731 = vadd.f32 %v1729, %v1730
      %v1732 = vsel %vm1091, %v1697, 0.0
      %v1733 = vadd.f32 %v1731, %v1732
      %v1734 = vsel %vm1091, %v1698, 0.0
      %v1735 = vadd.f32 %v1733, %v1734
      %v1736 = vsel %vm1091, %v1699, 0.0
      %v1737 = vadd.f32 %v1735, %v1736
      %v1738 = vsel %vm1091, %v1700, 0.0
      %v1739 = vadd.f32 %v1737, %v1738
      %v1740 = vsel %vm1091, %v1701, 0.0
      %v1741 = vadd.f32 %v1739, %v1740
      %v1742 = vsel %vm1091, %v1702, 0.0
      %v1743 = vadd.f32 %v1741, %v1742
      %v1744 = vsel %vm1091, %v1703, 0.0
      %v1745 = vadd.f32 %v1743, %v1744
      %v1746 = vsel %vm1091, %v1704, 0.0
      %v1747 = vadd.f32 %v1745, %v1746
      %v1748 = vsel %vm1091, %v1705, 0.0
      %v1749 = vadd.f32 %v1747, %v1748
      %v1750 = vsel %vm1091, %v1706, 0.0
      %v1751 = vadd.f32 %v1749, %v1750
      %v1752 = vsel %vm1091, %v1707, 0.0
      %v1753 = vadd.f32 %v1751, %v1752
      %v1754 = vsel %vm1091, %v1708, 0.0
      %v1755 = vadd.f32 %v1753, %v1754
      %v1756 = vsel %vm1091, %v1709, 0.0
      %v1757 = vadd.f32 %v1755, %v1756
      %v1758 = vsel %vm1091, %v1710, 0.0
      %v1759 = vadd.f32 %v1757, %v1758
      %v1760 = vsel %vm1091, %v1711, 0.0
      %v1761 = vadd.f32 %v1759, %v1760
      %v1762 = vsel %vm1091, %v1712, 0.0
      %v1763 = vadd.f32 %v1761, %v1762
      %v1764 = vsel %vm1091, %v1713, 0.0
      %v1765 = vadd.f32 %v1763, %v1764
      %v1766 = vsel %vm1091, %v1714, 0.0
      %v1767 = vadd.f32 %v1765, %v1766
      %v1768 = vsel %vm1091, %v1715, 0.0
      %v1769 = vadd.f32 %v1767, %v1768
      %v1770 = vsel %vm1091, %v1716, 0.0
      %v1771 = vadd.f32 %v1769, %v1770
      %v1772 = vsel %vm1091, %v1717, 0.0
      %v1773 = vadd.f32 %v1771, %v1772
      %v1774 = vsel %vm1091, %v1718, 0.0
      %v1775 = vadd.f32 %v1773, %v1774
      %v1776 = vsel %vm1091, %v1719, 0.0
      %v1777 = vadd.f32 %v1775, %v1776
      %v1778 = vsel %vm1091, %v1720, 0.0
      %v1779 = vadd.f32 %v1777, %v1778
      %v1780 = vsel %vm1091, %v1721, 0.0
      %v1781 = vadd.f32 %v1779, %v1780
      %v1782 = vsel %vm1091, %v1722, 0.0
      %v1783 = vadd.f32 %v1781, %v1782
      %v1784 = vsel %vm1091, %v1723, 0.0
      %v1785 = vadd.f32 %v1783, %v1784
      %v1786 = vsel %vm1091, %v1724, 0.0
      %v1787 = vadd.f32 %v1785, %v1786
      %v1788 = vrot.slane %v1787, 4
      %v1789 = vadd.f32 %v1787, %v1788
      %v1790 = vrot.slane %v1789, 2
      %v1791 = vadd.f32 %v1789, %v1790
      %v1792 = vrot.slane %v1791, 1
      %v1793 = vadd.f32 %v1791, %v1792
      %v1794 = vmul.f32 %v1793, 0.00390625
      %v1795 = vmul.f32 %v1692, %v1692
      %v1796 = vsub.f32 %v1794, %v1795
      %v1797 = vmax.f32 %v1796, 0.0
      %v1798 = vsub.f32 %v1497, %v1692
      %v1799 = vsub.f32 %v1500, %v1692
      %v1800 = vsub.f32 %v1505, %v1692
      %v1801 = vsub.f32 %v1508, %v1692
      %v1802 = vsub.f32 %v1513, %v1692
      %v1803 = vsub.f32 %v1516, %v1692
      %v1804 = vsub.f32 %v1521, %v1692
      %v1805 = vsub.f32 %v1524, %v1692
      %v1806 = vsub.f32 %v1529, %v1692
      %v1807 = vsub.f32 %v1532, %v1692
      %v1808 = vsub.f32 %v1537, %v1692
      %v1809 = vsub.f32 %v1540, %v1692
      %v1810 = vsub.f32 %v1545, %v1692
      %v1811 = vsub.f32 %v1548, %v1692
      %v1812 = vsub.f32 %v1553, %v1692
      %v1813 = vsub.f32 %v1556, %v1692
      %v1814 = vsub.f32 %v1561, %v1692
      %v1815 = vsub.f32 %v1564, %v1692
      %v1816 = vsub.f32 %v1569, %v1692
      %v1817 = vsub.f32 %v1572, %v1692
      %v1818 = vsub.f32 %v1577, %v1692
      %v1819 = vsub.f32 %v1580, %v1692
      %v1820 = vsub.f32 %v1585, %v1692
      %v1821 = vsub.f32 %v1588, %v1692
      %v1822 = vsub.f32 %v1593, %v1692
      %v1823 = vsub.f32 %v1596, %v1692
      %v1824 = vsub.f32 %v1601, %v1692
      %v1825 = vsub.f32 %v1604, %v1692
      %v1826 = vsub.f32 %v1609, %v1692
      %v1827 = vsub.f32 %v1612, %v1692
      %v1828 = vsub.f32 %v1617, %v1692
      %v1829 = vsub.f32 %v1620, %v1692
      %v1830 = vadd.f32 %v1797, 1e-05
      %v1831 = vrsqrt.pop %v1830
      %v1832 = vmul.f32 %v1798, %v1831
      %v1833 = vmul.f32 %v1799, %v1831
      %v1834 = vmul.f32 %v1800, %v1831
      %v1835 = vmul.f32 %v1801, %v1831
      %v1836 = vmul.f32 %v1802, %v1831
      %v1837 = vmul.f32 %v1803, %v1831
      %v1838 = vmul.f32 %v1804, %v1831
      %v1839 = vmul.f32 %v1805, %v1831
      %v1840 = vmul.f32 %v1806, %v1831
      %v1841 = vmul.f32 %v1807, %v1831
      %v1842 = vmul.f32 %v1808, %v1831
      %v1843 = vmul.f32 %v1809, %v1831
      %v1844 = vmul.f32 %v1810, %v1831
      %v1845 = vmul.f32 %v1811, %v1831
      %v1846 = vmul.f32 %v1812, %v1831
      %v1847 = vmul.f32 %v1813, %v1831
      %v1848 = vmul.f32 %v1814, %v1831
      %v1849 = vmul.f32 %v1815, %v1831
      %v1850 = vmul.f32 %v1816, %v1831
      %v1851 = vmul.f32 %v1817, %v1831
      %v1852 = vmul.f32 %v1818, %v1831
      %v1853 = vmul.f32 %v1819, %v1831
      %v1854 = vmul.f32 %v1820, %v1831
      %v1855 = vmul.f32 %v1821, %v1831
      %v1856 = vmul.f32 %v1822, %v1831
      %v1857 = vmul.f32 %v1823, %v1831
      %v1858 = vmul.f32 %v1824, %v1831
      %v1859 = vmul.f32 %v1825, %v1831
      %v1860 = vmul.f32 %v1826, %v1831
      %v1861 = vmul.f32 %v1827, %v1831
      %v1862 = vmul.f32 %v1828, %v1831
      %v1863 = vmul.f32 %v1829, %v1831
      %v1864 = vld [vmem:[%s3] sm:$0x1]
      %v1866 = vlaneseq
      %v1867 = vshrl.u32 %v1866, 7
      %v1868 = vsub.s32 0, %v1867
      %v1869 = vrot.slane %v1864, %v1868
      %v1871 = vmul.f32 %v1832, %v1869
      %v1872 = vmul.f32 %v1833, %v1869
      %v1873 = vmul.f32 %v1834, %v1869
      %v1874 = vmul.f32 %v1835, %v1869
      %v1875 = vmul.f32 %v1836, %v1869
      %v1876 = vmul.f32 %v1837, %v1869
      %v1877 = vmul.f32 %v1838, %v1869
      %v1878 = vmul.f32 %v1839, %v1869
      %v1879 = vmul.f32 %v1840, %v1869
      %v1880 = vmul.f32 %v1841, %v1869
      %v1881 = vmul.f32 %v1842, %v1869
      %v1882 = vmul.f32 %v1843, %v1869
      %v1883 = vmul.f32 %v1844, %v1869
      %v1884 = vmul.f32 %v1845, %v1869
      %v1885 = vmul.f32 %v1846, %v1869
      %v1886 = vmul.f32 %v1847, %v1869
      %v1887 = vmul.f32 %v1848, %v1869
      %v1888 = vmul.f32 %v1849, %v1869
      %v1889 = vmul.f32 %v1850, %v1869
      %v1890 = vmul.f32 %v1851, %v1869
      %v1891 = vmul.f32 %v1852, %v1869
      %v1892 = vmul.f32 %v1853, %v1869
      %v1893 = vmul.f32 %v1854, %v1869
      %v1894 = vmul.f32 %v1855, %v1869
      %v1895 = vmul.f32 %v1856, %v1869
      %v1896 = vmul.f32 %v1857, %v1869
      %v1897 = vmul.f32 %v1858, %v1869
      %v1898 = vmul.f32 %v1859, %v1869
      %v1899 = vmul.f32 %v1860, %v1869
      %v1900 = vmul.f32 %v1861, %v1869
      %v1901 = vmul.f32 %v1862, %v1869
      %v1902 = vmul.f32 %v1863, %v1869
      %v1903 = vld [vmem:[%s4] sm:$0x1]
      %v1905 = vlaneseq
      %v1906 = vshrl.u32 %v1905, 7
      %v1907 = vsub.s32 0, %v1906
      %v1908 = vrot.slane %v1903, %v1907
      %v1910 = vadd.f32 %v1871, %v1908
      %v1911 = vadd.f32 %v1872, %v1908
      %v1912 = vadd.f32 %v1873, %v1908
      %v1913 = vadd.f32 %v1874, %v1908
      %v1914 = vadd.f32 %v1875, %v1908
      %v1915 = vadd.f32 %v1876, %v1908
      %v1916 = vadd.f32 %v1877, %v1908
      %v1917 = vadd.f32 %v1878, %v1908
      %v1918 = vadd.f32 %v1879, %v1908
      %v1919 = vadd.f32 %v1880, %v1908
      %v1920 = vadd.f32 %v1881, %v1908
      %v1921 = vadd.f32 %v1882, %v1908
      %v1922 = vadd.f32 %v1883, %v1908
      %v1923 = vadd.f32 %v1884, %v1908
      %v1924 = vadd.f32 %v1885, %v1908
      %v1925 = vadd.f32 %v1886, %v1908
      %v1926 = vadd.f32 %v1887, %v1908
      %v1927 = vadd.f32 %v1888, %v1908
      %v1928 = vadd.f32 %v1889, %v1908
      %v1929 = vadd.f32 %v1890, %v1908
      %v1930 = vadd.f32 %v1891, %v1908
      %v1931 = vadd.f32 %v1892, %v1908
      %v1932 = vadd.f32 %v1893, %v1908
      %v1933 = vadd.f32 %v1894, %v1908
      %v1934 = vadd.f32 %v1895, %v1908
      %v1935 = vadd.f32 %v1896, %v1908
      %v1936 = vadd.f32 %v1897, %v1908
      %v1937 = vadd.f32 %v1898, %v1908
      %v1938 = vadd.f32 %v1899, %v1908
      %v1939 = vadd.f32 %v1900, %v1908
      %v1940 = vadd.f32 %v1901, %v1908
      %v1941 = vadd.f32 %v1902, %v1908
      %v1942 = vld [vmem:[%s293] sm:$0xf]
      %v1943 = vld [vmem:[%s293 + $0x4] sm:$0xf]
      %v1944 = vld [vmem:[%s293 + $0x8] sm:$0xf]
      %v1945 = vld [vmem:[%s293 + $0xc] sm:$0xf]
      %v1946 = vld [vmem:[%s293 + $0x10] sm:$0xf]
      %v1947 = vld [vmem:[%s293 + $0x14] sm:$0xf]
      %v1948 = vld [vmem:[%s293 + $0x18] sm:$0xf]
      %v1949 = vld [vmem:[%s293 + $0x1c] sm:$0xf]
      %v1950 = vld [vmem:[%s293 + $0x20] sm:$0xf]
      %v1951 = vld [vmem:[%s293 + $0x24] sm:$0xf]
      %v1952 = vld [vmem:[%s293 + $0x28] sm:$0xf]
      %v1953 = vld [vmem:[%s293 + $0x2c] sm:$0xf]
      %v1954 = vld [vmem:[%s293 + $0x30] sm:$0xf]
      %v1955 = vld [vmem:[%s293 + $0x34] sm:$0xf]
      %v1956 = vld [vmem:[%s293 + $0x38] sm:$0xf]
      %v1957 = vld [vmem:[%s293 + $0x3c] sm:$0xf]
      %v1958 = vld [vmem:[%s293 + $0x40] sm:$0xf]
      %v1959 = vld [vmem:[%s293 + $0x44] sm:$0xf]
      %v1960 = vld [vmem:[%s293 + $0x48] sm:$0xf]
      %v1961 = vld [vmem:[%s293 + $0x4c] sm:$0xf]
      %v1962 = vld [vmem:[%s293 + $0x50] sm:$0xf]
      %v1963 = vld [vmem:[%s293 + $0x54] sm:$0xf]
      %v1964 = vld [vmem:[%s293 + $0x58] sm:$0xf]
      %v1965 = vld [vmem:[%s293 + $0x5c] sm:$0xf]
      %v1966 = vld [vmem:[%s293 + $0x60] sm:$0xf]
      %v1967 = vld [vmem:[%s293 + $0x64] sm:$0xf]
      %v1968 = vld [vmem:[%s293 + $0x68] sm:$0xf]
      %v1969 = vld [vmem:[%s293 + $0x6c] sm:$0xf]
      %v1970 = vld [vmem:[%s293 + $0x70] sm:$0xf]
      %v1971 = vld [vmem:[%s293 + $0x74] sm:$0xf]
      %v1972 = vld [vmem:[%s293 + $0x78] sm:$0xf]
      %v1973 = vld [vmem:[%s293 + $0x7c] sm:$0xf]
      %v1974 = vunpack.c.l.bf16 %v1942
      %v1975 = vunpack.c.l.bf16 %v1943
      %v1976 = vunpack.c.l.bf16 %v1944
      %v1977 = vunpack.c.l.bf16 %v1945
      %v1978 = vunpack.c.l.bf16 %v1946
      %v1979 = vunpack.c.l.bf16 %v1947
      %v1980 = vunpack.c.l.bf16 %v1948
      %v1981 = vunpack.c.l.bf16 %v1949
      %v1982 = vunpack.c.l.bf16 %v1950
      %v1983 = vunpack.c.l.bf16 %v1951
      %v1984 = vunpack.c.l.bf16 %v1952
      %v1985 = vunpack.c.l.bf16 %v1953
      %v1986 = vunpack.c.l.bf16 %v1954
      %v1987 = vunpack.c.l.bf16 %v1955
      %v1988 = vunpack.c.l.bf16 %v1956
      %v1989 = vunpack.c.l.bf16 %v1957
      %v1990 = vunpack.c.l.bf16 %v1958
      %v1991 = vunpack.c.l.bf16 %v1959
      %v1992 = vunpack.c.l.bf16 %v1960
      %v1993 = vunpack.c.l.bf16 %v1961
      %v1994 = vunpack.c.l.bf16 %v1962
      %v1995 = vunpack.c.l.bf16 %v1963
      %v1996 = vunpack.c.l.bf16 %v1964
      %v1997 = vunpack.c.l.bf16 %v1965
      %v1998 = vunpack.c.l.bf16 %v1966
      %v1999 = vunpack.c.l.bf16 %v1967
      %v2000 = vunpack.c.l.bf16 %v1968
      %v2001 = vunpack.c.l.bf16 %v1969
      %v2002 = vunpack.c.l.bf16 %v1970
      %v2003 = vunpack.c.l.bf16 %v1971
      %v2004 = vunpack.c.l.bf16 %v1972
      %v2005 = vunpack.c.l.bf16 %v1973
      %v2006 = vadd.f32 %v1910, %v1974
      %v2007 = vadd.f32 %v1911, %v1975
      %v2008 = vadd.f32 %v1912, %v1976
      %v2009 = vadd.f32 %v1913, %v1977
      %v2010 = vadd.f32 %v1914, %v1978
      %v2011 = vadd.f32 %v1915, %v1979
      %v2012 = vadd.f32 %v1916, %v1980
      %v2013 = vadd.f32 %v1917, %v1981
      %v2014 = vadd.f32 %v1918, %v1982
      %v2015 = vadd.f32 %v1919, %v1983
      %v2016 = vadd.f32 %v1920, %v1984
      %v2017 = vadd.f32 %v1921, %v1985
      %v2018 = vadd.f32 %v1922, %v1986
      %v2019 = vadd.f32 %v1923, %v1987
      %v2020 = vadd.f32 %v1924, %v1988
      %v2021 = vadd.f32 %v1925, %v1989
      %v2022 = vadd.f32 %v1926, %v1990
      %v2023 = vadd.f32 %v1927, %v1991
      %v2024 = vadd.f32 %v1928, %v1992
      %v2025 = vadd.f32 %v1929, %v1993
      %v2026 = vadd.f32 %v1930, %v1994
      %v2027 = vadd.f32 %v1931, %v1995
      %v2028 = vadd.f32 %v1932, %v1996
      %v2029 = vadd.f32 %v1933, %v1997
      %v2030 = vadd.f32 %v1934, %v1998
      %v2031 = vadd.f32 %v1935, %v1999
      %v2032 = vadd.f32 %v1936, %v2000
      %v2033 = vadd.f32 %v1937, %v2001
      %v2034 = vadd.f32 %v1938, %v2002
      %v2035 = vadd.f32 %v1939, %v2003
      %v2036 = vadd.f32 %v1940, %v2004
      %v2037 = vadd.f32 %v1941, %v2005
      %v2038 = vmax.f32 %v2006, 0.0
      %v2039 = vmax.f32 %v2007, 0.0
      %v2040 = vmax.f32 %v2008, 0.0
      %v2041 = vmax.f32 %v2009, 0.0
      %v2042 = vmax.f32 %v2010, 0.0
      %v2043 = vmax.f32 %v2011, 0.0
      %v2044 = vmax.f32 %v2012, 0.0
      %v2045 = vmax.f32 %v2013, 0.0
      %v2046 = vmax.f32 %v2014, 0.0
      %v2047 = vmax.f32 %v2015, 0.0
      %v2048 = vmax.f32 %v2016, 0.0
      %v2049 = vmax.f32 %v2017, 0.0
      %v2050 = vmax.f32 %v2018, 0.0
      %v2051 = vmax.f32 %v2019, 0.0
      %v2052 = vmax.f32 %v2020, 0.0
      %v2053 = vmax.f32 %v2021, 0.0
      %v2054 = vmax.f32 %v2022, 0.0
      %v2055 = vmax.f32 %v2023, 0.0
      %v2056 = vmax.f32 %v2024, 0.0
      %v2057 = vmax.f32 %v2025, 0.0
      %v2058 = vmax.f32 %v2026, 0.0
      %v2059 = vmax.f32 %v2027, 0.0
      %v2060 = vmax.f32 %v2028, 0.0
      %v2061 = vmax.f32 %v2029, 0.0
      %v2062 = vmax.f32 %v2030, 0.0
      %v2063 = vmax.f32 %v2031, 0.0
      %v2064 = vmax.f32 %v2032, 0.0
      %v2065 = vmax.f32 %v2033, 0.0
      %v2066 = vmax.f32 %v2034, 0.0
      %v2067 = vmax.f32 %v2035, 0.0
      %v2068 = vmax.f32 %v2036, 0.0
      %v2069 = vmax.f32 %v2037, 0.0
      %v2070 = vpack.c.bf16 %v2039, %v2038
      %v2071 = vpack.c.bf16 %v2041, %v2040
      %v2072 = vpack.c.bf16 %v2043, %v2042
      %v2073 = vpack.c.bf16 %v2045, %v2044
      %v2074 = vpack.c.bf16 %v2047, %v2046
      %v2075 = vpack.c.bf16 %v2049, %v2048
      %v2076 = vpack.c.bf16 %v2051, %v2050
      %v2077 = vpack.c.bf16 %v2053, %v2052
      %v2078 = vpack.c.bf16 %v2055, %v2054
      %v2079 = vpack.c.bf16 %v2057, %v2056
      %v2080 = vpack.c.bf16 %v2059, %v2058
      %v2081 = vpack.c.bf16 %v2061, %v2060
      %v2082 = vpack.c.bf16 %v2063, %v2062
      %v2083 = vpack.c.bf16 %v2065, %v2064
      %v2084 = vpack.c.bf16 %v2067, %v2066
      %v2085 = vpack.c.bf16 %v2069, %v2068
      %v2102 = vunpack.c.l.b16 %v2070
      %v2103 = vunpack.c.h.b16 %v2070
      %v2104 = vunpack.c.l.b16 %v2071
      %v2105 = vunpack.c.h.b16 %v2071
      %v2106 = vunpack.c.l.b16 %v2072
      %v2107 = vunpack.c.h.b16 %v2072
      %v2108 = vunpack.c.l.b16 %v2073
      %v2109 = vunpack.c.h.b16 %v2073
      %v2110 = vunpack.c.l.b16 %v2074
      %v2111 = vunpack.c.h.b16 %v2074
      %v2112 = vunpack.c.l.b16 %v2075
      %v2113 = vunpack.c.h.b16 %v2075
      %v2114 = vunpack.c.l.b16 %v2076
      %v2115 = vunpack.c.h.b16 %v2076
      %v2116 = vunpack.c.l.b16 %v2077
      %v2117 = vunpack.c.h.b16 %v2077
      %v2118 = vunpack.c.l.b16 %v2078
      %v2119 = vunpack.c.h.b16 %v2078
      %v2120 = vunpack.c.l.b16 %v2079
      %v2121 = vunpack.c.h.b16 %v2079
      %v2122 = vunpack.c.l.b16 %v2080
      %v2123 = vunpack.c.h.b16 %v2080
      %v2124 = vunpack.c.l.b16 %v2081
      %v2125 = vunpack.c.h.b16 %v2081
      %v2126 = vunpack.c.l.b16 %v2082
      %v2127 = vunpack.c.h.b16 %v2082
      %v2128 = vunpack.c.l.b16 %v2083
      %v2129 = vunpack.c.h.b16 %v2083
      %v2130 = vunpack.c.l.b16 %v2084
      %v2131 = vunpack.c.h.b16 %v2084
      %v2132 = vunpack.c.l.b16 %v2085
      %v2133 = vunpack.c.h.b16 %v2085
      %v2134 = vpack.c.b16 %v2102, %v2102
      %v2135 = vpack.c.b16 %v2103, %v2103
      %v2136 = vpack.c.b16 %v2104, %v2104
      %v2137 = vpack.c.b16 %v2105, %v2105
      %v2138 = vpack.c.b16 %v2106, %v2106
      %v2139 = vpack.c.b16 %v2107, %v2107
      %v2140 = vpack.c.b16 %v2108, %v2108
      %v2141 = vpack.c.b16 %v2109, %v2109
      %v2142 = vpack.c.b16 %v2110, %v2110
      %v2143 = vpack.c.b16 %v2111, %v2111
      %v2144 = vpack.c.b16 %v2112, %v2112
      %v2145 = vpack.c.b16 %v2113, %v2113
      %v2146 = vpack.c.b16 %v2114, %v2114
      %v2147 = vpack.c.b16 %v2115, %v2115
      %v2148 = vpack.c.b16 %v2116, %v2116
      %v2149 = vpack.c.b16 %v2117, %v2117
      %v2150 = vpack.c.b16 %v2118, %v2118
      %v2151 = vpack.c.b16 %v2119, %v2119
      %v2152 = vpack.c.b16 %v2120, %v2120
      %v2153 = vpack.c.b16 %v2121, %v2121
      %v2154 = vpack.c.b16 %v2122, %v2122
      %v2155 = vpack.c.b16 %v2123, %v2123
      %v2156 = vpack.c.b16 %v2124, %v2124
      %v2157 = vpack.c.b16 %v2125, %v2125
      %v2158 = vpack.c.b16 %v2126, %v2126
      %v2159 = vpack.c.b16 %v2127, %v2127
      %v2160 = vpack.c.b16 %v2128, %v2128
      %v2161 = vpack.c.b16 %v2129, %v2129
      %v2162 = vpack.c.b16 %v2130, %v2130
      %v2163 = vpack.c.b16 %v2131, %v2131
      %v2164 = vpack.c.b16 %v2132, %v2132
      %v2165 = vpack.c.b16 %v2133, %v2133
      %vm2198 = vcmask 519168
      %2199 = vst.msk [vmem:[%s298] sm:$0xf] %vm2198, %v2134
      %2200 = vst.msk [vmem:[%s298 + $0x4] sm:$0xf] %vm2198, %v2135
      %2201 = vst.msk [vmem:[%s298 + $0x8] sm:$0xf] %vm2198, %v2136
      %2202 = vst.msk [vmem:[%s298 + $0xc] sm:$0xf] %vm2198, %v2137
      %2203 = vst.msk [vmem:[%s298 + $0x10] sm:$0xf] %vm2198, %v2138
      %2204 = vst.msk [vmem:[%s298 + $0x14] sm:$0xf] %vm2198, %v2139
      %2205 = vst.msk [vmem:[%s298 + $0x18] sm:$0xf] %vm2198, %v2140
      %2206 = vst.msk [vmem:[%s298 + $0x1c] sm:$0xf] %vm2198, %v2141
      %2207 = vst.msk [vmem:[%s298 + $0x20] sm:$0xf] %vm2198, %v2142
      %2208 = vst.msk [vmem:[%s298 + $0x24] sm:$0xf] %vm2198, %v2143
      %2209 = vst.msk [vmem:[%s298 + $0x28] sm:$0xf] %vm2198, %v2144
      %2210 = vst.msk [vmem:[%s298 + $0x2c] sm:$0xf] %vm2198, %v2145
      %2211 = vst.msk [vmem:[%s298 + $0x30] sm:$0xf] %vm2198, %v2146
      %2212 = vst.msk [vmem:[%s298 + $0x34] sm:$0xf] %vm2198, %v2147
      %2213 = vst.msk [vmem:[%s298 + $0x38] sm:$0xf] %vm2198, %v2148
      %2214 = vst.msk [vmem:[%s298 + $0x3c] sm:$0xf] %vm2198, %v2149
      %2215 = vst.msk [vmem:[%s298 + $0x40] sm:$0xf] %vm2198, %v2150
      %2216 = vst.msk [vmem:[%s298 + $0x44] sm:$0xf] %vm2198, %v2151
      %2217 = vst.msk [vmem:[%s298 + $0x48] sm:$0xf] %vm2198, %v2152
      %2218 = vst.msk [vmem:[%s298 + $0x4c] sm:$0xf] %vm2198, %v2153
      %2219 = vst.msk [vmem:[%s298 + $0x50] sm:$0xf] %vm2198, %v2154
      %2220 = vst.msk [vmem:[%s298 + $0x54] sm:$0xf] %vm2198, %v2155
      %2221 = vst.msk [vmem:[%s298 + $0x58] sm:$0xf] %vm2198, %v2156
      %2222 = vst.msk [vmem:[%s298 + $0x5c] sm:$0xf] %vm2198, %v2157
      %2223 = vst.msk [vmem:[%s298 + $0x60] sm:$0xf] %vm2198, %v2158
      %2224 = vst.msk [vmem:[%s298 + $0x64] sm:$0xf] %vm2198, %v2159
      %2225 = vst.msk [vmem:[%s298 + $0x68] sm:$0xf] %vm2198, %v2160
      %2226 = vst.msk [vmem:[%s298 + $0x6c] sm:$0xf] %vm2198, %v2161
      %2227 = vst.msk [vmem:[%s298 + $0x70] sm:$0xf] %vm2198, %v2162
      %2228 = vst.msk [vmem:[%s298 + $0x74] sm:$0xf] %vm2198, %v2163
      %2229 = vst.msk [vmem:[%s298 + $0x78] sm:$0xf] %vm2198, %v2164
      %2230 = vst.msk [vmem:[%s298 + $0x7c] sm:$0xf] %vm2198, %v2165
      %p2231 = scmp.lt.s32.totalorder %s18, 1
      %s2232 = scalar_select %p2231, %s18, 1
      %s2233 = smul.addr %s2232, 32
      %s2234 = smul.addr %s2233, 4
      %s2235 = scalar_lea.vmem %s7, %s2234
      // Predicated region
      $region49: #{course_sr_forward.16} parent=47 // pred_check
        %p2236 = pneg %p193
      $region50: #{course_sr_forward.16} parent=47 // pred_check_branch
        %2238 = sbr.rel (%p2236) target = $region52
      $region51: #{course_sr_forward.16} parent=47 // pred_region
        _
      $region52: #{course_sr_forward.16} parent=47 // pred_fallthru
        _
    $region48: #{course_sr_forward.16} parent=5 // pred_fallthru
      _
    %p2239 = scmp.le.s32.totalorder 2, %s13
    // Predicated region
    $region53: #{course_sr_forward.16} parent=5 // pred_check
      %p2240 = pneg %p2239
    $region54: #{course_sr_forward.16} parent=5 // pred_check_branch
      %2242 = sbr.rel (%p2240) target = $region56
    $region55: #{course_sr_forward.16} parent=5 // pred_region
      %s2243 = ssub.s32 %s13, 2
      // Predicated region
      $region57: #{course_sr_forward.16} parent=55 // pred_check
        %p2244 = pneg %p199
      $region58: #{course_sr_forward.16} parent=55 // pred_check_branch
        %2246 = sbr.rel (%p2244) target = $region60
      $region59: #{course_sr_forward.16} parent=55 // pred_region
        %p2247 = scmp.lt.s32.totalorder %s19, 1
        %s2248 = scalar_select %p2247, %s19, 1
        %s2249 = smul.addr %s2248, 32
        %s2250 = smul.addr %s2249, 4
        %s2251 = scalar_lea.vmem %s7, %s2250
      $region60: #{course_sr_forward.16} parent=55 // pred_fallthru
        _
    $region56: #{course_sr_forward.16} parent=5 // pred_fallthru
      _
  $region6: #{course_sr_forward.16} parent=0 // loop_footer
    %s17 = sadd.s32 1, %s13
  $region7: #{course_sr_forward.16} parent=0 // loop_footer_branch
    %12 = sbr.rel target = $region3
  $region8: #{course_sr_forward.16} parent=0 // loop_exit
    _

// kernel: course_sr_forward.15
$region0: #{course_sr_forward.15}
  #allocation0 [shape = 'u32[]', space=smem, size = 0x4, offset = 0x4, fixed_abs, tag = 'smem constant byte address 0x4 - core index']
  #allocation1 [shape = 'u32[144,128]{1,0:T(1,128)}', space=vmem, size = 0x12000, scoped, tag = 'internal scratch']
  %s0 = inlined_call_operand.vmem [shape: bf16[2,256,576], index: 0, kind: input, shape index: {}]
  %s1 = inlined_call_operand.vmem [shape: bf16[576,64], index: 1, kind: input, shape index: {}]
  %s2 = inlined_call_operand.vmem [shape: f32[1,64], index: 2, kind: input, shape index: {}]
  %s3 = inlined_call_operand.vmem [shape: f32[1,64], index: 3, kind: input, shape index: {}]
  %s4 = inlined_call_operand.vmem [shape: f32[1,64], index: 4, kind: input, shape index: {}]
  %s5 = inlined_call_operand.vmem [shape: f32[1,64], index: 5, kind: input, shape index: {}]
  %s6 = inlined_call_operand.vmem [shape: bf16[2,256,64], index: 6, kind: output, shape index: {}]
  %s7 = sld [smem:[#allocation0]]
  $region57: #{course_sr_forward.15} parent=0
    _
  %s9 = ssub.s32 1, %s7
  %s10 = scalar_select 0, %s9, %s7
  loop: start=0, step=1, limit=4
  $region2: #{course_sr_forward.15} parent=0 // loop_pre_header
    _
  $region3: #{course_sr_forward.15} parent=0 // loop_header
    %s12 = sphi 0, %s16
    %p13 = scmp.ge.s32.totalorder %s12, 4
    %s22 = sphi 0, %s24
    %s25 = sphi 0, %s22
    %s26 = sphi 0, %s25
    %s42 = sphi 0, %s26
    %s46 = sphi 0, %s46
    %s48 = sphi 0, %s46
    %s49 = sphi 0, %s48
    %s63 = sphi 0, %s49
    %s67 = sphi 0, %s67
    %s69 = sphi 0, %s67
    %s70 = sphi 0, %s69
    %s84 = sphi 0, %s70
    %s88 = sphi 0, %s88
    %s90 = sphi 0, %s88
    %s91 = sphi 0, %s90
    %s105 = sphi 0, %s91
    %s109 = sphi 0, %s109
    %s111 = sphi 0, %s109
    %s112 = sphi 0, %s111
    %s126 = sphi 0, %s112
    %s130 = sphi 0, %s130
    %s132 = sphi 0, %s130
    %s133 = sphi 0, %s132
    %s147 = sphi 0, %s133
    %s153 = sphi 0, %s155
    %s156 = sphi 0, %s153
    %s157 = sphi 0, %s156
    %s173 = sphi 0, %s157
  $region4: #{course_sr_forward.15} parent=0 // loop_header_branch
    %15 = sbr.rel (%p13) target = $region8
  $region5: #{course_sr_forward.15} parent=0 // loop_body
    %s17 = ssub.s32 %s12, 1
    %s18 = ssub.s32 %s12, 2
    %s19 = sadd.s32 %s12, 1
    %s20 = ssub.s32 %s12, %s19
    %p21 = scmp.eq.s32.totalorder %s20, 0
    %s23 = sadd.s32 %s22, 1
    %s24 = scalar_select %p21, %s22, %s23
    %p27 = pneg %p21
    %p28 = scmp.eq.s32.totalorder %s12, 1
    %p29 = por %p27, %p28
    %p30 = scmp.ne.s32.totalorder %s22, %s25
    %p31 = scmp.eq.s32.totalorder %s12, 0
    %p32 = por %p30, %p31
    %p33 = scmp.ne.s32.totalorder %s22, %s25
    %p34 = scmp.eq.s32.totalorder %s17, 1
    %p35 = por %p33, %p34
    %p36 = scmp.ne.s32.totalorder %s25, %s26
    %p37 = scmp.eq.s32.totalorder %s17, 0
    %p38 = por %p36, %p37
    %p39 = scmp.ne.s32.totalorder %s25, %s26
    %p40 = scmp.eq.s32.totalorder %s18, 1
    %p41 = por %p39, %p40
    %p43 = scmp.ne.s32.totalorder %s26, %s42
    %p44 = scmp.eq.s32.totalorder %s18, 0
    %p45 = por %p43, %p44
    %s47 = sadd.s32 %s46, 1
    %p50 = scmp.eq.s32.totalorder %s12, 1
    %p51 = scmp.ne.s32.totalorder %s46, %s48
    %p52 = scmp.eq.s32.totalorder %s12, 0
    %p53 = por %p51, %p52
    %p54 = scmp.ne.s32.totalorder %s46, %s48
    %p55 = scmp.eq.s32.totalorder %s17, 1
    %p56 = por %p54, %p55
    %p57 = scmp.ne.s32.totalorder %s48, %s49
    %p58 = scmp.eq.s32.totalorder %s17, 0
    %p59 = por %p57, %p58
    %p60 = scmp.ne.s32.totalorder %s48, %s49
    %p61 = scmp.eq.s32.totalorder %s18, 1
    %p62 = por %p60, %p61
    %p64 = scmp.ne.s32.totalorder %s49, %s63
    %p65 = scmp.eq.s32.totalorder %s18, 0
    %p66 = por %p64, %p65
    %s68 = sadd.s32 %s67, 1
    %p71 = scmp.eq.s32.totalorder %s12, 1
    %p72 = scmp.ne.s32.totalorder %s67, %s69
    %p73 = scmp.eq.s32.totalorder %s12, 0
    %p74 = por %p72, %p73
    %p75 = scmp.ne.s32.totalorder %s67, %s69
    %p76 = scmp.eq.s32.totalorder %s17, 1
    %p77 = por %p75, %p76
    %p78 = scmp.ne.s32.totalorder %s69, %s70
    %p79 = scmp.eq.s32.totalorder %s17, 0
    %p80 = por %p78, %p79
    %p81 = scmp.ne.s32.totalorder %s69, %s70
    %p82 = scmp.eq.s32.totalorder %s18, 1
    %p83 = por %p81, %p82
    %p85 = scmp.ne.s32.totalorder %s70, %s84
    %p86 = scmp.eq.s32.totalorder %s18, 0
    %p87 = por %p85, %p86
    %s89 = sadd.s32 %s88, 1
    %p92 = scmp.eq.s32.totalorder %s12, 1
    %p93 = scmp.ne.s32.totalorder %s88, %s90
    %p94 = scmp.eq.s32.totalorder %s12, 0
    %p95 = por %p93, %p94
    %p96 = scmp.ne.s32.totalorder %s88, %s90
    %p97 = scmp.eq.s32.totalorder %s17, 1
    %p98 = por %p96, %p97
    %p99 = scmp.ne.s32.totalorder %s90, %s91
    %p100 = scmp.eq.s32.totalorder %s17, 0
    %p101 = por %p99, %p100
    %p102 = scmp.ne.s32.totalorder %s90, %s91
    %p103 = scmp.eq.s32.totalorder %s18, 1
    %p104 = por %p102, %p103
    %p106 = scmp.ne.s32.totalorder %s91, %s105
    %p107 = scmp.eq.s32.totalorder %s18, 0
    %p108 = por %p106, %p107
    %s110 = sadd.s32 %s109, 1
    %p113 = scmp.eq.s32.totalorder %s12, 1
    %p114 = scmp.ne.s32.totalorder %s109, %s111
    %p115 = scmp.eq.s32.totalorder %s12, 0
    %p116 = por %p114, %p115
    %p117 = scmp.ne.s32.totalorder %s109, %s111
    %p118 = scmp.eq.s32.totalorder %s17, 1
    %p119 = por %p117, %p118
    %p120 = scmp.ne.s32.totalorder %s111, %s112
    %p121 = scmp.eq.s32.totalorder %s17, 0
    %p122 = por %p120, %p121
    %p123 = scmp.ne.s32.totalorder %s111, %s112
    %p124 = scmp.eq.s32.totalorder %s18, 1
    %p125 = por %p123, %p124
    %p127 = scmp.ne.s32.totalorder %s112, %s126
    %p128 = scmp.eq.s32.totalorder %s18, 0
    %p129 = por %p127, %p128
    %s131 = sadd.s32 %s130, 1
    %p134 = scmp.eq.s32.totalorder %s12, 1
    %p135 = scmp.ne.s32.totalorder %s130, %s132
    %p136 = scmp.eq.s32.totalorder %s12, 0
    %p137 = por %p135, %p136
    %p138 = scmp.ne.s32.totalorder %s130, %s132
    %p139 = scmp.eq.s32.totalorder %s17, 1
    %p140 = por %p138, %p139
    %p141 = scmp.ne.s32.totalorder %s132, %s133
    %p142 = scmp.eq.s32.totalorder %s17, 0
    %p143 = por %p141, %p142
    %p144 = scmp.ne.s32.totalorder %s132, %s133
    %p145 = scmp.eq.s32.totalorder %s18, 1
    %p146 = por %p144, %p145
    %p148 = scmp.ne.s32.totalorder %s133, %s147
    %p149 = scmp.eq.s32.totalorder %s18, 0
    %p150 = por %p148, %p149
    %s151 = ssub.s32 %s12, %s19
    %p152 = scmp.eq.s32.totalorder %s151, 0
    %s154 = sadd.s32 %s153, 1
    %s155 = scalar_select %p152, %s153, %s154
    %p158 = pneg %p152
    %p159 = scmp.eq.s32.totalorder %s12, 1
    %p160 = por %p158, %p159
    %p161 = scmp.ne.s32.totalorder %s153, %s156
    %p162 = scmp.eq.s32.totalorder %s12, 0
    %p163 = por %p161, %p162
    %p164 = scmp.ne.s32.totalorder %s153, %s156
    %p165 = scmp.eq.s32.totalorder %s17, 1
    %p166 = por %p164, %p165
    %p167 = scmp.ne.s32.totalorder %s156, %s157
    %p168 = scmp.eq.s32.totalorder %s17, 0
    %p169 = por %p167, %p168
    %p170 = scmp.ne.s32.totalorder %s156, %s157
    %p171 = scmp.eq.s32.totalorder %s18, 1
    %p172 = por %p170, %p171
    %p174 = scmp.ne.s32.totalorder %s157, %s173
    %p175 = scmp.eq.s32.totalorder %s18, 0
    %p176 = por %p174, %p175
    %p177 = scmp.le.s32.totalorder 1, %s12
    %p178 = scmp.lt.s32.totalorder %s12, 3
    %p179 = pnand %p177, %p178
    %p180 = pneg %p179
    // Predicated region
    $region9: #{course_sr_forward.15} parent=5 // pred_check
      _
    $region10: #{course_sr_forward.15} parent=5 // pred_check_branch
      %182 = sbr.rel (%p179) target = $region12
    $region11: #{course_sr_forward.15} parent=5 // pred_region
      %s183 = ssub.s32 %s12, 1
      // Predicated region
      $region13: #{course_sr_forward.15} parent=11 // pred_check
        %p184 = pneg %p59
      $region14: #{course_sr_forward.15} parent=11 // pred_check_branch
        %186 = sbr.rel (%p184) target = $region16
      $region15: #{course_sr_forward.15} parent=11 // pred_region
        _
      $region16: #{course_sr_forward.15} parent=11 // pred_fallthru
        _
      // Predicated region
      $region17: #{course_sr_forward.15} parent=11 // pred_check
        %p187 = pneg %p80
      $region18: #{course_sr_forward.15} parent=11 // pred_check_branch
        %189 = sbr.rel (%p187) target = $region20
      $region19: #{course_sr_forward.15} parent=11 // pred_region
        _
      $region20: #{course_sr_forward.15} parent=11 // pred_fallthru
        _
      // Predicated region
      $region21: #{course_sr_forward.15} parent=11 // pred_check
        %p190 = pneg %p101
      $region22: #{course_sr_forward.15} parent=11 // pred_check_branch
        %192 = sbr.rel (%p190) target = $region24
      $region23: #{course_sr_forward.15} parent=11 // pred_region
        _
      $region24: #{course_sr_forward.15} parent=11 // pred_fallthru
        _
      // Predicated region
      $region25: #{course_sr_forward.15} parent=11 // pred_check
        %p193 = pneg %p122
      $region26: #{course_sr_forward.15} parent=11 // pred_check_branch
        %195 = sbr.rel (%p193) target = $region28
      $region27: #{course_sr_forward.15} parent=11 // pred_region
        _
      $region28: #{course_sr_forward.15} parent=11 // pred_fallthru
        _
      // Predicated region
      $region29: #{course_sr_forward.15} parent=11 // pred_check
        %p196 = pneg %p143
      $region30: #{course_sr_forward.15} parent=11 // pred_check_branch
        %198 = sbr.rel (%p196) target = $region32
      $region31: #{course_sr_forward.15} parent=11 // pred_region
        _
      $region32: #{course_sr_forward.15} parent=11 // pred_fallthru
        _
    $region12: #{course_sr_forward.15} parent=5 // pred_fallthru
      _
    %p199 = scmp.lt.s32.totalorder %s12, 2
    // Predicated region
    $region33: #{course_sr_forward.15} parent=5 // pred_check
      %p200 = pneg %p199
    $region34: #{course_sr_forward.15} parent=5 // pred_check_branch
      %202 = sbr.rel (%p200) target = $region36
    $region35: #{course_sr_forward.15} parent=5 // pred_region
      // Predicated region
      $region37: #{course_sr_forward.15} parent=35 // pred_check
        %p203 = pneg %p32
      $region38: #{course_sr_forward.15} parent=35 // pred_check_branch
        %205 = sbr.rel (%p203) target = $region40
      $region39: #{course_sr_forward.15} parent=35 // pred_region
        %p206 = scmp.lt.s32.totalorder %s12, 1
        %s207 = scalar_select %p206, %s12, 1
        %s208 = smul.addr %s207, 160
        %s209 = smul.addr %s208, 4
        %s210 = scalar_lea.vmem %s0, %s209
      $region40: #{course_sr_forward.15} parent=35 // pred_fallthru
        _
    $region36: #{course_sr_forward.15} parent=5 // pred_fallthru
      _
    %p211 = scmp.le.s32.totalorder 1, %s12
    %p212 = scmp.lt.s32.totalorder %s12, 3
    %p213 = pnand %p211, %p212
    %p214 = pneg %p213
    // Predicated region
    $region41: #{course_sr_forward.15} parent=5 // pred_check
      _
    $region42: #{course_sr_forward.15} parent=5 // pred_check_branch
      %216 = sbr.rel (%p213) target = $region44
    $region43: #{course_sr_forward.15} parent=5 // pred_region
      %s217 = ssub.s32 %s12, 1
      %p218 = scmp.lt.s32.totalorder %s17, 1
      %s219 = scalar_select %p218, %s17, 1
      %s220 = smul.addr %s219, 160
      %s221 = smul.addr %s220, 4
      %s222 = scalar_lea.vmem %s0, %s221
      %p223 = pneg %p38
      %p224 = pneg %p35
      %p225 = pneg %p59
      %p226 = pneg %p56
      %p227 = pneg %p80
      %p228 = pneg %p77
      %p229 = pneg %p101
      %p230 = pneg %p98
      %p231 = pneg %p122
      %p232 = pneg %p119
      %p233 = pneg %p143
      %p234 = pneg %p140
      %p235 = pneg %p169
      %p236 = pneg %p166
      %p237 = scmp.lt.s32.totalorder %s17, 1
      %s238 = scalar_select %p237, %s17, 1
      %s239 = smul.addr %s238, 32
      %s240 = smul.addr %s239, 4
      %s241 = scalar_lea.vmem %s6, %s240
      %p242 = scmp.lt.s32.totalorder %s17, 1
      %s243 = scalar_select %p242, %s17, 1
      %s244 = smul.addr %s243, 160
      %s245 = smul.addr %s244, 4
      %s246 = scalar_lea.vmem %s0, %s245
      %p247 = scmp.lt.s32.totalorder %s17, 1
      %s248 = scalar_select %p247, %s17, 1
      %s249 = smul.addr %s248, 32
      %s250 = smul.addr %s249, 4
      %s251 = scalar_lea.vmem %s6, %s250
      %v253 = vld [vmem:[%s246] sm:$0xff]
      %v254 = vld [vmem:[%s246 + $0x8] sm:$0xff]
      %v255 = vld [vmem:[%s246 + $0x10] sm:$0xf]
      %v256 = vld [vmem:[%s246 + $0x14] sm:$0xff]
      %v257 = vld [vmem:[%s246 + $0x1c] sm:$0xff]
      %v258 = vld [vmem:[%s246 + $0x24] sm:$0xf]
      %v259 = vld [vmem:[%s246 + $0x28] sm:$0xff]
      %v260 = vld [vmem:[%s246 + $0x30] sm:$0xff]
      %v261 = vld [vmem:[%s246 + $0x38] sm:$0xf]
      %v262 = vld [vmem:[%s246 + $0x3c] sm:$0xff]
      %v263 = vld [vmem:[%s246 + $0x44] sm:$0xff]
      %v264 = vld [vmem:[%s246 + $0x4c] sm:$0xf]
      %v265 = vld [vmem:[%s246 + $0x50] sm:$0xff]
      %v266 = vld [vmem:[%s246 + $0x58] sm:$0xff]
      %v267 = vld [vmem:[%s246 + $0x60] sm:$0xf]
      %v268 = vld [vmem:[%s246 + $0x64] sm:$0xff]
      %v269 = vld [vmem:[%s246 + $0x6c] sm:$0xff]
      %v270 = vld [vmem:[%s246 + $0x74] sm:$0xf]
      %v271 = vld [vmem:[%s246 + $0x78] sm:$0xff]
      %v272 = vld [vmem:[%s246 + $0x80] sm:$0xff]
      %v273 = vld [vmem:[%s246 + $0x88] sm:$0xf]
      %v274 = vld [vmem:[%s246 + $0x8c] sm:$0xff]
      %v275 = vld [vmem:[%s246 + $0x94] sm:$0xff]
      %v276 = vld [vmem:[%s246 + $0x9c] sm:$0xf]
      %v277 = vld [vmem:[%s246 + $0xa0] sm:$0xff]
      %v278 = vld [vmem:[%s246 + $0xa8] sm:$0xff]
      %v279 = vld [vmem:[%s246 + $0xb0] sm:$0xf]
      %v280 = vld [vmem:[%s246 + $0xb4] sm:$0xff]
      %v281 = vld [vmem:[%s246 + $0xbc] sm:$0xff]
      %v282 = vld [vmem:[%s246 + $0xc4] sm:$0xf]
      %v283 = vld [vmem:[%s246 + $0xc8] sm:$0xff]
      %v284 = vld [vmem:[%s246 + $0xd0] sm:$0xff]
      %v285 = vld [vmem:[%s246 + $0xd8] sm:$0xf]
      %v286 = vld [vmem:[%s246 + $0xdc] sm:$0xff]
      %v287 = vld [vmem:[%s246 + $0xe4] sm:$0xff]
      %v288 = vld [vmem:[%s246 + $0xec] sm:$0xf]
      %v289 = vld [vmem:[%s246 + $0xf0] sm:$0xff]
      %v290 = vld [vmem:[%s246 + $0xf8] sm:$0xff]
      %v291 = vld [vmem:[%s246 + $0x100] sm:$0xf]
      %v292 = vld [vmem:[%s246 + $0x104] sm:$0xff]
      %v293 = vld [vmem:[%s246 + $0x10c] sm:$0xff]
      %v294 = vld [vmem:[%s246 + $0x114] sm:$0xf]
      %v295 = vld [vmem:[%s246 + $0x118] sm:$0xff]
      %v296 = vld [vmem:[%s246 + $0x120] sm:$0xff]
      %v297 = vld [vmem:[%s246 + $0x128] sm:$0xf]
      %v298 = vld [vmem:[%s246 + $0x12c] sm:$0xff]
      %v299 = vld [vmem:[%s246 + $0x134] sm:$0xff]
      %v300 = vld [vmem:[%s246 + $0x13c] sm:$0xf]
      %v301 = vld [vmem:[%s246 + $0x140] sm:$0xff]
      %v302 = vld [vmem:[%s246 + $0x148] sm:$0xff]
      %v303 = vld [vmem:[%s246 + $0x150] sm:$0xf]
      %v304 = vld [vmem:[%s246 + $0x154] sm:$0xff]
      %v305 = vld [vmem:[%s246 + $0x15c] sm:$0xff]
      %v306 = vld [vmem:[%s246 + $0x164] sm:$0xf]
      %v307 = vld [vmem:[%s246 + $0x168] sm:$0xff]
      %v308 = vld [vmem:[%s246 + $0x170] sm:$0xff]
      %v309 = vld [vmem:[%s246 + $0x178] sm:$0xf]
      %v310 = vld [vmem:[%s246 + $0x17c] sm:$0xff]
      %v311 = vld [vmem:[%s246 + $0x184] sm:$0xff]
      %v312 = vld [vmem:[%s246 + $0x18c] sm:$0xf]
      %v313 = vld [vmem:[%s246 + $0x190] sm:$0xff]
      %v314 = vld [vmem:[%s246 + $0x198] sm:$0xff]
      %v315 = vld [vmem:[%s246 + $0x1a0] sm:$0xf]
      %v316 = vld [vmem:[%s246 + $0x1a4] sm:$0xff]
      %v317 = vld [vmem:[%s246 + $0x1ac] sm:$0xff]
      %v318 = vld [vmem:[%s246 + $0x1b4] sm:$0xf]
      %v319 = vld [vmem:[%s246 + $0x1b8] sm:$0xff]
      %v320 = vld [vmem:[%s246 + $0x1c0] sm:$0xff]
      %v321 = vld [vmem:[%s246 + $0x1c8] sm:$0xf]
      %v322 = vld [vmem:[%s246 + $0x1cc] sm:$0xff]
      %v323 = vld [vmem:[%s246 + $0x1d4] sm:$0xff]
      %v324 = vld [vmem:[%s246 + $0x1dc] sm:$0xf]
      %v325 = vld [vmem:[%s246 + $0x1e0] sm:$0xff]
      %v326 = vld [vmem:[%s246 + $0x1e8] sm:$0xff]
      %v327 = vld [vmem:[%s246 + $0x1f0] sm:$0xf]
      %v328 = vld [vmem:[%s246 + $0x1f4] sm:$0xff]
      %v329 = vld [vmem:[%s246 + $0x1fc] sm:$0xff]
      %v330 = vld [vmem:[%s246 + $0x204] sm:$0xf]
      %v331 = vld [vmem:[%s246 + $0x208] sm:$0xff]
      %v332 = vld [vmem:[%s246 + $0x210] sm:$0xff]
      %v333 = vld [vmem:[%s246 + $0x218] sm:$0xf]
      %v334 = vld [vmem:[%s246 + $0x21c] sm:$0xff]
      %v335 = vld [vmem:[%s246 + $0x224] sm:$0xff]
      %v336 = vld [vmem:[%s246 + $0x22c] sm:$0xf]
      %v337 = vld [vmem:[%s246 + $0x230] sm:$0xff]
      %v338 = vld [vmem:[%s246 + $0x238] sm:$0xff]
      %v339 = vld [vmem:[%s246 + $0x240] sm:$0xf]
      %v340 = vld [vmem:[%s246 + $0x244] sm:$0xff]
      %v341 = vld [vmem:[%s246 + $0x24c] sm:$0xff]
      %v342 = vld [vmem:[%s246 + $0x254] sm:$0xf]
      %v343 = vld [vmem:[%s246 + $0x258] sm:$0xff]
      %v344 = vld [vmem:[%s246 + $0x260] sm:$0xff]
      %v345 = vld [vmem:[%s246 + $0x268] sm:$0xf]
      %v346 = vld [vmem:[%s246 + $0x26c] sm:$0xff]
      %v347 = vld [vmem:[%s246 + $0x274] sm:$0xff]
      %v348 = vld [vmem:[%s246 + $0x27c] sm:$0xf]
      %v349 = vld [vmem:[%s1] sm:$0xf]
      %v350 = vld [vmem:[%s1 + $0x4] sm:$0xf]
      %v351 = vld [vmem:[%s1 + $0x8] sm:$0xf]
      %v352 = vld [vmem:[%s1 + $0xc] sm:$0xf]
      %v353 = vld [vmem:[%s1 + $0x10] sm:$0xf]
      %v354 = vld [vmem:[%s1 + $0x14] sm:$0xf]
      %v355 = vld [vmem:[%s1 + $0x18] sm:$0xf]
      %v356 = vld [vmem:[%s1 + $0x1c] sm:$0xf]
      %v357 = vld [vmem:[%s1 + $0x20] sm:$0xf]
      %v358 = vld [vmem:[%s1 + $0x24] sm:$0xf]
      %v359 = vld [vmem:[%s1 + $0x28] sm:$0xf]
      %v360 = vld [vmem:[%s1 + $0x2c] sm:$0xf]
      %v361 = vld [vmem:[%s1 + $0x30] sm:$0xf]
      %v362 = vld [vmem:[%s1 + $0x34] sm:$0xf]
      %v363 = vld [vmem:[%s1 + $0x38] sm:$0xf]
      %v364 = vld [vmem:[%s1 + $0x3c] sm:$0xf]
      %v365 = vld [vmem:[%s1 + $0x40] sm:$0xf]
      %v366 = vld [vmem:[%s1 + $0x44] sm:$0xf]
      %v367 = vld [vmem:[%s1 + $0x48] sm:$0xf]
      %v368 = vld [vmem:[%s1 + $0x4c] sm:$0xf]
      %v369 = vld [vmem:[%s1 + $0x50] sm:$0xf]
      %v370 = vld [vmem:[%s1 + $0x54] sm:$0xf]
      %v371 = vld [vmem:[%s1 + $0x58] sm:$0xf]
      %v372 = vld [vmem:[%s1 + $0x5c] sm:$0xf]
      %v373 = vld [vmem:[%s1 + $0x60] sm:$0xf]
      %v374 = vld [vmem:[%s1 + $0x64] sm:$0xf]
      %v375 = vld [vmem:[%s1 + $0x68] sm:$0xf]
      %v376 = vld [vmem:[%s1 + $0x6c] sm:$0xf]
      %v377 = vld [vmem:[%s1 + $0x70] sm:$0xf]
      %v378 = vld [vmem:[%s1 + $0x74] sm:$0xf]
      %v379 = vld [vmem:[%s1 + $0x78] sm:$0xf]
      %v380 = vld [vmem:[%s1 + $0x7c] sm:$0xf]
      %v381 = vld [vmem:[%s1 + $0x80] sm:$0xf]
      %v382 = vld [vmem:[%s1 + $0x84] sm:$0xf]
      %v383 = vld [vmem:[%s1 + $0x88] sm:$0xf]
      %v384 = vld [vmem:[%s1 + $0x8c] sm:$0xf]
      %v385 = vld [vmem:[%s1 + $0x90] sm:$0xf]
      %v386 = vld [vmem:[%s1 + $0x94] sm:$0xf]
      %v387 = vld [vmem:[%s1 + $0x98] sm:$0xf]
      %v388 = vld [vmem:[%s1 + $0x9c] sm:$0xf]
      %v389 = vld [vmem:[%s1 + $0xa0] sm:$0xf]
      %v390 = vld [vmem:[%s1 + $0xa4] sm:$0xf]
      %v391 = vld [vmem:[%s1 + $0xa8] sm:$0xf]
      %v392 = vld [vmem:[%s1 + $0xac] sm:$0xf]
      %v393 = vld [vmem:[%s1 + $0xb0] sm:$0xf]
      %v394 = vld [vmem:[%s1 + $0xb4] sm:$0xf]
      %v395 = vld [vmem:[%s1 + $0xb8] sm:$0xf]
      %v396 = vld [vmem:[%s1 + $0xbc] sm:$0xf]
      %v397 = vld [vmem:[%s1 + $0xc0] sm:$0xf]
      %v398 = vld [vmem:[%s1 + $0xc4] sm:$0xf]
      %v399 = vld [vmem:[%s1 + $0xc8] sm:$0xf]
      %v400 = vld [vmem:[%s1 + $0xcc] sm:$0xf]
      %v401 = vld [vmem:[%s1 + $0xd0] sm:$0xf]
      %v402 = vld [vmem:[%s1 + $0xd4] sm:$0xf]
      %v403 = vld [vmem:[%s1 + $0xd8] sm:$0xf]
      %v404 = vld [vmem:[%s1 + $0xdc] sm:$0xf]
      %v405 = vld [vmem:[%s1 + $0xe0] sm:$0xf]
      %v406 = vld [vmem:[%s1 + $0xe4] sm:$0xf]
      %v407 = vld [vmem:[%s1 + $0xe8] sm:$0xf]
      %v408 = vld [vmem:[%s1 + $0xec] sm:$0xf]
      %v409 = vld [vmem:[%s1 + $0xf0] sm:$0xf]
      %v410 = vld [vmem:[%s1 + $0xf4] sm:$0xf]
      %v411 = vld [vmem:[%s1 + $0xf8] sm:$0xf]
      %v412 = vld [vmem:[%s1 + $0xfc] sm:$0xf]
      %v413 = vld [vmem:[%s1 + $0x100] sm:$0xf]
      %v414 = vld [vmem:[%s1 + $0x104] sm:$0xf]
      %v415 = vld [vmem:[%s1 + $0x108] sm:$0xf]
      %v416 = vld [vmem:[%s1 + $0x10c] sm:$0xf]
      %v417 = vld [vmem:[%s1 + $0x110] sm:$0xf]
      %v418 = vld [vmem:[%s1 + $0x114] sm:$0xf]
      %v419 = vld [vmem:[%s1 + $0x118] sm:$0xf]
      %v420 = vld [vmem:[%s1 + $0x11c] sm:$0xf]
      %v421 = vld [vmem:[%s2] sm:$0x1]
      %v423 = vlaneseq
      %v424 = vshrl.u32 %v423, 7
      %v425 = vsub.s32 0, %v424
      %v426 = vrot.slane %v421, %v425
      %v524 = vunpack.c.l.b16 %v253
      %v525 = vunpack.c.h.b16 %v253
      %v526 = vunpack.c.l.b16 %v254
      %v527 = vunpack.c.h.b16 %v254
      %v528 = vunpack.c.l.b16 %v255
      %v529 = vunpack.c.l.b16 %v256
      %v530 = vunpack.c.h.b16 %v256
      %v531 = vunpack.c.l.b16 %v257
      %v532 = vunpack.c.h.b16 %v257
      %v533 = vunpack.c.l.b16 %v258
      %v534 = vunpack.c.l.b16 %v259
      %v535 = vunpack.c.h.b16 %v259
      %v536 = vunpack.c.l.b16 %v260
      %v537 = vunpack.c.h.b16 %v260
      %v538 = vunpack.c.l.b16 %v261
      %v539 = vunpack.c.l.b16 %v262
      %v540 = vunpack.c.h.b16 %v262
      %v541 = vunpack.c.l.b16 %v263
      %v542 = vunpack.c.h.b16 %v263
      %v543 = vunpack.c.l.b16 %v264
      %v544 = vunpack.c.l.b16 %v265
      %v545 = vunpack.c.h.b16 %v265
      %v546 = vunpack.c.l.b16 %v266
      %v547 = vunpack.c.h.b16 %v266
      %v548 = vunpack.c.l.b16 %v267
      %v549 = vunpack.c.l.b16 %v268
      %v550 = vunpack.c.h.b16 %v268
      %v551 = vunpack.c.l.b16 %v269
      %v552 = vunpack.c.h.b16 %v269
      %v553 = vunpack.c.l.b16 %v270
      %v554 = vunpack.c.l.b16 %v271
      %v555 = vunpack.c.h.b16 %v271
      %v556 = vunpack.c.l.b16 %v272
      %v557 = vunpack.c.h.b16 %v272
      %v558 = vunpack.c.l.b16 %v273
      %v559 = vunpack.c.l.b16 %v274
      %v560 = vunpack.c.h.b16 %v274
      %v561 = vunpack.c.l.b16 %v275
      %v562 = vunpack.c.h.b16 %v275
      %v563 = vunpack.c.l.b16 %v276
      %v564 = vunpack.c.l.b16 %v277
      %v565 = vunpack.c.h.b16 %v277
      %v566 = vunpack.c.l.b16 %v278
      %v567 = vunpack.c.h.b16 %v278
      %v568 = vunpack.c.l.b16 %v279
      %v569 = vunpack.c.l.b16 %v280
      %v570 = vunpack.c.h.b16 %v280
      %v571 = vunpack.c.l.b16 %v281
      %v572 = vunpack.c.h.b16 %v281
      %v573 = vunpack.c.l.b16 %v282
      %v574 = vunpack.c.l.b16 %v283
      %v575 = vunpack.c.h.b16 %v283
      %v576 = vunpack.c.l.b16 %v284
      %v577 = vunpack.c.h.b16 %v284
      %v578 = vunpack.c.l.b16 %v285
      %v579 = vunpack.c.l.b16 %v286
      %v580 = vunpack.c.h.b16 %v286
      %v581 = vunpack.c.l.b16 %v287
      %v582 = vunpack.c.h.b16 %v287
      %v583 = vunpack.c.l.b16 %v288
      %v584 = vunpack.c.l.b16 %v289
      %v585 = vunpack.c.h.b16 %v289
      %v586 = vunpack.c.l.b16 %v290
      %v587 = vunpack.c.h.b16 %v290
      %v588 = vunpack.c.l.b16 %v291
      %v589 = vunpack.c.l.b16 %v292
      %v590 = vunpack.c.h.b16 %v292
      %v591 = vunpack.c.l.b16 %v293
      %v592 = vunpack.c.h.b16 %v293
      %v593 = vunpack.c.l.b16 %v294
      %v594 = vunpack.c.l.b16 %v295
      %v595 = vunpack.c.h.b16 %v295
      %v596 = vunpack.c.l.b16 %v296
      %v597 = vunpack.c.h.b16 %v296
      %v598 = vunpack.c.l.b16 %v297
      %v599 = vunpack.c.l.b16 %v298
      %v600 = vunpack.c.h.b16 %v298
      %v601 = vunpack.c.l.b16 %v299
      %v602 = vunpack.c.h.b16 %v299
      %v603 = vunpack.c.l.b16 %v300
      %v604 = vunpack.c.l.b16 %v301
      %v605 = vunpack.c.h.b16 %v301
      %v606 = vunpack.c.l.b16 %v302
      %v607 = vunpack.c.h.b16 %v302
      %v608 = vunpack.c.l.b16 %v303
      %v609 = vunpack.c.l.b16 %v304
      %v610 = vunpack.c.h.b16 %v304
      %v611 = vunpack.c.l.b16 %v305
      %v612 = vunpack.c.h.b16 %v305
      %v613 = vunpack.c.l.b16 %v306
      %v614 = vunpack.c.l.b16 %v307
      %v615 = vunpack.c.h.b16 %v307
      %v616 = vunpack.c.l.b16 %v308
      %v617 = vunpack.c.h.b16 %v308
      %v618 = vunpack.c.l.b16 %v309
      %v619 = vunpack.c.l.b16 %v310
      %v620 = vunpack.c.h.b16 %v310
      %v621 = vunpack.c.l.b16 %v311
      %v622 = vunpack.c.h.b16 %v311
      %v623 = vunpack.c.l.b16 %v312
      %v624 = vunpack.c.l.b16 %v313
      %v625 = vunpack.c.h.b16 %v313
      %v626 = vunpack.c.l.b16 %v314
      %v627 = vunpack.c.h.b16 %v314
      %v628 = vunpack.c.l.b16 %v315
      %v629 = vunpack.c.l.b16 %v316
      %v630 = vunpack.c.h.b16 %v316
      %v631 = vunpack.c.l.b16 %v317
      %v632 = vunpack.c.h.b16 %v317
      %v633 = vunpack.c.l.b16 %v318
      %v634 = vunpack.c.l.b16 %v319
      %v635 = vunpack.c.h.b16 %v319
      %v636 = vunpack.c.l.b16 %v320
      %v637 = vunpack.c.h.b16 %v320
      %v638 = vunpack.c.l.b16 %v321
      %v639 = vunpack.c.l.b16 %v322
      %v640 = vunpack.c.h.b16 %v322
      %v641 = vunpack.c.l.b16 %v323
      %v642 = vunpack.c.h.b16 %v323
      %v643 = vunpack.c.l.b16 %v324
      %v644 = vunpack.c.l.b16 %v325
      %v645 = vunpack.c.h.b16 %v325
      %v646 = vunpack.c.l.b16 %v326
      %v647 = vunpack.c.h.b16 %v326
      %v648 = vunpack.c.l.b16 %v327
      %v649 = vunpack.c.l.b16 %v328
      %v650 = vunpack.c.h.b16 %v328
      %v651 = vunpack.c.l.b16 %v329
      %v652 = vunpack.c.h.b16 %v329
      %v653 = vunpack.c.l.b16 %v330
      %v654 = vunpack.c.l.b16 %v331
      %v655 = vunpack.c.h.b16 %v331
      %v656 = vunpack.c.l.b16 %v332
      %v657 = vunpack.c.h.b16 %v332
      %v658 = vunpack.c.l.b16 %v333
      %v659 = vunpack.c.l.b16 %v334
      %v660 = vunpack.c.h.b16 %v334
      %v661 = vunpack.c.l.b16 %v335
      %v662 = vunpack.c.h.b16 %v335
      %v663 = vunpack.c.l.b16 %v336
      %v664 = vunpack.c.l.b16 %v337
      %v665 = vunpack.c.h.b16 %v337
      %v666 = vunpack.c.l.b16 %v338
      %v667 = vunpack.c.h.b16 %v338
      %v668 = vunpack.c.l.b16 %v339
      %v669 = vunpack.c.l.b16 %v340
      %v670 = vunpack.c.h.b16 %v340
      %v671 = vunpack.c.l.b16 %v341
      %v672 = vunpack.c.h.b16 %v341
      %v673 = vunpack.c.l.b16 %v342
      %v674 = vunpack.c.l.b16 %v343
      %v675 = vunpack.c.h.b16 %v343
      %v676 = vunpack.c.l.b16 %v344
      %v677 = vunpack.c.h.b16 %v344
      %v678 = vunpack.c.l.b16 %v345
      %v679 = vunpack.c.l.b16 %v346
      %v680 = vunpack.c.h.b16 %v346
      %v681 = vunpack.c.l.b16 %v347
      %v682 = vunpack.c.h.b16 %v347
      %v683 = vunpack.c.l.b16 %v348
      %v684 = vpack.c.b16 %v529, %v524
      %v685 = vpack.c.b16 %v530, %v525
      %v686 = vpack.c.b16 %v531, %v526
      %v687 = vpack.c.b16 %v532, %v527
      %v688 = vpack.c.b16 %v533, %v528
      %v689 = vpack.c.b16 %v539, %v534
      %v690 = vpack.c.b16 %v540, %v535
      %v691 = vpack.c.b16 %v541, %v536
      %v692 = vpack.c.b16 %v542, %v537
      %v693 = vpack.c.b16 %v543, %v538
      %v694 = vpack.c.b16 %v549, %v544
      %v695 = vpack.c.b16 %v550, %v545
      %v696 = vpack.c.b16 %v551, %v546
      %v697 = vpack.c.b16 %v552, %v547
      %v698 = vpack.c.b16 %v553, %v548
      %v699 = vpack.c.b16 %v559, %v554
      %v700 = vpack.c.b16 %v560, %v555
      %v701 = vpack.c.b16 %v561, %v556
      %v702 = vpack.c.b16 %v562, %v557
      %v703 = vpack.c.b16 %v563, %v558
      %v704 = vpack.c.b16 %v569, %v564
      %v705 = vpack.c.b16 %v570, %v565
      %v706 = vpack.c.b16 %v571, %v566
      %v707 = vpack.c.b16 %v572, %v567
      %v708 = vpack.c.b16 %v573, %v568
      %v709 = vpack.c.b16 %v579, %v574
      %v710 = vpack.c.b16 %v580, %v575
      %v711 = vpack.c.b16 %v581, %v576
      %v712 = vpack.c.b16 %v582, %v577
      %v713 = vpack.c.b16 %v583, %v578
      %v714 = vpack.c.b16 %v589, %v584
      %v715 = vpack.c.b16 %v590, %v585
      %v716 = vpack.c.b16 %v591, %v586
      %v717 = vpack.c.b16 %v592, %v587
      %v718 = vpack.c.b16 %v593, %v588
      %v719 = vpack.c.b16 %v599, %v594
      %v720 = vpack.c.b16 %v600, %v595
      %v721 = vpack.c.b16 %v601, %v596
      %v722 = vpack.c.b16 %v602, %v597
      %v723 = vpack.c.b16 %v603, %v598
      %v724 = vpack.c.b16 %v609, %v604
      %v725 = vpack.c.b16 %v610, %v605
      %v726 = vpack.c.b16 %v611, %v606
      %v727 = vpack.c.b16 %v612, %v607
      %v728 = vpack.c.b16 %v613, %v608
      %v729 = vpack.c.b16 %v619, %v614
      %v730 = vpack.c.b16 %v620, %v615
      %v731 = vpack.c.b16 %v621, %v616
      %v732 = vpack.c.b16 %v622, %v617
      %v733 = vpack.c.b16 %v623, %v618
      %v734 = vpack.c.b16 %v629, %v624
      %v735 = vpack.c.b16 %v630, %v625
      %v736 = vpack.c.b16 %v631, %v626
      %v737 = vpack.c.b16 %v632, %v627
      %v738 = vpack.c.b16 %v633, %v628
      %v739 = vpack.c.b16 %v639, %v634
      %v740 = vpack.c.b16 %v640, %v635
      %v741 = vpack.c.b16 %v641, %v636
      %v742 = vpack.c.b16 %v642, %v637
      %v743 = vpack.c.b16 %v643, %v638
      %v744 = vpack.c.b16 %v649, %v644
      %v745 = vpack.c.b16 %v650, %v645
      %v746 = vpack.c.b16 %v651, %v646
      %v747 = vpack.c.b16 %v652, %v647
      %v748 = vpack.c.b16 %v653, %v648
      %v749 = vpack.c.b16 %v659, %v654
      %v750 = vpack.c.b16 %v660, %v655
      %v751 = vpack.c.b16 %v661, %v656
      %v752 = vpack.c.b16 %v662, %v657
      %v753 = vpack.c.b16 %v663, %v658
      %v754 = vpack.c.b16 %v669, %v664
      %v755 = vpack.c.b16 %v670, %v665
      %v756 = vpack.c.b16 %v671, %v666
      %v757 = vpack.c.b16 %v672, %v667
      %v758 = vpack.c.b16 %v673, %v668
      %v759 = vpack.c.b16 %v679, %v674
      %v760 = vpack.c.b16 %v680, %v675
      %v761 = vpack.c.b16 %v681, %v676
      %v762 = vpack.c.b16 %v682, %v677
      %v763 = vpack.c.b16 %v683, %v678
      %v900 = vunpack.c.l.b16 %v349
      %v901 = vunpack.c.l.b16 %v350
      %v902 = vunpack.c.l.b16 %v351
      %v903 = vunpack.c.l.b16 %v352
      %v904 = vunpack.c.l.b16 %v353
      %v905 = vunpack.c.l.b16 %v354
      %v906 = vunpack.c.l.b16 %v355
      %v907 = vunpack.c.l.b16 %v356
      %v908 = vunpack.c.l.b16 %v357
      %v909 = vunpack.c.l.b16 %v358
      %v910 = vunpack.c.l.b16 %v359
      %v911 = vunpack.c.l.b16 %v360
      %v912 = vunpack.c.l.b16 %v361
      %v913 = vunpack.c.l.b16 %v362
      %v914 = vunpack.c.l.b16 %v363
      %v915 = vunpack.c.l.b16 %v364
      %v916 = vunpack.c.l.b16 %v365
      %v917 = vunpack.c.l.b16 %v366
      %v918 = vunpack.c.l.b16 %v367
      %v919 = vunpack.c.l.b16 %v368
      %v920 = vunpack.c.l.b16 %v369
      %v921 = vunpack.c.l.b16 %v370
      %v922 = vunpack.c.l.b16 %v371
      %v923 = vunpack.c.l.b16 %v372
      %v924 = vunpack.c.l.b16 %v373
      %v925 = vunpack.c.l.b16 %v374
      %v926 = vunpack.c.l.b16 %v375
      %v927 = vunpack.c.l.b16 %v376
      %v928 = vunpack.c.l.b16 %v377
      %v929 = vunpack.c.l.b16 %v378
      %v930 = vunpack.c.l.b16 %v379
      %v931 = vunpack.c.l.b16 %v380
      %v932 = vunpack.c.l.b16 %v381
      %v933 = vunpack.c.l.b16 %v382
      %v934 = vunpack.c.l.b16 %v383
      %v935 = vunpack.c.l.b16 %v384
      %v936 = vunpack.c.l.b16 %v385
      %v937 = vunpack.c.l.b16 %v386
      %v938 = vunpack.c.l.b16 %v387
      %v939 = vunpack.c.l.b16 %v388
      %v940 = vunpack.c.l.b16 %v389
      %v941 = vunpack.c.l.b16 %v390
      %v942 = vunpack.c.l.b16 %v391
      %v943 = vunpack.c.l.b16 %v392
      %v944 = vunpack.c.l.b16 %v393
      %v945 = vunpack.c.l.b16 %v394
      %v946 = vunpack.c.l.b16 %v395
      %v947 = vunpack.c.l.b16 %v396
      %v948 = vunpack.c.l.b16 %v397
      %v949 = vunpack.c.l.b16 %v398
      %v950 = vunpack.c.l.b16 %v399
      %v951 = vunpack.c.l.b16 %v400
      %v952 = vunpack.c.l.b16 %v401
      %v953 = vunpack.c.l.b16 %v402
      %v954 = vunpack.c.l.b16 %v403
      %v955 = vunpack.c.l.b16 %v404
      %v956 = vunpack.c.l.b16 %v405
      %v957 = vunpack.c.l.b16 %v406
      %v958 = vunpack.c.l.b16 %v407
      %v959 = vunpack.c.l.b16 %v408
      %v960 = vunpack.c.l.b16 %v409
      %v961 = vunpack.c.l.b16 %v410
      %v962 = vunpack.c.l.b16 %v411
      %v963 = vunpack.c.l.b16 %v412
      %v964 = vunpack.c.l.b16 %v413
      %v965 = vunpack.c.l.b16 %v414
      %v966 = vunpack.c.l.b16 %v415
      %v967 = vunpack.c.l.b16 %v416
      %v968 = vunpack.c.l.b16 %v417
      %v969 = vunpack.c.l.b16 %v418
      %v970 = vunpack.c.l.b16 %v419
      %v971 = vunpack.c.l.b16 %v420
      %v972 = vpack.c.b16 %v901, %v900
      %v973 = vpack.c.b16 %v903, %v902
      %v974 = vpack.c.b16 %v905, %v904
      %v975 = vpack.c.b16 %v907, %v906
      %v976 = vpack.c.b16 %v909, %v908
      %v977 = vpack.c.b16 %v911, %v910
      %v978 = vpack.c.b16 %v913, %v912
      %v979 = vpack.c.b16 %v915, %v914
      %v980 = vpack.c.b16 %v917, %v916
      %v981 = vpack.c.b16 %v919, %v918
      %v982 = vpack.c.b16 %v921, %v920
      %v983 = vpack.c.b16 %v923, %v922
      %v984 = vpack.c.b16 %v925, %v924
      %v985 = vpack.c.b16 %v927, %v926
      %v986 = vpack.c.b16 %v929, %v928
      %v987 = vpack.c.b16 %v931, %v930
      %v988 = vpack.c.b16 %v933, %v932
      %v989 = vpack.c.b16 %v935, %v934
      %v990 = vpack.c.b16 %v937, %v936
      %v991 = vpack.c.b16 %v939, %v938
      %v992 = vpack.c.b16 %v941, %v940
      %v993 = vpack.c.b16 %v943, %v942
      %v994 = vpack.c.b16 %v945, %v944
      %v995 = vpack.c.b16 %v947, %v946
      %v996 = vpack.c.b16 %v949, %v948
      %v997 = vpack.c.b16 %v951, %v950
      %v998 = vpack.c.b16 %v953, %v952
      %v999 = vpack.c.b16 %v955, %v954
      %v1000 = vpack.c.b16 %v957, %v956
      %v1001 = vpack.c.b16 %v959, %v958
      %v1002 = vpack.c.b16 %v961, %v960
      %v1003 = vpack.c.b16 %v963, %v962
      %v1004 = vpack.c.b16 %v965, %v964
      %v1005 = vpack.c.b16 %v967, %v966
      %v1006 = vpack.c.b16 %v969, %v968
      %v1007 = vpack.c.b16 %v971, %v970
      %vm1044 = vcmask 523264
      %v1046 = vsel %vm1044, %v688, 0
      %v1049 = vsel %vm1044, %v693, 0
      %v1052 = vsel %vm1044, %v698, 0
      %v1055 = vsel %vm1044, %v703, 0
      %v1058 = vsel %vm1044, %v708, 0
      %v1061 = vsel %vm1044, %v713, 0
      %v1064 = vsel %vm1044, %v718, 0
      %v1067 = vsel %vm1044, %v723, 0
      %v1070 = vsel %vm1044, %v728, 0
      %v1073 = vsel %vm1044, %v733, 0
      %v1076 = vsel %vm1044, %v738, 0
      %v1079 = vsel %vm1044, %v743, 0
      %v1082 = vsel %vm1044, %v748, 0
      %v1085 = vsel %vm1044, %v753, 0
      %v1088 = vsel %vm1044, %v758, 0
      %v1091 = vsel %vm1044, %v763, 0
      %1093 = vmatprep.subr.bf16.mxu0 0
      %1094 = vmatpush1.bf16.msra.mxu0 %v979
      %1095 = vmatprep.subr.bf16.mxu0 0
      %1096 = vmatpush1.bf16.msra.mxu0 %v978
      %1097 = vmatprep.subr.bf16.mxu0 0
      %1098 = vmatpush1.bf16.msra.mxu0 %v977
      %1099 = vmatprep.subr.bf16.mxu0 0
      %1100 = vmatpush1.bf16.msra.mxu0 %v976
      %1101 = vmatprep.subr.bf16.mxu0 0
      %1102 = vmatpush1.bf16.msra.mxu0 %v975
      %1103 = vmatprep.subr.bf16.mxu0 0
      %1104 = vmatpush1.bf16.msra.mxu0 %v974
      %1105 = vmatprep.subr.bf16.mxu0 0
      %1106 = vmatpush1.bf16.msra.mxu0 %v973
      %1107 = vmatprep.subr.bf16.mxu0 0
      %1108 = vmatpush1.bf16.msra.mxu0 %v972
      %1109 = vmatprep.subr.bf16.mxu0 0
      %1110 = vmatpush2.bf16.msra.mxu0 %v987
      %1111 = vmatprep.subr.bf16.mxu0 0
      %1112 = vmatpush2.bf16.msra.mxu0 %v986
      %1113 = vmatprep.subr.bf16.mxu0 0
      %1114 = vmatpush2.bf16.msra.mxu0 %v985
      %1115 = vmatprep.subr.bf16.mxu0 0
      %1116 = vmatpush2.bf16.msra.mxu0 %v984
      %1117 = vmatprep.subr.bf16.mxu0 0
      %1118 = vmatpush2.bf16.msra.mxu0 %v983
      %1119 = vmatprep.subr.bf16.mxu0 0
      %1120 = vmatpush2.bf16.msra.mxu0 %v982
      %1121 = vmatprep.subr.bf16.mxu0 0
      %1122 = vmatpush2.bf16.msra.mxu0 %v981
      %1123 = vmatprep.subr.bf16.mxu0 0
      %1124 = vmatpush2.bf16.msra.mxu0 %v980
      %1125 = vmatprep.mubr.bf16.mxu0 %v685
      %1126 = vmatmul.mubr.bf16.gmra.mxu0 %v684
      %v1127 = vpop.f32.mrf.mxu0
      %v1128 = vadd.f32 %v426, %v1127
      %v1129 = vpop.f32.mrf.mxu0
      %v1130 = vpop.f32.mrf.mxu0
      %v1131 = vadd.f32 %v426, %v1130
      %v1132 = vpop.f32.mrf.mxu0
      %1133 = vmatprep.mubr.bf16.mxu0 %v690
      %1134 = vmatmul.mubr.bf16.gmra.mxu0 %v689
      %v1135 = vpop.f32.mrf.mxu0
      %v1136 = vadd.f32 %v426, %v1135
      %v1137 = vpop.f32.mrf.mxu0
      %v1138 = vpop.f32.mrf.mxu0
      %v1139 = vadd.f32 %v426, %v1138
      %v1140 = vpop.f32.mrf.mxu0
      %1141 = vmatprep.mubr.bf16.mxu0 %v695
      %1142 = vmatmul.mubr.bf16.gmra.mxu0 %v694
      %v1143 = vpop.f32.mrf.mxu0
      %v1144 = vadd.f32 %v426, %v1143
      %v1145 = vpop.f32.mrf.mxu0
      %v1146 = vpop.f32.mrf.mxu0
      %v1147 = vadd.f32 %v426, %v1146
      %v1148 = vpop.f32.mrf.mxu0
      %1149 = vmatprep.mubr.bf16.mxu0 %v700
      %1150 = vmatmul.mubr.bf16.gmra.mxu0 %v699
      %v1151 = vpop.f32.mrf.mxu0
      %v1152 = vadd.f32 %v426, %v1151
      %v1153 = vpop.f32.mrf.mxu0
      %v1154 = vpop.f32.mrf.mxu0
      %v1155 = vadd.f32 %v426, %v1154
      %v1156 = vpop.f32.mrf.mxu0
      %1157 = vmatprep.mubr.bf16.mxu0 %v705
      %1158 = vmatmul.mubr.bf16.gmra.mxu0 %v704
      %v1159 = vpop.f32.mrf.mxu0
      %v1160 = vadd.f32 %v426, %v1159
      %v1161 = vpop.f32.mrf.mxu0
      %v1162 = vpop.f32.mrf.mxu0
      %v1163 = vadd.f32 %v426, %v1162
      %v1164 = vpop.f32.mrf.mxu0
      %1165 = vmatprep.mubr.bf16.mxu0 %v710
      %1166 = vmatmul.mubr.bf16.gmra.mxu0 %v709
      %v1167 = vpop.f32.mrf.mxu0
      %v1168 = vadd.f32 %v426, %v1167
      %v1169 = vpop.f32.mrf.mxu0
      %v1170 = vpop.f32.mrf.mxu0
      %v1171 = vadd.f32 %v426, %v1170
      %v1172 = vpop.f32.mrf.mxu0
      %1173 = vmatprep.mubr.bf16.mxu0 %v715
      %1174 = vmatmul.mubr.bf16.gmra.mxu0 %v714
      %v1175 = vpop.f32.mrf.mxu0
      %v1176 = vadd.f32 %v426, %v1175
      %v1177 = vpop.f32.mrf.mxu0
      %v1178 = vpop.f32.mrf.mxu0
      %v1179 = vadd.f32 %v426, %v1178
      %v1180 = vpop.f32.mrf.mxu0
      %1181 = vmatprep.mubr.bf16.mxu0 %v720
      %1182 = vmatmul.mubr.bf16.gmra.mxu0 %v719
      %v1183 = vpop.f32.mrf.mxu0
      %v1184 = vadd.f32 %v426, %v1183
      %v1185 = vpop.f32.mrf.mxu0
      %v1186 = vpop.f32.mrf.mxu0
      %v1187 = vadd.f32 %v426, %v1186
      %v1188 = vpop.f32.mrf.mxu0
      %1189 = vmatprep.mubr.bf16.mxu0 %v725
      %1190 = vmatmul.mubr.bf16.gmra.mxu0 %v724
      %v1191 = vpop.f32.mrf.mxu0
      %v1192 = vadd.f32 %v426, %v1191
      %v1193 = vpop.f32.mrf.mxu0
      %v1194 = vpop.f32.mrf.mxu0
      %v1195 = vadd.f32 %v426, %v1194
      %v1196 = vpop.f32.mrf.mxu0
      %1197 = vmatprep.mubr.bf16.mxu0 %v730
      %1198 = vmatmul.mubr.bf16.gmra.mxu0 %v729
      %v1199 = vpop.f32.mrf.mxu0
      %v1200 = vadd.f32 %v426, %v1199
      %v1201 = vpop.f32.mrf.mxu0
      %v1202 = vpop.f32.mrf.mxu0
      %v1203 = vadd.f32 %v426, %v1202
      %v1204 = vpop.f32.mrf.mxu0
      %1205 = vmatprep.mubr.bf16.mxu0 %v735
      %1206 = vmatmul.mubr.bf16.gmra.mxu0 %v734
      %v1207 = vpop.f32.mrf.mxu0
      %v1208 = vadd.f32 %v426, %v1207
      %v1209 = vpop.f32.mrf.mxu0
      %v1210 = vpop.f32.mrf.mxu0
      %v1211 = vadd.f32 %v426, %v1210
      %v1212 = vpop.f32.mrf.mxu0
      %1213 = vmatprep.mubr.bf16.mxu0 %v740
      %1214 = vmatmul.mubr.bf16.gmra.mxu0 %v739
      %v1215 = vpop.f32.mrf.mxu0
      %v1216 = vadd.f32 %v426, %v1215
      %v1217 = vpop.f32.mrf.mxu0
      %v1218 = vpop.f32.mrf.mxu0
      %v1219 = vadd.f32 %v426, %v1218
      %v1220 = vpop.f32.mrf.mxu0
      %1221 = vmatprep.mubr.bf16.mxu0 %v745
      %1222 = vmatmul.mubr.bf16.gmra.mxu0 %v744
      %v1223 = vpop.f32.mrf.mxu0
      %v1224 = vadd.f32 %v426, %v1223
      %v1225 = vpop.f32.mrf.mxu0
      %v1226 = vpop.f32.mrf.mxu0
      %v1227 = vadd.f32 %v426, %v1226
      %v1228 = vpop.f32.mrf.mxu0
      %1229 = vmatprep.mubr.bf16.mxu0 %v750
      %1230 = vmatmul.mubr.bf16.gmra.mxu0 %v749
      %v1231 = vpop.f32.mrf.mxu0
      %v1232 = vadd.f32 %v426, %v1231
      %v1233 = vpop.f32.mrf.mxu0
      %v1234 = vpop.f32.mrf.mxu0
      %v1235 = vadd.f32 %v426, %v1234
      %v1236 = vpop.f32.mrf.mxu0
      %1237 = vmatprep.mubr.bf16.mxu0 %v755
      %1238 = vmatmul.mubr.bf16.gmra.mxu0 %v754
      %v1239 = vpop.f32.mrf.mxu0
      %v1240 = vadd.f32 %v426, %v1239
      %v1241 = vpop.f32.mrf.mxu0
      %v1242 = vpop.f32.mrf.mxu0
      %v1243 = vadd.f32 %v426, %v1242
      %v1244 = vpop.f32.mrf.mxu0
      %1245 = vmatprep.mubr.bf16.mxu0 %v760
      %1246 = vmatmul.mubr.bf16.gmra.mxu0 %v759
      %v1247 = vpop.f32.mrf.mxu0
      %v1248 = vadd.f32 %v426, %v1247
      %v1249 = vpop.f32.mrf.mxu0
      %v1250 = vpop.f32.mrf.mxu0
      %v1251 = vadd.f32 %v426, %v1250
      %v1252 = vpop.f32.mrf.mxu0
      %1253 = vdwg.mxu0
      %1254 = vmatprep.subr.bf16.mxu0 0
      %1255 = vmatpush1.bf16.msra.mxu0 %v995
      %1256 = vmatprep.subr.bf16.mxu0 0
      %1257 = vmatpush1.bf16.msra.mxu0 %v994
      %1258 = vmatprep.subr.bf16.mxu0 0
      %1259 = vmatpush1.bf16.msra.mxu0 %v993
      %1260 = vmatprep.subr.bf16.mxu0 0
      %1261 = vmatpush1.bf16.msra.mxu0 %v992
      %1262 = vmatprep.subr.bf16.mxu0 0
      %1263 = vmatpush1.bf16.msra.mxu0 %v991
      %1264 = vmatprep.subr.bf16.mxu0 0
      %1265 = vmatpush1.bf16.msra.mxu0 %v990
      %1266 = vmatprep.subr.bf16.mxu0 0
      %1267 = vmatpush1.bf16.msra.mxu0 %v989
      %1268 = vmatprep.subr.bf16.mxu0 0
      %1269 = vmatpush1.bf16.msra.mxu0 %v988
      %1270 = vmatprep.subr.bf16.mxu0 0
      %1271 = vmatpush2.bf16.msra.mxu0 %v1003
      %1272 = vmatprep.subr.bf16.mxu0 0
      %1273 = vmatpush2.bf16.msra.mxu0 %v1002
      %1274 = vmatprep.subr.bf16.mxu0 0
      %1275 = vmatpush2.bf16.msra.mxu0 %v1001
      %1276 = vmatprep.subr.bf16.mxu0 0
      %1277 = vmatpush2.bf16.msra.mxu0 %v1000
      %1278 = vmatprep.subr.bf16.mxu0 0
      %1279 = vmatpush2.bf16.msra.mxu0 %v999
      %1280 = vmatprep.subr.bf16.mxu0 0
      %1281 = vmatpush2.bf16.msra.mxu0 %v998
      %1282 = vmatprep.subr.bf16.mxu0 0
      %1283 = vmatpush2.bf16.msra.mxu0 %v997
      %1284 = vmatprep.subr.bf16.mxu0 0
      %1285 = vmatpush2.bf16.msra.mxu0 %v996
      %1286 = vmatprep.mubr.bf16.mxu0 %v687
      %1287 = vmatmul.mubr.bf16.gmra.mxu0 %v686
      %v1288 = vpop.f32.mrf.mxu0
      %v1289 = vadd.f32 %v1128, %v1288
      %v1290 = vpop.f32.mrf.mxu0
      %v1291 = vpop.f32.mrf.mxu0
      %v1292 = vadd.f32 %v1131, %v1291
      %v1293 = vpop.f32.mrf.mxu0
      %1294 = vmatprep.mubr.bf16.mxu0 %v692
      %1295 = vmatmul.mubr.bf16.gmra.mxu0 %v691
      %v1296 = vpop.f32.mrf.mxu0
      %v1297 = vadd.f32 %v1136, %v1296
      %v1298 = vpop.f32.mrf.mxu0
      %v1299 = vpop.f32.mrf.mxu0
      %v1300 = vadd.f32 %v1139, %v1299
      %v1301 = vpop.f32.mrf.mxu0
      %1302 = vmatprep.mubr.bf16.mxu0 %v697
      %1303 = vmatmul.mubr.bf16.gmra.mxu0 %v696
      %v1304 = vpop.f32.mrf.mxu0
      %v1305 = vadd.f32 %v1144, %v1304
      %v1306 = vpop.f32.mrf.mxu0
      %v1307 = vpop.f32.mrf.mxu0
      %v1308 = vadd.f32 %v1147, %v1307
      %v1309 = vpop.f32.mrf.mxu0
      %1310 = vmatprep.mubr.bf16.mxu0 %v702
      %1311 = vmatmul.mubr.bf16.gmra.mxu0 %v701
      %v1312 = vpop.f32.mrf.mxu0
      %v1313 = vadd.f32 %v1152, %v1312
      %v1314 = vpop.f32.mrf.mxu0
      %v1315 = vpop.f32.mrf.mxu0
      %v1316 = vadd.f32 %v1155, %v1315
      %v1317 = vpop.f32.mrf.mxu0
      %1318 = vmatprep.mubr.bf16.mxu0 %v707
      %1319 = vmatmul.mubr.bf16.gmra.mxu0 %v706
      %v1320 = vpop.f32.mrf.mxu0
      %v1321 = vadd.f32 %v1160, %v1320
      %v1322 = vpop.f32.mrf.mxu0
      %v1323 = vpop.f32.mrf.mxu0
      %v1324 = vadd.f32 %v1163, %v1323
      %v1325 = vpop.f32.mrf.mxu0
      %1326 = vmatprep.mubr.bf16.mxu0 %v712
      %1327 = vmatmul.mubr.bf16.gmra.mxu0 %v711
      %v1328 = vpop.f32.mrf.mxu0
      %v1329 = vadd.f32 %v1168, %v1328
      %v1330 = vpop.f32.mrf.mxu0
      %v1331 = vpop.f32.mrf.mxu0
      %v1332 = vadd.f32 %v1171, %v1331
      %v1333 = vpop.f32.mrf.mxu0
      %1334 = vmatprep.mubr.bf16.mxu0 %v717
      %1335 = vmatmul.mubr.bf16.gmra.mxu0 %v716
      %v1336 = vpop.f32.mrf.mxu0
      %v1337 = vadd.f32 %v1176, %v1336
      %v1338 = vpop.f32.mrf.mxu0
      %v1339 = vpop.f32.mrf.mxu0
      %v1340 = vadd.f32 %v1179, %v1339
      %v1341 = vpop.f32.mrf.mxu0
      %1342 = vmatprep.mubr.bf16.mxu0 %v722
      %1343 = vmatmul.mubr.bf16.gmra.mxu0 %v721
      %v1344 = vpop.f32.mrf.mxu0
      %v1345 = vadd.f32 %v1184, %v1344
      %v1346 = vpop.f32.mrf.mxu0
      %v1347 = vpop.f32.mrf.mxu0
      %v1348 = vadd.f32 %v1187, %v1347
      %v1349 = vpop.f32.mrf.mxu0
      %1350 = vmatprep.mubr.bf16.mxu0 %v727
      %1351 = vmatmul.mubr.bf16.gmra.mxu0 %v726
      %v1352 = vpop.f32.mrf.mxu0
      %v1353 = vadd.f32 %v1192, %v1352
      %v1354 = vpop.f32.mrf.mxu0
      %v1355 = vpop.f32.mrf.mxu0
      %v1356 = vadd.f32 %v1195, %v1355
      %v1357 = vpop.f32.mrf.mxu0
      %1358 = vmatprep.mubr.bf16.mxu0 %v732
      %1359 = vmatmul.mubr.bf16.gmra.mxu0 %v731
      %v1360 = vpop.f32.mrf.mxu0
      %v1361 = vadd.f32 %v1200, %v1360
      %v1362 = vpop.f32.mrf.mxu0
      %v1363 = vpop.f32.mrf.mxu0
      %v1364 = vadd.f32 %v1203, %v1363
      %v1365 = vpop.f32.mrf.mxu0
      %1366 = vmatprep.mubr.bf16.mxu0 %v737
      %1367 = vmatmul.mubr.bf16.gmra.mxu0 %v736
      %v1368 = vpop.f32.mrf.mxu0
      %v1369 = vadd.f32 %v1208, %v1368
      %v1370 = vpop.f32.mrf.mxu0
      %v1371 = vpop.f32.mrf.mxu0
      %v1372 = vadd.f32 %v1211, %v1371
      %v1373 = vpop.f32.mrf.mxu0
      %1374 = vmatprep.mubr.bf16.mxu0 %v742
      %1375 = vmatmul.mubr.bf16.gmra.mxu0 %v741
      %v1376 = vpop.f32.mrf.mxu0
      %v1377 = vadd.f32 %v1216, %v1376
      %v1378 = vpop.f32.mrf.mxu0
      %v1379 = vpop.f32.mrf.mxu0
      %v1380 = vadd.f32 %v1219, %v1379
      %v1381 = vpop.f32.mrf.mxu0
      %1382 = vmatprep.mubr.bf16.mxu0 %v747
      %1383 = vmatmul.mubr.bf16.gmra.mxu0 %v746
      %v1384 = vpop.f32.mrf.mxu0
      %v1385 = vadd.f32 %v1224, %v1384
      %v1386 = vpop.f32.mrf.mxu0
      %v1387 = vpop.f32.mrf.mxu0
      %v1388 = vadd.f32 %v1227, %v1387
      %v1389 = vpop.f32.mrf.mxu0
      %1390 = vmatprep.mubr.bf16.mxu0 %v752
      %1391 = vmatmul.mubr.bf16.gmra.mxu0 %v751
      %v1392 = vpop.f32.mrf.mxu0
      %v1393 = vadd.f32 %v1232, %v1392
      %v1394 = vpop.f32.mrf.mxu0
      %v1395 = vpop.f32.mrf.mxu0
      %v1396 = vadd.f32 %v1235, %v1395
      %v1397 = vpop.f32.mrf.mxu0
      %1398 = vmatprep.mubr.bf16.mxu0 %v757
      %1399 = vmatmul.mubr.bf16.gmra.mxu0 %v756
      %v1400 = vpop.f32.mrf.mxu0
      %v1401 = vadd.f32 %v1240, %v1400
      %v1402 = vpop.f32.mrf.mxu0
      %v1403 = vpop.f32.mrf.mxu0
      %v1404 = vadd.f32 %v1243, %v1403
      %v1405 = vpop.f32.mrf.mxu0
      %1406 = vmatprep.mubr.bf16.mxu0 %v762
      %1407 = vmatmul.mubr.bf16.gmra.mxu0 %v761
      %v1408 = vpop.f32.mrf.mxu0
      %v1409 = vadd.f32 %v1248, %v1408
      %v1410 = vpop.f32.mrf.mxu0
      %v1411 = vpop.f32.mrf.mxu0
      %v1412 = vadd.f32 %v1251, %v1411
      %v1413 = vpop.f32.mrf.mxu0
      %1414 = vdwg.mxu0
      %1415 = vmatprep.subr.bf16.mxu0 0
      %1416 = vmatpush1.bf16.msra.mxu0 0
      %1417 = vmatprep.subr.bf16.mxu0 0
      %1418 = vmatpush1.bf16.msra.mxu0 0
      %1419 = vmatprep.subr.bf16.mxu0 0
      %1420 = vmatpush1.bf16.msra.mxu0 0
      %1421 = vmatprep.subr.bf16.mxu0 0
      %1422 = vmatpush1.bf16.msra.mxu0 0
      %1423 = vmatprep.subr.bf16.mxu0 0
      %1424 = vmatpush1.bf16.msra.mxu0 %v1007
      %1425 = vmatprep.subr.bf16.mxu0 0
      %1426 = vmatpush1.bf16.msra.mxu0 %v1006
      %1427 = vmatprep.subr.bf16.mxu0 0
      %1428 = vmatpush1.bf16.msra.mxu0 %v1005
      %1429 = vmatprep.subr.bf16.mxu0 0
      %1430 = vmatpush1.bf16.msra.mxu0 %v1004
      %1431 = vmatprep.subr.bf16.mxu0 0
      %1432 = vmatpush2.bf16.msra.mxu0 0
      %1433 = vmatprep.subr.bf16.mxu0 0
      %1434 = vmatpush2.bf16.msra.mxu0 0
      %1435 = vmatprep.subr.bf16.mxu0 0
      %1436 = vmatpush2.bf16.msra.mxu0 0
      %1437 = vmatprep.subr.bf16.mxu0 0
      %1438 = vmatpush2.bf16.msra.mxu0 0
      %1439 = vmatprep.subr.bf16.mxu0 0
      %1440 = vmatpush2.bf16.msra.mxu0 0
      %1441 = vmatprep.subr.bf16.mxu0 0
      %1442 = vmatpush2.bf16.msra.mxu0 0
      %1443 = vmatprep.subr.bf16.mxu0 0
      %1444 = vmatpush2.bf16.msra.mxu0 0
      %1445 = vmatprep.subr.bf16.mxu0 0
      %1446 = vmatpush2.bf16.msra.mxu0 0
      %1447 = vmatprep.mubr.bf16.mxu0 0
      %1448 = vmatmul.mubr.bf16.gmra.mxu0 %v1046
      %v1449 = vpop.f32.mrf.mxu0
      %v1450 = vadd.f32 %v1289, %v1449
      %v1451 = vpop.f32.mrf.mxu0
      %v1452 = vpop.f32.mrf.mxu0
      %v1453 = vadd.f32 %v1292, %v1452
      %v1454 = vpop.f32.mrf.mxu0
      %1455 = vmatprep.mubr.bf16.mxu0 0
      %1456 = vmatmul.mubr.bf16.gmra.mxu0 %v1049
      %v1457 = vpop.f32.mrf.mxu0
      %v1458 = vadd.f32 %v1297, %v1457
      %v1459 = vpop.f32.mrf.mxu0
      %v1460 = vpop.f32.mrf.mxu0
      %v1461 = vadd.f32 %v1300, %v1460
      %v1462 = vpop.f32.mrf.mxu0
      %1463 = vmatprep.mubr.bf16.mxu0 0
      %1464 = vmatmul.mubr.bf16.gmra.mxu0 %v1052
      %v1465 = vpop.f32.mrf.mxu0
      %v1466 = vadd.f32 %v1305, %v1465
      %v1467 = vpop.f32.mrf.mxu0
      %v1468 = vpop.f32.mrf.mxu0
      %v1469 = vadd.f32 %v1308, %v1468
      %v1470 = vpop.f32.mrf.mxu0
      %1471 = vmatprep.mubr.bf16.mxu0 0
      %1472 = vmatmul.mubr.bf16.gmra.mxu0 %v1055
      %v1473 = vpop.f32.mrf.mxu0
      %v1474 = vadd.f32 %v1313, %v1473
      %v1475 = vpop.f32.mrf.mxu0
      %v1476 = vpop.f32.mrf.mxu0
      %v1477 = vadd.f32 %v1316, %v1476
      %v1478 = vpop.f32.mrf.mxu0
      %1479 = vmatprep.mubr.bf16.mxu0 0
      %1480 = vmatmul.mubr.bf16.gmra.mxu0 %v1058
      %v1481 = vpop.f32.mrf.mxu0
      %v1482 = vadd.f32 %v1321, %v1481
      %v1483 = vpop.f32.mrf.mxu0
      %v1484 = vpop.f32.mrf.mxu0
      %v1485 = vadd.f32 %v1324, %v1484
      %v1486 = vpop.f32.mrf.mxu0
      %1487 = vmatprep.mubr.bf16.mxu0 0
      %1488 = vmatmul.mubr.bf16.gmra.mxu0 %v1061
      %v1489 = vpop.f32.mrf.mxu0
      %v1490 = vadd.f32 %v1329, %v1489
      %v1491 = vpop.f32.mrf.mxu0
      %v1492 = vpop.f32.mrf.mxu0
      %v1493 = vadd.f32 %v1332, %v1492
      %v1494 = vpop.f32.mrf.mxu0
      %1495 = vmatprep.mubr.bf16.mxu0 0
      %1496 = vmatmul.mubr.bf16.gmra.mxu0 %v1064
      %v1497 = vpop.f32.mrf.mxu0
      %v1498 = vadd.f32 %v1337, %v1497
      %v1499 = vpop.f32.mrf.mxu0
      %v1500 = vpop.f32.mrf.mxu0
      %v1501 = vadd.f32 %v1340, %v1500
      %v1502 = vpop.f32.mrf.mxu0
      %1503 = vmatprep.mubr.bf16.mxu0 0
      %1504 = vmatmul.mubr.bf16.gmra.mxu0 %v1067
      %v1505 = vpop.f32.mrf.mxu0
      %v1506 = vadd.f32 %v1345, %v1505
      %v1507 = vpop.f32.mrf.mxu0
      %v1508 = vpop.f32.mrf.mxu0
      %v1509 = vadd.f32 %v1348, %v1508
      %v1510 = vpop.f32.mrf.mxu0
      %1511 = vmatprep.mubr.bf16.mxu0 0
      %1512 = vmatmul.mubr.bf16.gmra.mxu0 %v1070
      %v1513 = vpop.f32.mrf.mxu0
      %v1514 = vadd.f32 %v1353, %v1513
      %v1515 = vpop.f32.mrf.mxu0
      %v1516 = vpop.f32.mrf.mxu0
      %v1517 = vadd.f32 %v1356, %v1516
      %v1518 = vpop.f32.mrf.mxu0
      %1519 = vmatprep.mubr.bf16.mxu0 0
      %1520 = vmatmul.mubr.bf16.gmra.mxu0 %v1073
      %v1521 = vpop.f32.mrf.mxu0
      %v1522 = vadd.f32 %v1361, %v1521
      %v1523 = vpop.f32.mrf.mxu0
      %v1524 = vpop.f32.mrf.mxu0
      %v1525 = vadd.f32 %v1364, %v1524
      %v1526 = vpop.f32.mrf.mxu0
      %1527 = vmatprep.mubr.bf16.mxu0 0
      %1528 = vmatmul.mubr.bf16.gmra.mxu0 %v1076
      %v1529 = vpop.f32.mrf.mxu0
      %v1530 = vadd.f32 %v1369, %v1529
      %v1531 = vpop.f32.mrf.mxu0
      %v1532 = vpop.f32.mrf.mxu0
      %v1533 = vadd.f32 %v1372, %v1532
      %v1534 = vpop.f32.mrf.mxu0
      %1535 = vmatprep.mubr.bf16.mxu0 0
      %1536 = vmatmul.mubr.bf16.gmra.mxu0 %v1079
      %v1537 = vpop.f32.mrf.mxu0
      %v1538 = vadd.f32 %v1377, %v1537
      %v1539 = vpop.f32.mrf.mxu0
      %v1540 = vpop.f32.mrf.mxu0
      %v1541 = vadd.f32 %v1380, %v1540
      %v1542 = vpop.f32.mrf.mxu0
      %1543 = vmatprep.mubr.bf16.mxu0 0
      %1544 = vmatmul.mubr.bf16.gmra.mxu0 %v1082
      %v1545 = vpop.f32.mrf.mxu0
      %v1546 = vadd.f32 %v1385, %v1545
      %v1547 = vpop.f32.mrf.mxu0
      %v1548 = vpop.f32.mrf.mxu0
      %v1549 = vadd.f32 %v1388, %v1548
      %v1550 = vpop.f32.mrf.mxu0
      %1551 = vmatprep.mubr.bf16.mxu0 0
      %1552 = vmatmul.mubr.bf16.gmra.mxu0 %v1085
      %v1553 = vpop.f32.mrf.mxu0
      %v1554 = vadd.f32 %v1393, %v1553
      %v1555 = vpop.f32.mrf.mxu0
      %v1556 = vpop.f32.mrf.mxu0
      %v1557 = vadd.f32 %v1396, %v1556
      %v1558 = vpop.f32.mrf.mxu0
      %1559 = vmatprep.mubr.bf16.mxu0 0
      %1560 = vmatmul.mubr.bf16.gmra.mxu0 %v1088
      %v1561 = vpop.f32.mrf.mxu0
      %v1562 = vadd.f32 %v1401, %v1561
      %v1563 = vpop.f32.mrf.mxu0
      %v1564 = vpop.f32.mrf.mxu0
      %v1565 = vadd.f32 %v1404, %v1564
      %v1566 = vpop.f32.mrf.mxu0
      %1567 = vmatprep.mubr.bf16.mxu0 0
      %1568 = vmatmul.mubr.bf16.gmra.mxu0 %v1091
      %v1569 = vpop.f32.mrf.mxu0
      %v1570 = vadd.f32 %v1409, %v1569
      %v1571 = vpop.f32.mrf.mxu0
      %v1572 = vpop.f32.mrf.mxu0
      %v1573 = vadd.f32 %v1412, %v1572
      %v1574 = vpop.f32.mrf.mxu0
      %1575 = vdwg.mxu0
      %v1576 = vsel %vm1044, %v1450, 0.0
      %v1577 = vsel %vm1044, %v1453, 0.0
      %v1578 = vadd.f32 %v1576, %v1577
      %v1579 = vsel %vm1044, %v1458, 0.0
      %v1580 = vadd.f32 %v1578, %v1579
      %v1581 = vsel %vm1044, %v1461, 0.0
      %v1582 = vadd.f32 %v1580, %v1581
      %v1583 = vsel %vm1044, %v1466, 0.0
      %v1584 = vadd.f32 %v1582, %v1583
      %v1585 = vsel %vm1044, %v1469, 0.0
      %v1586 = vadd.f32 %v1584, %v1585
      %v1587 = vsel %vm1044, %v1474, 0.0
      %v1588 = vadd.f32 %v1586, %v1587
      %v1589 = vsel %vm1044, %v1477, 0.0
      %v1590 = vadd.f32 %v1588, %v1589
      %v1591 = vsel %vm1044, %v1482, 0.0
      %v1592 = vadd.f32 %v1590, %v1591
      %v1593 = vsel %vm1044, %v1485, 0.0
      %v1594 = vadd.f32 %v1592, %v1593
      %v1595 = vsel %vm1044, %v1490, 0.0
      %v1596 = vadd.f32 %v1594, %v1595
      %v1597 = vsel %vm1044, %v1493, 0.0
      %v1598 = vadd.f32 %v1596, %v1597
      %v1599 = vsel %vm1044, %v1498, 0.0
      %v1600 = vadd.f32 %v1598, %v1599
      %v1601 = vsel %vm1044, %v1501, 0.0
      %v1602 = vadd.f32 %v1600, %v1601
      %v1603 = vsel %vm1044, %v1506, 0.0
      %v1604 = vadd.f32 %v1602, %v1603
      %v1605 = vsel %vm1044, %v1509, 0.0
      %v1606 = vadd.f32 %v1604, %v1605
      %v1607 = vsel %vm1044, %v1514, 0.0
      %v1608 = vadd.f32 %v1606, %v1607
      %v1609 = vsel %vm1044, %v1517, 0.0
      %v1610 = vadd.f32 %v1608, %v1609
      %v1611 = vsel %vm1044, %v1522, 0.0
      %v1612 = vadd.f32 %v1610, %v1611
      %v1613 = vsel %vm1044, %v1525, 0.0
      %v1614 = vadd.f32 %v1612, %v1613
      %v1615 = vsel %vm1044, %v1530, 0.0
      %v1616 = vadd.f32 %v1614, %v1615
      %v1617 = vsel %vm1044, %v1533, 0.0
      %v1618 = vadd.f32 %v1616, %v1617
      %v1619 = vsel %vm1044, %v1538, 0.0
      %v1620 = vadd.f32 %v1618, %v1619
      %v1621 = vsel %vm1044, %v1541, 0.0
      %v1622 = vadd.f32 %v1620, %v1621
      %v1623 = vsel %vm1044, %v1546, 0.0
      %v1624 = vadd.f32 %v1622, %v1623
      %v1625 = vsel %vm1044, %v1549, 0.0
      %v1626 = vadd.f32 %v1624, %v1625
      %v1627 = vsel %vm1044, %v1554, 0.0
      %v1628 = vadd.f32 %v1626, %v1627
      %v1629 = vsel %vm1044, %v1557, 0.0
      %v1630 = vadd.f32 %v1628, %v1629
      %v1631 = vsel %vm1044, %v1562, 0.0
      %v1632 = vadd.f32 %v1630, %v1631
      %v1633 = vsel %vm1044, %v1565, 0.0
      %v1634 = vadd.f32 %v1632, %v1633
      %v1635 = vsel %vm1044, %v1570, 0.0
      %v1636 = vadd.f32 %v1634, %v1635
      %v1637 = vsel %vm1044, %v1573, 0.0
      %v1638 = vadd.f32 %v1636, %v1637
      %v1639 = vrot.slane %v1638, 4
      %v1640 = vadd.f32 %v1638, %v1639
      %v1641 = vrot.slane %v1640, 2
      %v1642 = vadd.f32 %v1640, %v1641
      %v1643 = vrot.slane %v1642, 1
      %v1644 = vadd.f32 %v1642, %v1643
      %v1645 = vmul.f32 %v1644, 0.00390625
      %v1646 = vmul.f32 %v1450, %v1450
      %v1647 = vmul.f32 %v1453, %v1453
      %v1648 = vmul.f32 %v1458, %v1458
      %v1649 = vmul.f32 %v1461, %v1461
      %v1650 = vmul.f32 %v1466, %v1466
      %v1651 = vmul.f32 %v1469, %v1469
      %v1652 = vmul.f32 %v1474, %v1474
      %v1653 = vmul.f32 %v1477, %v1477
      %v1654 = vmul.f32 %v1482, %v1482
      %v1655 = vmul.f32 %v1485, %v1485
      %v1656 = vmul.f32 %v1490, %v1490
      %v1657 = vmul.f32 %v1493, %v1493
      %v1658 = vmul.f32 %v1498, %v1498
      %v1659 = vmul.f32 %v1501, %v1501
      %v1660 = vmul.f32 %v1506, %v1506
      %v1661 = vmul.f32 %v1509, %v1509
      %v1662 = vmul.f32 %v1514, %v1514
      %v1663 = vmul.f32 %v1517, %v1517
      %v1664 = vmul.f32 %v1522, %v1522
      %v1665 = vmul.f32 %v1525, %v1525
      %v1666 = vmul.f32 %v1530, %v1530
      %v1667 = vmul.f32 %v1533, %v1533
      %v1668 = vmul.f32 %v1538, %v1538
      %v1669 = vmul.f32 %v1541, %v1541
      %v1670 = vmul.f32 %v1546, %v1546
      %v1671 = vmul.f32 %v1549, %v1549
      %v1672 = vmul.f32 %v1554, %v1554
      %v1673 = vmul.f32 %v1557, %v1557
      %v1674 = vmul.f32 %v1562, %v1562
      %v1675 = vmul.f32 %v1565, %v1565
      %v1676 = vmul.f32 %v1570, %v1570
      %v1677 = vmul.f32 %v1573, %v1573
      %v1678 = vsel %vm1044, %v1646, 0.0
      %v1679 = vsel %vm1044, %v1647, 0.0
      %v1680 = vadd.f32 %v1678, %v1679
      %v1681 = vsel %vm1044, %v1648, 0.0
      %v1682 = vadd.f32 %v1680, %v1681
      %v1683 = vsel %vm1044, %v1649, 0.0
      %v1684 = vadd.f32 %v1682, %v1683
      %v1685 = vsel %vm1044, %v1650, 0.0
      %v1686 = vadd.f32 %v1684, %v1685
      %v1687 = vsel %vm1044, %v1651, 0.0
      %v1688 = vadd.f32 %v1686, %v1687
      %v1689 = vsel %vm1044, %v1652, 0.0
      %v1690 = vadd.f32 %v1688, %v1689
      %v1691 = vsel %vm1044, %v1653, 0.0
      %v1692 = vadd.f32 %v1690, %v1691
      %v1693 = vsel %vm1044, %v1654, 0.0
      %v1694 = vadd.f32 %v1692, %v1693
      %v1695 = vsel %vm1044, %v1655, 0.0
      %v1696 = vadd.f32 %v1694, %v1695
      %v1697 = vsel %vm1044, %v1656, 0.0
      %v1698 = vadd.f32 %v1696, %v1697
      %v1699 = vsel %vm1044, %v1657, 0.0
      %v1700 = vadd.f32 %v1698, %v1699
      %v1701 = vsel %vm1044, %v1658, 0.0
      %v1702 = vadd.f32 %v1700, %v1701
      %v1703 = vsel %vm1044, %v1659, 0.0
      %v1704 = vadd.f32 %v1702, %v1703
      %v1705 = vsel %vm1044, %v1660, 0.0
      %v1706 = vadd.f32 %v1704, %v1705
      %v1707 = vsel %vm1044, %v1661, 0.0
      %v1708 = vadd.f32 %v1706, %v1707
      %v1709 = vsel %vm1044, %v1662, 0.0
      %v1710 = vadd.f32 %v1708, %v1709
      %v1711 = vsel %vm1044, %v1663, 0.0
      %v1712 = vadd.f32 %v1710, %v1711
      %v1713 = vsel %vm1044, %v1664, 0.0
      %v1714 = vadd.f32 %v1712, %v1713
      %v1715 = vsel %vm1044, %v1665, 0.0
      %v1716 = vadd.f32 %v1714, %v1715
      %v1717 = vsel %vm1044, %v1666, 0.0
      %v1718 = vadd.f32 %v1716, %v1717
      %v1719 = vsel %vm1044, %v1667, 0.0
      %v1720 = vadd.f32 %v1718, %v1719
      %v1721 = vsel %vm1044, %v1668, 0.0
      %v1722 = vadd.f32 %v1720, %v1721
      %v1723 = vsel %vm1044, %v1669, 0.0
      %v1724 = vadd.f32 %v1722, %v1723
      %v1725 = vsel %vm1044, %v1670, 0.0
      %v1726 = vadd.f32 %v1724, %v1725
      %v1727 = vsel %vm1044, %v1671, 0.0
      %v1728 = vadd.f32 %v1726, %v1727
      %v1729 = vsel %vm1044, %v1672, 0.0
      %v1730 = vadd.f32 %v1728, %v1729
      %v1731 = vsel %vm1044, %v1673, 0.0
      %v1732 = vadd.f32 %v1730, %v1731
      %v1733 = vsel %vm1044, %v1674, 0.0
      %v1734 = vadd.f32 %v1732, %v1733
      %v1735 = vsel %vm1044, %v1675, 0.0
      %v1736 = vadd.f32 %v1734, %v1735
      %v1737 = vsel %vm1044, %v1676, 0.0
      %v1738 = vadd.f32 %v1736, %v1737
      %v1739 = vsel %vm1044, %v1677, 0.0
      %v1740 = vadd.f32 %v1738, %v1739
      %v1741 = vrot.slane %v1740, 4
      %v1742 = vadd.f32 %v1740, %v1741
      %v1743 = vrot.slane %v1742, 2
      %v1744 = vadd.f32 %v1742, %v1743
      %v1745 = vrot.slane %v1744, 1
      %v1746 = vadd.f32 %v1744, %v1745
      %v1747 = vmul.f32 %v1746, 0.00390625
      %v1748 = vmul.f32 %v1645, %v1645
      %v1749 = vsub.f32 %v1747, %v1748
      %v1750 = vmax.f32 %v1749, 0.0
      %v1751 = vsub.f32 %v1450, %v1645
      %v1752 = vsub.f32 %v1453, %v1645
      %v1753 = vsub.f32 %v1458, %v1645
      %v1754 = vsub.f32 %v1461, %v1645
      %v1755 = vsub.f32 %v1466, %v1645
      %v1756 = vsub.f32 %v1469, %v1645
      %v1757 = vsub.f32 %v1474, %v1645
      %v1758 = vsub.f32 %v1477, %v1645
      %v1759 = vsub.f32 %v1482, %v1645
      %v1760 = vsub.f32 %v1485, %v1645
      %v1761 = vsub.f32 %v1490, %v1645
      %v1762 = vsub.f32 %v1493, %v1645
      %v1763 = vsub.f32 %v1498, %v1645
      %v1764 = vsub.f32 %v1501, %v1645
      %v1765 = vsub.f32 %v1506, %v1645
      %v1766 = vsub.f32 %v1509, %v1645
      %v1767 = vsub.f32 %v1514, %v1645
      %v1768 = vsub.f32 %v1517, %v1645
      %v1769 = vsub.f32 %v1522, %v1645
      %v1770 = vsub.f32 %v1525, %v1645
      %v1771 = vsub.f32 %v1530, %v1645
      %v1772 = vsub.f32 %v1533, %v1645
      %v1773 = vsub.f32 %v1538, %v1645
      %v1774 = vsub.f32 %v1541, %v1645
      %v1775 = vsub.f32 %v1546, %v1645
      %v1776 = vsub.f32 %v1549, %v1645
      %v1777 = vsub.f32 %v1554, %v1645
      %v1778 = vsub.f32 %v1557, %v1645
      %v1779 = vsub.f32 %v1562, %v1645
      %v1780 = vsub.f32 %v1565, %v1645
      %v1781 = vsub.f32 %v1570, %v1645
      %v1782 = vsub.f32 %v1573, %v1645
      %v1783 = vadd.f32 %v1750, 1e-05
      %v1784 = vrsqrt.pop %v1783
      %v1785 = vmul.f32 %v1751, %v1784
      %v1786 = vmul.f32 %v1752, %v1784
      %v1787 = vmul.f32 %v1753, %v1784
      %v1788 = vmul.f32 %v1754, %v1784
      %v1789 = vmul.f32 %v1755, %v1784
      %v1790 = vmul.f32 %v1756, %v1784
      %v1791 = vmul.f32 %v1757, %v1784
      %v1792 = vmul.f32 %v1758, %v1784
      %v1793 = vmul.f32 %v1759, %v1784
      %v1794 = vmul.f32 %v1760, %v1784
      %v1795 = vmul.f32 %v1761, %v1784
      %v1796 = vmul.f32 %v1762, %v1784
      %v1797 = vmul.f32 %v1763, %v1784
      %v1798 = vmul.f32 %v1764, %v1784
      %v1799 = vmul.f32 %v1765, %v1784
      %v1800 = vmul.f32 %v1766, %v1784
      %v1801 = vmul.f32 %v1767, %v1784
      %v1802 = vmul.f32 %v1768, %v1784
      %v1803 = vmul.f32 %v1769, %v1784
      %v1804 = vmul.f32 %v1770, %v1784
      %v1805 = vmul.f32 %v1771, %v1784
      %v1806 = vmul.f32 %v1772, %v1784
      %v1807 = vmul.f32 %v1773, %v1784
      %v1808 = vmul.f32 %v1774, %v1784
      %v1809 = vmul.f32 %v1775, %v1784
      %v1810 = vmul.f32 %v1776, %v1784
      %v1811 = vmul.f32 %v1777, %v1784
      %v1812 = vmul.f32 %v1778, %v1784
      %v1813 = vmul.f32 %v1779, %v1784
      %v1814 = vmul.f32 %v1780, %v1784
      %v1815 = vmul.f32 %v1781, %v1784
      %v1816 = vmul.f32 %v1782, %v1784
      %v1817 = vld [vmem:[%s3] sm:$0x1]
      %v1819 = vlaneseq
      %v1820 = vshrl.u32 %v1819, 7
      %v1821 = vsub.s32 0, %v1820
      %v1822 = vrot.slane %v1817, %v1821
      %v1824 = vmul.f32 %v1785, %v1822
      %v1825 = vmul.f32 %v1786, %v1822
      %v1826 = vmul.f32 %v1787, %v1822
      %v1827 = vmul.f32 %v1788, %v1822
      %v1828 = vmul.f32 %v1789, %v1822
      %v1829 = vmul.f32 %v1790, %v1822
      %v1830 = vmul.f32 %v1791, %v1822
      %v1831 = vmul.f32 %v1792, %v1822
      %v1832 = vmul.f32 %v1793, %v1822
      %v1833 = vmul.f32 %v1794, %v1822
      %v1834 = vmul.f32 %v1795, %v1822
      %v1835 = vmul.f32 %v1796, %v1822
      %v1836 = vmul.f32 %v1797, %v1822
      %v1837 = vmul.f32 %v1798, %v1822
      %v1838 = vmul.f32 %v1799, %v1822
      %v1839 = vmul.f32 %v1800, %v1822
      %v1840 = vmul.f32 %v1801, %v1822
      %v1841 = vmul.f32 %v1802, %v1822
      %v1842 = vmul.f32 %v1803, %v1822
      %v1843 = vmul.f32 %v1804, %v1822
      %v1844 = vmul.f32 %v1805, %v1822
      %v1845 = vmul.f32 %v1806, %v1822
      %v1846 = vmul.f32 %v1807, %v1822
      %v1847 = vmul.f32 %v1808, %v1822
      %v1848 = vmul.f32 %v1809, %v1822
      %v1849 = vmul.f32 %v1810, %v1822
      %v1850 = vmul.f32 %v1811, %v1822
      %v1851 = vmul.f32 %v1812, %v1822
      %v1852 = vmul.f32 %v1813, %v1822
      %v1853 = vmul.f32 %v1814, %v1822
      %v1854 = vmul.f32 %v1815, %v1822
      %v1855 = vmul.f32 %v1816, %v1822
      %v1856 = vld [vmem:[%s4] sm:$0x1]
      %v1858 = vlaneseq
      %v1859 = vshrl.u32 %v1858, 7
      %v1860 = vsub.s32 0, %v1859
      %v1861 = vrot.slane %v1856, %v1860
      %v1863 = vadd.f32 %v1824, %v1861
      %v1864 = vadd.f32 %v1825, %v1861
      %v1865 = vadd.f32 %v1826, %v1861
      %v1866 = vadd.f32 %v1827, %v1861
      %v1867 = vadd.f32 %v1828, %v1861
      %v1868 = vadd.f32 %v1829, %v1861
      %v1869 = vadd.f32 %v1830, %v1861
      %v1870 = vadd.f32 %v1831, %v1861
      %v1871 = vadd.f32 %v1832, %v1861
      %v1872 = vadd.f32 %v1833, %v1861
      %v1873 = vadd.f32 %v1834, %v1861
      %v1874 = vadd.f32 %v1835, %v1861
      %v1875 = vadd.f32 %v1836, %v1861
      %v1876 = vadd.f32 %v1837, %v1861
      %v1877 = vadd.f32 %v1838, %v1861
      %v1878 = vadd.f32 %v1839, %v1861
      %v1879 = vadd.f32 %v1840, %v1861
      %v1880 = vadd.f32 %v1841, %v1861
      %v1881 = vadd.f32 %v1842, %v1861
      %v1882 = vadd.f32 %v1843, %v1861
      %v1883 = vadd.f32 %v1844, %v1861
      %v1884 = vadd.f32 %v1845, %v1861
      %v1885 = vadd.f32 %v1846, %v1861
      %v1886 = vadd.f32 %v1847, %v1861
      %v1887 = vadd.f32 %v1848, %v1861
      %v1888 = vadd.f32 %v1849, %v1861
      %v1889 = vadd.f32 %v1850, %v1861
      %v1890 = vadd.f32 %v1851, %v1861
      %v1891 = vadd.f32 %v1852, %v1861
      %v1892 = vadd.f32 %v1853, %v1861
      %v1893 = vadd.f32 %v1854, %v1861
      %v1894 = vadd.f32 %v1855, %v1861
      %v1895 = vmax.f32 %v1863, 0.0
      %v1896 = vmax.f32 %v1864, 0.0
      %v1897 = vmax.f32 %v1865, 0.0
      %v1898 = vmax.f32 %v1866, 0.0
      %v1899 = vmax.f32 %v1867, 0.0
      %v1900 = vmax.f32 %v1868, 0.0
      %v1901 = vmax.f32 %v1869, 0.0
      %v1902 = vmax.f32 %v1870, 0.0
      %v1903 = vmax.f32 %v1871, 0.0
      %v1904 = vmax.f32 %v1872, 0.0
      %v1905 = vmax.f32 %v1873, 0.0
      %v1906 = vmax.f32 %v1874, 0.0
      %v1907 = vmax.f32 %v1875, 0.0
      %v1908 = vmax.f32 %v1876, 0.0
      %v1909 = vmax.f32 %v1877, 0.0
      %v1910 = vmax.f32 %v1878, 0.0
      %v1911 = vmax.f32 %v1879, 0.0
      %v1912 = vmax.f32 %v1880, 0.0
      %v1913 = vmax.f32 %v1881, 0.0
      %v1914 = vmax.f32 %v1882, 0.0
      %v1915 = vmax.f32 %v1883, 0.0
      %v1916 = vmax.f32 %v1884, 0.0
      %v1917 = vmax.f32 %v1885, 0.0
      %v1918 = vmax.f32 %v1886, 0.0
      %v1919 = vmax.f32 %v1887, 0.0
      %v1920 = vmax.f32 %v1888, 0.0
      %v1921 = vmax.f32 %v1889, 0.0
      %v1922 = vmax.f32 %v1890, 0.0
      %v1923 = vmax.f32 %v1891, 0.0
      %v1924 = vmax.f32 %v1892, 0.0
      %v1925 = vmax.f32 %v1893, 0.0
      %v1926 = vmax.f32 %v1894, 0.0
      %v1927 = vpack.c.bf16 %v1896, %v1895
      %v1928 = vpack.c.bf16 %v1898, %v1897
      %v1929 = vpack.c.bf16 %v1900, %v1899
      %v1930 = vpack.c.bf16 %v1902, %v1901
      %v1931 = vpack.c.bf16 %v1904, %v1903
      %v1932 = vpack.c.bf16 %v1906, %v1905
      %v1933 = vpack.c.bf16 %v1908, %v1907
      %v1934 = vpack.c.bf16 %v1910, %v1909
      %v1935 = vpack.c.bf16 %v1912, %v1911
      %v1936 = vpack.c.bf16 %v1914, %v1913
      %v1937 = vpack.c.bf16 %v1916, %v1915
      %v1938 = vpack.c.bf16 %v1918, %v1917
      %v1939 = vpack.c.bf16 %v1920, %v1919
      %v1940 = vpack.c.bf16 %v1922, %v1921
      %v1941 = vpack.c.bf16 %v1924, %v1923
      %v1942 = vpack.c.bf16 %v1926, %v1925
      %v1959 = vunpack.c.l.b16 %v1927
      %v1960 = vunpack.c.h.b16 %v1927
      %v1961 = vunpack.c.l.b16 %v1928
      %v1962 = vunpack.c.h.b16 %v1928
      %v1963 = vunpack.c.l.b16 %v1929
      %v1964 = vunpack.c.h.b16 %v1929
      %v1965 = vunpack.c.l.b16 %v1930
      %v1966 = vunpack.c.h.b16 %v1930
      %v1967 = vunpack.c.l.b16 %v1931
      %v1968 = vunpack.c.h.b16 %v1931
      %v1969 = vunpack.c.l.b16 %v1932
      %v1970 = vunpack.c.h.b16 %v1932
      %v1971 = vunpack.c.l.b16 %v1933
      %v1972 = vunpack.c.h.b16 %v1933
      %v1973 = vunpack.c.l.b16 %v1934
      %v1974 = vunpack.c.h.b16 %v1934
      %v1975 = vunpack.c.l.b16 %v1935
      %v1976 = vunpack.c.h.b16 %v1935
      %v1977 = vunpack.c.l.b16 %v1936
      %v1978 = vunpack.c.h.b16 %v1936
      %v1979 = vunpack.c.l.b16 %v1937
      %v1980 = vunpack.c.h.b16 %v1937
      %v1981 = vunpack.c.l.b16 %v1938
      %v1982 = vunpack.c.h.b16 %v1938
      %v1983 = vunpack.c.l.b16 %v1939
      %v1984 = vunpack.c.h.b16 %v1939
      %v1985 = vunpack.c.l.b16 %v1940
      %v1986 = vunpack.c.h.b16 %v1940
      %v1987 = vunpack.c.l.b16 %v1941
      %v1988 = vunpack.c.h.b16 %v1941
      %v1989 = vunpack.c.l.b16 %v1942
      %v1990 = vunpack.c.h.b16 %v1942
      %v1991 = vpack.c.b16 %v1959, %v1959
      %v1992 = vpack.c.b16 %v1960, %v1960
      %v1993 = vpack.c.b16 %v1961, %v1961
      %v1994 = vpack.c.b16 %v1962, %v1962
      %v1995 = vpack.c.b16 %v1963, %v1963
      %v1996 = vpack.c.b16 %v1964, %v1964
      %v1997 = vpack.c.b16 %v1965, %v1965
      %v1998 = vpack.c.b16 %v1966, %v1966
      %v1999 = vpack.c.b16 %v1967, %v1967
      %v2000 = vpack.c.b16 %v1968, %v1968
      %v2001 = vpack.c.b16 %v1969, %v1969
      %v2002 = vpack.c.b16 %v1970, %v1970
      %v2003 = vpack.c.b16 %v1971, %v1971
      %v2004 = vpack.c.b16 %v1972, %v1972
      %v2005 = vpack.c.b16 %v1973, %v1973
      %v2006 = vpack.c.b16 %v1974, %v1974
      %v2007 = vpack.c.b16 %v1975, %v1975
      %v2008 = vpack.c.b16 %v1976, %v1976
      %v2009 = vpack.c.b16 %v1977, %v1977
      %v2010 = vpack.c.b16 %v1978, %v1978
      %v2011 = vpack.c.b16 %v1979, %v1979
      %v2012 = vpack.c.b16 %v1980, %v1980
      %v2013 = vpack.c.b16 %v1981, %v1981
      %v2014 = vpack.c.b16 %v1982, %v1982
      %v2015 = vpack.c.b16 %v1983, %v1983
      %v2016 = vpack.c.b16 %v1984, %v1984
      %v2017 = vpack.c.b16 %v1985, %v1985
      %v2018 = vpack.c.b16 %v1986, %v1986
      %v2019 = vpack.c.b16 %v1987, %v1987
      %v2020 = vpack.c.b16 %v1988, %v1988
      %v2021 = vpack.c.b16 %v1989, %v1989
      %v2022 = vpack.c.b16 %v1990, %v1990
      %vm2055 = vcmask 519168
      %2056 = vst.msk [vmem:[%s251] sm:$0xf] %vm2055, %v1991
      %2057 = vst.msk [vmem:[%s251 + $0x4] sm:$0xf] %vm2055, %v1992
      %2058 = vst.msk [vmem:[%s251 + $0x8] sm:$0xf] %vm2055, %v1993
      %2059 = vst.msk [vmem:[%s251 + $0xc] sm:$0xf] %vm2055, %v1994
      %2060 = vst.msk [vmem:[%s251 + $0x10] sm:$0xf] %vm2055, %v1995
      %2061 = vst.msk [vmem:[%s251 + $0x14] sm:$0xf] %vm2055, %v1996
      %2062 = vst.msk [vmem:[%s251 + $0x18] sm:$0xf] %vm2055, %v1997
      %2063 = vst.msk [vmem:[%s251 + $0x1c] sm:$0xf] %vm2055, %v1998
      %2064 = vst.msk [vmem:[%s251 + $0x20] sm:$0xf] %vm2055, %v1999
      %2065 = vst.msk [vmem:[%s251 + $0x24] sm:$0xf] %vm2055, %v2000
      %2066 = vst.msk [vmem:[%s251 + $0x28] sm:$0xf] %vm2055, %v2001
      %2067 = vst.msk [vmem:[%s251 + $0x2c] sm:$0xf] %vm2055, %v2002
      %2068 = vst.msk [vmem:[%s251 + $0x30] sm:$0xf] %vm2055, %v2003
      %2069 = vst.msk [vmem:[%s251 + $0x34] sm:$0xf] %vm2055, %v2004
      %2070 = vst.msk [vmem:[%s251 + $0x38] sm:$0xf] %vm2055, %v2005
      %2071 = vst.msk [vmem:[%s251 + $0x3c] sm:$0xf] %vm2055, %v2006
      %2072 = vst.msk [vmem:[%s251 + $0x40] sm:$0xf] %vm2055, %v2007
      %2073 = vst.msk [vmem:[%s251 + $0x44] sm:$0xf] %vm2055, %v2008
      %2074 = vst.msk [vmem:[%s251 + $0x48] sm:$0xf] %vm2055, %v2009
      %2075 = vst.msk [vmem:[%s251 + $0x4c] sm:$0xf] %vm2055, %v2010
      %2076 = vst.msk [vmem:[%s251 + $0x50] sm:$0xf] %vm2055, %v2011
      %2077 = vst.msk [vmem:[%s251 + $0x54] sm:$0xf] %vm2055, %v2012
      %2078 = vst.msk [vmem:[%s251 + $0x58] sm:$0xf] %vm2055, %v2013
      %2079 = vst.msk [vmem:[%s251 + $0x5c] sm:$0xf] %vm2055, %v2014
      %2080 = vst.msk [vmem:[%s251 + $0x60] sm:$0xf] %vm2055, %v2015
      %2081 = vst.msk [vmem:[%s251 + $0x64] sm:$0xf] %vm2055, %v2016
      %2082 = vst.msk [vmem:[%s251 + $0x68] sm:$0xf] %vm2055, %v2017
      %2083 = vst.msk [vmem:[%s251 + $0x6c] sm:$0xf] %vm2055, %v2018
      %2084 = vst.msk [vmem:[%s251 + $0x70] sm:$0xf] %vm2055, %v2019
      %2085 = vst.msk [vmem:[%s251 + $0x74] sm:$0xf] %vm2055, %v2020
      %2086 = vst.msk [vmem:[%s251 + $0x78] sm:$0xf] %vm2055, %v2021
      %2087 = vst.msk [vmem:[%s251 + $0x7c] sm:$0xf] %vm2055, %v2022
      %p2088 = scmp.lt.s32.totalorder %s17, 1
      %s2089 = scalar_select %p2088, %s17, 1
      %s2090 = smul.addr %s2089, 32
      %s2091 = smul.addr %s2090, 4
      %s2092 = scalar_lea.vmem %s6, %s2091
      // Predicated region
      $region45: #{course_sr_forward.15} parent=43 // pred_check
        %p2093 = pneg %p166
      $region46: #{course_sr_forward.15} parent=43 // pred_check_branch
        %2095 = sbr.rel (%p2093) target = $region48
      $region47: #{course_sr_forward.15} parent=43 // pred_region
        _
      $region48: #{course_sr_forward.15} parent=43 // pred_fallthru
        _
    $region44: #{course_sr_forward.15} parent=5 // pred_fallthru
      _
    %p2096 = scmp.le.s32.totalorder 2, %s12
    // Predicated region
    $region49: #{course_sr_forward.15} parent=5 // pred_check
      %p2097 = pneg %p2096
    $region50: #{course_sr_forward.15} parent=5 // pred_check_branch
      %2099 = sbr.rel (%p2097) target = $region52
    $region51: #{course_sr_forward.15} parent=5 // pred_region
      %s2100 = ssub.s32 %s12, 2
      // Predicated region
      $region53: #{course_sr_forward.15} parent=51 // pred_check
        %p2101 = pneg %p172
      $region54: #{course_sr_forward.15} parent=51 // pred_check_branch
        %2103 = sbr.rel (%p2101) target = $region56
      $region55: #{course_sr_forward.15} parent=51 // pred_region
        %p2104 = scmp.lt.s32.totalorder %s18, 1
        %s2105 = scalar_select %p2104, %s18, 1
        %s2106 = smul.addr %s2105, 32
        %s2107 = smul.addr %s2106, 4
        %s2108 = scalar_lea.vmem %s6, %s2107
      $region56: #{course_sr_forward.15} parent=51 // pred_fallthru
        _
    $region52: #{course_sr_forward.15} parent=5 // pred_fallthru
      _
  $region6: #{course_sr_forward.15} parent=0 // loop_footer
    %s16 = sadd.s32 1, %s12
  $region7: #{course_sr_forward.15} parent=0 // loop_footer_branch
    %11 = sbr.rel target = $region3
  $region8: #{course_sr_forward.15} parent=0 // loop_exit
    _

// kernel: course_sr_forward.27
$region0: #{course_sr_forward.27}
  #allocation0 [shape = 'u32[]', space=smem, size = 0x4, offset = 0x4, fixed_abs, tag = 'smem constant byte address 0x4 - core index']
  #allocation1 [shape = 'u32[144,128]{1,0:T(1,128)}', space=vmem, size = 0x12000, scoped, tag = 'internal scratch']
  %s0 = inlined_call_operand.vmem [shape: bf16[2,256,576], index: 0, kind: input, shape index: {}]
  %s1 = inlined_call_operand.vmem [shape: bf16[576,128], index: 1, kind: input, shape index: {}]
  %s2 = inlined_call_operand.vmem [shape: f32[1,128], index: 2, kind: input, shape index: {}]
  %s3 = inlined_call_operand.vmem [shape: f32[1,128], index: 3, kind: input, shape index: {}]
  %s4 = inlined_call_operand.vmem [shape: f32[1,128], index: 4, kind: input, shape index: {}, may-alias: {4,5}]
  %s5 = inlined_call_operand.vmem [shape: f32[1,128], index: 5, kind: input, shape index: {}, may-alias: {4,5}]
  %s6 = inlined_call_operand.vmem [shape: f32[2,256,128], index: 6, kind: output, shape index: {}]
  %s7 = sld [smem:[#allocation0]]
  $region57: #{course_sr_forward.27} parent=0
    _
  %s9 = ssub.s32 1, %s7
  %s10 = scalar_select 0, %s9, %s7
  loop: start=0, step=1, limit=4
  $region2: #{course_sr_forward.27} parent=0 // loop_pre_header
    _
  $region3: #{course_sr_forward.27} parent=0 // loop_header
    %s12 = sphi 0, %s16
    %p13 = scmp.ge.s32.totalorder %s12, 4
    %s22 = sphi 0, %s24
    %s25 = sphi 0, %s22
    %s26 = sphi 0, %s25
    %s42 = sphi 0, %s26
    %s46 = sphi 0, %s46
    %s48 = sphi 0, %s46
    %s49 = sphi 0, %s48
    %s63 = sphi 0, %s49
    %s67 = sphi 0, %s67
    %s69 = sphi 0, %s67
    %s70 = sphi 0, %s69
    %s84 = sphi 0, %s70
    %s88 = sphi 0, %s88
    %s90 = sphi 0, %s88
    %s91 = sphi 0, %s90
    %s105 = sphi 0, %s91
    %s109 = sphi 0, %s109
    %s111 = sphi 0, %s109
    %s112 = sphi 0, %s111
    %s126 = sphi 0, %s112
    %s130 = sphi 0, %s130
    %s132 = sphi 0, %s130
    %s133 = sphi 0, %s132
    %s147 = sphi 0, %s133
    %s153 = sphi 0, %s155
    %s156 = sphi 0, %s153
    %s157 = sphi 0, %s156
    %s173 = sphi 0, %s157
  $region4: #{course_sr_forward.27} parent=0 // loop_header_branch
    %15 = sbr.rel (%p13) target = $region8
  $region5: #{course_sr_forward.27} parent=0 // loop_body
    %s17 = ssub.s32 %s12, 1
    %s18 = ssub.s32 %s12, 2
    %s19 = sadd.s32 %s12, 1
    %s20 = ssub.s32 %s12, %s19
    %p21 = scmp.eq.s32.totalorder %s20, 0
    %s23 = sadd.s32 %s22, 1
    %s24 = scalar_select %p21, %s22, %s23
    %p27 = pneg %p21
    %p28 = scmp.eq.s32.totalorder %s12, 1
    %p29 = por %p27, %p28
    %p30 = scmp.ne.s32.totalorder %s22, %s25
    %p31 = scmp.eq.s32.totalorder %s12, 0
    %p32 = por %p30, %p31
    %p33 = scmp.ne.s32.totalorder %s22, %s25
    %p34 = scmp.eq.s32.totalorder %s17, 1
    %p35 = por %p33, %p34
    %p36 = scmp.ne.s32.totalorder %s25, %s26
    %p37 = scmp.eq.s32.totalorder %s17, 0
    %p38 = por %p36, %p37
    %p39 = scmp.ne.s32.totalorder %s25, %s26
    %p40 = scmp.eq.s32.totalorder %s18, 1
    %p41 = por %p39, %p40
    %p43 = scmp.ne.s32.totalorder %s26, %s42
    %p44 = scmp.eq.s32.totalorder %s18, 0
    %p45 = por %p43, %p44
    %s47 = sadd.s32 %s46, 1
    %p50 = scmp.eq.s32.totalorder %s12, 1
    %p51 = scmp.ne.s32.totalorder %s46, %s48
    %p52 = scmp.eq.s32.totalorder %s12, 0
    %p53 = por %p51, %p52
    %p54 = scmp.ne.s32.totalorder %s46, %s48
    %p55 = scmp.eq.s32.totalorder %s17, 1
    %p56 = por %p54, %p55
    %p57 = scmp.ne.s32.totalorder %s48, %s49
    %p58 = scmp.eq.s32.totalorder %s17, 0
    %p59 = por %p57, %p58
    %p60 = scmp.ne.s32.totalorder %s48, %s49
    %p61 = scmp.eq.s32.totalorder %s18, 1
    %p62 = por %p60, %p61
    %p64 = scmp.ne.s32.totalorder %s49, %s63
    %p65 = scmp.eq.s32.totalorder %s18, 0
    %p66 = por %p64, %p65
    %s68 = sadd.s32 %s67, 1
    %p71 = scmp.eq.s32.totalorder %s12, 1
    %p72 = scmp.ne.s32.totalorder %s67, %s69
    %p73 = scmp.eq.s32.totalorder %s12, 0
    %p74 = por %p72, %p73
    %p75 = scmp.ne.s32.totalorder %s67, %s69
    %p76 = scmp.eq.s32.totalorder %s17, 1
    %p77 = por %p75, %p76
    %p78 = scmp.ne.s32.totalorder %s69, %s70
    %p79 = scmp.eq.s32.totalorder %s17, 0
    %p80 = por %p78, %p79
    %p81 = scmp.ne.s32.totalorder %s69, %s70
    %p82 = scmp.eq.s32.totalorder %s18, 1
    %p83 = por %p81, %p82
    %p85 = scmp.ne.s32.totalorder %s70, %s84
    %p86 = scmp.eq.s32.totalorder %s18, 0
    %p87 = por %p85, %p86
    %s89 = sadd.s32 %s88, 1
    %p92 = scmp.eq.s32.totalorder %s12, 1
    %p93 = scmp.ne.s32.totalorder %s88, %s90
    %p94 = scmp.eq.s32.totalorder %s12, 0
    %p95 = por %p93, %p94
    %p96 = scmp.ne.s32.totalorder %s88, %s90
    %p97 = scmp.eq.s32.totalorder %s17, 1
    %p98 = por %p96, %p97
    %p99 = scmp.ne.s32.totalorder %s90, %s91
    %p100 = scmp.eq.s32.totalorder %s17, 0
    %p101 = por %p99, %p100
    %p102 = scmp.ne.s32.totalorder %s90, %s91
    %p103 = scmp.eq.s32.totalorder %s18, 1
    %p104 = por %p102, %p103
    %p106 = scmp.ne.s32.totalorder %s91, %s105
    %p107 = scmp.eq.s32.totalorder %s18, 0
    %p108 = por %p106, %p107
    %s110 = sadd.s32 %s109, 1
    %p113 = scmp.eq.s32.totalorder %s12, 1
    %p114 = scmp.ne.s32.totalorder %s109, %s111
    %p115 = scmp.eq.s32.totalorder %s12, 0
    %p116 = por %p114, %p115
    %p117 = scmp.ne.s32.totalorder %s109, %s111
    %p118 = scmp.eq.s32.totalorder %s17, 1
    %p119 = por %p117, %p118
    %p120 = scmp.ne.s32.totalorder %s111, %s112
    %p121 = scmp.eq.s32.totalorder %s17, 0
    %p122 = por %p120, %p121
    %p123 = scmp.ne.s32.totalorder %s111, %s112
    %p124 = scmp.eq.s32.totalorder %s18, 1
    %p125 = por %p123, %p124
    %p127 = scmp.ne.s32.totalorder %s112, %s126
    %p128 = scmp.eq.s32.totalorder %s18, 0
    %p129 = por %p127, %p128
    %s131 = sadd.s32 %s130, 1
    %p134 = scmp.eq.s32.totalorder %s12, 1
    %p135 = scmp.ne.s32.totalorder %s130, %s132
    %p136 = scmp.eq.s32.totalorder %s12, 0
    %p137 = por %p135, %p136
    %p138 = scmp.ne.s32.totalorder %s130, %s132
    %p139 = scmp.eq.s32.totalorder %s17, 1
    %p140 = por %p138, %p139
    %p141 = scmp.ne.s32.totalorder %s132, %s133
    %p142 = scmp.eq.s32.totalorder %s17, 0
    %p143 = por %p141, %p142
    %p144 = scmp.ne.s32.totalorder %s132, %s133
    %p145 = scmp.eq.s32.totalorder %s18, 1
    %p146 = por %p144, %p145
    %p148 = scmp.ne.s32.totalorder %s133, %s147
    %p149 = scmp.eq.s32.totalorder %s18, 0
    %p150 = por %p148, %p149
    %s151 = ssub.s32 %s12, %s19
    %p152 = scmp.eq.s32.totalorder %s151, 0
    %s154 = sadd.s32 %s153, 1
    %s155 = scalar_select %p152, %s153, %s154
    %p158 = pneg %p152
    %p159 = scmp.eq.s32.totalorder %s12, 1
    %p160 = por %p158, %p159
    %p161 = scmp.ne.s32.totalorder %s153, %s156
    %p162 = scmp.eq.s32.totalorder %s12, 0
    %p163 = por %p161, %p162
    %p164 = scmp.ne.s32.totalorder %s153, %s156
    %p165 = scmp.eq.s32.totalorder %s17, 1
    %p166 = por %p164, %p165
    %p167 = scmp.ne.s32.totalorder %s156, %s157
    %p168 = scmp.eq.s32.totalorder %s17, 0
    %p169 = por %p167, %p168
    %p170 = scmp.ne.s32.totalorder %s156, %s157
    %p171 = scmp.eq.s32.totalorder %s18, 1
    %p172 = por %p170, %p171
    %p174 = scmp.ne.s32.totalorder %s157, %s173
    %p175 = scmp.eq.s32.totalorder %s18, 0
    %p176 = por %p174, %p175
    %p177 = scmp.le.s32.totalorder 1, %s12
    %p178 = scmp.lt.s32.totalorder %s12, 3
    %p179 = pnand %p177, %p178
    %p180 = pneg %p179
    // Predicated region
    $region9: #{course_sr_forward.27} parent=5 // pred_check
      _
    $region10: #{course_sr_forward.27} parent=5 // pred_check_branch
      %182 = sbr.rel (%p179) target = $region12
    $region11: #{course_sr_forward.27} parent=5 // pred_region
      %s183 = ssub.s32 %s12, 1
      // Predicated region
      $region13: #{course_sr_forward.27} parent=11 // pred_check
        %p184 = pneg %p59
      $region14: #{course_sr_forward.27} parent=11 // pred_check_branch
        %186 = sbr.rel (%p184) target = $region16
      $region15: #{course_sr_forward.27} parent=11 // pred_region
        _
      $region16: #{course_sr_forward.27} parent=11 // pred_fallthru
        _
      // Predicated region
      $region17: #{course_sr_forward.27} parent=11 // pred_check
        %p187 = pneg %p80
      $region18: #{course_sr_forward.27} parent=11 // pred_check_branch
        %189 = sbr.rel (%p187) target = $region20
      $region19: #{course_sr_forward.27} parent=11 // pred_region
        _
      $region20: #{course_sr_forward.27} parent=11 // pred_fallthru
        _
      // Predicated region
      $region21: #{course_sr_forward.27} parent=11 // pred_check
        %p190 = pneg %p101
      $region22: #{course_sr_forward.27} parent=11 // pred_check_branch
        %192 = sbr.rel (%p190) target = $region24
      $region23: #{course_sr_forward.27} parent=11 // pred_region
        _
      $region24: #{course_sr_forward.27} parent=11 // pred_fallthru
        _
      // Predicated region
      $region25: #{course_sr_forward.27} parent=11 // pred_check
        %p193 = pneg %p122
      $region26: #{course_sr_forward.27} parent=11 // pred_check_branch
        %195 = sbr.rel (%p193) target = $region28
      $region27: #{course_sr_forward.27} parent=11 // pred_region
        _
      $region28: #{course_sr_forward.27} parent=11 // pred_fallthru
        _
      // Predicated region
      $region29: #{course_sr_forward.27} parent=11 // pred_check
        %p196 = pneg %p143
      $region30: #{course_sr_forward.27} parent=11 // pred_check_branch
        %198 = sbr.rel (%p196) target = $region32
      $region31: #{course_sr_forward.27} parent=11 // pred_region
        _
      $region32: #{course_sr_forward.27} parent=11 // pred_fallthru
        _
    $region12: #{course_sr_forward.27} parent=5 // pred_fallthru
      _
    %p199 = scmp.lt.s32.totalorder %s12, 2
    // Predicated region
    $region33: #{course_sr_forward.27} parent=5 // pred_check
      %p200 = pneg %p199
    $region34: #{course_sr_forward.27} parent=5 // pred_check_branch
      %202 = sbr.rel (%p200) target = $region36
    $region35: #{course_sr_forward.27} parent=5 // pred_region
      // Predicated region
      $region37: #{course_sr_forward.27} parent=35 // pred_check
        %p203 = pneg %p32
      $region38: #{course_sr_forward.27} parent=35 // pred_check_branch
        %205 = sbr.rel (%p203) target = $region40
      $region39: #{course_sr_forward.27} parent=35 // pred_region
        %p206 = scmp.lt.s32.totalorder %s12, 1
        %s207 = scalar_select %p206, %s12, 1
        %s208 = smul.addr %s207, 160
        %s209 = smul.addr %s208, 4
        %s210 = scalar_lea.vmem %s0, %s209
      $region40: #{course_sr_forward.27} parent=35 // pred_fallthru
        _
    $region36: #{course_sr_forward.27} parent=5 // pred_fallthru
      _
    %p211 = scmp.le.s32.totalorder 1, %s12
    %p212 = scmp.lt.s32.totalorder %s12, 3
    %p213 = pnand %p211, %p212
    %p214 = pneg %p213
    // Predicated region
    $region41: #{course_sr_forward.27} parent=5 // pred_check
      _
    $region42: #{course_sr_forward.27} parent=5 // pred_check_branch
      %216 = sbr.rel (%p213) target = $region44
    $region43: #{course_sr_forward.27} parent=5 // pred_region
      %s217 = ssub.s32 %s12, 1
      %p218 = scmp.lt.s32.totalorder %s17, 1
      %s219 = scalar_select %p218, %s17, 1
      %s220 = smul.addr %s219, 160
      %s221 = smul.addr %s220, 4
      %s222 = scalar_lea.vmem %s0, %s221
      %p223 = pneg %p38
      %p224 = pneg %p35
      %p225 = pneg %p59
      %p226 = pneg %p56
      %p227 = pneg %p80
      %p228 = pneg %p77
      %p229 = pneg %p101
      %p230 = pneg %p98
      %p231 = pneg %p122
      %p232 = pneg %p119
      %p233 = pneg %p143
      %p234 = pneg %p140
      %p235 = pneg %p169
      %p236 = pneg %p166
      %p237 = scmp.lt.s32.totalorder %s17, 1
      %s238 = scalar_select %p237, %s17, 1
      %s239 = smul.addr %s238, 32
      %s240 = smul.addr %s239, 8
      %s241 = scalar_lea.vmem %s6, %s240
      %p242 = scmp.lt.s32.totalorder %s17, 1
      %s243 = scalar_select %p242, %s17, 1
      %s244 = smul.addr %s243, 160
      %s245 = smul.addr %s244, 4
      %s246 = scalar_lea.vmem %s0, %s245
      %p247 = scmp.lt.s32.totalorder %s17, 1
      %s248 = scalar_select %p247, %s17, 1
      %s249 = smul.addr %s248, 32
      %s250 = smul.addr %s249, 8
      %s251 = scalar_lea.vmem %s6, %s250
      %v253 = vld [vmem:[%s246] sm:$0xff]
      %v254 = vld [vmem:[%s246 + $0x8] sm:$0xff]
      %v255 = vld [vmem:[%s246 + $0x10] sm:$0xf]
      %v256 = vld [vmem:[%s246 + $0x14] sm:$0xff]
      %v257 = vld [vmem:[%s246 + $0x1c] sm:$0xff]
      %v258 = vld [vmem:[%s246 + $0x24] sm:$0xf]
      %v259 = vld [vmem:[%s246 + $0x28] sm:$0xff]
      %v260 = vld [vmem:[%s246 + $0x30] sm:$0xff]
      %v261 = vld [vmem:[%s246 + $0x38] sm:$0xf]
      %v262 = vld [vmem:[%s246 + $0x3c] sm:$0xff]
      %v263 = vld [vmem:[%s246 + $0x44] sm:$0xff]
      %v264 = vld [vmem:[%s246 + $0x4c] sm:$0xf]
      %v265 = vld [vmem:[%s246 + $0x50] sm:$0xff]
      %v266 = vld [vmem:[%s246 + $0x58] sm:$0xff]
      %v267 = vld [vmem:[%s246 + $0x60] sm:$0xf]
      %v268 = vld [vmem:[%s246 + $0x64] sm:$0xff]
      %v269 = vld [vmem:[%s246 + $0x6c] sm:$0xff]
      %v270 = vld [vmem:[%s246 + $0x74] sm:$0xf]
      %v271 = vld [vmem:[%s246 + $0x78] sm:$0xff]
      %v272 = vld [vmem:[%s246 + $0x80] sm:$0xff]
      %v273 = vld [vmem:[%s246 + $0x88] sm:$0xf]
      %v274 = vld [vmem:[%s246 + $0x8c] sm:$0xff]
      %v275 = vld [vmem:[%s246 + $0x94] sm:$0xff]
      %v276 = vld [vmem:[%s246 + $0x9c] sm:$0xf]
      %v277 = vld [vmem:[%s246 + $0xa0] sm:$0xff]
      %v278 = vld [vmem:[%s246 + $0xa8] sm:$0xff]
      %v279 = vld [vmem:[%s246 + $0xb0] sm:$0xf]
      %v280 = vld [vmem:[%s246 + $0xb4] sm:$0xff]
      %v281 = vld [vmem:[%s246 + $0xbc] sm:$0xff]
      %v282 = vld [vmem:[%s246 + $0xc4] sm:$0xf]
      %v283 = vld [vmem:[%s246 + $0xc8] sm:$0xff]
      %v284 = vld [vmem:[%s246 + $0xd0] sm:$0xff]
      %v285 = vld [vmem:[%s246 + $0xd8] sm:$0xf]
      %v286 = vld [vmem:[%s246 + $0xdc] sm:$0xff]
      %v287 = vld [vmem:[%s246 + $0xe4] sm:$0xff]
      %v288 = vld [vmem:[%s246 + $0xec] sm:$0xf]
      %v289 = vld [vmem:[%s246 + $0xf0] sm:$0xff]
      %v290 = vld [vmem:[%s246 + $0xf8] sm:$0xff]
      %v291 = vld [vmem:[%s246 + $0x100] sm:$0xf]
      %v292 = vld [vmem:[%s246 + $0x104] sm:$0xff]
      %v293 = vld [vmem:[%s246 + $0x10c] sm:$0xff]
      %v294 = vld [vmem:[%s246 + $0x114] sm:$0xf]
      %v295 = vld [vmem:[%s246 + $0x118] sm:$0xff]
      %v296 = vld [vmem:[%s246 + $0x120] sm:$0xff]
      %v297 = vld [vmem:[%s246 + $0x128] sm:$0xf]
      %v298 = vld [vmem:[%s246 + $0x12c] sm:$0xff]
      %v299 = vld [vmem:[%s246 + $0x134] sm:$0xff]
      %v300 = vld [vmem:[%s246 + $0x13c] sm:$0xf]
      %v301 = vld [vmem:[%s246 + $0x140] sm:$0xff]
      %v302 = vld [vmem:[%s246 + $0x148] sm:$0xff]
      %v303 = vld [vmem:[%s246 + $0x150] sm:$0xf]
      %v304 = vld [vmem:[%s246 + $0x154] sm:$0xff]
      %v305 = vld [vmem:[%s246 + $0x15c] sm:$0xff]
      %v306 = vld [vmem:[%s246 + $0x164] sm:$0xf]
      %v307 = vld [vmem:[%s246 + $0x168] sm:$0xff]
      %v308 = vld [vmem:[%s246 + $0x170] sm:$0xff]
      %v309 = vld [vmem:[%s246 + $0x178] sm:$0xf]
      %v310 = vld [vmem:[%s246 + $0x17c] sm:$0xff]
      %v311 = vld [vmem:[%s246 + $0x184] sm:$0xff]
      %v312 = vld [vmem:[%s246 + $0x18c] sm:$0xf]
      %v313 = vld [vmem:[%s246 + $0x190] sm:$0xff]
      %v314 = vld [vmem:[%s246 + $0x198] sm:$0xff]
      %v315 = vld [vmem:[%s246 + $0x1a0] sm:$0xf]
      %v316 = vld [vmem:[%s246 + $0x1a4] sm:$0xff]
      %v317 = vld [vmem:[%s246 + $0x1ac] sm:$0xff]
      %v318 = vld [vmem:[%s246 + $0x1b4] sm:$0xf]
      %v319 = vld [vmem:[%s246 + $0x1b8] sm:$0xff]
      %v320 = vld [vmem:[%s246 + $0x1c0] sm:$0xff]
      %v321 = vld [vmem:[%s246 + $0x1c8] sm:$0xf]
      %v322 = vld [vmem:[%s246 + $0x1cc] sm:$0xff]
      %v323 = vld [vmem:[%s246 + $0x1d4] sm:$0xff]
      %v324 = vld [vmem:[%s246 + $0x1dc] sm:$0xf]
      %v325 = vld [vmem:[%s246 + $0x1e0] sm:$0xff]
      %v326 = vld [vmem:[%s246 + $0x1e8] sm:$0xff]
      %v327 = vld [vmem:[%s246 + $0x1f0] sm:$0xf]
      %v328 = vld [vmem:[%s246 + $0x1f4] sm:$0xff]
      %v329 = vld [vmem:[%s246 + $0x1fc] sm:$0xff]
      %v330 = vld [vmem:[%s246 + $0x204] sm:$0xf]
      %v331 = vld [vmem:[%s246 + $0x208] sm:$0xff]
      %v332 = vld [vmem:[%s246 + $0x210] sm:$0xff]
      %v333 = vld [vmem:[%s246 + $0x218] sm:$0xf]
      %v334 = vld [vmem:[%s246 + $0x21c] sm:$0xff]
      %v335 = vld [vmem:[%s246 + $0x224] sm:$0xff]
      %v336 = vld [vmem:[%s246 + $0x22c] sm:$0xf]
      %v337 = vld [vmem:[%s246 + $0x230] sm:$0xff]
      %v338 = vld [vmem:[%s246 + $0x238] sm:$0xff]
      %v339 = vld [vmem:[%s246 + $0x240] sm:$0xf]
      %v340 = vld [vmem:[%s246 + $0x244] sm:$0xff]
      %v341 = vld [vmem:[%s246 + $0x24c] sm:$0xff]
      %v342 = vld [vmem:[%s246 + $0x254] sm:$0xf]
      %v343 = vld [vmem:[%s246 + $0x258] sm:$0xff]
      %v344 = vld [vmem:[%s246 + $0x260] sm:$0xff]
      %v345 = vld [vmem:[%s246 + $0x268] sm:$0xf]
      %v346 = vld [vmem:[%s246 + $0x26c] sm:$0xff]
      %v347 = vld [vmem:[%s246 + $0x274] sm:$0xff]
      %v348 = vld [vmem:[%s246 + $0x27c] sm:$0xf]
      %v349 = vld [vmem:[%s1] sm:$0xf]
      %v350 = vld [vmem:[%s1 + $0x4] sm:$0xf]
      %v351 = vld [vmem:[%s1 + $0x8] sm:$0xf]
      %v352 = vld [vmem:[%s1 + $0xc] sm:$0xf]
      %v353 = vld [vmem:[%s1 + $0x10] sm:$0xf]
      %v354 = vld [vmem:[%s1 + $0x14] sm:$0xf]
      %v355 = vld [vmem:[%s1 + $0x18] sm:$0xf]
      %v356 = vld [vmem:[%s1 + $0x1c] sm:$0xf]
      %v357 = vld [vmem:[%s1 + $0x20] sm:$0xf]
      %v358 = vld [vmem:[%s1 + $0x24] sm:$0xf]
      %v359 = vld [vmem:[%s1 + $0x28] sm:$0xf]
      %v360 = vld [vmem:[%s1 + $0x2c] sm:$0xf]
      %v361 = vld [vmem:[%s1 + $0x30] sm:$0xf]
      %v362 = vld [vmem:[%s1 + $0x34] sm:$0xf]
      %v363 = vld [vmem:[%s1 + $0x38] sm:$0xf]
      %v364 = vld [vmem:[%s1 + $0x3c] sm:$0xf]
      %v365 = vld [vmem:[%s1 + $0x40] sm:$0xf]
      %v366 = vld [vmem:[%s1 + $0x44] sm:$0xf]
      %v367 = vld [vmem:[%s1 + $0x48] sm:$0xf]
      %v368 = vld [vmem:[%s1 + $0x4c] sm:$0xf]
      %v369 = vld [vmem:[%s1 + $0x50] sm:$0xf]
      %v370 = vld [vmem:[%s1 + $0x54] sm:$0xf]
      %v371 = vld [vmem:[%s1 + $0x58] sm:$0xf]
      %v372 = vld [vmem:[%s1 + $0x5c] sm:$0xf]
      %v373 = vld [vmem:[%s1 + $0x60] sm:$0xf]
      %v374 = vld [vmem:[%s1 + $0x64] sm:$0xf]
      %v375 = vld [vmem:[%s1 + $0x68] sm:$0xf]
      %v376 = vld [vmem:[%s1 + $0x6c] sm:$0xf]
      %v377 = vld [vmem:[%s1 + $0x70] sm:$0xf]
      %v378 = vld [vmem:[%s1 + $0x74] sm:$0xf]
      %v379 = vld [vmem:[%s1 + $0x78] sm:$0xf]
      %v380 = vld [vmem:[%s1 + $0x7c] sm:$0xf]
      %v381 = vld [vmem:[%s1 + $0x80] sm:$0xf]
      %v382 = vld [vmem:[%s1 + $0x84] sm:$0xf]
      %v383 = vld [vmem:[%s1 + $0x88] sm:$0xf]
      %v384 = vld [vmem:[%s1 + $0x8c] sm:$0xf]
      %v385 = vld [vmem:[%s1 + $0x90] sm:$0xf]
      %v386 = vld [vmem:[%s1 + $0x94] sm:$0xf]
      %v387 = vld [vmem:[%s1 + $0x98] sm:$0xf]
      %v388 = vld [vmem:[%s1 + $0x9c] sm:$0xf]
      %v389 = vld [vmem:[%s1 + $0xa0] sm:$0xf]
      %v390 = vld [vmem:[%s1 + $0xa4] sm:$0xf]
      %v391 = vld [vmem:[%s1 + $0xa8] sm:$0xf]
      %v392 = vld [vmem:[%s1 + $0xac] sm:$0xf]
      %v393 = vld [vmem:[%s1 + $0xb0] sm:$0xf]
      %v394 = vld [vmem:[%s1 + $0xb4] sm:$0xf]
      %v395 = vld [vmem:[%s1 + $0xb8] sm:$0xf]
      %v396 = vld [vmem:[%s1 + $0xbc] sm:$0xf]
      %v397 = vld [vmem:[%s1 + $0xc0] sm:$0xf]
      %v398 = vld [vmem:[%s1 + $0xc4] sm:$0xf]
      %v399 = vld [vmem:[%s1 + $0xc8] sm:$0xf]
      %v400 = vld [vmem:[%s1 + $0xcc] sm:$0xf]
      %v401 = vld [vmem:[%s1 + $0xd0] sm:$0xf]
      %v402 = vld [vmem:[%s1 + $0xd4] sm:$0xf]
      %v403 = vld [vmem:[%s1 + $0xd8] sm:$0xf]
      %v404 = vld [vmem:[%s1 + $0xdc] sm:$0xf]
      %v405 = vld [vmem:[%s1 + $0xe0] sm:$0xf]
      %v406 = vld [vmem:[%s1 + $0xe4] sm:$0xf]
      %v407 = vld [vmem:[%s1 + $0xe8] sm:$0xf]
      %v408 = vld [vmem:[%s1 + $0xec] sm:$0xf]
      %v409 = vld [vmem:[%s1 + $0xf0] sm:$0xf]
      %v410 = vld [vmem:[%s1 + $0xf4] sm:$0xf]
      %v411 = vld [vmem:[%s1 + $0xf8] sm:$0xf]
      %v412 = vld [vmem:[%s1 + $0xfc] sm:$0xf]
      %v413 = vld [vmem:[%s1 + $0x100] sm:$0xf]
      %v414 = vld [vmem:[%s1 + $0x104] sm:$0xf]
      %v415 = vld [vmem:[%s1 + $0x108] sm:$0xf]
      %v416 = vld [vmem:[%s1 + $0x10c] sm:$0xf]
      %v417 = vld [vmem:[%s1 + $0x110] sm:$0xf]
      %v418 = vld [vmem:[%s1 + $0x114] sm:$0xf]
      %v419 = vld [vmem:[%s1 + $0x118] sm:$0xf]
      %v420 = vld [vmem:[%s1 + $0x11c] sm:$0xf]
      %v421 = vld [vmem:[%s2] sm:$0x1]
      %v423 = vlaneseq
      %v424 = vshrl.u32 %v423, 7
      %v425 = vsub.s32 0, %v424
      %v426 = vrot.slane %v421, %v425
      %v524 = vunpack.c.l.b16 %v253
      %v525 = vunpack.c.h.b16 %v253
      %v526 = vunpack.c.l.b16 %v254
      %v527 = vunpack.c.h.b16 %v254
      %v528 = vunpack.c.l.b16 %v255
      %v529 = vunpack.c.l.b16 %v256
      %v530 = vunpack.c.h.b16 %v256
      %v531 = vunpack.c.l.b16 %v257
      %v532 = vunpack.c.h.b16 %v257
      %v533 = vunpack.c.l.b16 %v258
      %v534 = vunpack.c.l.b16 %v259
      %v535 = vunpack.c.h.b16 %v259
      %v536 = vunpack.c.l.b16 %v260
      %v537 = vunpack.c.h.b16 %v260
      %v538 = vunpack.c.l.b16 %v261
      %v539 = vunpack.c.l.b16 %v262
      %v540 = vunpack.c.h.b16 %v262
      %v541 = vunpack.c.l.b16 %v263
      %v542 = vunpack.c.h.b16 %v263
      %v543 = vunpack.c.l.b16 %v264
      %v544 = vunpack.c.l.b16 %v265
      %v545 = vunpack.c.h.b16 %v265
      %v546 = vunpack.c.l.b16 %v266
      %v547 = vunpack.c.h.b16 %v266
      %v548 = vunpack.c.l.b16 %v267
      %v549 = vunpack.c.l.b16 %v268
      %v550 = vunpack.c.h.b16 %v268
      %v551 = vunpack.c.l.b16 %v269
      %v552 = vunpack.c.h.b16 %v269
      %v553 = vunpack.c.l.b16 %v270
      %v554 = vunpack.c.l.b16 %v271
      %v555 = vunpack.c.h.b16 %v271
      %v556 = vunpack.c.l.b16 %v272
      %v557 = vunpack.c.h.b16 %v272
      %v558 = vunpack.c.l.b16 %v273
      %v559 = vunpack.c.l.b16 %v274
      %v560 = vunpack.c.h.b16 %v274
      %v561 = vunpack.c.l.b16 %v275
      %v562 = vunpack.c.h.b16 %v275
      %v563 = vunpack.c.l.b16 %v276
      %v564 = vunpack.c.l.b16 %v277
      %v565 = vunpack.c.h.b16 %v277
      %v566 = vunpack.c.l.b16 %v278
      %v567 = vunpack.c.h.b16 %v278
      %v568 = vunpack.c.l.b16 %v279
      %v569 = vunpack.c.l.b16 %v280
      %v570 = vunpack.c.h.b16 %v280
      %v571 = vunpack.c.l.b16 %v281
      %v572 = vunpack.c.h.b16 %v281
      %v573 = vunpack.c.l.b16 %v282
      %v574 = vunpack.c.l.b16 %v283
      %v575 = vunpack.c.h.b16 %v283
      %v576 = vunpack.c.l.b16 %v284
      %v577 = vunpack.c.h.b16 %v284
      %v578 = vunpack.c.l.b16 %v285
      %v579 = vunpack.c.l.b16 %v286
      %v580 = vunpack.c.h.b16 %v286
      %v581 = vunpack.c.l.b16 %v287
      %v582 = vunpack.c.h.b16 %v287
      %v583 = vunpack.c.l.b16 %v288
      %v584 = vunpack.c.l.b16 %v289
      %v585 = vunpack.c.h.b16 %v289
      %v586 = vunpack.c.l.b16 %v290
      %v587 = vunpack.c.h.b16 %v290
      %v588 = vunpack.c.l.b16 %v291
      %v589 = vunpack.c.l.b16 %v292
      %v590 = vunpack.c.h.b16 %v292
      %v591 = vunpack.c.l.b16 %v293
      %v592 = vunpack.c.h.b16 %v293
      %v593 = vunpack.c.l.b16 %v294
      %v594 = vunpack.c.l.b16 %v295
      %v595 = vunpack.c.h.b16 %v295
      %v596 = vunpack.c.l.b16 %v296
      %v597 = vunpack.c.h.b16 %v296
      %v598 = vunpack.c.l.b16 %v297
      %v599 = vunpack.c.l.b16 %v298
      %v600 = vunpack.c.h.b16 %v298
      %v601 = vunpack.c.l.b16 %v299
      %v602 = vunpack.c.h.b16 %v299
      %v603 = vunpack.c.l.b16 %v300
      %v604 = vunpack.c.l.b16 %v301
      %v605 = vunpack.c.h.b16 %v301
      %v606 = vunpack.c.l.b16 %v302
      %v607 = vunpack.c.h.b16 %v302
      %v608 = vunpack.c.l.b16 %v303
      %v609 = vunpack.c.l.b16 %v304
      %v610 = vunpack.c.h.b16 %v304
      %v611 = vunpack.c.l.b16 %v305
      %v612 = vunpack.c.h.b16 %v305
      %v613 = vunpack.c.l.b16 %v306
      %v614 = vunpack.c.l.b16 %v307
      %v615 = vunpack.c.h.b16 %v307
      %v616 = vunpack.c.l.b16 %v308
      %v617 = vunpack.c.h.b16 %v308
      %v618 = vunpack.c.l.b16 %v309
      %v619 = vunpack.c.l.b16 %v310
      %v620 = vunpack.c.h.b16 %v310
      %v621 = vunpack.c.l.b16 %v311
      %v622 = vunpack.c.h.b16 %v311
      %v623 = vunpack.c.l.b16 %v312
      %v624 = vunpack.c.l.b16 %v313
      %v625 = vunpack.c.h.b16 %v313
      %v626 = vunpack.c.l.b16 %v314
      %v627 = vunpack.c.h.b16 %v314
      %v628 = vunpack.c.l.b16 %v315
      %v629 = vunpack.c.l.b16 %v316
      %v630 = vunpack.c.h.b16 %v316
      %v631 = vunpack.c.l.b16 %v317
      %v632 = vunpack.c.h.b16 %v317
      %v633 = vunpack.c.l.b16 %v318
      %v634 = vunpack.c.l.b16 %v319
      %v635 = vunpack.c.h.b16 %v319
      %v636 = vunpack.c.l.b16 %v320
      %v637 = vunpack.c.h.b16 %v320
      %v638 = vunpack.c.l.b16 %v321
      %v639 = vunpack.c.l.b16 %v322
      %v640 = vunpack.c.h.b16 %v322
      %v641 = vunpack.c.l.b16 %v323
      %v642 = vunpack.c.h.b16 %v323
      %v643 = vunpack.c.l.b16 %v324
      %v644 = vunpack.c.l.b16 %v325
      %v645 = vunpack.c.h.b16 %v325
      %v646 = vunpack.c.l.b16 %v326
      %v647 = vunpack.c.h.b16 %v326
      %v648 = vunpack.c.l.b16 %v327
      %v649 = vunpack.c.l.b16 %v328
      %v650 = vunpack.c.h.b16 %v328
      %v651 = vunpack.c.l.b16 %v329
      %v652 = vunpack.c.h.b16 %v329
      %v653 = vunpack.c.l.b16 %v330
      %v654 = vunpack.c.l.b16 %v331
      %v655 = vunpack.c.h.b16 %v331
      %v656 = vunpack.c.l.b16 %v332
      %v657 = vunpack.c.h.b16 %v332
      %v658 = vunpack.c.l.b16 %v333
      %v659 = vunpack.c.l.b16 %v334
      %v660 = vunpack.c.h.b16 %v334
      %v661 = vunpack.c.l.b16 %v335
      %v662 = vunpack.c.h.b16 %v335
      %v663 = vunpack.c.l.b16 %v336
      %v664 = vunpack.c.l.b16 %v337
      %v665 = vunpack.c.h.b16 %v337
      %v666 = vunpack.c.l.b16 %v338
      %v667 = vunpack.c.h.b16 %v338
      %v668 = vunpack.c.l.b16 %v339
      %v669 = vunpack.c.l.b16 %v340
      %v670 = vunpack.c.h.b16 %v340
      %v671 = vunpack.c.l.b16 %v341
      %v672 = vunpack.c.h.b16 %v341
      %v673 = vunpack.c.l.b16 %v342
      %v674 = vunpack.c.l.b16 %v343
      %v675 = vunpack.c.h.b16 %v343
      %v676 = vunpack.c.l.b16 %v344
      %v677 = vunpack.c.h.b16 %v344
      %v678 = vunpack.c.l.b16 %v345
      %v679 = vunpack.c.l.b16 %v346
      %v680 = vunpack.c.h.b16 %v346
      %v681 = vunpack.c.l.b16 %v347
      %v682 = vunpack.c.h.b16 %v347
      %v683 = vunpack.c.l.b16 %v348
      %v684 = vpack.c.b16 %v529, %v524
      %v685 = vpack.c.b16 %v530, %v525
      %v686 = vpack.c.b16 %v531, %v526
      %v687 = vpack.c.b16 %v532, %v527
      %v688 = vpack.c.b16 %v533, %v528
      %v689 = vpack.c.b16 %v539, %v534
      %v690 = vpack.c.b16 %v540, %v535
      %v691 = vpack.c.b16 %v541, %v536
      %v692 = vpack.c.b16 %v542, %v537
      %v693 = vpack.c.b16 %v543, %v538
      %v694 = vpack.c.b16 %v549, %v544
      %v695 = vpack.c.b16 %v550, %v545
      %v696 = vpack.c.b16 %v551, %v546
      %v697 = vpack.c.b16 %v552, %v547
      %v698 = vpack.c.b16 %v553, %v548
      %v699 = vpack.c.b16 %v559, %v554
      %v700 = vpack.c.b16 %v560, %v555
      %v701 = vpack.c.b16 %v561, %v556
      %v702 = vpack.c.b16 %v562, %v557
      %v703 = vpack.c.b16 %v563, %v558
      %v704 = vpack.c.b16 %v569, %v564
      %v705 = vpack.c.b16 %v570, %v565
      %v706 = vpack.c.b16 %v571, %v566
      %v707 = vpack.c.b16 %v572, %v567
      %v708 = vpack.c.b16 %v573, %v568
      %v709 = vpack.c.b16 %v579, %v574
      %v710 = vpack.c.b16 %v580, %v575
      %v711 = vpack.c.b16 %v581, %v576
      %v712 = vpack.c.b16 %v582, %v577
      %v713 = vpack.c.b16 %v583, %v578
      %v714 = vpack.c.b16 %v589, %v584
      %v715 = vpack.c.b16 %v590, %v585
      %v716 = vpack.c.b16 %v591, %v586
      %v717 = vpack.c.b16 %v592, %v587
      %v718 = vpack.c.b16 %v593, %v588
      %v719 = vpack.c.b16 %v599, %v594
      %v720 = vpack.c.b16 %v600, %v595
      %v721 = vpack.c.b16 %v601, %v596
      %v722 = vpack.c.b16 %v602, %v597
      %v723 = vpack.c.b16 %v603, %v598
      %v724 = vpack.c.b16 %v609, %v604
      %v725 = vpack.c.b16 %v610, %v605
      %v726 = vpack.c.b16 %v611, %v606
      %v727 = vpack.c.b16 %v612, %v607
      %v728 = vpack.c.b16 %v613, %v608
      %v729 = vpack.c.b16 %v619, %v614
      %v730 = vpack.c.b16 %v620, %v615
      %v731 = vpack.c.b16 %v621, %v616
      %v732 = vpack.c.b16 %v622, %v617
      %v733 = vpack.c.b16 %v623, %v618
      %v734 = vpack.c.b16 %v629, %v624
      %v735 = vpack.c.b16 %v630, %v625
      %v736 = vpack.c.b16 %v631, %v626
      %v737 = vpack.c.b16 %v632, %v627
      %v738 = vpack.c.b16 %v633, %v628
      %v739 = vpack.c.b16 %v639, %v634
      %v740 = vpack.c.b16 %v640, %v635
      %v741 = vpack.c.b16 %v641, %v636
      %v742 = vpack.c.b16 %v642, %v637
      %v743 = vpack.c.b16 %v643, %v638
      %v744 = vpack.c.b16 %v649, %v644
      %v745 = vpack.c.b16 %v650, %v645
      %v746 = vpack.c.b16 %v651, %v646
      %v747 = vpack.c.b16 %v652, %v647
      %v748 = vpack.c.b16 %v653, %v648
      %v749 = vpack.c.b16 %v659, %v654
      %v750 = vpack.c.b16 %v660, %v655
      %v751 = vpack.c.b16 %v661, %v656
      %v752 = vpack.c.b16 %v662, %v657
      %v753 = vpack.c.b16 %v663, %v658
      %v754 = vpack.c.b16 %v669, %v664
      %v755 = vpack.c.b16 %v670, %v665
      %v756 = vpack.c.b16 %v671, %v666
      %v757 = vpack.c.b16 %v672, %v667
      %v758 = vpack.c.b16 %v673, %v668
      %v759 = vpack.c.b16 %v679, %v674
      %v760 = vpack.c.b16 %v680, %v675
      %v761 = vpack.c.b16 %v681, %v676
      %v762 = vpack.c.b16 %v682, %v677
      %v763 = vpack.c.b16 %v683, %v678
      %v900 = vunpack.c.l.b16 %v349
      %v901 = vunpack.c.l.b16 %v350
      %v902 = vunpack.c.l.b16 %v351
      %v903 = vunpack.c.l.b16 %v352
      %v904 = vunpack.c.l.b16 %v353
      %v905 = vunpack.c.l.b16 %v354
      %v906 = vunpack.c.l.b16 %v355
      %v907 = vunpack.c.l.b16 %v356
      %v908 = vunpack.c.l.b16 %v357
      %v909 = vunpack.c.l.b16 %v358
      %v910 = vunpack.c.l.b16 %v359
      %v911 = vunpack.c.l.b16 %v360
      %v912 = vunpack.c.l.b16 %v361
      %v913 = vunpack.c.l.b16 %v362
      %v914 = vunpack.c.l.b16 %v363
      %v915 = vunpack.c.l.b16 %v364
      %v916 = vunpack.c.l.b16 %v365
      %v917 = vunpack.c.l.b16 %v366
      %v918 = vunpack.c.l.b16 %v367
      %v919 = vunpack.c.l.b16 %v368
      %v920 = vunpack.c.l.b16 %v369
      %v921 = vunpack.c.l.b16 %v370
      %v922 = vunpack.c.l.b16 %v371
      %v923 = vunpack.c.l.b16 %v372
      %v924 = vunpack.c.l.b16 %v373
      %v925 = vunpack.c.l.b16 %v374
      %v926 = vunpack.c.l.b16 %v375
      %v927 = vunpack.c.l.b16 %v376
      %v928 = vunpack.c.l.b16 %v377
      %v929 = vunpack.c.l.b16 %v378
      %v930 = vunpack.c.l.b16 %v379
      %v931 = vunpack.c.l.b16 %v380
      %v932 = vunpack.c.l.b16 %v381
      %v933 = vunpack.c.l.b16 %v382
      %v934 = vunpack.c.l.b16 %v383
      %v935 = vunpack.c.l.b16 %v384
      %v936 = vunpack.c.l.b16 %v385
      %v937 = vunpack.c.l.b16 %v386
      %v938 = vunpack.c.l.b16 %v387
      %v939 = vunpack.c.l.b16 %v388
      %v940 = vunpack.c.l.b16 %v389
      %v941 = vunpack.c.l.b16 %v390
      %v942 = vunpack.c.l.b16 %v391
      %v943 = vunpack.c.l.b16 %v392
      %v944 = vunpack.c.l.b16 %v393
      %v945 = vunpack.c.l.b16 %v394
      %v946 = vunpack.c.l.b16 %v395
      %v947 = vunpack.c.l.b16 %v396
      %v948 = vunpack.c.l.b16 %v397
      %v949 = vunpack.c.l.b16 %v398
      %v950 = vunpack.c.l.b16 %v399
      %v951 = vunpack.c.l.b16 %v400
      %v952 = vunpack.c.l.b16 %v401
      %v953 = vunpack.c.l.b16 %v402
      %v954 = vunpack.c.l.b16 %v403
      %v955 = vunpack.c.l.b16 %v404
      %v956 = vunpack.c.l.b16 %v405
      %v957 = vunpack.c.l.b16 %v406
      %v958 = vunpack.c.l.b16 %v407
      %v959 = vunpack.c.l.b16 %v408
      %v960 = vunpack.c.l.b16 %v409
      %v961 = vunpack.c.l.b16 %v410
      %v962 = vunpack.c.l.b16 %v411
      %v963 = vunpack.c.l.b16 %v412
      %v964 = vunpack.c.l.b16 %v413
      %v965 = vunpack.c.l.b16 %v414
      %v966 = vunpack.c.l.b16 %v415
      %v967 = vunpack.c.l.b16 %v416
      %v968 = vunpack.c.l.b16 %v417
      %v969 = vunpack.c.l.b16 %v418
      %v970 = vunpack.c.l.b16 %v419
      %v971 = vunpack.c.l.b16 %v420
      %v972 = vpack.c.b16 %v901, %v900
      %v973 = vpack.c.b16 %v903, %v902
      %v974 = vpack.c.b16 %v905, %v904
      %v975 = vpack.c.b16 %v907, %v906
      %v976 = vpack.c.b16 %v909, %v908
      %v977 = vpack.c.b16 %v911, %v910
      %v978 = vpack.c.b16 %v913, %v912
      %v979 = vpack.c.b16 %v915, %v914
      %v980 = vpack.c.b16 %v917, %v916
      %v981 = vpack.c.b16 %v919, %v918
      %v982 = vpack.c.b16 %v921, %v920
      %v983 = vpack.c.b16 %v923, %v922
      %v984 = vpack.c.b16 %v925, %v924
      %v985 = vpack.c.b16 %v927, %v926
      %v986 = vpack.c.b16 %v929, %v928
      %v987 = vpack.c.b16 %v931, %v930
      %v988 = vpack.c.b16 %v933, %v932
      %v989 = vpack.c.b16 %v935, %v934
      %v990 = vpack.c.b16 %v937, %v936
      %v991 = vpack.c.b16 %v939, %v938
      %v992 = vpack.c.b16 %v941, %v940
      %v993 = vpack.c.b16 %v943, %v942
      %v994 = vpack.c.b16 %v945, %v944
      %v995 = vpack.c.b16 %v947, %v946
      %v996 = vpack.c.b16 %v949, %v948
      %v997 = vpack.c.b16 %v951, %v950
      %v998 = vpack.c.b16 %v953, %v952
      %v999 = vpack.c.b16 %v955, %v954
      %v1000 = vpack.c.b16 %v957, %v956
      %v1001 = vpack.c.b16 %v959, %v958
      %v1002 = vpack.c.b16 %v961, %v960
      %v1003 = vpack.c.b16 %v963, %v962
      %v1004 = vpack.c.b16 %v965, %v964
      %v1005 = vpack.c.b16 %v967, %v966
      %v1006 = vpack.c.b16 %v969, %v968
      %v1007 = vpack.c.b16 %v971, %v970
      %vm1044 = vcmask 523264
      %v1046 = vsel %vm1044, %v688, 0
      %v1049 = vsel %vm1044, %v693, 0
      %v1052 = vsel %vm1044, %v698, 0
      %v1055 = vsel %vm1044, %v703, 0
      %v1058 = vsel %vm1044, %v708, 0
      %v1061 = vsel %vm1044, %v713, 0
      %v1064 = vsel %vm1044, %v718, 0
      %v1067 = vsel %vm1044, %v723, 0
      %v1070 = vsel %vm1044, %v728, 0
      %v1073 = vsel %vm1044, %v733, 0
      %v1076 = vsel %vm1044, %v738, 0
      %v1079 = vsel %vm1044, %v743, 0
      %v1082 = vsel %vm1044, %v748, 0
      %v1085 = vsel %vm1044, %v753, 0
      %v1088 = vsel %vm1044, %v758, 0
      %v1091 = vsel %vm1044, %v763, 0
      %1093 = vmatprep.subr.bf16.mxu0 0
      %1094 = vmatpush1.bf16.msra.mxu0 %v979
      %1095 = vmatprep.subr.bf16.mxu0 0
      %1096 = vmatpush1.bf16.msra.mxu0 %v978
      %1097 = vmatprep.subr.bf16.mxu0 0
      %1098 = vmatpush1.bf16.msra.mxu0 %v977
      %1099 = vmatprep.subr.bf16.mxu0 0
      %1100 = vmatpush1.bf16.msra.mxu0 %v976
      %1101 = vmatprep.subr.bf16.mxu0 0
      %1102 = vmatpush1.bf16.msra.mxu0 %v975
      %1103 = vmatprep.subr.bf16.mxu0 0
      %1104 = vmatpush1.bf16.msra.mxu0 %v974
      %1105 = vmatprep.subr.bf16.mxu0 0
      %1106 = vmatpush1.bf16.msra.mxu0 %v973
      %1107 = vmatprep.subr.bf16.mxu0 0
      %1108 = vmatpush1.bf16.msra.mxu0 %v972
      %1109 = vmatprep.subr.bf16.mxu0 0
      %1110 = vmatpush2.bf16.msra.mxu0 %v987
      %1111 = vmatprep.subr.bf16.mxu0 0
      %1112 = vmatpush2.bf16.msra.mxu0 %v986
      %1113 = vmatprep.subr.bf16.mxu0 0
      %1114 = vmatpush2.bf16.msra.mxu0 %v985
      %1115 = vmatprep.subr.bf16.mxu0 0
      %1116 = vmatpush2.bf16.msra.mxu0 %v984
      %1117 = vmatprep.subr.bf16.mxu0 0
      %1118 = vmatpush2.bf16.msra.mxu0 %v983
      %1119 = vmatprep.subr.bf16.mxu0 0
      %1120 = vmatpush2.bf16.msra.mxu0 %v982
      %1121 = vmatprep.subr.bf16.mxu0 0
      %1122 = vmatpush2.bf16.msra.mxu0 %v981
      %1123 = vmatprep.subr.bf16.mxu0 0
      %1124 = vmatpush2.bf16.msra.mxu0 %v980
      %1125 = vmatprep.mubr.bf16.mxu0 %v685
      %1126 = vmatmul.mubr.bf16.gmra.mxu0 %v684
      %v1127 = vpop.f32.mrf.mxu0
      %v1128 = vadd.f32 %v426, %v1127
      %v1129 = vpop.f32.mrf.mxu0
      %v1130 = vpop.f32.mrf.mxu0
      %v1131 = vadd.f32 %v426, %v1130
      %v1132 = vpop.f32.mrf.mxu0
      %1133 = vmatprep.mubr.bf16.mxu0 %v690
      %1134 = vmatmul.mubr.bf16.gmra.mxu0 %v689
      %v1135 = vpop.f32.mrf.mxu0
      %v1136 = vadd.f32 %v426, %v1135
      %v1137 = vpop.f32.mrf.mxu0
      %v1138 = vpop.f32.mrf.mxu0
      %v1139 = vadd.f32 %v426, %v1138
      %v1140 = vpop.f32.mrf.mxu0
      %1141 = vmatprep.mubr.bf16.mxu0 %v695
      %1142 = vmatmul.mubr.bf16.gmra.mxu0 %v694
      %v1143 = vpop.f32.mrf.mxu0
      %v1144 = vadd.f32 %v426, %v1143
      %v1145 = vpop.f32.mrf.mxu0
      %v1146 = vpop.f32.mrf.mxu0
      %v1147 = vadd.f32 %v426, %v1146
      %v1148 = vpop.f32.mrf.mxu0
      %1149 = vmatprep.mubr.bf16.mxu0 %v700
      %1150 = vmatmul.mubr.bf16.gmra.mxu0 %v699
      %v1151 = vpop.f32.mrf.mxu0
      %v1152 = vadd.f32 %v426, %v1151
      %v1153 = vpop.f32.mrf.mxu0
      %v1154 = vpop.f32.mrf.mxu0
      %v1155 = vadd.f32 %v426, %v1154
      %v1156 = vpop.f32.mrf.mxu0
      %1157 = vmatprep.mubr.bf16.mxu0 %v705
      %1158 = vmatmul.mubr.bf16.gmra.mxu0 %v704
      %v1159 = vpop.f32.mrf.mxu0
      %v1160 = vadd.f32 %v426, %v1159
      %v1161 = vpop.f32.mrf.mxu0
      %v1162 = vpop.f32.mrf.mxu0
      %v1163 = vadd.f32 %v426, %v1162
      %v1164 = vpop.f32.mrf.mxu0
      %1165 = vmatprep.mubr.bf16.mxu0 %v710
      %1166 = vmatmul.mubr.bf16.gmra.mxu0 %v709
      %v1167 = vpop.f32.mrf.mxu0
      %v1168 = vadd.f32 %v426, %v1167
      %v1169 = vpop.f32.mrf.mxu0
      %v1170 = vpop.f32.mrf.mxu0
      %v1171 = vadd.f32 %v426, %v1170
      %v1172 = vpop.f32.mrf.mxu0
      %1173 = vmatprep.mubr.bf16.mxu0 %v715
      %1174 = vmatmul.mubr.bf16.gmra.mxu0 %v714
      %v1175 = vpop.f32.mrf.mxu0
      %v1176 = vadd.f32 %v426, %v1175
      %v1177 = vpop.f32.mrf.mxu0
      %v1178 = vpop.f32.mrf.mxu0
      %v1179 = vadd.f32 %v426, %v1178
      %v1180 = vpop.f32.mrf.mxu0
      %1181 = vmatprep.mubr.bf16.mxu0 %v720
      %1182 = vmatmul.mubr.bf16.gmra.mxu0 %v719
      %v1183 = vpop.f32.mrf.mxu0
      %v1184 = vadd.f32 %v426, %v1183
      %v1185 = vpop.f32.mrf.mxu0
      %v1186 = vpop.f32.mrf.mxu0
      %v1187 = vadd.f32 %v426, %v1186
      %v1188 = vpop.f32.mrf.mxu0
      %1189 = vmatprep.mubr.bf16.mxu0 %v725
      %1190 = vmatmul.mubr.bf16.gmra.mxu0 %v724
      %v1191 = vpop.f32.mrf.mxu0
      %v1192 = vadd.f32 %v426, %v1191
      %v1193 = vpop.f32.mrf.mxu0
      %v1194 = vpop.f32.mrf.mxu0
      %v1195 = vadd.f32 %v426, %v1194
      %v1196 = vpop.f32.mrf.mxu0
      %1197 = vmatprep.mubr.bf16.mxu0 %v730
      %1198 = vmatmul.mubr.bf16.gmra.mxu0 %v729
      %v1199 = vpop.f32.mrf.mxu0
      %v1200 = vadd.f32 %v426, %v1199
      %v1201 = vpop.f32.mrf.mxu0
      %v1202 = vpop.f32.mrf.mxu0
      %v1203 = vadd.f32 %v426, %v1202
      %v1204 = vpop.f32.mrf.mxu0
      %1205 = vmatprep.mubr.bf16.mxu0 %v735
      %1206 = vmatmul.mubr.bf16.gmra.mxu0 %v734
      %v1207 = vpop.f32.mrf.mxu0
      %v1208 = vadd.f32 %v426, %v1207
      %v1209 = vpop.f32.mrf.mxu0
      %v1210 = vpop.f32.mrf.mxu0
      %v1211 = vadd.f32 %v426, %v1210
      %v1212 = vpop.f32.mrf.mxu0
      %1213 = vmatprep.mubr.bf16.mxu0 %v740
      %1214 = vmatmul.mubr.bf16.gmra.mxu0 %v739
      %v1215 = vpop.f32.mrf.mxu0
      %v1216 = vadd.f32 %v426, %v1215
      %v1217 = vpop.f32.mrf.mxu0
      %v1218 = vpop.f32.mrf.mxu0
      %v1219 = vadd.f32 %v426, %v1218
      %v1220 = vpop.f32.mrf.mxu0
      %1221 = vmatprep.mubr.bf16.mxu0 %v745
      %1222 = vmatmul.mubr.bf16.gmra.mxu0 %v744
      %v1223 = vpop.f32.mrf.mxu0
      %v1224 = vadd.f32 %v426, %v1223
      %v1225 = vpop.f32.mrf.mxu0
      %v1226 = vpop.f32.mrf.mxu0
      %v1227 = vadd.f32 %v426, %v1226
      %v1228 = vpop.f32.mrf.mxu0
      %1229 = vmatprep.mubr.bf16.mxu0 %v750
      %1230 = vmatmul.mubr.bf16.gmra.mxu0 %v749
      %v1231 = vpop.f32.mrf.mxu0
      %v1232 = vadd.f32 %v426, %v1231
      %v1233 = vpop.f32.mrf.mxu0
      %v1234 = vpop.f32.mrf.mxu0
      %v1235 = vadd.f32 %v426, %v1234
      %v1236 = vpop.f32.mrf.mxu0
      %1237 = vmatprep.mubr.bf16.mxu0 %v755
      %1238 = vmatmul.mubr.bf16.gmra.mxu0 %v754
      %v1239 = vpop.f32.mrf.mxu0
      %v1240 = vadd.f32 %v426, %v1239
      %v1241 = vpop.f32.mrf.mxu0
      %v1242 = vpop.f32.mrf.mxu0
      %v1243 = vadd.f32 %v426, %v1242
      %v1244 = vpop.f32.mrf.mxu0
      %1245 = vmatprep.mubr.bf16.mxu0 %v760
      %1246 = vmatmul.mubr.bf16.gmra.mxu0 %v759
      %v1247 = vpop.f32.mrf.mxu0
      %v1248 = vadd.f32 %v426, %v1247
      %v1249 = vpop.f32.mrf.mxu0
      %v1250 = vpop.f32.mrf.mxu0
      %v1251 = vadd.f32 %v426, %v1250
      %v1252 = vpop.f32.mrf.mxu0
      %1253 = vdwg.mxu0
      %1254 = vmatprep.subr.bf16.mxu0 0
      %1255 = vmatpush1.bf16.msra.mxu0 %v995
      %1256 = vmatprep.subr.bf16.mxu0 0
      %1257 = vmatpush1.bf16.msra.mxu0 %v994
      %1258 = vmatprep.subr.bf16.mxu0 0
      %1259 = vmatpush1.bf16.msra.mxu0 %v993
      %1260 = vmatprep.subr.bf16.mxu0 0
      %1261 = vmatpush1.bf16.msra.mxu0 %v992
      %1262 = vmatprep.subr.bf16.mxu0 0
      %1263 = vmatpush1.bf16.msra.mxu0 %v991
      %1264 = vmatprep.subr.bf16.mxu0 0
      %1265 = vmatpush1.bf16.msra.mxu0 %v990
      %1266 = vmatprep.subr.bf16.mxu0 0
      %1267 = vmatpush1.bf16.msra.mxu0 %v989
      %1268 = vmatprep.subr.bf16.mxu0 0
      %1269 = vmatpush1.bf16.msra.mxu0 %v988
      %1270 = vmatprep.subr.bf16.mxu0 0
      %1271 = vmatpush2.bf16.msra.mxu0 %v1003
      %1272 = vmatprep.subr.bf16.mxu0 0
      %1273 = vmatpush2.bf16.msra.mxu0 %v1002
      %1274 = vmatprep.subr.bf16.mxu0 0
      %1275 = vmatpush2.bf16.msra.mxu0 %v1001
      %1276 = vmatprep.subr.bf16.mxu0 0
      %1277 = vmatpush2.bf16.msra.mxu0 %v1000
      %1278 = vmatprep.subr.bf16.mxu0 0
      %1279 = vmatpush2.bf16.msra.mxu0 %v999
      %1280 = vmatprep.subr.bf16.mxu0 0
      %1281 = vmatpush2.bf16.msra.mxu0 %v998
      %1282 = vmatprep.subr.bf16.mxu0 0
      %1283 = vmatpush2.bf16.msra.mxu0 %v997
      %1284 = vmatprep.subr.bf16.mxu0 0
      %1285 = vmatpush2.bf16.msra.mxu0 %v996
      %1286 = vmatprep.mubr.bf16.mxu0 %v687
      %1287 = vmatmul.mubr.bf16.gmra.mxu0 %v686
      %v1288 = vpop.f32.mrf.mxu0
      %v1289 = vadd.f32 %v1128, %v1288
      %v1290 = vpop.f32.mrf.mxu0
      %v1291 = vpop.f32.mrf.mxu0
      %v1292 = vadd.f32 %v1131, %v1291
      %v1293 = vpop.f32.mrf.mxu0
      %1294 = vmatprep.mubr.bf16.mxu0 %v692
      %1295 = vmatmul.mubr.bf16.gmra.mxu0 %v691
      %v1296 = vpop.f32.mrf.mxu0
      %v1297 = vadd.f32 %v1136, %v1296
      %v1298 = vpop.f32.mrf.mxu0
      %v1299 = vpop.f32.mrf.mxu0
      %v1300 = vadd.f32 %v1139, %v1299
      %v1301 = vpop.f32.mrf.mxu0
      %1302 = vmatprep.mubr.bf16.mxu0 %v697
      %1303 = vmatmul.mubr.bf16.gmra.mxu0 %v696
      %v1304 = vpop.f32.mrf.mxu0
      %v1305 = vadd.f32 %v1144, %v1304
      %v1306 = vpop.f32.mrf.mxu0
      %v1307 = vpop.f32.mrf.mxu0
      %v1308 = vadd.f32 %v1147, %v1307
      %v1309 = vpop.f32.mrf.mxu0
      %1310 = vmatprep.mubr.bf16.mxu0 %v702
      %1311 = vmatmul.mubr.bf16.gmra.mxu0 %v701
      %v1312 = vpop.f32.mrf.mxu0
      %v1313 = vadd.f32 %v1152, %v1312
      %v1314 = vpop.f32.mrf.mxu0
      %v1315 = vpop.f32.mrf.mxu0
      %v1316 = vadd.f32 %v1155, %v1315
      %v1317 = vpop.f32.mrf.mxu0
      %1318 = vmatprep.mubr.bf16.mxu0 %v707
      %1319 = vmatmul.mubr.bf16.gmra.mxu0 %v706
      %v1320 = vpop.f32.mrf.mxu0
      %v1321 = vadd.f32 %v1160, %v1320
      %v1322 = vpop.f32.mrf.mxu0
      %v1323 = vpop.f32.mrf.mxu0
      %v1324 = vadd.f32 %v1163, %v1323
      %v1325 = vpop.f32.mrf.mxu0
      %1326 = vmatprep.mubr.bf16.mxu0 %v712
      %1327 = vmatmul.mubr.bf16.gmra.mxu0 %v711
      %v1328 = vpop.f32.mrf.mxu0
      %v1329 = vadd.f32 %v1168, %v1328
      %v1330 = vpop.f32.mrf.mxu0
      %v1331 = vpop.f32.mrf.mxu0
      %v1332 = vadd.f32 %v1171, %v1331
      %v1333 = vpop.f32.mrf.mxu0
      %1334 = vmatprep.mubr.bf16.mxu0 %v717
      %1335 = vmatmul.mubr.bf16.gmra.mxu0 %v716
      %v1336 = vpop.f32.mrf.mxu0
      %v1337 = vadd.f32 %v1176, %v1336
      %v1338 = vpop.f32.mrf.mxu0
      %v1339 = vpop.f32.mrf.mxu0
      %v1340 = vadd.f32 %v1179, %v1339
      %v1341 = vpop.f32.mrf.mxu0
      %1342 = vmatprep.mubr.bf16.mxu0 %v722
      %1343 = vmatmul.mubr.bf16.gmra.mxu0 %v721
      %v1344 = vpop.f32.mrf.mxu0
      %v1345 = vadd.f32 %v1184, %v1344
      %v1346 = vpop.f32.mrf.mxu0
      %v1347 = vpop.f32.mrf.mxu0
      %v1348 = vadd.f32 %v1187, %v1347
      %v1349 = vpop.f32.mrf.mxu0
      %1350 = vmatprep.mubr.bf16.mxu0 %v727
      %1351 = vmatmul.mubr.bf16.gmra.mxu0 %v726
      %v1352 = vpop.f32.mrf.mxu0
      %v1353 = vadd.f32 %v1192, %v1352
      %v1354 = vpop.f32.mrf.mxu0
      %v1355 = vpop.f32.mrf.mxu0
      %v1356 = vadd.f32 %v1195, %v1355
      %v1357 = vpop.f32.mrf.mxu0
      %1358 = vmatprep.mubr.bf16.mxu0 %v732
      %1359 = vmatmul.mubr.bf16.gmra.mxu0 %v731
      %v1360 = vpop.f32.mrf.mxu0
      %v1361 = vadd.f32 %v1200, %v1360
      %v1362 = vpop.f32.mrf.mxu0
      %v1363 = vpop.f32.mrf.mxu0
      %v1364 = vadd.f32 %v1203, %v1363
      %v1365 = vpop.f32.mrf.mxu0
      %1366 = vmatprep.mubr.bf16.mxu0 %v737
      %1367 = vmatmul.mubr.bf16.gmra.mxu0 %v736
      %v1368 = vpop.f32.mrf.mxu0
      %v1369 = vadd.f32 %v1208, %v1368
      %v1370 = vpop.f32.mrf.mxu0
      %v1371 = vpop.f32.mrf.mxu0
      %v1372 = vadd.f32 %v1211, %v1371
      %v1373 = vpop.f32.mrf.mxu0
      %1374 = vmatprep.mubr.bf16.mxu0 %v742
      %1375 = vmatmul.mubr.bf16.gmra.mxu0 %v741
      %v1376 = vpop.f32.mrf.mxu0
      %v1377 = vadd.f32 %v1216, %v1376
      %v1378 = vpop.f32.mrf.mxu0
      %v1379 = vpop.f32.mrf.mxu0
      %v1380 = vadd.f32 %v1219, %v1379
      %v1381 = vpop.f32.mrf.mxu0
      %1382 = vmatprep.mubr.bf16.mxu0 %v747
      %1383 = vmatmul.mubr.bf16.gmra.mxu0 %v746
      %v1384 = vpop.f32.mrf.mxu0
      %v1385 = vadd.f32 %v1224, %v1384
      %v1386 = vpop.f32.mrf.mxu0
      %v1387 = vpop.f32.mrf.mxu0
      %v1388 = vadd.f32 %v1227, %v1387
      %v1389 = vpop.f32.mrf.mxu0
      %1390 = vmatprep.mubr.bf16.mxu0 %v752
      %1391 = vmatmul.mubr.bf16.gmra.mxu0 %v751
      %v1392 = vpop.f32.mrf.mxu0
      %v1393 = vadd.f32 %v1232, %v1392
      %v1394 = vpop.f32.mrf.mxu0
      %v1395 = vpop.f32.mrf.mxu0
      %v1396 = vadd.f32 %v1235, %v1395
      %v1397 = vpop.f32.mrf.mxu0
      %1398 = vmatprep.mubr.bf16.mxu0 %v757
      %1399 = vmatmul.mubr.bf16.gmra.mxu0 %v756
      %v1400 = vpop.f32.mrf.mxu0
      %v1401 = vadd.f32 %v1240, %v1400
      %v1402 = vpop.f32.mrf.mxu0
      %v1403 = vpop.f32.mrf.mxu0
      %v1404 = vadd.f32 %v1243, %v1403
      %v1405 = vpop.f32.mrf.mxu0
      %1406 = vmatprep.mubr.bf16.mxu0 %v762
      %1407 = vmatmul.mubr.bf16.gmra.mxu0 %v761
      %v1408 = vpop.f32.mrf.mxu0
      %v1409 = vadd.f32 %v1248, %v1408
      %v1410 = vpop.f32.mrf.mxu0
      %v1411 = vpop.f32.mrf.mxu0
      %v1412 = vadd.f32 %v1251, %v1411
      %v1413 = vpop.f32.mrf.mxu0
      %1414 = vdwg.mxu0
      %1415 = vmatprep.subr.bf16.mxu0 0
      %1416 = vmatpush1.bf16.msra.mxu0 0
      %1417 = vmatprep.subr.bf16.mxu0 0
      %1418 = vmatpush1.bf16.msra.mxu0 0
      %1419 = vmatprep.subr.bf16.mxu0 0
      %1420 = vmatpush1.bf16.msra.mxu0 0
      %1421 = vmatprep.subr.bf16.mxu0 0
      %1422 = vmatpush1.bf16.msra.mxu0 0
      %1423 = vmatprep.subr.bf16.mxu0 0
      %1424 = vmatpush1.bf16.msra.mxu0 %v1007
      %1425 = vmatprep.subr.bf16.mxu0 0
      %1426 = vmatpush1.bf16.msra.mxu0 %v1006
      %1427 = vmatprep.subr.bf16.mxu0 0
      %1428 = vmatpush1.bf16.msra.mxu0 %v1005
      %1429 = vmatprep.subr.bf16.mxu0 0
      %1430 = vmatpush1.bf16.msra.mxu0 %v1004
      %1431 = vmatprep.subr.bf16.mxu0 0
      %1432 = vmatpush2.bf16.msra.mxu0 0
      %1433 = vmatprep.subr.bf16.mxu0 0
      %1434 = vmatpush2.bf16.msra.mxu0 0
      %1435 = vmatprep.subr.bf16.mxu0 0
      %1436 = vmatpush2.bf16.msra.mxu0 0
      %1437 = vmatprep.subr.bf16.mxu0 0
      %1438 = vmatpush2.bf16.msra.mxu0 0
      %1439 = vmatprep.subr.bf16.mxu0 0
      %1440 = vmatpush2.bf16.msra.mxu0 0
      %1441 = vmatprep.subr.bf16.mxu0 0
      %1442 = vmatpush2.bf16.msra.mxu0 0
      %1443 = vmatprep.subr.bf16.mxu0 0
      %1444 = vmatpush2.bf16.msra.mxu0 0
      %1445 = vmatprep.subr.bf16.mxu0 0
      %1446 = vmatpush2.bf16.msra.mxu0 0
      %1447 = vmatprep.mubr.bf16.mxu0 0
      %1448 = vmatmul.mubr.bf16.gmra.mxu0 %v1046
      %v1449 = vpop.f32.mrf.mxu0
      %v1450 = vadd.f32 %v1289, %v1449
      %v1451 = vpop.f32.mrf.mxu0
      %v1452 = vpop.f32.mrf.mxu0
      %v1453 = vadd.f32 %v1292, %v1452
      %v1454 = vpop.f32.mrf.mxu0
      %1455 = vmatprep.mubr.bf16.mxu0 0
      %1456 = vmatmul.mubr.bf16.gmra.mxu0 %v1049
      %v1457 = vpop.f32.mrf.mxu0
      %v1458 = vadd.f32 %v1297, %v1457
      %v1459 = vpop.f32.mrf.mxu0
      %v1460 = vpop.f32.mrf.mxu0
      %v1461 = vadd.f32 %v1300, %v1460
      %v1462 = vpop.f32.mrf.mxu0
      %1463 = vmatprep.mubr.bf16.mxu0 0
      %1464 = vmatmul.mubr.bf16.gmra.mxu0 %v1052
      %v1465 = vpop.f32.mrf.mxu0
      %v1466 = vadd.f32 %v1305, %v1465
      %v1467 = vpop.f32.mrf.mxu0
      %v1468 = vpop.f32.mrf.mxu0
      %v1469 = vadd.f32 %v1308, %v1468
      %v1470 = vpop.f32.mrf.mxu0
      %1471 = vmatprep.mubr.bf16.mxu0 0
      %1472 = vmatmul.mubr.bf16.gmra.mxu0 %v1055
      %v1473 = vpop.f32.mrf.mxu0
      %v1474 = vadd.f32 %v1313, %v1473
      %v1475 = vpop.f32.mrf.mxu0
      %v1476 = vpop.f32.mrf.mxu0
      %v1477 = vadd.f32 %v1316, %v1476
      %v1478 = vpop.f32.mrf.mxu0
      %1479 = vmatprep.mubr.bf16.mxu0 0
      %1480 = vmatmul.mubr.bf16.gmra.mxu0 %v1058
      %v1481 = vpop.f32.mrf.mxu0
      %v1482 = vadd.f32 %v1321, %v1481
      %v1483 = vpop.f32.mrf.mxu0
      %v1484 = vpop.f32.mrf.mxu0
      %v1485 = vadd.f32 %v1324, %v1484
      %v1486 = vpop.f32.mrf.mxu0
      %1487 = vmatprep.mubr.bf16.mxu0 0
      %1488 = vmatmul.mubr.bf16.gmra.mxu0 %v1061
      %v1489 = vpop.f32.mrf.mxu0
      %v1490 = vadd.f32 %v1329, %v1489
      %v1491 = vpop.f32.mrf.mxu0
      %v1492 = vpop.f32.mrf.mxu0
      %v1493 = vadd.f32 %v1332, %v1492
      %v1494 = vpop.f32.mrf.mxu0
      %1495 = vmatprep.mubr.bf16.mxu0 0
      %1496 = vmatmul.mubr.bf16.gmra.mxu0 %v1064
      %v1497 = vpop.f32.mrf.mxu0
      %v1498 = vadd.f32 %v1337, %v1497
      %v1499 = vpop.f32.mrf.mxu0
      %v1500 = vpop.f32.mrf.mxu0
      %v1501 = vadd.f32 %v1340, %v1500
      %v1502 = vpop.f32.mrf.mxu0
      %1503 = vmatprep.mubr.bf16.mxu0 0
      %1504 = vmatmul.mubr.bf16.gmra.mxu0 %v1067
      %v1505 = vpop.f32.mrf.mxu0
      %v1506 = vadd.f32 %v1345, %v1505
      %v1507 = vpop.f32.mrf.mxu0
      %v1508 = vpop.f32.mrf.mxu0
      %v1509 = vadd.f32 %v1348, %v1508
      %v1510 = vpop.f32.mrf.mxu0
      %1511 = vmatprep.mubr.bf16.mxu0 0
      %1512 = vmatmul.mubr.bf16.gmra.mxu0 %v1070
      %v1513 = vpop.f32.mrf.mxu0
      %v1514 = vadd.f32 %v1353, %v1513
      %v1515 = vpop.f32.mrf.mxu0
      %v1516 = vpop.f32.mrf.mxu0
      %v1517 = vadd.f32 %v1356, %v1516
      %v1518 = vpop.f32.mrf.mxu0
      %1519 = vmatprep.mubr.bf16.mxu0 0
      %1520 = vmatmul.mubr.bf16.gmra.mxu0 %v1073
      %v1521 = vpop.f32.mrf.mxu0
      %v1522 = vadd.f32 %v1361, %v1521
      %v1523 = vpop.f32.mrf.mxu0
      %v1524 = vpop.f32.mrf.mxu0
      %v1525 = vadd.f32 %v1364, %v1524
      %v1526 = vpop.f32.mrf.mxu0
      %1527 = vmatprep.mubr.bf16.mxu0 0
      %1528 = vmatmul.mubr.bf16.gmra.mxu0 %v1076
      %v1529 = vpop.f32.mrf.mxu0
      %v1530 = vadd.f32 %v1369, %v1529
      %v1531 = vpop.f32.mrf.mxu0
      %v1532 = vpop.f32.mrf.mxu0
      %v1533 = vadd.f32 %v1372, %v1532
      %v1534 = vpop.f32.mrf.mxu0
      %1535 = vmatprep.mubr.bf16.mxu0 0
      %1536 = vmatmul.mubr.bf16.gmra.mxu0 %v1079
      %v1537 = vpop.f32.mrf.mxu0
      %v1538 = vadd.f32 %v1377, %v1537
      %v1539 = vpop.f32.mrf.mxu0
      %v1540 = vpop.f32.mrf.mxu0
      %v1541 = vadd.f32 %v1380, %v1540
      %v1542 = vpop.f32.mrf.mxu0
      %1543 = vmatprep.mubr.bf16.mxu0 0
      %1544 = vmatmul.mubr.bf16.gmra.mxu0 %v1082
      %v1545 = vpop.f32.mrf.mxu0
      %v1546 = vadd.f32 %v1385, %v1545
      %v1547 = vpop.f32.mrf.mxu0
      %v1548 = vpop.f32.mrf.mxu0
      %v1549 = vadd.f32 %v1388, %v1548
      %v1550 = vpop.f32.mrf.mxu0
      %1551 = vmatprep.mubr.bf16.mxu0 0
      %1552 = vmatmul.mubr.bf16.gmra.mxu0 %v1085
      %v1553 = vpop.f32.mrf.mxu0
      %v1554 = vadd.f32 %v1393, %v1553
      %v1555 = vpop.f32.mrf.mxu0
      %v1556 = vpop.f32.mrf.mxu0
      %v1557 = vadd.f32 %v1396, %v1556
      %v1558 = vpop.f32.mrf.mxu0
      %1559 = vmatprep.mubr.bf16.mxu0 0
      %1560 = vmatmul.mubr.bf16.gmra.mxu0 %v1088
      %v1561 = vpop.f32.mrf.mxu0
      %v1562 = vadd.f32 %v1401, %v1561
      %v1563 = vpop.f32.mrf.mxu0
      %v1564 = vpop.f32.mrf.mxu0
      %v1565 = vadd.f32 %v1404, %v1564
      %v1566 = vpop.f32.mrf.mxu0
      %1567 = vmatprep.mubr.bf16.mxu0 0
      %1568 = vmatmul.mubr.bf16.gmra.mxu0 %v1091
      %v1569 = vpop.f32.mrf.mxu0
      %v1570 = vadd.f32 %v1409, %v1569
      %v1571 = vpop.f32.mrf.mxu0
      %v1572 = vpop.f32.mrf.mxu0
      %v1573 = vadd.f32 %v1412, %v1572
      %v1574 = vpop.f32.mrf.mxu0
      %1575 = vdwg.mxu0
      %1576 = vst [vmem:[%s251] sm:$0xff] %v1450
      %1577 = vst [vmem:[%s251 + $0x8] sm:$0xff] %v1453
      %1578 = vst [vmem:[%s251 + $0x10] sm:$0xff] %v1458
      %1579 = vst [vmem:[%s251 + $0x18] sm:$0xff] %v1461
      %1580 = vst [vmem:[%s251 + $0x20] sm:$0xff] %v1466
      %1581 = vst [vmem:[%s251 + $0x28] sm:$0xff] %v1469
      %1582 = vst [vmem:[%s251 + $0x30] sm:$0xff] %v1474
      %1583 = vst [vmem:[%s251 + $0x38] sm:$0xff] %v1477
      %1584 = vst [vmem:[%s251 + $0x40] sm:$0xff] %v1482
      %1585 = vst [vmem:[%s251 + $0x48] sm:$0xff] %v1485
      %1586 = vst [vmem:[%s251 + $0x50] sm:$0xff] %v1490
      %1587 = vst [vmem:[%s251 + $0x58] sm:$0xff] %v1493
      %1588 = vst [vmem:[%s251 + $0x60] sm:$0xff] %v1498
      %1589 = vst [vmem:[%s251 + $0x68] sm:$0xff] %v1501
      %1590 = vst [vmem:[%s251 + $0x70] sm:$0xff] %v1506
      %1591 = vst [vmem:[%s251 + $0x78] sm:$0xff] %v1509
      %1592 = vst [vmem:[%s251 + $0x80] sm:$0xff] %v1514
      %1593 = vst [vmem:[%s251 + $0x88] sm:$0xff] %v1517
      %1594 = vst [vmem:[%s251 + $0x90] sm:$0xff] %v1522
      %1595 = vst [vmem:[%s251 + $0x98] sm:$0xff] %v1525
      %1596 = vst [vmem:[%s251 + $0xa0] sm:$0xff] %v1530
      %1597 = vst [vmem:[%s251 + $0xa8] sm:$0xff] %v1533
      %1598 = vst [vmem:[%s251 + $0xb0] sm:$0xff] %v1538
      %1599 = vst [vmem:[%s251 + $0xb8] sm:$0xff] %v1541
      %1600 = vst [vmem:[%s251 + $0xc0] sm:$0xff] %v1546
      %1601 = vst [vmem:[%s251 + $0xc8] sm:$0xff] %v1549
      %1602 = vst [vmem:[%s251 + $0xd0] sm:$0xff] %v1554
      %1603 = vst [vmem:[%s251 + $0xd8] sm:$0xff] %v1557
      %1604 = vst [vmem:[%s251 + $0xe0] sm:$0xff] %v1562
      %1605 = vst [vmem:[%s251 + $0xe8] sm:$0xff] %v1565
      %1606 = vst [vmem:[%s251 + $0xf0] sm:$0xff] %v1570
      %1607 = vst [vmem:[%s251 + $0xf8] sm:$0xff] %v1573
      %p1608 = scmp.lt.s32.totalorder %s17, 1
      %s1609 = scalar_select %p1608, %s17, 1
      %s1610 = smul.addr %s1609, 32
      %s1611 = smul.addr %s1610, 8
      %s1612 = scalar_lea.vmem %s6, %s1611
      // Predicated region
      $region45: #{course_sr_forward.27} parent=43 // pred_check
        %p1613 = pneg %p166
      $region46: #{course_sr_forward.27} parent=43 // pred_check_branch
        %1615 = sbr.rel (%p1613) target = $region48
      $region47: #{course_sr_forward.27} parent=43 // pred_region
        _
      $region48: #{course_sr_forward.27} parent=43 // pred_fallthru
        _
    $region44: #{course_sr_forward.27} parent=5 // pred_fallthru
      _
    %p1616 = scmp.le.s32.totalorder 2, %s12
    // Predicated region
    $region49: #{course_sr_forward.27} parent=5 // pred_check
      %p1617 = pneg %p1616
    $region50: #{course_sr_forward.27} parent=5 // pred_check_branch
      %1619 = sbr.rel (%p1617) target = $region52
    $region51: #{course_sr_forward.27} parent=5 // pred_region
      %s1620 = ssub.s32 %s12, 2
      // Predicated region
      $region53: #{course_sr_forward.27} parent=51 // pred_check
        %p1621 = pneg %p172
      $region54: #{course_sr_forward.27} parent=51 // pred_check_branch
        %1623 = sbr.rel (%p1621) target = $region56
      $region55: #{course_sr_forward.27} parent=51 // pred_region
        %p1624 = scmp.lt.s32.totalorder %s18, 1
        %s1625 = scalar_select %p1624, %s18, 1
        %s1626 = smul.addr %s1625, 32
        %s1627 = smul.addr %s1626, 8
        %s1628 = scalar_lea.vmem %s6, %s1627
      $region56: #{course_sr_forward.27} parent=51 // pred_fallthru
        _
    $region52: #{course_sr_forward.27} parent=5 // pred_fallthru
      _
  $region6: #{course_sr_forward.27} parent=0 // loop_footer
    %s16 = sadd.s32 1, %s12
  $region7: #{course_sr_forward.27} parent=0 // loop_footer_branch
    %11 = sbr.rel target = $region3
  $region8: #{course_sr_forward.27} parent=0 // loop_exit
    _

</llo_original>
